<compile_context>
chip_gen: v6e
topology: v6e:2x2x1
jax: 0.10.0
libtpu: 0.0.40
codegen_flags: <defaults>
</compile_context>

<pallas_src>
import math

import jax
import jax.numpy as jnp
from jax.experimental import pallas as pl

# ---- config: constructor args shrunk for a quick test; values hardcoded in
# ---- the module (conv kernel sizes, fc output = 100) are kept as-is.
INPUT_SIZE  = 256               # signal length (PyTorch default: 1000)
KEY_SIZE    = 16                # (PyTorch default: 100)
NUM_KERNELS = 8                 # (PyTorch default: 24)
CONV_SIZES  = (192, 96, 64)     # hardcoded Conv1d kernel sizes in the module
FC_OUT      = 100               # hardcoded fc output size in the module
PS_SIZE     = INPUT_SIZE // 2 + 1        # power_spectrum_size
N_FFT       = PS_SIZE * 2 - 2            # == INPUT_SIZE (even L)
HOP         = N_FFT // 4                 # torch.stft default hop_length
N_FRAMES    = 1 + INPUT_SIZE // HOP      # torch.stft center=True, rect window
LEAKY_SLOPE = 0.01                       # F.leaky_relu default
PAD         = N_FFT // 2                 # reflect pad (also conv window offset)


def _rup(n, m):
    return ((n + m - 1) // m) * m


KPAD       = tuple(_rup(k, 128) for k in CONV_SIZES)        # (256, 128, 128)
T_CONV     = tuple(INPUT_SIZE - k + 1 for k in CONV_SIZES)  # (65, 161, 193)
PS_PAD     = _rup(PS_SIZE, 128)                             # 256
FC_IN_K    = 3 * NUM_KERNELS + PS_PAD                       # 280 (kernel fc rows)
FC_OUT_PAD = _rup(FC_OUT, 128)                              # 128

# Window gathers (incl. lane padding beyond ksize) must stay inside the
# reflect-padded signal; padded columns read real samples, which is harmless
# because the matching weight rows are exactly zero.
assert all(kp - k <= PAD for kp, k in zip(KPAD, CONV_SIZES))
assert (N_FRAMES - 1) * HOP + N_FFT <= INPUT_SIZE + 2 * PAD


def _leaky(x):
    return jnp.where(x >= 0, x, LEAKY_SLOPE * x)


# ----------------------------- Pallas kernel --------------------------------
def ecg_kernel(win1_ref, win23_ref, frames_ref,
               w1_ref, w23_ref, b1_ref, b23_ref,
               dft_ref, wsig_ref, bfc_ref, out_ref):
    T1, T2, T3 = T_CONV
    K = NUM_KERNELS
    S = out_ref.shape[0]                    # number of stacked signals (3*B)

    # Conv1d(1, K, 192): one matmul over all signals' windows (bf16 MXU, f32 acc).
    y1 = _leaky(jnp.dot(win1_ref[...], w1_ref[...],
                        preferred_element_type=jnp.float32) + b1_ref[...])
    # Conv1d kernel2 + kernel3 merged column-wise into one (., 128)x(128, 16).
    y23 = _leaky(jnp.dot(win23_ref[...], w23_ref[...],
                         preferred_element_type=jnp.float32) + b23_ref[...])
    # STFT: fused cos|sin matmul; re/im split at a lane-aligned 256 boundary.
    z = jnp.dot(frames_ref[...], dft_ref[...],
                preferred_element_type=jnp.float32)          # (S*NF, 2*PS_PAD)
    re = z[:, :PS_PAD]
    im = z[:, PS_PAD:]
    mag = jnp.sqrt(re * re + im * im)                        # pad cols stay 0

    # Per-signal segment means over the row-stacked outputs (f32 VALU/XLU).
    rows1 = jax.lax.broadcasted_iota(jnp.int32, y1.shape, 0)
    rows23 = jax.lax.broadcasted_iota(jnp.int32, y23.shape, 0)
    rows_f = jax.lax.broadcasted_iota(jnp.int32, mag.shape, 0)

    def seg_mean(y, rows, start, length):
        m = (rows >= start) & (rows < start + length)
        return jnp.sum(jnp.where(m, y, 0.0), axis=0, keepdims=True) * (1.0 / length)

    off3 = S * T2                                            # win3 rows start here
    row_ids = jax.lax.broadcasted_iota(jnp.int32, (S, FC_IN_K), 0)
    feat = jnp.zeros((S, FC_IN_K), jnp.float32)
    for s in range(S):                                       # static trip count
        c1 = seg_mean(y1, rows1, s * T1, T1)                          # (1, K)
        c2 = seg_mean(y23, rows23, s * T2, T2)[:, :K]                 # (1, K)
        c3 = seg_mean(y23, rows23, off3 + s * T3, T3)[:, K:2 * K]     # (1, K)
        ps = seg_mean(mag, rows_f, s * N_FRAMES, N_FRAMES)            # (1, PS_PAD)
        row = jnp.concatenate([c1, c2, c3, ps], axis=-1)              # (1, FC_IN_K)
        feat = feat + jnp.where(row_ids == s,
                                jnp.broadcast_to(row, feat.shape), 0.0)

    # Fused fc (signal-dependent rows) for all signals in one MXU matmul.
    out_ref[...] = (jnp.dot(feat.astype(jnp.bfloat16), wsig_ref[...],
                            preferred_element_type=jnp.float32)
                    + bfc_ref[...])                                    # (S, 128)


# ------------------------------ glue (plain JAX) ----------------------------
def signal_forward(x, kp):
    """Signal-dependent fc output (incl. bias) for stacked signals x: (S, L)."""
    S, _ = x.shape
    # One reflect-padded bf16 copy of the signals; conv windows (incl. lane
    # padding) and STFT frames are gathered straight from it: one pad, one
    # cast, four gathers total on the wrapper side.
    x_ext = jnp.pad(x, ((0, 0), (PAD, PAD)), mode="reflect").astype(jnp.bfloat16)

    def gather_windows(width, count, offset, hop):
        idx = offset + jnp.arange(count)[:, None] * hop + jnp.arange(width)[None, :]
        return x_ext[:, idx].reshape(S * count, width)

    win1 = gather_windows(KPAD[0], T_CONV[0], PAD, 1)        # (S*T1, 256)
    win2 = gather_windows(KPAD[1], T_CONV[1], PAD, 1)        # (S*T2, 128)
    win3 = gather_windows(KPAD[2], T_CONV[2], PAD, 1)        # (S*T3, 128)
    win23 = jnp.concatenate([win2, win3], axis=0)            # (S*(T2+T3), 128)
    frames = gather_windows(N_FFT, N_FRAMES, 0, HOP)         # (S*NF, 256)

    out = pl.pallas_call(
        ecg_kernel,
        out_shape=jax.ShapeDtypeStruct((S, FC_OUT_PAD), jnp.float32),
    )(win1, win23, frames, kp["w1"], kp["w23"], kp["b1"], kp["b23"],
      kp["dft"], kp["wsig"], kp["bfc"])
    return out[:, :FC_OUT]


@jax.jit
def enhanced_secure_model(xA, xP, xN, k1, k2, kp):
    """EnhancedSecureModel.forward: features computed once per unique signal
    (xA, xP, xN) in a single grid-less Pallas launch; key term added in JAX."""
    B = xA.shape[0]
    x = jnp.concatenate([xA, xP, xN], axis=0)                # (3B, L)
    sig = signal_forward(x, kp)                              # (3B, FC_OUT), incl. bias
    kt1 = jnp.dot(k1.astype(jnp.float32), kp["wfk"])         # (1, FC_OUT)
    kt2 = jnp.dot(k2.astype(jnp.float32), kp["wfk"])
    a, p, n = sig[0:B], sig[B:2 * B], sig[2 * B:3 * B]
    return (a + kt1, p + kt1, p + kt2, n + kt1, n + kt2)


# ----------------------------- pure-JAX reference ---------------------------
def im2col(x, ksize):
    T = x.shape[1] - ksize + 1
    idx = jnp.arange(T)[:, None] + jnp.arange(ksize)[None, :]
    return x[:, idx]                                         # (B, T, ksize)


def stft_frames(x):
    xp = jnp.pad(x, ((0, 0), (PAD, PAD)), mode="reflect")
    idx = jnp.arange(N_FRAMES)[:, None] * HOP + jnp.arange(N_FFT)[None, :]
    return xp[:, idx]                                        # (B, NF, n_fft)


def dft_matrices():
    n = jnp.arange(N_FFT, dtype=jnp.float32)[:, None]
    f = jnp.arange(PS_SIZE, dtype=jnp.float32)[None, :]
    ang = 2.0 * math.pi * n * f / float(N_FFT)
    return jnp.cos(ang), -jnp.sin(ang)                       # (n_fft, n_freq) each


def network_reference(x, key_vec, raw):
    """f32 reference of one EnhancedSecureBiometricECGModel.forward call."""
    def conv_feat(ksize, w, b):
        win = im2col(x, ksize)
        y = _leaky(jnp.einsum("btj,jk->btk", win, w) + b)
        return jnp.mean(y, axis=1)

    c1 = conv_feat(CONV_SIZES[0], raw["w1"], raw["b1"])
    c2 = conv_feat(CONV_SIZES[1], raw["w2"], raw["b2"])
    c3 = conv_feat(CONV_SIZES[2], raw["w3"], raw["b3"])
    frames = stft_frames(x)
    cosm, sinm = dft_matrices()
    re = jnp.einsum("btn,nf->btf", frames, cosm)
    im = jnp.einsum("btn,nf->btf", frames, sinm)
    ps = jnp.mean(jnp.sqrt(re * re + im * im), axis=1)
    key_b = jnp.broadcast_to(key_vec, (x.shape[0], KEY_SIZE))
    feats = jnp.concatenate([c1, c2, c3, ps, key_b], axis=1)
    return feats @ raw["wfc"] + raw["bfc"]


# ------------------------------ parameters / inputs -------------------------
def init_params(rng):
    """Raw f32 parameters with PyTorch-style init (weights pre-transposed)."""
    ks = jax.random.split(rng, 5)

    def conv_params(k, ksize):
        bound = 1.0 / math.sqrt(1 * ksize)
        kw, kb = jax.random.split(k)
        w = jax.random.uniform(kw, (NUM_KERNELS, 1, ksize), jnp.float32,
                               -bound, bound)                # PyTorch (K, 1, ks)
        b = jax.random.uniform(kb, (NUM_KERNELS,), jnp.float32, -bound, bound)
        return w.reshape(NUM_KERNELS, ksize).T, b.reshape(1, NUM_KERNELS)

    w1, b1 = conv_params(ks[0], CONV_SIZES[0])
    w2, b2 = conv_params(ks[1], CONV_SIZES[1])
    w3, b3 = conv_params(ks[2], CONV_SIZES[2])

    fc_in = 3 * NUM_KERNELS + PS_SIZE + KEY_SIZE
    bound = 1.0 / math.sqrt(fc_in)
    wfc = jax.random.uniform(ks[3], (FC_OUT, fc_in), jnp.float32,
                             -bound, bound).T                # (fc_in, FC_OUT)
    bfc = jax.random.uniform(ks[4], (FC_OUT,), jnp.float32,
                             -bound, bound).reshape(1, FC_OUT)
    return dict(w1=w1, b1=b1, w2=w2, b2=b2, w3=w3, b3=b3, wfc=wfc, bfc=bfc)


def prepare_kernel_params(raw):
    """Built ONCE at init: padded/stacked bf16 weights and the fused DFT matrix."""
    K = NUM_KERNELS
    # conv1 weight: (192, K) -> zero-pad rows to 256 -> bf16
    w1 = jnp.pad(raw["w1"], ((0, KPAD[0] - CONV_SIZES[0]), (0, 0))).astype(jnp.bfloat16)
    # conv2 | conv3 merged column-wise: (128, 2K) bf16 (zero rows beyond ksize)
    w2p = jnp.pad(raw["w2"], ((0, KPAD[1] - CONV_SIZES[1]), (0, 0)))
    w3p = jnp.pad(raw["w3"], ((0, KPAD[2] - CONV_SIZES[2]), (0, 0)))
    w23 = jnp.concatenate([w2p, w3p], axis=1).astype(jnp.bfloat16)
    b23 = jnp.concatenate([raw["b2"], raw["b3"]], axis=1)    # (1, 2K) f32
    # fused DFT: [cos | sin], each zero-padded 129 -> 256 columns, bf16
    cosm, sinm = dft_matrices()
    cosp = jnp.pad(cosm, ((0, 0), (0, PS_PAD - PS_SIZE)))
    sinp = jnp.pad(sinm, ((0, 0), (0, PS_PAD - PS_SIZE)))
    dft = jnp.concatenate([cosp, sinp], axis=1).astype(jnp.bfloat16)  # (256, 512)
    # fc: rows [c1 c2 c3 | ps(129 real) | zeros(127 ps pad)] -> (280, 128) bf16
    wT = raw["wfc"]                                          # (fc_in, FC_OUT)
    w_conv = wT[:3 * K]                                      # (24, FC_OUT)
    w_ps = wT[3 * K:3 * K + PS_SIZE]                         # (129, FC_OUT)
    wfk = wT[3 * K + PS_SIZE:]                               # (16, FC_OUT) key rows (JAX side)
    w_ps_pad = jnp.pad(w_ps, ((0, PS_PAD - PS_SIZE), (0, 0)))
    wsig = jnp.concatenate([w_conv, w_ps_pad], axis=0)       # (280, FC_OUT)
    wsig = jnp.pad(wsig, ((0, 0), (0, FC_OUT_PAD - FC_OUT))).astype(jnp.bfloat16)
    bfc = jnp.pad(raw["bfc"], ((0, 0), (0, FC_OUT_PAD - FC_OUT)))     # (1, 128) f32
    return dict(w1=w1, w23=w23, b1=raw["b1"], b23=b23,
                dft=dft, wsig=wsig, bfc=bfc, wfk=wfk)


def generate_key(rng, key_size=KEY_SIZE):
    bits = jax.random.bernoulli(rng, 0.5, (1, key_size)).astype(jnp.float32)
    return bits / jnp.linalg.norm(bits)


if __name__ == "__main__":
    root = jax.random.PRNGKey(0)
    kprm, kx, kk1, kk2 = jax.random.split(root, 4)
    raw = init_params(kprm)
    kp = prepare_kernel_params(raw)      # constants built once, outside the jit

    kxA, kxP, kxN = jax.random.split(kx, 3)
    # torch.randn(1, 1, input_size) -> squeeze channel -> (1, L) layout
    xA = jax.random.normal(kxA, (1, 1, INPUT_SIZE), jnp.float32)[:, 0, :]
    xP = jax.random.normal(kxP, (1, 1, INPUT_SIZE), jnp.float32)[:, 0, :]
    xN = jax.random.normal(kxN, (1, 1, INPUT_SIZE), jnp.float32)[:, 0, :]
    k1 = generate_key(kk1)
    k2 = generate_key(kk2)

    outs = enhanced_secure_model(xA, xP, xN, k1, k2, kp)
    outs = jax.block_until_ready(outs)

    refs = (network_reference(xA, k1, raw),
            network_reference(xP, k1, raw),
            network_reference(xP, k2, raw),
            network_reference(xN, k1, raw),
            network_reference(xN, k2, raw))

    for o, r in zip(outs, refs):
        assert o.shape == (1, FC_OUT), o.shape
        err = float(jnp.max(jnp.abs(o - r)))
        # bf16 MXU operands everywhere (conv windows, STFT frames/DFT, fc) with
        # f32 accumulate: the O(16)-magnitude spectrum features quantize to
        # ~3e-2 absolute in bf16, so the fc output carries a few 1e-2 of
        # absolute error vs the pure-f32 reference.
        assert jnp.allclose(o, r, rtol=2e-2, atol=1e-1), err

    print("KERNEL_OK")
</pallas_src>

<mosaic_0001>
module attributes {stable_mosaic.version = 11 : i64} {
  func.func @ecg_kernel(%arg0: memref<195x256xbf16, #tpu.memory_space<vmem>>, %arg1: memref<1062x128xbf16, #tpu.memory_space<vmem>>, %arg2: memref<15x256xbf16, #tpu.memory_space<vmem>>, %arg3: memref<256x8xbf16, #tpu.memory_space<vmem>>, %arg4: memref<128x16xbf16, #tpu.memory_space<vmem>>, %arg5: memref<1x8xf32, #tpu.memory_space<vmem>>, %arg6: memref<1x16xf32, #tpu.memory_space<vmem>>, %arg7: memref<256x512xbf16, #tpu.memory_space<vmem>>, %arg8: memref<280x128xbf16, #tpu.memory_space<vmem>>, %arg9: memref<1x128xf32, #tpu.memory_space<vmem>>, %arg10: memref<3x128xf32, #tpu.memory_space<vmem>>) attributes {dimension_semantics = [], scalar_prefetch = 0 : i64, scratch_operands = 0 : i64, tpu.core_type = #tpu.core_type<tc>} {
    %c0 = arith.constant 0 : index
    %c0_0 = arith.constant 0 : index
    %0 = vector.load %arg0[%c0, %c0_0] : memref<195x256xbf16, #tpu.memory_space<vmem>>, vector<195x256xbf16>
    %c0_1 = arith.constant 0 : index
    %c0_2 = arith.constant 0 : index
    %1 = vector.load %arg3[%c0_1, %c0_2] : memref<256x8xbf16, #tpu.memory_space<vmem>>, vector<256x8xbf16>
    %cst = arith.constant dense<0.000000e+00> : vector<195x8xf32>
    %2 = tpu.matmul %0, %1, %cst {dimension_numbers = #tpu.dot_dimension_numbers<[1], [0], [0], [1], [0, 0, 1, 1], [], []>} : vector<195x256xbf16>, vector<256x8xbf16>, vector<195x8xf32> -> vector<195x8xf32>
    %c0_3 = arith.constant 0 : index
    %c0_4 = arith.constant 0 : index
    %3 = vector.load %arg5[%c0_3, %c0_4] : memref<1x8xf32, #tpu.memory_space<vmem>>, vector<1x8xf32>
    %4 = vector.broadcast %3 : vector<1x8xf32> to vector<195x8xf32>
    %5 = arith.addf %2, %4 : vector<195x8xf32>
    %cst_5 = arith.constant 0.000000e+00 : f32
    %6 = vector.broadcast %cst_5 : f32 to vector<195x8xf32>
    %7 = arith.cmpf oge, %5, %6 : vector<195x8xf32>
    %cst_6 = arith.constant 0.00999999977 : f32
    %8 = vector.broadcast %cst_6 : f32 to vector<195x8xf32>
    %9 = arith.mulf %8, %5 : vector<195x8xf32>
    %10 = arith.select %7, %5, %9 : vector<195x8xi1>, vector<195x8xf32>
    %c0_7 = arith.constant 0 : index
    %c0_8 = arith.constant 0 : index
    %11 = vector.load %arg1[%c0_7, %c0_8] : memref<1062x128xbf16, #tpu.memory_space<vmem>>, vector<1062x128xbf16>
    %c0_9 = arith.constant 0 : index
    %c0_10 = arith.constant 0 : index
    %12 = vector.load %arg4[%c0_9, %c0_10] : memref<128x16xbf16, #tpu.memory_space<vmem>>, vector<128x16xbf16>
    %cst_11 = arith.constant dense<0.000000e+00> : vector<1062x16xf32>
    %13 = tpu.matmul %11, %12, %cst_11 {dimension_numbers = #tpu.dot_dimension_numbers<[1], [0], [0], [1], [0, 0, 1, 1], [], []>} : vector<1062x128xbf16>, vector<128x16xbf16>, vector<1062x16xf32> -> vector<1062x16xf32>
    %c0_12 = arith.constant 0 : index
    %c0_13 = arith.constant 0 : index
    %14 = vector.load %arg6[%c0_12, %c0_13] : memref<1x16xf32, #tpu.memory_space<vmem>>, vector<1x16xf32>
    %15 = vector.broadcast %14 : vector<1x16xf32> to vector<1062x16xf32>
    %16 = arith.addf %13, %15 : vector<1062x16xf32>
    %cst_14 = arith.constant 0.000000e+00 : f32
    %17 = vector.broadcast %cst_14 : f32 to vector<1062x16xf32>
    %18 = arith.cmpf oge, %16, %17 : vector<1062x16xf32>
    %cst_15 = arith.constant 0.00999999977 : f32
    %19 = vector.broadcast %cst_15 : f32 to vector<1062x16xf32>
    %20 = arith.mulf %19, %16 : vector<1062x16xf32>
    %21 = arith.select %18, %16, %20 : vector<1062x16xi1>, vector<1062x16xf32>
    %c0_16 = arith.constant 0 : index
    %c0_17 = arith.constant 0 : index
    %22 = vector.load %arg2[%c0_16, %c0_17] : memref<15x256xbf16, #tpu.memory_space<vmem>>, vector<15x256xbf16>
    %c0_18 = arith.constant 0 : index
    %c0_19 = arith.constant 0 : index
    %23 = vector.load %arg7[%c0_18, %c0_19] : memref<256x512xbf16, #tpu.memory_space<vmem>>, vector<256x512xbf16>
    %cst_20 = arith.constant dense<0.000000e+00> : vector<15x512xf32>
    %24 = tpu.matmul %22, %23, %cst_20 {dimension_numbers = #tpu.dot_dimension_numbers<[1], [0], [0], [1], [0, 0, 1, 1], [], []>} : vector<15x256xbf16>, vector<256x512xbf16>, vector<15x512xf32> -> vector<15x512xf32>
    %25 = vector.extract_strided_slice %24 {offsets = [0, 0], sizes = [15, 256], strides = [1, 1]} : vector<15x512xf32> to vector<15x256xf32>
    %26 = vector.extract_strided_slice %24 {offsets = [0, 256], sizes = [15, 256], strides = [1, 1]} : vector<15x512xf32> to vector<15x256xf32>
    %27 = arith.mulf %25, %25 : vector<15x256xf32>
    %28 = arith.mulf %26, %26 : vector<15x256xf32>
    %29 = arith.addf %27, %28 : vector<15x256xf32>
    %30 = math.sqrt %29 : vector<15x256xf32>
    %31 = tpu.iota {dimensions = array<i32: 0>} : vector<195x8xi32>
    %32 = tpu.iota {dimensions = array<i32: 0>} : vector<1062x16xi32>
    %33 = tpu.iota {dimensions = array<i32: 0>} : vector<15x256xi32>
    %34 = tpu.iota {dimensions = array<i32: 0>} : vector<3x280xi32>
    %cst_21 = arith.constant 0.000000e+00 : f32
    %35 = vector.broadcast %cst_21 : f32 to vector<3x280xf32>
    %c0_i32 = arith.constant 0 : i32
    %36 = vector.broadcast %c0_i32 : i32 to vector<195x8xi32>
    %37 = arith.cmpi sge, %31, %36 : vector<195x8xi32>
    %c65_i32 = arith.constant 65 : i32
    %38 = vector.broadcast %c65_i32 : i32 to vector<195x8xi32>
    %39 = arith.cmpi slt, %31, %38 : vector<195x8xi32>
    %40 = arith.andi %37, %39 : vector<195x8xi1>
    %cst_22 = arith.constant 0.000000e+00 : f32
    %41 = vector.broadcast %cst_22 : f32 to vector<195x8xf32>
    %42 = arith.select %40, %10, %41 : vector<195x8xi1>, vector<195x8xf32>
    %cst_23 = arith.constant dense<0.000000e+00> : vector<8xf32>
    %43 = vector.multi_reduction <add>, %42, %cst_23 [0] : vector<195x8xf32> to vector<8xf32>
    %44 = vector.shape_cast %43 : vector<8xf32> to vector<1x8xf32>
    %cst_24 = arith.constant 0.0153846154 : f32
    %45 = vector.broadcast %cst_24 : f32 to vector<1x8xf32>
    %46 = arith.mulf %44, %45 : vector<1x8xf32>
    %c0_i32_25 = arith.constant 0 : i32
    %47 = vector.broadcast %c0_i32_25 : i32 to vector<1062x16xi32>
    %48 = arith.cmpi sge, %32, %47 : vector<1062x16xi32>
    %c161_i32 = arith.constant 161 : i32
    %49 = vector.broadcast %c161_i32 : i32 to vector<1062x16xi32>
    %50 = arith.cmpi slt, %32, %49 : vector<1062x16xi32>
    %51 = arith.andi %48, %50 : vector<1062x16xi1>
    %cst_26 = arith.constant 0.000000e+00 : f32
    %52 = vector.broadcast %cst_26 : f32 to vector<1062x16xf32>
    %53 = arith.select %51, %21, %52 : vector<1062x16xi1>, vector<1062x16xf32>
    %cst_27 = arith.constant dense<0.000000e+00> : vector<16xf32>
    %54 = vector.multi_reduction <add>, %53, %cst_27 [0] : vector<1062x16xf32> to vector<16xf32>
    %55 = vector.shape_cast %54 : vector<16xf32> to vector<1x16xf32>
    %cst_28 = arith.constant 0.00621118024 : f32
    %56 = vector.broadcast %cst_28 : f32 to vector<1x16xf32>
    %57 = arith.mulf %55, %56 : vector<1x16xf32>
    %58 = vector.extract_strided_slice %57 {offsets = [0, 0], sizes = [1, 8], strides = [1, 1]} : vector<1x16xf32> to vector<1x8xf32>
    %c483_i32 = arith.constant 483 : i32
    %59 = vector.broadcast %c483_i32 : i32 to vector<1062x16xi32>
    %60 = arith.cmpi sge, %32, %59 : vector<1062x16xi32>
    %c676_i32 = arith.constant 676 : i32
    %61 = vector.broadcast %c676_i32 : i32 to vector<1062x16xi32>
    %62 = arith.cmpi slt, %32, %61 : vector<1062x16xi32>
    %63 = arith.andi %60, %62 : vector<1062x16xi1>
    %cst_29 = arith.constant 0.000000e+00 : f32
    %64 = vector.broadcast %cst_29 : f32 to vector<1062x16xf32>
    %65 = arith.select %63, %21, %64 : vector<1062x16xi1>, vector<1062x16xf32>
    %cst_30 = arith.constant dense<0.000000e+00> : vector<16xf32>
    %66 = vector.multi_reduction <add>, %65, %cst_30 [0] : vector<1062x16xf32> to vector<16xf32>
    %67 = vector.shape_cast %66 : vector<16xf32> to vector<1x16xf32>
    %cst_31 = arith.constant 0.00518134702 : f32
    %68 = vector.broadcast %cst_31 : f32 to vector<1x16xf32>
    %69 = arith.mulf %67, %68 : vector<1x16xf32>
    %70 = vector.extract_strided_slice %69 {offsets = [0, 8], sizes = [1, 8], strides = [1, 1]} : vector<1x16xf32> to vector<1x8xf32>
    %c0_i32_32 = arith.constant 0 : i32
    %71 = vector.broadcast %c0_i32_32 : i32 to vector<15x256xi32>
    %72 = arith.cmpi sge, %33, %71 : vector<15x256xi32>
    %c5_i32 = arith.constant 5 : i32
    %73 = vector.broadcast %c5_i32 : i32 to vector<15x256xi32>
    %74 = arith.cmpi slt, %33, %73 : vector<15x256xi32>
    %75 = arith.andi %72, %74 : vector<15x256xi1>
    %cst_33 = arith.constant 0.000000e+00 : f32
    %76 = vector.broadcast %cst_33 : f32 to vector<15x256xf32>
    %77 = arith.select %75, %30, %76 : vector<15x256xi1>, vector<15x256xf32>
    %cst_34 = arith.constant dense<0.000000e+00> : vector<256xf32>
    %78 = vector.multi_reduction <add>, %77, %cst_34 [0] : vector<15x256xf32> to vector<256xf32>
    %79 = vector.shape_cast %78 : vector<256xf32> to vector<1x256xf32>
    %cst_35 = arith.constant 2.000000e-01 : f32
    %80 = vector.broadcast %cst_35 : f32 to vector<1x256xf32>
    %81 = arith.mulf %79, %80 : vector<1x256xf32>
    %82 = tpu.concatenate %46, %58, %70, %81 in 1 : vector<1x8xf32>, vector<1x8xf32>, vector<1x8xf32>, vector<1x256xf32> -> vector<1x280xf32>
    %c0_i32_36 = arith.constant 0 : i32
    %83 = vector.broadcast %c0_i32_36 : i32 to vector<3x280xi32>
    %84 = arith.cmpi eq, %34, %83 : vector<3x280xi32>
    %85 = vector.shape_cast %82 : vector<1x280xf32> to vector<1x280xf32>
    %86 = vector.broadcast %85 : vector<1x280xf32> to vector<3x280xf32>
    %cst_37 = arith.constant 0.000000e+00 : f32
    %87 = vector.broadcast %cst_37 : f32 to vector<3x280xf32>
    %88 = arith.select %84, %86, %87 : vector<3x280xi1>, vector<3x280xf32>
    %89 = arith.addf %35, %88 : vector<3x280xf32>
    %c65_i32_38 = arith.constant 65 : i32
    %90 = vector.broadcast %c65_i32_38 : i32 to vector<195x8xi32>
    %91 = arith.cmpi sge, %31, %90 : vector<195x8xi32>
    %c130_i32 = arith.constant 130 : i32
    %92 = vector.broadcast %c130_i32 : i32 to vector<195x8xi32>
    %93 = arith.cmpi slt, %31, %92 : vector<195x8xi32>
    %94 = arith.andi %91, %93 : vector<195x8xi1>
    %cst_39 = arith.constant 0.000000e+00 : f32
    %95 = vector.broadcast %cst_39 : f32 to vector<195x8xf32>
    %96 = arith.select %94, %10, %95 : vector<195x8xi1>, vector<195x8xf32>
    %cst_40 = arith.constant dense<0.000000e+00> : vector<8xf32>
    %97 = vector.multi_reduction <add>, %96, %cst_40 [0] : vector<195x8xf32> to vector<8xf32>
    %98 = vector.shape_cast %97 : vector<8xf32> to vector<1x8xf32>
    %cst_41 = arith.constant 0.0153846154 : f32
    %99 = vector.broadcast %cst_41 : f32 to vector<1x8xf32>
    %100 = arith.mulf %98, %99 : vector<1x8xf32>
    %c161_i32_42 = arith.constant 161 : i32
    %101 = vector.broadcast %c161_i32_42 : i32 to vector<1062x16xi32>
    %102 = arith.cmpi sge, %32, %101 : vector<1062x16xi32>
    %c322_i32 = arith.constant 322 : i32
    %103 = vector.broadcast %c322_i32 : i32 to vector<1062x16xi32>
    %104 = arith.cmpi slt, %32, %103 : vector<1062x16xi32>
    %105 = arith.andi %102, %104 : vector<1062x16xi1>
    %cst_43 = arith.constant 0.000000e+00 : f32
    %106 = vector.broadcast %cst_43 : f32 to vector<1062x16xf32>
    %107 = arith.select %105, %21, %106 : vector<1062x16xi1>, vector<1062x16xf32>
    %cst_44 = arith.constant dense<0.000000e+00> : vector<16xf32>
    %108 = vector.multi_reduction <add>, %107, %cst_44 [0] : vector<1062x16xf32> to vector<16xf32>
    %109 = vector.shape_cast %108 : vector<16xf32> to vector<1x16xf32>
    %cst_45 = arith.constant 0.00621118024 : f32
    %110 = vector.broadcast %cst_45 : f32 to vector<1x16xf32>
    %111 = arith.mulf %109, %110 : vector<1x16xf32>
    %112 = vector.extract_strided_slice %111 {offsets = [0, 0], sizes = [1, 8], strides = [1, 1]} : vector<1x16xf32> to vector<1x8xf32>
    %c676_i32_46 = arith.constant 676 : i32
    %113 = vector.broadcast %c676_i32_46 : i32 to vector<1062x16xi32>
    %114 = arith.cmpi sge, %32, %113 : vector<1062x16xi32>
    %c869_i32 = arith.constant 869 : i32
    %115 = vector.broadcast %c869_i32 : i32 to vector<1062x16xi32>
    %116 = arith.cmpi slt, %32, %115 : vector<1062x16xi32>
    %117 = arith.andi %114, %116 : vector<1062x16xi1>
    %cst_47 = arith.constant 0.000000e+00 : f32
    %118 = vector.broadcast %cst_47 : f32 to vector<1062x16xf32>
    %119 = arith.select %117, %21, %118 : vector<1062x16xi1>, vector<1062x16xf32>
    %cst_48 = arith.constant dense<0.000000e+00> : vector<16xf32>
    %120 = vector.multi_reduction <add>, %119, %cst_48 [0] : vector<1062x16xf32> to vector<16xf32>
    %121 = vector.shape_cast %120 : vector<16xf32> to vector<1x16xf32>
    %cst_49 = arith.constant 0.00518134702 : f32
    %122 = vector.broadcast %cst_49 : f32 to vector<1x16xf32>
    %123 = arith.mulf %121, %122 : vector<1x16xf32>
    %124 = vector.extract_strided_slice %123 {offsets = [0, 8], sizes = [1, 8], strides = [1, 1]} : vector<1x16xf32> to vector<1x8xf32>
    %c5_i32_50 = arith.constant 5 : i32
    %125 = vector.broadcast %c5_i32_50 : i32 to vector<15x256xi32>
    %126 = arith.cmpi sge, %33, %125 : vector<15x256xi32>
    %c10_i32 = arith.constant 10 : i32
    %127 = vector.broadcast %c10_i32 : i32 to vector<15x256xi32>
    %128 = arith.cmpi slt, %33, %127 : vector<15x256xi32>
    %129 = arith.andi %126, %128 : vector<15x256xi1>
    %cst_51 = arith.constant 0.000000e+00 : f32
    %130 = vector.broadcast %cst_51 : f32 to vector<15x256xf32>
    %131 = arith.select %129, %30, %130 : vector<15x256xi1>, vector<15x256xf32>
    %cst_52 = arith.constant dense<0.000000e+00> : vector<256xf32>
    %132 = vector.multi_reduction <add>, %131, %cst_52 [0] : vector<15x256xf32> to vector<256xf32>
    %133 = vector.shape_cast %132 : vector<256xf32> to vector<1x256xf32>
    %cst_53 = arith.constant 2.000000e-01 : f32
    %134 = vector.broadcast %cst_53 : f32 to vector<1x256xf32>
    %135 = arith.mulf %133, %134 : vector<1x256xf32>
    %136 = tpu.concatenate %100, %112, %124, %135 in 1 : vector<1x8xf32>, vector<1x8xf32>, vector<1x8xf32>, vector<1x256xf32> -> vector<1x280xf32>
    %c1_i32 = arith.constant 1 : i32
    %137 = vector.broadcast %c1_i32 : i32 to vector<3x280xi32>
    %138 = arith.cmpi eq, %34, %137 : vector<3x280xi32>
    %139 = vector.shape_cast %136 : vector<1x280xf32> to vector<1x280xf32>
    %140 = vector.broadcast %139 : vector<1x280xf32> to vector<3x280xf32>
    %cst_54 = arith.constant 0.000000e+00 : f32
    %141 = vector.broadcast %cst_54 : f32 to vector<3x280xf32>
    %142 = arith.select %138, %140, %141 : vector<3x280xi1>, vector<3x280xf32>
    %143 = arith.addf %89, %142 : vector<3x280xf32>
    %c130_i32_55 = arith.constant 130 : i32
    %144 = vector.broadcast %c130_i32_55 : i32 to vector<195x8xi32>
    %145 = arith.cmpi sge, %31, %144 : vector<195x8xi32>
    %c195_i32 = arith.constant 195 : i32
    %146 = vector.broadcast %c195_i32 : i32 to vector<195x8xi32>
    %147 = arith.cmpi slt, %31, %146 : vector<195x8xi32>
    %148 = arith.andi %145, %147 : vector<195x8xi1>
    %cst_56 = arith.constant 0.000000e+00 : f32
    %149 = vector.broadcast %cst_56 : f32 to vector<195x8xf32>
    %150 = arith.select %148, %10, %149 : vector<195x8xi1>, vector<195x8xf32>
    %cst_57 = arith.constant dense<0.000000e+00> : vector<8xf32>
    %151 = vector.multi_reduction <add>, %150, %cst_57 [0] : vector<195x8xf32> to vector<8xf32>
    %152 = vector.shape_cast %151 : vector<8xf32> to vector<1x8xf32>
    %cst_58 = arith.constant 0.0153846154 : f32
    %153 = vector.broadcast %cst_58 : f32 to vector<1x8xf32>
    %154 = arith.mulf %152, %153 : vector<1x8xf32>
    %c322_i32_59 = arith.constant 322 : i32
    %155 = vector.broadcast %c322_i32_59 : i32 to vector<1062x16xi32>
    %156 = arith.cmpi sge, %32, %155 : vector<1062x16xi32>
    %c483_i32_60 = arith.constant 483 : i32
    %157 = vector.broadcast %c483_i32_60 : i32 to vector<1062x16xi32>
    %158 = arith.cmpi slt, %32, %157 : vector<1062x16xi32>
    %159 = arith.andi %156, %158 : vector<1062x16xi1>
    %cst_61 = arith.constant 0.000000e+00 : f32
    %160 = vector.broadcast %cst_61 : f32 to vector<1062x16xf32>
    %161 = arith.select %159, %21, %160 : vector<1062x16xi1>, vector<1062x16xf32>
    %cst_62 = arith.constant dense<0.000000e+00> : vector<16xf32>
    %162 = vector.multi_reduction <add>, %161, %cst_62 [0] : vector<1062x16xf32> to vector<16xf32>
    %163 = vector.shape_cast %162 : vector<16xf32> to vector<1x16xf32>
    %cst_63 = arith.constant 0.00621118024 : f32
    %164 = vector.broadcast %cst_63 : f32 to vector<1x16xf32>
    %165 = arith.mulf %163, %164 : vector<1x16xf32>
    %166 = vector.extract_strided_slice %165 {offsets = [0, 0], sizes = [1, 8], strides = [1, 1]} : vector<1x16xf32> to vector<1x8xf32>
    %c869_i32_64 = arith.constant 869 : i32
    %167 = vector.broadcast %c869_i32_64 : i32 to vector<1062x16xi32>
    %168 = arith.cmpi sge, %32, %167 : vector<1062x16xi32>
    %c1062_i32 = arith.constant 1062 : i32
    %169 = vector.broadcast %c1062_i32 : i32 to vector<1062x16xi32>
    %170 = arith.cmpi slt, %32, %169 : vector<1062x16xi32>
    %171 = arith.andi %168, %170 : vector<1062x16xi1>
    %cst_65 = arith.constant 0.000000e+00 : f32
    %172 = vector.broadcast %cst_65 : f32 to vector<1062x16xf32>
    %173 = arith.select %171, %21, %172 : vector<1062x16xi1>, vector<1062x16xf32>
    %cst_66 = arith.constant dense<0.000000e+00> : vector<16xf32>
    %174 = vector.multi_reduction <add>, %173, %cst_66 [0] : vector<1062x16xf32> to vector<16xf32>
    %175 = vector.shape_cast %174 : vector<16xf32> to vector<1x16xf32>
    %cst_67 = arith.constant 0.00518134702 : f32
    %176 = vector.broadcast %cst_67 : f32 to vector<1x16xf32>
    %177 = arith.mulf %175, %176 : vector<1x16xf32>
    %178 = vector.extract_strided_slice %177 {offsets = [0, 8], sizes = [1, 8], strides = [1, 1]} : vector<1x16xf32> to vector<1x8xf32>
    %c10_i32_68 = arith.constant 10 : i32
    %179 = vector.broadcast %c10_i32_68 : i32 to vector<15x256xi32>
    %180 = arith.cmpi sge, %33, %179 : vector<15x256xi32>
    %c15_i32 = arith.constant 15 : i32
    %181 = vector.broadcast %c15_i32 : i32 to vector<15x256xi32>
    %182 = arith.cmpi slt, %33, %181 : vector<15x256xi32>
    %183 = arith.andi %180, %182 : vector<15x256xi1>
    %cst_69 = arith.constant 0.000000e+00 : f32
    %184 = vector.broadcast %cst_69 : f32 to vector<15x256xf32>
    %185 = arith.select %183, %30, %184 : vector<15x256xi1>, vector<15x256xf32>
    %cst_70 = arith.constant dense<0.000000e+00> : vector<256xf32>
    %186 = vector.multi_reduction <add>, %185, %cst_70 [0] : vector<15x256xf32> to vector<256xf32>
    %187 = vector.shape_cast %186 : vector<256xf32> to vector<1x256xf32>
    %cst_71 = arith.constant 2.000000e-01 : f32
    %188 = vector.broadcast %cst_71 : f32 to vector<1x256xf32>
    %189 = arith.mulf %187, %188 : vector<1x256xf32>
    %190 = tpu.concatenate %154, %166, %178, %189 in 1 : vector<1x8xf32>, vector<1x8xf32>, vector<1x8xf32>, vector<1x256xf32> -> vector<1x280xf32>
    %c2_i32 = arith.constant 2 : i32
    %191 = vector.broadcast %c2_i32 : i32 to vector<3x280xi32>
    %192 = arith.cmpi eq, %34, %191 : vector<3x280xi32>
    %193 = vector.shape_cast %190 : vector<1x280xf32> to vector<1x280xf32>
    %194 = vector.broadcast %193 : vector<1x280xf32> to vector<3x280xf32>
    %cst_72 = arith.constant 0.000000e+00 : f32
    %195 = vector.broadcast %cst_72 : f32 to vector<3x280xf32>
    %196 = arith.select %192, %194, %195 : vector<3x280xi1>, vector<3x280xf32>
    %197 = arith.addf %143, %196 : vector<3x280xf32>
    %198 = arith.truncf %197 : vector<3x280xf32> to vector<3x280xbf16>
    %c0_73 = arith.constant 0 : index
    %c0_74 = arith.constant 0 : index
    %199 = vector.load %arg8[%c0_73, %c0_74] : memref<280x128xbf16, #tpu.memory_space<vmem>>, vector<280x128xbf16>
    %cst_75 = arith.constant dense<0.000000e+00> : vector<3x128xf32>
    %200 = tpu.matmul %198, %199, %cst_75 {dimension_numbers = #tpu.dot_dimension_numbers<[1], [0], [0], [1], [0, 0, 1, 1], [], []>} : vector<3x280xbf16>, vector<280x128xbf16>, vector<3x128xf32> -> vector<3x128xf32>
    %c0_76 = arith.constant 0 : index
    %c0_77 = arith.constant 0 : index
    %201 = vector.load %arg9[%c0_76, %c0_77] : memref<1x128xf32, #tpu.memory_space<vmem>>, vector<1x128xf32>
    %202 = vector.broadcast %201 : vector<1x128xf32> to vector<3x128xf32>
    %203 = arith.addf %200, %202 : vector<3x128xf32>
    %c0_78 = arith.constant 0 : index
    %c0_79 = arith.constant 0 : index
    %204 = vector.load %arg10[%c0_78, %c0_79] : memref<3x128xf32, #tpu.memory_space<vmem>>, vector<3x128xf32>
    tpu.vector_store %arg10[%c0_78, %c0_79], %203 {strides = array<i32>} : memref<3x128xf32, #tpu.memory_space<vmem>>, vector<3x128xf32>,
    return
  }
}

</mosaic_0001>

<llo_original>
// kernel: enhanced_secure_model.1
$region0: #{enhanced_secure_model.1}
  #allocation0 [shape = 'u32[]', space=smem, size = 0x4, offset = 0x4, fixed_abs, tag = 'smem constant byte address 0x4 - core index']
  #allocation1 [shape = 'u32[144,128]{1,0:T(1,128)}', space=vmem, size = 0x12000, scoped, tag = 'internal scratch']
  %s0 = inlined_call_operand.vmem [shape: bf16[195,256], index: 0, kind: input, shape index: {}]
  %s1 = inlined_call_operand.vmem [shape: bf16[1062,128], index: 1, kind: input, shape index: {}]
  %s2 = inlined_call_operand.vmem [shape: bf16[15,256], index: 2, kind: input, shape index: {}]
  %s3 = inlined_call_operand.vmem [shape: bf16[256,8], index: 3, kind: input, shape index: {}]
  %s4 = inlined_call_operand.vmem [shape: bf16[128,16], index: 4, kind: input, shape index: {}]
  %s5 = inlined_call_operand.vmem [shape: f32[1,8], index: 5, kind: input, shape index: {}]
  %s6 = inlined_call_operand.vmem [shape: f32[1,16], index: 6, kind: input, shape index: {}]
  %s7 = inlined_call_operand.vmem [shape: bf16[256,512], index: 7, kind: input, shape index: {}]
  %s8 = inlined_call_operand.vmem [shape: bf16[280,128], index: 8, kind: input, shape index: {}]
  %s9 = inlined_call_operand.vmem [shape: f32[1,128], index: 9, kind: input, shape index: {}]
  %s10 = inlined_call_operand.vmem [shape: f32[3,128], index: 10, kind: output, shape index: {}]
  %s11 = sld [smem:[#allocation0]]
  $region50: #{enhanced_secure_model.1} parent=0
    _
  %s13 = ssub.s32 1, %s11
  %s14 = scalar_select 0, %s13, %s11
  // Predicated region
  $region2: #{enhanced_secure_model.1} parent=0 // pred_check
    _
  $region3: #{enhanced_secure_model.1} parent=0 // pred_check_branch
    %16 = sbr.rel (0) target = $region5
  $region4: #{enhanced_secure_model.1} parent=0 // pred_region
    _
  $region5: #{enhanced_secure_model.1} parent=0 // pred_fallthru
    _
  // Predicated region
  $region6: #{enhanced_secure_model.1} parent=0 // pred_check
    _
  $region7: #{enhanced_secure_model.1} parent=0 // pred_check_branch
    %18 = sbr.rel (0) target = $region9
  $region8: #{enhanced_secure_model.1} parent=0 // pred_region
    _
  $region9: #{enhanced_secure_model.1} parent=0 // pred_fallthru
    _
  // Predicated region
  $region10: #{enhanced_secure_model.1} parent=0 // pred_check
    _
  $region11: #{enhanced_secure_model.1} parent=0 // pred_check_branch
    %20 = sbr.rel (0) target = $region13
  $region12: #{enhanced_secure_model.1} parent=0 // pred_region
    _
  $region13: #{enhanced_secure_model.1} parent=0 // pred_fallthru
    _
  // Predicated region
  $region14: #{enhanced_secure_model.1} parent=0 // pred_check
    _
  $region15: #{enhanced_secure_model.1} parent=0 // pred_check_branch
    %22 = sbr.rel (0) target = $region17
  $region16: #{enhanced_secure_model.1} parent=0 // pred_region
    _
  $region17: #{enhanced_secure_model.1} parent=0 // pred_fallthru
    _
  // Predicated region
  $region18: #{enhanced_secure_model.1} parent=0 // pred_check
    _
  $region19: #{enhanced_secure_model.1} parent=0 // pred_check_branch
    %24 = sbr.rel (0) target = $region21
  $region20: #{enhanced_secure_model.1} parent=0 // pred_region
    _
  $region21: #{enhanced_secure_model.1} parent=0 // pred_fallthru
    _
  // Predicated region
  $region22: #{enhanced_secure_model.1} parent=0 // pred_check
    _
  $region23: #{enhanced_secure_model.1} parent=0 // pred_check_branch
    %26 = sbr.rel (0) target = $region25
  $region24: #{enhanced_secure_model.1} parent=0 // pred_region
    _
  $region25: #{enhanced_secure_model.1} parent=0 // pred_fallthru
    _
  // Predicated region
  $region26: #{enhanced_secure_model.1} parent=0 // pred_check
    _
  $region27: #{enhanced_secure_model.1} parent=0 // pred_check_branch
    %28 = sbr.rel (0) target = $region29
  $region28: #{enhanced_secure_model.1} parent=0 // pred_region
    _
  $region29: #{enhanced_secure_model.1} parent=0 // pred_fallthru
    _
  // Predicated region
  $region30: #{enhanced_secure_model.1} parent=0 // pred_check
    _
  $region31: #{enhanced_secure_model.1} parent=0 // pred_check_branch
    %30 = sbr.rel (0) target = $region33
  $region32: #{enhanced_secure_model.1} parent=0 // pred_region
    _
  $region33: #{enhanced_secure_model.1} parent=0 // pred_fallthru
    _
  // Predicated region
  $region34: #{enhanced_secure_model.1} parent=0 // pred_check
    _
  $region35: #{enhanced_secure_model.1} parent=0 // pred_check_branch
    %32 = sbr.rel (0) target = $region37
  $region36: #{enhanced_secure_model.1} parent=0 // pred_region
    _
  $region37: #{enhanced_secure_model.1} parent=0 // pred_fallthru
    _
  // Predicated region
  $region38: #{enhanced_secure_model.1} parent=0 // pred_check
    _
  $region39: #{enhanced_secure_model.1} parent=0 // pred_check_branch
    %34 = sbr.rel (0) target = $region41
  $region40: #{enhanced_secure_model.1} parent=0 // pred_region
    _
  $region41: #{enhanced_secure_model.1} parent=0 // pred_fallthru
    _
  %v36 = vld [vmem:[%s0] sm:$0xff]
  %v37 = vld [vmem:[%s0 + $0x8] sm:$0xff]
  %v38 = vld [vmem:[%s0 + $0x10] sm:$0xff]
  %v39 = vld [vmem:[%s0 + $0x18] sm:$0xff]
  %v40 = vld [vmem:[%s0 + $0x20] sm:$0xff]
  %v41 = vld [vmem:[%s0 + $0x28] sm:$0xff]
  %v42 = vld [vmem:[%s0 + $0x30] sm:$0xff]
  %v43 = vld [vmem:[%s0 + $0x38] sm:$0xff]
  %v44 = vld [vmem:[%s0 + $0x40] sm:$0xff]
  %v45 = vld [vmem:[%s0 + $0x48] sm:$0xff]
  %v46 = vld [vmem:[%s0 + $0x50] sm:$0xff]
  %v47 = vld [vmem:[%s0 + $0x58] sm:$0xff]
  %v48 = vld [vmem:[%s0 + $0x60] sm:$0xff]
  %v49 = vld [vmem:[%s0 + $0x68] sm:$0xff]
  %v50 = vld [vmem:[%s0 + $0x70] sm:$0xff]
  %v51 = vld [vmem:[%s0 + $0x78] sm:$0xff]
  %v52 = vld [vmem:[%s0 + $0x80] sm:$0xff]
  %v53 = vld [vmem:[%s0 + $0x88] sm:$0xff]
  %v54 = vld [vmem:[%s0 + $0x90] sm:$0xff]
  %v55 = vld [vmem:[%s0 + $0x98] sm:$0xff]
  %v56 = vld [vmem:[%s0 + $0xa0] sm:$0xff]
  %v57 = vld [vmem:[%s0 + $0xa8] sm:$0xff]
  %v58 = vld [vmem:[%s0 + $0xb0] sm:$0xff]
  %v59 = vld [vmem:[%s0 + $0xb8] sm:$0xff]
  %v60 = vld [vmem:[%s0 + $0xc0] sm:$0x33]
  %v61 = vld [vmem:[%s3] sm:$0xf]
  %v62 = vld [vmem:[%s3 + $0x4] sm:$0xf]
  %v63 = vld [vmem:[%s3 + $0x8] sm:$0xf]
  %v64 = vld [vmem:[%s3 + $0xc] sm:$0xf]
  %v65 = vld [vmem:[%s3 + $0x10] sm:$0xf]
  %v66 = vld [vmem:[%s3 + $0x14] sm:$0xf]
  %v67 = vld [vmem:[%s3 + $0x18] sm:$0xf]
  %v68 = vld [vmem:[%s3 + $0x1c] sm:$0xf]
  %v69 = vld [vmem:[%s3 + $0x20] sm:$0xf]
  %v70 = vld [vmem:[%s3 + $0x24] sm:$0xf]
  %v71 = vld [vmem:[%s3 + $0x28] sm:$0xf]
  %v72 = vld [vmem:[%s3 + $0x2c] sm:$0xf]
  %v73 = vld [vmem:[%s3 + $0x30] sm:$0xf]
  %v74 = vld [vmem:[%s3 + $0x34] sm:$0xf]
  %v75 = vld [vmem:[%s3 + $0x38] sm:$0xf]
  %v76 = vld [vmem:[%s3 + $0x3c] sm:$0xf]
  %v77 = vld [vmem:[%s3 + $0x40] sm:$0xf]
  %v78 = vld [vmem:[%s3 + $0x44] sm:$0xf]
  %v79 = vld [vmem:[%s3 + $0x48] sm:$0xf]
  %v80 = vld [vmem:[%s3 + $0x4c] sm:$0xf]
  %v81 = vld [vmem:[%s3 + $0x50] sm:$0xf]
  %v82 = vld [vmem:[%s3 + $0x54] sm:$0xf]
  %v83 = vld [vmem:[%s3 + $0x58] sm:$0xf]
  %v84 = vld [vmem:[%s3 + $0x5c] sm:$0xf]
  %v85 = vld [vmem:[%s3 + $0x60] sm:$0xf]
  %v86 = vld [vmem:[%s3 + $0x64] sm:$0xf]
  %v87 = vld [vmem:[%s3 + $0x68] sm:$0xf]
  %v88 = vld [vmem:[%s3 + $0x6c] sm:$0xf]
  %v89 = vld [vmem:[%s3 + $0x70] sm:$0xf]
  %v90 = vld [vmem:[%s3 + $0x74] sm:$0xf]
  %v91 = vld [vmem:[%s3 + $0x78] sm:$0xf]
  %v92 = vld [vmem:[%s3 + $0x7c] sm:$0xf]
  %v93 = vld [vmem:[%s5] sm:$0x1]
  %v95 = vlaneseq
  %v96 = vshrl.u32 %v95, 7
  %v97 = vsub.s32 0, %v96
  %v98 = vrot.slane %v93, %v97
  %v125 = vunpack.c.l.b16 %v36
  %v126 = vunpack.c.h.b16 %v36
  %v127 = vunpack.c.l.b16 %v37
  %v128 = vunpack.c.h.b16 %v37
  %v129 = vunpack.c.l.b16 %v38
  %v130 = vunpack.c.h.b16 %v38
  %v131 = vunpack.c.l.b16 %v39
  %v132 = vunpack.c.h.b16 %v39
  %v133 = vunpack.c.l.b16 %v40
  %v134 = vunpack.c.h.b16 %v40
  %v135 = vunpack.c.l.b16 %v41
  %v136 = vunpack.c.h.b16 %v41
  %v137 = vunpack.c.l.b16 %v42
  %v138 = vunpack.c.h.b16 %v42
  %v139 = vunpack.c.l.b16 %v43
  %v140 = vunpack.c.h.b16 %v43
  %v141 = vunpack.c.l.b16 %v44
  %v142 = vunpack.c.h.b16 %v44
  %v143 = vunpack.c.l.b16 %v45
  %v144 = vunpack.c.h.b16 %v45
  %v145 = vunpack.c.l.b16 %v46
  %v146 = vunpack.c.h.b16 %v46
  %v147 = vunpack.c.l.b16 %v47
  %v148 = vunpack.c.h.b16 %v47
  %v149 = vunpack.c.l.b16 %v48
  %v150 = vunpack.c.h.b16 %v48
  %v151 = vunpack.c.l.b16 %v49
  %v152 = vunpack.c.h.b16 %v49
  %v153 = vunpack.c.l.b16 %v50
  %v154 = vunpack.c.h.b16 %v50
  %v155 = vunpack.c.l.b16 %v51
  %v156 = vunpack.c.h.b16 %v51
  %v157 = vunpack.c.l.b16 %v52
  %v158 = vunpack.c.h.b16 %v52
  %v159 = vunpack.c.l.b16 %v53
  %v160 = vunpack.c.h.b16 %v53
  %v161 = vunpack.c.l.b16 %v54
  %v162 = vunpack.c.h.b16 %v54
  %v163 = vunpack.c.l.b16 %v55
  %v164 = vunpack.c.h.b16 %v55
  %v165 = vunpack.c.l.b16 %v56
  %v166 = vunpack.c.h.b16 %v56
  %v167 = vunpack.c.l.b16 %v57
  %v168 = vunpack.c.h.b16 %v57
  %v169 = vunpack.c.l.b16 %v58
  %v170 = vunpack.c.h.b16 %v58
  %v171 = vunpack.c.l.b16 %v59
  %v172 = vunpack.c.h.b16 %v59
  %v173 = vunpack.c.l.b16 %v60
  %v174 = vunpack.c.h.b16 %v60
  %v175 = vpack.c.b16 %v127, %v125
  %v176 = vpack.c.b16 %v128, %v126
  %v177 = vpack.c.b16 %v131, %v129
  %v178 = vpack.c.b16 %v132, %v130
  %v179 = vpack.c.b16 %v135, %v133
  %v180 = vpack.c.b16 %v136, %v134
  %v181 = vpack.c.b16 %v139, %v137
  %v182 = vpack.c.b16 %v140, %v138
  %v183 = vpack.c.b16 %v143, %v141
  %v184 = vpack.c.b16 %v144, %v142
  %v185 = vpack.c.b16 %v147, %v145
  %v186 = vpack.c.b16 %v148, %v146
  %v187 = vpack.c.b16 %v151, %v149
  %v188 = vpack.c.b16 %v152, %v150
  %v189 = vpack.c.b16 %v155, %v153
  %v190 = vpack.c.b16 %v156, %v154
  %v191 = vpack.c.b16 %v159, %v157
  %v192 = vpack.c.b16 %v160, %v158
  %v193 = vpack.c.b16 %v163, %v161
  %v194 = vpack.c.b16 %v164, %v162
  %v195 = vpack.c.b16 %v167, %v165
  %v196 = vpack.c.b16 %v168, %v166
  %v197 = vpack.c.b16 %v171, %v169
  %v198 = vpack.c.b16 %v172, %v170
  %v199 = vpack.c.b16 %v173, %v173
  %v200 = vpack.c.b16 %v174, %v174
  %v259 = vunpack.c.l.b16 %v61
  %v260 = vunpack.c.l.b16 %v62
  %v261 = vunpack.c.l.b16 %v63
  %v262 = vunpack.c.l.b16 %v64
  %v263 = vunpack.c.l.b16 %v65
  %v264 = vunpack.c.l.b16 %v66
  %v265 = vunpack.c.l.b16 %v67
  %v266 = vunpack.c.l.b16 %v68
  %v267 = vunpack.c.l.b16 %v69
  %v268 = vunpack.c.l.b16 %v70
  %v269 = vunpack.c.l.b16 %v71
  %v270 = vunpack.c.l.b16 %v72
  %v271 = vunpack.c.l.b16 %v73
  %v272 = vunpack.c.l.b16 %v74
  %v273 = vunpack.c.l.b16 %v75
  %v274 = vunpack.c.l.b16 %v76
  %v275 = vunpack.c.l.b16 %v77
  %v276 = vunpack.c.l.b16 %v78
  %v277 = vunpack.c.l.b16 %v79
  %v278 = vunpack.c.l.b16 %v80
  %v279 = vunpack.c.l.b16 %v81
  %v280 = vunpack.c.l.b16 %v82
  %v281 = vunpack.c.l.b16 %v83
  %v282 = vunpack.c.l.b16 %v84
  %v283 = vunpack.c.l.b16 %v85
  %v284 = vunpack.c.l.b16 %v86
  %v285 = vunpack.c.l.b16 %v87
  %v286 = vunpack.c.l.b16 %v88
  %v287 = vunpack.c.l.b16 %v89
  %v288 = vunpack.c.l.b16 %v90
  %v289 = vunpack.c.l.b16 %v91
  %v290 = vunpack.c.l.b16 %v92
  %v291 = vpack.c.b16 %v260, %v259
  %v292 = vpack.c.b16 %v262, %v261
  %v293 = vpack.c.b16 %v264, %v263
  %v294 = vpack.c.b16 %v266, %v265
  %v295 = vpack.c.b16 %v268, %v267
  %v296 = vpack.c.b16 %v270, %v269
  %v297 = vpack.c.b16 %v272, %v271
  %v298 = vpack.c.b16 %v274, %v273
  %v299 = vpack.c.b16 %v276, %v275
  %v300 = vpack.c.b16 %v278, %v277
  %v301 = vpack.c.b16 %v280, %v279
  %v302 = vpack.c.b16 %v282, %v281
  %v303 = vpack.c.b16 %v284, %v283
  %v304 = vpack.c.b16 %v286, %v285
  %v305 = vpack.c.b16 %v288, %v287
  %v306 = vpack.c.b16 %v290, %v289
  %323 = vmatprep.subr.bf16.mxu0 0
  %324 = vmatpush1.bf16.msra.mxu0 %v298
  %325 = vmatprep.subr.bf16.mxu0 0
  %326 = vmatpush1.bf16.msra.mxu0 %v297
  %327 = vmatprep.subr.bf16.mxu0 0
  %328 = vmatpush1.bf16.msra.mxu0 %v296
  %329 = vmatprep.subr.bf16.mxu0 0
  %330 = vmatpush1.bf16.msra.mxu0 %v295
  %331 = vmatprep.subr.bf16.mxu0 0
  %332 = vmatpush1.bf16.msra.mxu0 %v294
  %333 = vmatprep.subr.bf16.mxu0 0
  %334 = vmatpush1.bf16.msra.mxu0 %v293
  %335 = vmatprep.subr.bf16.mxu0 0
  %336 = vmatpush1.bf16.msra.mxu0 %v292
  %337 = vmatprep.subr.bf16.mxu0 0
  %338 = vmatpush1.bf16.msra.mxu0 %v291
  %339 = vmatprep.subr.bf16.mxu0 0
  %340 = vmatpush2.bf16.msra.mxu0 %v306
  %341 = vmatprep.subr.bf16.mxu0 0
  %342 = vmatpush2.bf16.msra.mxu0 %v305
  %343 = vmatprep.subr.bf16.mxu0 0
  %344 = vmatpush2.bf16.msra.mxu0 %v304
  %345 = vmatprep.subr.bf16.mxu0 0
  %346 = vmatpush2.bf16.msra.mxu0 %v303
  %347 = vmatprep.subr.bf16.mxu0 0
  %348 = vmatpush2.bf16.msra.mxu0 %v302
  %349 = vmatprep.subr.bf16.mxu0 0
  %350 = vmatpush2.bf16.msra.mxu0 %v301
  %351 = vmatprep.subr.bf16.mxu0 0
  %352 = vmatpush2.bf16.msra.mxu0 %v300
  %353 = vmatprep.subr.bf16.mxu0 0
  %354 = vmatpush2.bf16.msra.mxu0 %v299
  %355 = vmatprep.mubr.bf16.mxu0 %v176
  %356 = vmatmul.mubr.bf16.gmra.mxu0 %v175
  %v357 = vpop.f32.mrf.mxu0
  %v358 = vadd.f32 %v98, %v357
  %v359 = vpop.f32.mrf.mxu0
  %v360 = vpop.f32.mrf.mxu0
  %v361 = vadd.f32 %v98, %v360
  %v362 = vpop.f32.mrf.mxu0
  %363 = vmatprep.mubr.bf16.mxu0 %v178
  %364 = vmatmul.mubr.bf16.gmra.mxu0 %v177
  %v365 = vpop.f32.mrf.mxu0
  %v366 = vadd.f32 %v98, %v365
  %v367 = vpop.f32.mrf.mxu0
  %v368 = vpop.f32.mrf.mxu0
  %v369 = vadd.f32 %v98, %v368
  %v370 = vpop.f32.mrf.mxu0
  %371 = vmatprep.mubr.bf16.mxu0 %v180
  %372 = vmatmul.mubr.bf16.gmra.mxu0 %v179
  %v373 = vpop.f32.mrf.mxu0
  %v374 = vadd.f32 %v98, %v373
  %v375 = vpop.f32.mrf.mxu0
  %v376 = vpop.f32.mrf.mxu0
  %v377 = vadd.f32 %v98, %v376
  %v378 = vpop.f32.mrf.mxu0
  %379 = vmatprep.mubr.bf16.mxu0 %v182
  %380 = vmatmul.mubr.bf16.gmra.mxu0 %v181
  %v381 = vpop.f32.mrf.mxu0
  %v382 = vadd.f32 %v98, %v381
  %v383 = vpop.f32.mrf.mxu0
  %v384 = vpop.f32.mrf.mxu0
  %v385 = vadd.f32 %v98, %v384
  %v386 = vpop.f32.mrf.mxu0
  %387 = vmatprep.mubr.bf16.mxu0 %v184
  %388 = vmatmul.mubr.bf16.gmra.mxu0 %v183
  %v389 = vpop.f32.mrf.mxu0
  %v390 = vadd.f32 %v98, %v389
  %v391 = vpop.f32.mrf.mxu0
  %v392 = vpop.f32.mrf.mxu0
  %v393 = vadd.f32 %v98, %v392
  %v394 = vpop.f32.mrf.mxu0
  %395 = vmatprep.mubr.bf16.mxu0 %v186
  %396 = vmatmul.mubr.bf16.gmra.mxu0 %v185
  %v397 = vpop.f32.mrf.mxu0
  %v398 = vadd.f32 %v98, %v397
  %v399 = vpop.f32.mrf.mxu0
  %v400 = vpop.f32.mrf.mxu0
  %v401 = vadd.f32 %v98, %v400
  %v402 = vpop.f32.mrf.mxu0
  %403 = vmatprep.mubr.bf16.mxu0 %v188
  %404 = vmatmul.mubr.bf16.gmra.mxu0 %v187
  %v405 = vpop.f32.mrf.mxu0
  %v406 = vadd.f32 %v98, %v405
  %v407 = vpop.f32.mrf.mxu0
  %v408 = vpop.f32.mrf.mxu0
  %v409 = vadd.f32 %v98, %v408
  %v410 = vpop.f32.mrf.mxu0
  %411 = vmatprep.mubr.bf16.mxu0 %v190
  %412 = vmatmul.mubr.bf16.gmra.mxu0 %v189
  %v413 = vpop.f32.mrf.mxu0
  %v414 = vadd.f32 %v98, %v413
  %v415 = vpop.f32.mrf.mxu0
  %v416 = vpop.f32.mrf.mxu0
  %v417 = vadd.f32 %v98, %v416
  %v418 = vpop.f32.mrf.mxu0
  %419 = vmatprep.mubr.bf16.mxu0 %v192
  %420 = vmatmul.mubr.bf16.gmra.mxu0 %v191
  %v421 = vpop.f32.mrf.mxu0
  %v422 = vadd.f32 %v98, %v421
  %v423 = vpop.f32.mrf.mxu0
  %v424 = vpop.f32.mrf.mxu0
  %v425 = vadd.f32 %v98, %v424
  %v426 = vpop.f32.mrf.mxu0
  %427 = vmatprep.mubr.bf16.mxu0 %v194
  %428 = vmatmul.mubr.bf16.gmra.mxu0 %v193
  %v429 = vpop.f32.mrf.mxu0
  %v430 = vadd.f32 %v98, %v429
  %v431 = vpop.f32.mrf.mxu0
  %v432 = vpop.f32.mrf.mxu0
  %v433 = vadd.f32 %v98, %v432
  %v434 = vpop.f32.mrf.mxu0
  %435 = vmatprep.mubr.bf16.mxu0 %v196
  %436 = vmatmul.mubr.bf16.gmra.mxu0 %v195
  %v437 = vpop.f32.mrf.mxu0
  %v438 = vadd.f32 %v98, %v437
  %v439 = vpop.f32.mrf.mxu0
  %v440 = vpop.f32.mrf.mxu0
  %v441 = vadd.f32 %v98, %v440
  %v442 = vpop.f32.mrf.mxu0
  %443 = vmatprep.mubr.bf16.mxu0 %v198
  %444 = vmatmul.mubr.bf16.gmra.mxu0 %v197
  %v445 = vpop.f32.mrf.mxu0
  %v446 = vadd.f32 %v98, %v445
  %v447 = vpop.f32.mrf.mxu0
  %v448 = vpop.f32.mrf.mxu0
  %v449 = vadd.f32 %v98, %v448
  %v450 = vpop.f32.mrf.mxu0
  %451 = vmatprep.mubr.bf16.mxu0 %v200
  %452 = vmatmul.mubr.bf16.gmra.mxu0 %v199
  %v453 = vpop.f32.mrf.mxu0
  %v454 = vadd.f32 %v98, %v453
  %v455 = vpop.f32.mrf.mxu0
  %v456 = vpop.f32.mrf.mxu0
  %v457 = vpop.f32.mrf.mxu0
  %458 = vdwg.mxu0
  %vm459 = vcmp.ge.f32.partialorder %v358, 0.0
  %vm460 = vcmp.ge.f32.partialorder %v361, 0.0
  %vm461 = vcmp.ge.f32.partialorder %v366, 0.0
  %vm462 = vcmp.ge.f32.partialorder %v369, 0.0
  %vm463 = vcmp.ge.f32.partialorder %v374, 0.0
  %vm464 = vcmp.ge.f32.partialorder %v377, 0.0
  %vm465 = vcmp.ge.f32.partialorder %v382, 0.0
  %vm466 = vcmp.ge.f32.partialorder %v385, 0.0
  %vm467 = vcmp.ge.f32.partialorder %v390, 0.0
  %vm468 = vcmp.ge.f32.partialorder %v393, 0.0
  %vm469 = vcmp.ge.f32.partialorder %v398, 0.0
  %vm470 = vcmp.ge.f32.partialorder %v401, 0.0
  %vm471 = vcmp.ge.f32.partialorder %v406, 0.0
  %vm472 = vcmp.ge.f32.partialorder %v409, 0.0
  %vm473 = vcmp.ge.f32.partialorder %v414, 0.0
  %vm474 = vcmp.ge.f32.partialorder %v417, 0.0
  %vm475 = vcmp.ge.f32.partialorder %v422, 0.0
  %vm476 = vcmp.ge.f32.partialorder %v425, 0.0
  %vm477 = vcmp.ge.f32.partialorder %v430, 0.0
  %vm478 = vcmp.ge.f32.partialorder %v433, 0.0
  %vm479 = vcmp.ge.f32.partialorder %v438, 0.0
  %vm480 = vcmp.ge.f32.partialorder %v441, 0.0
  %vm481 = vcmp.ge.f32.partialorder %v446, 0.0
  %vm482 = vcmp.ge.f32.partialorder %v449, 0.0
  %vm483 = vcmp.ge.f32.partialorder %v454, 0.0
  %v484 = vmul.f32 %v358, 0.01
  %v485 = vmul.f32 %v361, 0.01
  %v486 = vmul.f32 %v366, 0.01
  %v487 = vmul.f32 %v369, 0.01
  %v488 = vmul.f32 %v374, 0.01
  %v489 = vmul.f32 %v377, 0.01
  %v490 = vmul.f32 %v382, 0.01
  %v491 = vmul.f32 %v385, 0.01
  %v492 = vmul.f32 %v390, 0.01
  %v493 = vmul.f32 %v393, 0.01
  %v494 = vmul.f32 %v398, 0.01
  %v495 = vmul.f32 %v401, 0.01
  %v496 = vmul.f32 %v406, 0.01
  %v497 = vmul.f32 %v409, 0.01
  %v498 = vmul.f32 %v414, 0.01
  %v499 = vmul.f32 %v417, 0.01
  %v500 = vmul.f32 %v422, 0.01
  %v501 = vmul.f32 %v425, 0.01
  %v502 = vmul.f32 %v430, 0.01
  %v503 = vmul.f32 %v433, 0.01
  %v504 = vmul.f32 %v438, 0.01
  %v505 = vmul.f32 %v441, 0.01
  %v506 = vmul.f32 %v446, 0.01
  %v507 = vmul.f32 %v449, 0.01
  %v508 = vmul.f32 %v454, 0.01
  %v509 = vsel %vm459, %v358, %v484
  %v510 = vsel %vm460, %v361, %v485
  %v511 = vsel %vm461, %v366, %v486
  %v512 = vsel %vm462, %v369, %v487
  %v513 = vsel %vm463, %v374, %v488
  %v514 = vsel %vm464, %v377, %v489
  %v515 = vsel %vm465, %v382, %v490
  %v516 = vsel %vm466, %v385, %v491
  %v517 = vsel %vm467, %v390, %v492
  %v518 = vsel %vm468, %v393, %v493
  %v519 = vsel %vm469, %v398, %v494
  %v520 = vsel %vm470, %v401, %v495
  %v521 = vsel %vm471, %v406, %v496
  %v522 = vsel %vm472, %v409, %v497
  %v523 = vsel %vm473, %v414, %v498
  %v524 = vsel %vm474, %v417, %v499
  %v525 = vsel %vm475, %v422, %v500
  %v526 = vsel %vm476, %v425, %v501
  %v527 = vsel %vm477, %v430, %v502
  %v528 = vsel %vm478, %v433, %v503
  %v529 = vsel %vm479, %v438, %v504
  %v530 = vsel %vm480, %v441, %v505
  %v531 = vsel %vm481, %v446, %v506
  %v532 = vsel %vm482, %v449, %v507
  %v533 = vsel %vm483, %v454, %v508
  %v534 = vld [vmem:[%s1] sm:$0xf]
  %v535 = vld [vmem:[%s1 + $0x4] sm:$0xf]
  %v536 = vld [vmem:[%s1 + $0x8] sm:$0xf]
  %v537 = vld [vmem:[%s1 + $0xc] sm:$0xf]
  %v538 = vld [vmem:[%s1 + $0x10] sm:$0xf]
  %v539 = vld [vmem:[%s1 + $0x14] sm:$0xf]
  %v540 = vld [vmem:[%s1 + $0x18] sm:$0xf]
  %v541 = vld [vmem:[%s1 + $0x1c] sm:$0xf]
  %v542 = vld [vmem:[%s1 + $0x20] sm:$0xf]
  %v543 = vld [vmem:[%s1 + $0x24] sm:$0xf]
  %v544 = vld [vmem:[%s1 + $0x28] sm:$0xf]
  %v545 = vld [vmem:[%s1 + $0x2c] sm:$0xf]
  %v546 = vld [vmem:[%s1 + $0x30] sm:$0xf]
  %v547 = vld [vmem:[%s1 + $0x34] sm:$0xf]
  %v548 = vld [vmem:[%s1 + $0x38] sm:$0xf]
  %v549 = vld [vmem:[%s1 + $0x3c] sm:$0xf]
  %v550 = vld [vmem:[%s1 + $0x40] sm:$0xf]
  %v551 = vld [vmem:[%s1 + $0x44] sm:$0xf]
  %v552 = vld [vmem:[%s1 + $0x48] sm:$0xf]
  %v553 = vld [vmem:[%s1 + $0x4c] sm:$0xf]
  %v554 = vld [vmem:[%s1 + $0x50] sm:$0xf]
  %v555 = vld [vmem:[%s1 + $0x54] sm:$0xf]
  %v556 = vld [vmem:[%s1 + $0x58] sm:$0xf]
  %v557 = vld [vmem:[%s1 + $0x5c] sm:$0xf]
  %v558 = vld [vmem:[%s1 + $0x60] sm:$0xf]
  %v559 = vld [vmem:[%s1 + $0x64] sm:$0xf]
  %v560 = vld [vmem:[%s1 + $0x68] sm:$0xf]
  %v561 = vld [vmem:[%s1 + $0x6c] sm:$0xf]
  %v562 = vld [vmem:[%s1 + $0x70] sm:$0xf]
  %v563 = vld [vmem:[%s1 + $0x74] sm:$0xf]
  %v564 = vld [vmem:[%s1 + $0x78] sm:$0xf]
  %v565 = vld [vmem:[%s1 + $0x7c] sm:$0xf]
  %v566 = vld [vmem:[%s1 + $0x80] sm:$0xf]
  %v567 = vld [vmem:[%s1 + $0x84] sm:$0xf]
  %v568 = vld [vmem:[%s1 + $0x88] sm:$0xf]
  %v569 = vld [vmem:[%s1 + $0x8c] sm:$0xf]
  %v570 = vld [vmem:[%s1 + $0x90] sm:$0xf]
  %v571 = vld [vmem:[%s1 + $0x94] sm:$0xf]
  %v572 = vld [vmem:[%s1 + $0x98] sm:$0xf]
  %v573 = vld [vmem:[%s1 + $0x9c] sm:$0xf]
  %v574 = vld [vmem:[%s1 + $0xa0] sm:$0xf]
  %v575 = vld [vmem:[%s1 + $0xa4] sm:$0xf]
  %v576 = vld [vmem:[%s1 + $0xa8] sm:$0xf]
  %v577 = vld [vmem:[%s1 + $0xac] sm:$0xf]
  %v578 = vld [vmem:[%s1 + $0xb0] sm:$0xf]
  %v579 = vld [vmem:[%s1 + $0xb4] sm:$0xf]
  %v580 = vld [vmem:[%s1 + $0xb8] sm:$0xf]
  %v581 = vld [vmem:[%s1 + $0xbc] sm:$0xf]
  %v582 = vld [vmem:[%s1 + $0xc0] sm:$0xf]
  %v583 = vld [vmem:[%s1 + $0xc4] sm:$0xf]
  %v584 = vld [vmem:[%s1 + $0xc8] sm:$0xf]
  %v585 = vld [vmem:[%s1 + $0xcc] sm:$0xf]
  %v586 = vld [vmem:[%s1 + $0xd0] sm:$0xf]
  %v587 = vld [vmem:[%s1 + $0xd4] sm:$0xf]
  %v588 = vld [vmem:[%s1 + $0xd8] sm:$0xf]
  %v589 = vld [vmem:[%s1 + $0xdc] sm:$0xf]
  %v590 = vld [vmem:[%s1 + $0xe0] sm:$0xf]
  %v591 = vld [vmem:[%s1 + $0xe4] sm:$0xf]
  %v592 = vld [vmem:[%s1 + $0xe8] sm:$0xf]
  %v593 = vld [vmem:[%s1 + $0xec] sm:$0xf]
  %v594 = vld [vmem:[%s1 + $0xf0] sm:$0xf]
  %v595 = vld [vmem:[%s1 + $0xf4] sm:$0xf]
  %v596 = vld [vmem:[%s1 + $0xf8] sm:$0xf]
  %v597 = vld [vmem:[%s1 + $0xfc] sm:$0xf]
  %v598 = vld [vmem:[%s1 + $0x100] sm:$0xf]
  %v599 = vld [vmem:[%s1 + $0x104] sm:$0xf]
  %v600 = vld [vmem:[%s1 + $0x108] sm:$0xf]
  %v601 = vld [vmem:[%s1 + $0x10c] sm:$0xf]
  %v602 = vld [vmem:[%s1 + $0x110] sm:$0xf]
  %v603 = vld [vmem:[%s1 + $0x114] sm:$0xf]
  %v604 = vld [vmem:[%s1 + $0x118] sm:$0xf]
  %v605 = vld [vmem:[%s1 + $0x11c] sm:$0xf]
  %v606 = vld [vmem:[%s1 + $0x120] sm:$0xf]
  %v607 = vld [vmem:[%s1 + $0x124] sm:$0xf]
  %v608 = vld [vmem:[%s1 + $0x128] sm:$0xf]
  %v609 = vld [vmem:[%s1 + $0x12c] sm:$0xf]
  %v610 = vld [vmem:[%s1 + $0x130] sm:$0xf]
  %v611 = vld [vmem:[%s1 + $0x134] sm:$0xf]
  %v612 = vld [vmem:[%s1 + $0x138] sm:$0xf]
  %v613 = vld [vmem:[%s1 + $0x13c] sm:$0xf]
  %v614 = vld [vmem:[%s1 + $0x140] sm:$0xf]
  %v615 = vld [vmem:[%s1 + $0x144] sm:$0xf]
  %v616 = vld [vmem:[%s1 + $0x148] sm:$0xf]
  %v617 = vld [vmem:[%s1 + $0x14c] sm:$0xf]
  %v618 = vld [vmem:[%s1 + $0x150] sm:$0xf]
  %v619 = vld [vmem:[%s1 + $0x154] sm:$0xf]
  %v620 = vld [vmem:[%s1 + $0x158] sm:$0xf]
  %v621 = vld [vmem:[%s1 + $0x15c] sm:$0xf]
  %v622 = vld [vmem:[%s1 + $0x160] sm:$0xf]
  %v623 = vld [vmem:[%s1 + $0x164] sm:$0xf]
  %v624 = vld [vmem:[%s1 + $0x168] sm:$0xf]
  %v625 = vld [vmem:[%s1 + $0x16c] sm:$0xf]
  %v626 = vld [vmem:[%s1 + $0x170] sm:$0xf]
  %v627 = vld [vmem:[%s1 + $0x174] sm:$0xf]
  %v628 = vld [vmem:[%s1 + $0x178] sm:$0xf]
  %v629 = vld [vmem:[%s1 + $0x17c] sm:$0xf]
  %v630 = vld [vmem:[%s1 + $0x180] sm:$0xf]
  %v631 = vld [vmem:[%s1 + $0x184] sm:$0xf]
  %v632 = vld [vmem:[%s1 + $0x188] sm:$0xf]
  %v633 = vld [vmem:[%s1 + $0x18c] sm:$0xf]
  %v634 = vld [vmem:[%s1 + $0x190] sm:$0xf]
  %v635 = vld [vmem:[%s1 + $0x194] sm:$0xf]
  %v636 = vld [vmem:[%s1 + $0x198] sm:$0xf]
  %v637 = vld [vmem:[%s1 + $0x19c] sm:$0xf]
  %v638 = vld [vmem:[%s1 + $0x1a0] sm:$0xf]
  %v639 = vld [vmem:[%s1 + $0x1a4] sm:$0xf]
  %v640 = vld [vmem:[%s1 + $0x1a8] sm:$0xf]
  %v641 = vld [vmem:[%s1 + $0x1ac] sm:$0xf]
  %v642 = vld [vmem:[%s1 + $0x1b0] sm:$0xf]
  %v643 = vld [vmem:[%s1 + $0x1b4] sm:$0xf]
  %v644 = vld [vmem:[%s1 + $0x1b8] sm:$0xf]
  %v645 = vld [vmem:[%s1 + $0x1bc] sm:$0xf]
  %v646 = vld [vmem:[%s1 + $0x1c0] sm:$0xf]
  %v647 = vld [vmem:[%s1 + $0x1c4] sm:$0xf]
  %v648 = vld [vmem:[%s1 + $0x1c8] sm:$0xf]
  %v649 = vld [vmem:[%s1 + $0x1cc] sm:$0xf]
  %v650 = vld [vmem:[%s1 + $0x1d0] sm:$0xf]
  %v651 = vld [vmem:[%s1 + $0x1d4] sm:$0xf]
  %v652 = vld [vmem:[%s1 + $0x1d8] sm:$0xf]
  %v653 = vld [vmem:[%s1 + $0x1dc] sm:$0xf]
  %v654 = vld [vmem:[%s1 + $0x1e0] sm:$0xf]
  %v655 = vld [vmem:[%s1 + $0x1e4] sm:$0xf]
  %v656 = vld [vmem:[%s1 + $0x1e8] sm:$0xf]
  %v657 = vld [vmem:[%s1 + $0x1ec] sm:$0xf]
  %v658 = vld [vmem:[%s1 + $0x1f0] sm:$0xf]
  %v659 = vld [vmem:[%s1 + $0x1f4] sm:$0xf]
  %v660 = vld [vmem:[%s1 + $0x1f8] sm:$0xf]
  %v661 = vld [vmem:[%s1 + $0x1fc] sm:$0xf]
  %v662 = vld [vmem:[%s1 + $0x200] sm:$0xf]
  %v663 = vld [vmem:[%s1 + $0x204] sm:$0xf]
  %v664 = vld [vmem:[%s1 + $0x208] sm:$0xf]
  %v665 = vld [vmem:[%s1 + $0x20c] sm:$0xf]
  %v666 = vld [vmem:[%s1 + $0x210] sm:$0x7]
  %v667 = vld [vmem:[%s4] sm:$0xf]
  %v668 = vld [vmem:[%s4 + $0x4] sm:$0xf]
  %v669 = vld [vmem:[%s4 + $0x8] sm:$0xf]
  %v670 = vld [vmem:[%s4 + $0xc] sm:$0xf]
  %v671 = vld [vmem:[%s4 + $0x10] sm:$0xf]
  %v672 = vld [vmem:[%s4 + $0x14] sm:$0xf]
  %v673 = vld [vmem:[%s4 + $0x18] sm:$0xf]
  %v674 = vld [vmem:[%s4 + $0x1c] sm:$0xf]
  %v675 = vld [vmem:[%s4 + $0x20] sm:$0xf]
  %v676 = vld [vmem:[%s4 + $0x24] sm:$0xf]
  %v677 = vld [vmem:[%s4 + $0x28] sm:$0xf]
  %v678 = vld [vmem:[%s4 + $0x2c] sm:$0xf]
  %v679 = vld [vmem:[%s4 + $0x30] sm:$0xf]
  %v680 = vld [vmem:[%s4 + $0x34] sm:$0xf]
  %v681 = vld [vmem:[%s4 + $0x38] sm:$0xf]
  %v682 = vld [vmem:[%s4 + $0x3c] sm:$0xf]
  %v683 = vld [vmem:[%s6] sm:$0x1]
  %v685 = vlaneseq
  %v686 = vshrl.u32 %v685, 7
  %v687 = vsub.s32 0, %v686
  %v688 = vrot.slane %v683, %v687
  %v823 = vunpack.c.l.b16 %v534
  %v824 = vunpack.c.l.b16 %v535
  %v825 = vunpack.c.l.b16 %v536
  %v826 = vunpack.c.l.b16 %v537
  %v827 = vunpack.c.l.b16 %v538
  %v828 = vunpack.c.l.b16 %v539
  %v829 = vunpack.c.l.b16 %v540
  %v830 = vunpack.c.l.b16 %v541
  %v831 = vunpack.c.l.b16 %v542
  %v832 = vunpack.c.l.b16 %v543
  %v833 = vunpack.c.l.b16 %v544
  %v834 = vunpack.c.l.b16 %v545
  %v835 = vunpack.c.l.b16 %v546
  %v836 = vunpack.c.l.b16 %v547
  %v837 = vunpack.c.l.b16 %v548
  %v838 = vunpack.c.l.b16 %v549
  %v839 = vunpack.c.l.b16 %v550
  %v840 = vunpack.c.l.b16 %v551
  %v841 = vunpack.c.l.b16 %v552
  %v842 = vunpack.c.l.b16 %v553
  %v843 = vunpack.c.l.b16 %v554
  %v844 = vunpack.c.l.b16 %v555
  %v845 = vunpack.c.l.b16 %v556
  %v846 = vunpack.c.l.b16 %v557
  %v847 = vunpack.c.l.b16 %v558
  %v848 = vunpack.c.l.b16 %v559
  %v849 = vunpack.c.l.b16 %v560
  %v850 = vunpack.c.l.b16 %v561
  %v851 = vunpack.c.l.b16 %v562
  %v852 = vunpack.c.l.b16 %v563
  %v853 = vunpack.c.l.b16 %v564
  %v854 = vunpack.c.l.b16 %v565
  %v855 = vunpack.c.l.b16 %v566
  %v856 = vunpack.c.l.b16 %v567
  %v857 = vunpack.c.l.b16 %v568
  %v858 = vunpack.c.l.b16 %v569
  %v859 = vunpack.c.l.b16 %v570
  %v860 = vunpack.c.l.b16 %v571
  %v861 = vunpack.c.l.b16 %v572
  %v862 = vunpack.c.l.b16 %v573
  %v863 = vunpack.c.l.b16 %v574
  %v864 = vunpack.c.l.b16 %v575
  %v865 = vunpack.c.l.b16 %v576
  %v866 = vunpack.c.l.b16 %v577
  %v867 = vunpack.c.l.b16 %v578
  %v868 = vunpack.c.l.b16 %v579
  %v869 = vunpack.c.l.b16 %v580
  %v870 = vunpack.c.l.b16 %v581
  %v871 = vunpack.c.l.b16 %v582
  %v872 = vunpack.c.l.b16 %v583
  %v873 = vunpack.c.l.b16 %v584
  %v874 = vunpack.c.l.b16 %v585
  %v875 = vunpack.c.l.b16 %v586
  %v876 = vunpack.c.l.b16 %v587
  %v877 = vunpack.c.l.b16 %v588
  %v878 = vunpack.c.l.b16 %v589
  %v879 = vunpack.c.l.b16 %v590
  %v880 = vunpack.c.l.b16 %v591
  %v881 = vunpack.c.l.b16 %v592
  %v882 = vunpack.c.l.b16 %v593
  %v883 = vunpack.c.l.b16 %v594
  %v884 = vunpack.c.l.b16 %v595
  %v885 = vunpack.c.l.b16 %v596
  %v886 = vunpack.c.l.b16 %v597
  %v887 = vunpack.c.l.b16 %v598
  %v888 = vunpack.c.l.b16 %v599
  %v889 = vunpack.c.l.b16 %v600
  %v890 = vunpack.c.l.b16 %v601
  %v891 = vunpack.c.l.b16 %v602
  %v892 = vunpack.c.l.b16 %v603
  %v893 = vunpack.c.l.b16 %v604
  %v894 = vunpack.c.l.b16 %v605
  %v895 = vunpack.c.l.b16 %v606
  %v896 = vunpack.c.l.b16 %v607
  %v897 = vunpack.c.l.b16 %v608
  %v898 = vunpack.c.l.b16 %v609
  %v899 = vunpack.c.l.b16 %v610
  %v900 = vunpack.c.l.b16 %v611
  %v901 = vunpack.c.l.b16 %v612
  %v902 = vunpack.c.l.b16 %v613
  %v903 = vunpack.c.l.b16 %v614
  %v904 = vunpack.c.l.b16 %v615
  %v905 = vunpack.c.l.b16 %v616
  %v906 = vunpack.c.l.b16 %v617
  %v907 = vunpack.c.l.b16 %v618
  %v908 = vunpack.c.l.b16 %v619
  %v909 = vunpack.c.l.b16 %v620
  %v910 = vunpack.c.l.b16 %v621
  %v911 = vunpack.c.l.b16 %v622
  %v912 = vunpack.c.l.b16 %v623
  %v913 = vunpack.c.l.b16 %v624
  %v914 = vunpack.c.l.b16 %v625
  %v915 = vunpack.c.l.b16 %v626
  %v916 = vunpack.c.l.b16 %v627
  %v917 = vunpack.c.l.b16 %v628
  %v918 = vunpack.c.l.b16 %v629
  %v919 = vunpack.c.l.b16 %v630
  %v920 = vunpack.c.l.b16 %v631
  %v921 = vunpack.c.l.b16 %v632
  %v922 = vunpack.c.l.b16 %v633
  %v923 = vunpack.c.l.b16 %v634
  %v924 = vunpack.c.l.b16 %v635
  %v925 = vunpack.c.l.b16 %v636
  %v926 = vunpack.c.l.b16 %v637
  %v927 = vunpack.c.l.b16 %v638
  %v928 = vunpack.c.l.b16 %v639
  %v929 = vunpack.c.l.b16 %v640
  %v930 = vunpack.c.l.b16 %v641
  %v931 = vunpack.c.l.b16 %v642
  %v932 = vunpack.c.l.b16 %v643
  %v933 = vunpack.c.l.b16 %v644
  %v934 = vunpack.c.l.b16 %v645
  %v935 = vunpack.c.l.b16 %v646
  %v936 = vunpack.c.l.b16 %v647
  %v937 = vunpack.c.l.b16 %v648
  %v938 = vunpack.c.l.b16 %v649
  %v939 = vunpack.c.l.b16 %v650
  %v940 = vunpack.c.l.b16 %v651
  %v941 = vunpack.c.l.b16 %v652
  %v942 = vunpack.c.l.b16 %v653
  %v943 = vunpack.c.l.b16 %v654
  %v944 = vunpack.c.l.b16 %v655
  %v945 = vunpack.c.l.b16 %v656
  %v946 = vunpack.c.l.b16 %v657
  %v947 = vunpack.c.l.b16 %v658
  %v948 = vunpack.c.l.b16 %v659
  %v949 = vunpack.c.l.b16 %v660
  %v950 = vunpack.c.l.b16 %v661
  %v951 = vunpack.c.l.b16 %v662
  %v952 = vunpack.c.l.b16 %v663
  %v953 = vunpack.c.l.b16 %v664
  %v954 = vunpack.c.l.b16 %v665
  %v955 = vunpack.c.l.b16 %v666
  %v956 = vpack.c.b16 %v824, %v823
  %v957 = vpack.c.b16 %v826, %v825
  %v958 = vpack.c.b16 %v828, %v827
  %v959 = vpack.c.b16 %v830, %v829
  %v960 = vpack.c.b16 %v832, %v831
  %v961 = vpack.c.b16 %v834, %v833
  %v962 = vpack.c.b16 %v836, %v835
  %v963 = vpack.c.b16 %v838, %v837
  %v964 = vpack.c.b16 %v840, %v839
  %v965 = vpack.c.b16 %v842, %v841
  %v966 = vpack.c.b16 %v844, %v843
  %v967 = vpack.c.b16 %v846, %v845
  %v968 = vpack.c.b16 %v848, %v847
  %v969 = vpack.c.b16 %v850, %v849
  %v970 = vpack.c.b16 %v852, %v851
  %v971 = vpack.c.b16 %v854, %v853
  %v972 = vpack.c.b16 %v856, %v855
  %v973 = vpack.c.b16 %v858, %v857
  %v974 = vpack.c.b16 %v860, %v859
  %v975 = vpack.c.b16 %v862, %v861
  %v976 = vpack.c.b16 %v864, %v863
  %v977 = vpack.c.b16 %v866, %v865
  %v978 = vpack.c.b16 %v868, %v867
  %v979 = vpack.c.b16 %v870, %v869
  %v980 = vpack.c.b16 %v872, %v871
  %v981 = vpack.c.b16 %v874, %v873
  %v982 = vpack.c.b16 %v876, %v875
  %v983 = vpack.c.b16 %v878, %v877
  %v984 = vpack.c.b16 %v880, %v879
  %v985 = vpack.c.b16 %v882, %v881
  %v986 = vpack.c.b16 %v884, %v883
  %v987 = vpack.c.b16 %v886, %v885
  %v988 = vpack.c.b16 %v888, %v887
  %v989 = vpack.c.b16 %v890, %v889
  %v990 = vpack.c.b16 %v892, %v891
  %v991 = vpack.c.b16 %v894, %v893
  %v992 = vpack.c.b16 %v896, %v895
  %v993 = vpack.c.b16 %v898, %v897
  %v994 = vpack.c.b16 %v900, %v899
  %v995 = vpack.c.b16 %v902, %v901
  %v996 = vpack.c.b16 %v904, %v903
  %v997 = vpack.c.b16 %v906, %v905
  %v998 = vpack.c.b16 %v908, %v907
  %v999 = vpack.c.b16 %v910, %v909
  %v1000 = vpack.c.b16 %v912, %v911
  %v1001 = vpack.c.b16 %v914, %v913
  %v1002 = vpack.c.b16 %v916, %v915
  %v1003 = vpack.c.b16 %v918, %v917
  %v1004 = vpack.c.b16 %v920, %v919
  %v1005 = vpack.c.b16 %v922, %v921
  %v1006 = vpack.c.b16 %v924, %v923
  %v1007 = vpack.c.b16 %v926, %v925
  %v1008 = vpack.c.b16 %v928, %v927
  %v1009 = vpack.c.b16 %v930, %v929
  %v1010 = vpack.c.b16 %v932, %v931
  %v1011 = vpack.c.b16 %v934, %v933
  %v1012 = vpack.c.b16 %v936, %v935
  %v1013 = vpack.c.b16 %v938, %v937
  %v1014 = vpack.c.b16 %v940, %v939
  %v1015 = vpack.c.b16 %v942, %v941
  %v1016 = vpack.c.b16 %v944, %v943
  %v1017 = vpack.c.b16 %v946, %v945
  %v1018 = vpack.c.b16 %v948, %v947
  %v1019 = vpack.c.b16 %v950, %v949
  %v1020 = vpack.c.b16 %v952, %v951
  %v1021 = vpack.c.b16 %v954, %v953
  %v1022 = vpack.c.b16 %v955, %v955
  %v1106 = vunpack.c.l.b16 %v667
  %v1107 = vunpack.c.l.b16 %v668
  %v1108 = vunpack.c.l.b16 %v669
  %v1109 = vunpack.c.l.b16 %v670
  %v1110 = vunpack.c.l.b16 %v671
  %v1111 = vunpack.c.l.b16 %v672
  %v1112 = vunpack.c.l.b16 %v673
  %v1113 = vunpack.c.l.b16 %v674
  %v1114 = vunpack.c.l.b16 %v675
  %v1115 = vunpack.c.l.b16 %v676
  %v1116 = vunpack.c.l.b16 %v677
  %v1117 = vunpack.c.l.b16 %v678
  %v1118 = vunpack.c.l.b16 %v679
  %v1119 = vunpack.c.l.b16 %v680
  %v1120 = vunpack.c.l.b16 %v681
  %v1121 = vunpack.c.l.b16 %v682
  %v1122 = vpack.c.b16 %v1107, %v1106
  %v1123 = vpack.c.b16 %v1109, %v1108
  %v1124 = vpack.c.b16 %v1111, %v1110
  %v1125 = vpack.c.b16 %v1113, %v1112
  %v1126 = vpack.c.b16 %v1115, %v1114
  %v1127 = vpack.c.b16 %v1117, %v1116
  %v1128 = vpack.c.b16 %v1119, %v1118
  %v1129 = vpack.c.b16 %v1121, %v1120
  %1138 = vmatprep.subr.bf16.mxu0 0
  %1139 = vmatpush1.bf16.msra.mxu0 %v1129
  %1140 = vmatprep.subr.bf16.mxu0 0
  %1141 = vmatpush1.bf16.msra.mxu0 %v1128
  %1142 = vmatprep.subr.bf16.mxu0 0
  %1143 = vmatpush1.bf16.msra.mxu0 %v1127
  %1144 = vmatprep.subr.bf16.mxu0 0
  %1145 = vmatpush1.bf16.msra.mxu0 %v1126
  %1146 = vmatprep.subr.bf16.mxu0 0
  %1147 = vmatpush1.bf16.msra.mxu0 %v1125
  %1148 = vmatprep.subr.bf16.mxu0 0
  %1149 = vmatpush1.bf16.msra.mxu0 %v1124
  %1150 = vmatprep.subr.bf16.mxu0 0
  %1151 = vmatpush1.bf16.msra.mxu0 %v1123
  %1152 = vmatprep.subr.bf16.mxu0 0
  %1153 = vmatpush1.bf16.msra.mxu0 %v1122
  %1154 = vmatprep.subr.bf16.mxu0 0
  %1155 = vmatpush2.bf16.msra.mxu0 0
  %1156 = vmatprep.subr.bf16.mxu0 0
  %1157 = vmatpush2.bf16.msra.mxu0 0
  %1158 = vmatprep.subr.bf16.mxu0 0
  %1159 = vmatpush2.bf16.msra.mxu0 0
  %1160 = vmatprep.subr.bf16.mxu0 0
  %1161 = vmatpush2.bf16.msra.mxu0 0
  %1162 = vmatprep.subr.bf16.mxu0 0
  %1163 = vmatpush2.bf16.msra.mxu0 0
  %1164 = vmatprep.subr.bf16.mxu0 0
  %1165 = vmatpush2.bf16.msra.mxu0 0
  %1166 = vmatprep.subr.bf16.mxu0 0
  %1167 = vmatpush2.bf16.msra.mxu0 0
  %1168 = vmatprep.subr.bf16.mxu0 0
  %1169 = vmatpush2.bf16.msra.mxu0 0
  %1170 = vmatprep.mubr.bf16.mxu0 0
  %1171 = vmatmul.mubr.bf16.gmra.mxu0 %v956
  %v1172 = vpop.f32.mrf.mxu0
  %v1173 = vadd.f32 %v688, %v1172
  %v1174 = vpop.f32.mrf.mxu0
  %v1175 = vpop.f32.mrf.mxu0
  %v1176 = vadd.f32 %v688, %v1175
  %v1177 = vpop.f32.mrf.mxu0
  %1178 = vmatprep.mubr.bf16.mxu0 0
  %1179 = vmatmul.mubr.bf16.gmra.mxu0 %v957
  %v1180 = vpop.f32.mrf.mxu0
  %v1181 = vadd.f32 %v688, %v1180
  %v1182 = vpop.f32.mrf.mxu0
  %v1183 = vpop.f32.mrf.mxu0
  %v1184 = vadd.f32 %v688, %v1183
  %v1185 = vpop.f32.mrf.mxu0
  %1186 = vmatprep.mubr.bf16.mxu0 0
  %1187 = vmatmul.mubr.bf16.gmra.mxu0 %v958
  %v1188 = vpop.f32.mrf.mxu0
  %v1189 = vadd.f32 %v688, %v1188
  %v1190 = vpop.f32.mrf.mxu0
  %v1191 = vpop.f32.mrf.mxu0
  %v1192 = vadd.f32 %v688, %v1191
  %v1193 = vpop.f32.mrf.mxu0
  %1194 = vmatprep.mubr.bf16.mxu0 0
  %1195 = vmatmul.mubr.bf16.gmra.mxu0 %v959
  %v1196 = vpop.f32.mrf.mxu0
  %v1197 = vadd.f32 %v688, %v1196
  %v1198 = vpop.f32.mrf.mxu0
  %v1199 = vpop.f32.mrf.mxu0
  %v1200 = vadd.f32 %v688, %v1199
  %v1201 = vpop.f32.mrf.mxu0
  %1202 = vmatprep.mubr.bf16.mxu0 0
  %1203 = vmatmul.mubr.bf16.gmra.mxu0 %v960
  %v1204 = vpop.f32.mrf.mxu0
  %v1205 = vadd.f32 %v688, %v1204
  %v1206 = vpop.f32.mrf.mxu0
  %v1207 = vpop.f32.mrf.mxu0
  %v1208 = vadd.f32 %v688, %v1207
  %v1209 = vpop.f32.mrf.mxu0
  %1210 = vmatprep.mubr.bf16.mxu0 0
  %1211 = vmatmul.mubr.bf16.gmra.mxu0 %v961
  %v1212 = vpop.f32.mrf.mxu0
  %v1213 = vadd.f32 %v688, %v1212
  %v1214 = vpop.f32.mrf.mxu0
  %v1215 = vpop.f32.mrf.mxu0
  %v1216 = vadd.f32 %v688, %v1215
  %v1217 = vpop.f32.mrf.mxu0
  %1218 = vmatprep.mubr.bf16.mxu0 0
  %1219 = vmatmul.mubr.bf16.gmra.mxu0 %v962
  %v1220 = vpop.f32.mrf.mxu0
  %v1221 = vadd.f32 %v688, %v1220
  %v1222 = vpop.f32.mrf.mxu0
  %v1223 = vpop.f32.mrf.mxu0
  %v1224 = vadd.f32 %v688, %v1223
  %v1225 = vpop.f32.mrf.mxu0
  %1226 = vmatprep.mubr.bf16.mxu0 0
  %1227 = vmatmul.mubr.bf16.gmra.mxu0 %v963
  %v1228 = vpop.f32.mrf.mxu0
  %v1229 = vadd.f32 %v688, %v1228
  %v1230 = vpop.f32.mrf.mxu0
  %v1231 = vpop.f32.mrf.mxu0
  %v1232 = vadd.f32 %v688, %v1231
  %v1233 = vpop.f32.mrf.mxu0
  %1234 = vmatprep.mubr.bf16.mxu0 0
  %1235 = vmatmul.mubr.bf16.gmra.mxu0 %v964
  %v1236 = vpop.f32.mrf.mxu0
  %v1237 = vadd.f32 %v688, %v1236
  %v1238 = vpop.f32.mrf.mxu0
  %v1239 = vpop.f32.mrf.mxu0
  %v1240 = vadd.f32 %v688, %v1239
  %v1241 = vpop.f32.mrf.mxu0
  %1242 = vmatprep.mubr.bf16.mxu0 0
  %1243 = vmatmul.mubr.bf16.gmra.mxu0 %v965
  %v1244 = vpop.f32.mrf.mxu0
  %v1245 = vadd.f32 %v688, %v1244
  %v1246 = vpop.f32.mrf.mxu0
  %v1247 = vpop.f32.mrf.mxu0
  %v1248 = vadd.f32 %v688, %v1247
  %v1249 = vpop.f32.mrf.mxu0
  %1250 = vmatprep.mubr.bf16.mxu0 0
  %1251 = vmatmul.mubr.bf16.gmra.mxu0 %v966
  %v1252 = vpop.f32.mrf.mxu0
  %v1253 = vadd.f32 %v688, %v1252
  %v1254 = vpop.f32.mrf.mxu0
  %v1255 = vpop.f32.mrf.mxu0
  %v1256 = vadd.f32 %v688, %v1255
  %v1257 = vpop.f32.mrf.mxu0
  %1258 = vmatprep.mubr.bf16.mxu0 0
  %1259 = vmatmul.mubr.bf16.gmra.mxu0 %v967
  %v1260 = vpop.f32.mrf.mxu0
  %v1261 = vadd.f32 %v688, %v1260
  %v1262 = vpop.f32.mrf.mxu0
  %v1263 = vpop.f32.mrf.mxu0
  %v1264 = vadd.f32 %v688, %v1263
  %v1265 = vpop.f32.mrf.mxu0
  %1266 = vmatprep.mubr.bf16.mxu0 0
  %1267 = vmatmul.mubr.bf16.gmra.mxu0 %v968
  %v1268 = vpop.f32.mrf.mxu0
  %v1269 = vadd.f32 %v688, %v1268
  %v1270 = vpop.f32.mrf.mxu0
  %v1271 = vpop.f32.mrf.mxu0
  %v1272 = vadd.f32 %v688, %v1271
  %v1273 = vpop.f32.mrf.mxu0
  %1274 = vmatprep.mubr.bf16.mxu0 0
  %1275 = vmatmul.mubr.bf16.gmra.mxu0 %v969
  %v1276 = vpop.f32.mrf.mxu0
  %v1277 = vadd.f32 %v688, %v1276
  %v1278 = vpop.f32.mrf.mxu0
  %v1279 = vpop.f32.mrf.mxu0
  %v1280 = vadd.f32 %v688, %v1279
  %v1281 = vpop.f32.mrf.mxu0
  %1282 = vmatprep.mubr.bf16.mxu0 0
  %1283 = vmatmul.mubr.bf16.gmra.mxu0 %v970
  %v1284 = vpop.f32.mrf.mxu0
  %v1285 = vadd.f32 %v688, %v1284
  %v1286 = vpop.f32.mrf.mxu0
  %v1287 = vpop.f32.mrf.mxu0
  %v1288 = vadd.f32 %v688, %v1287
  %v1289 = vpop.f32.mrf.mxu0
  %1290 = vmatprep.mubr.bf16.mxu0 0
  %1291 = vmatmul.mubr.bf16.gmra.mxu0 %v971
  %v1292 = vpop.f32.mrf.mxu0
  %v1293 = vadd.f32 %v688, %v1292
  %v1294 = vpop.f32.mrf.mxu0
  %v1295 = vpop.f32.mrf.mxu0
  %v1296 = vadd.f32 %v688, %v1295
  %v1297 = vpop.f32.mrf.mxu0
  %1298 = vmatprep.mubr.bf16.mxu0 0
  %1299 = vmatmul.mubr.bf16.gmra.mxu0 %v972
  %v1300 = vpop.f32.mrf.mxu0
  %v1301 = vadd.f32 %v688, %v1300
  %v1302 = vpop.f32.mrf.mxu0
  %v1303 = vpop.f32.mrf.mxu0
  %v1304 = vadd.f32 %v688, %v1303
  %v1305 = vpop.f32.mrf.mxu0
  %1306 = vmatprep.mubr.bf16.mxu0 0
  %1307 = vmatmul.mubr.bf16.gmra.mxu0 %v973
  %v1308 = vpop.f32.mrf.mxu0
  %v1309 = vadd.f32 %v688, %v1308
  %v1310 = vpop.f32.mrf.mxu0
  %v1311 = vpop.f32.mrf.mxu0
  %v1312 = vadd.f32 %v688, %v1311
  %v1313 = vpop.f32.mrf.mxu0
  %1314 = vmatprep.mubr.bf16.mxu0 0
  %1315 = vmatmul.mubr.bf16.gmra.mxu0 %v974
  %v1316 = vpop.f32.mrf.mxu0
  %v1317 = vadd.f32 %v688, %v1316
  %v1318 = vpop.f32.mrf.mxu0
  %v1319 = vpop.f32.mrf.mxu0
  %v1320 = vadd.f32 %v688, %v1319
  %v1321 = vpop.f32.mrf.mxu0
  %1322 = vmatprep.mubr.bf16.mxu0 0
  %1323 = vmatmul.mubr.bf16.gmra.mxu0 %v975
  %v1324 = vpop.f32.mrf.mxu0
  %v1325 = vadd.f32 %v688, %v1324
  %v1326 = vpop.f32.mrf.mxu0
  %v1327 = vpop.f32.mrf.mxu0
  %v1328 = vadd.f32 %v688, %v1327
  %v1329 = vpop.f32.mrf.mxu0
  %1330 = vmatprep.mubr.bf16.mxu0 0
  %1331 = vmatmul.mubr.bf16.gmra.mxu0 %v976
  %v1332 = vpop.f32.mrf.mxu0
  %v1333 = vadd.f32 %v688, %v1332
  %v1334 = vpop.f32.mrf.mxu0
  %v1335 = vpop.f32.mrf.mxu0
  %v1336 = vadd.f32 %v688, %v1335
  %v1337 = vpop.f32.mrf.mxu0
  %1338 = vmatprep.mubr.bf16.mxu0 0
  %1339 = vmatmul.mubr.bf16.gmra.mxu0 %v977
  %v1340 = vpop.f32.mrf.mxu0
  %v1341 = vadd.f32 %v688, %v1340
  %v1342 = vpop.f32.mrf.mxu0
  %v1343 = vpop.f32.mrf.mxu0
  %v1344 = vadd.f32 %v688, %v1343
  %v1345 = vpop.f32.mrf.mxu0
  %1346 = vmatprep.mubr.bf16.mxu0 0
  %1347 = vmatmul.mubr.bf16.gmra.mxu0 %v978
  %v1348 = vpop.f32.mrf.mxu0
  %v1349 = vadd.f32 %v688, %v1348
  %v1350 = vpop.f32.mrf.mxu0
  %v1351 = vpop.f32.mrf.mxu0
  %v1352 = vadd.f32 %v688, %v1351
  %v1353 = vpop.f32.mrf.mxu0
  %1354 = vmatprep.mubr.bf16.mxu0 0
  %1355 = vmatmul.mubr.bf16.gmra.mxu0 %v979
  %v1356 = vpop.f32.mrf.mxu0
  %v1357 = vadd.f32 %v688, %v1356
  %v1358 = vpop.f32.mrf.mxu0
  %v1359 = vpop.f32.mrf.mxu0
  %v1360 = vadd.f32 %v688, %v1359
  %v1361 = vpop.f32.mrf.mxu0
  %1362 = vmatprep.mubr.bf16.mxu0 0
  %1363 = vmatmul.mubr.bf16.gmra.mxu0 %v980
  %v1364 = vpop.f32.mrf.mxu0
  %v1365 = vadd.f32 %v688, %v1364
  %v1366 = vpop.f32.mrf.mxu0
  %v1367 = vpop.f32.mrf.mxu0
  %v1368 = vadd.f32 %v688, %v1367
  %v1369 = vpop.f32.mrf.mxu0
  %1370 = vmatprep.mubr.bf16.mxu0 0
  %1371 = vmatmul.mubr.bf16.gmra.mxu0 %v981
  %v1372 = vpop.f32.mrf.mxu0
  %v1373 = vadd.f32 %v688, %v1372
  %v1374 = vpop.f32.mrf.mxu0
  %v1375 = vpop.f32.mrf.mxu0
  %v1376 = vadd.f32 %v688, %v1375
  %v1377 = vpop.f32.mrf.mxu0
  %1378 = vmatprep.mubr.bf16.mxu0 0
  %1379 = vmatmul.mubr.bf16.gmra.mxu0 %v982
  %v1380 = vpop.f32.mrf.mxu0
  %v1381 = vadd.f32 %v688, %v1380
  %v1382 = vpop.f32.mrf.mxu0
  %v1383 = vpop.f32.mrf.mxu0
  %v1384 = vadd.f32 %v688, %v1383
  %v1385 = vpop.f32.mrf.mxu0
  %1386 = vmatprep.mubr.bf16.mxu0 0
  %1387 = vmatmul.mubr.bf16.gmra.mxu0 %v983
  %v1388 = vpop.f32.mrf.mxu0
  %v1389 = vadd.f32 %v688, %v1388
  %v1390 = vpop.f32.mrf.mxu0
  %v1391 = vpop.f32.mrf.mxu0
  %v1392 = vadd.f32 %v688, %v1391
  %v1393 = vpop.f32.mrf.mxu0
  %1394 = vmatprep.mubr.bf16.mxu0 0
  %1395 = vmatmul.mubr.bf16.gmra.mxu0 %v984
  %v1396 = vpop.f32.mrf.mxu0
  %v1397 = vadd.f32 %v688, %v1396
  %v1398 = vpop.f32.mrf.mxu0
  %v1399 = vpop.f32.mrf.mxu0
  %v1400 = vadd.f32 %v688, %v1399
  %v1401 = vpop.f32.mrf.mxu0
  %1402 = vmatprep.mubr.bf16.mxu0 0
  %1403 = vmatmul.mubr.bf16.gmra.mxu0 %v985
  %v1404 = vpop.f32.mrf.mxu0
  %v1405 = vadd.f32 %v688, %v1404
  %v1406 = vpop.f32.mrf.mxu0
  %v1407 = vpop.f32.mrf.mxu0
  %v1408 = vadd.f32 %v688, %v1407
  %v1409 = vpop.f32.mrf.mxu0
  %1410 = vmatprep.mubr.bf16.mxu0 0
  %1411 = vmatmul.mubr.bf16.gmra.mxu0 %v986
  %v1412 = vpop.f32.mrf.mxu0
  %v1413 = vadd.f32 %v688, %v1412
  %v1414 = vpop.f32.mrf.mxu0
  %v1415 = vpop.f32.mrf.mxu0
  %v1416 = vadd.f32 %v688, %v1415
  %v1417 = vpop.f32.mrf.mxu0
  %1418 = vmatprep.mubr.bf16.mxu0 0
  %1419 = vmatmul.mubr.bf16.gmra.mxu0 %v987
  %v1420 = vpop.f32.mrf.mxu0
  %v1421 = vadd.f32 %v688, %v1420
  %v1422 = vpop.f32.mrf.mxu0
  %v1423 = vpop.f32.mrf.mxu0
  %v1424 = vadd.f32 %v688, %v1423
  %v1425 = vpop.f32.mrf.mxu0
  %1426 = vmatprep.mubr.bf16.mxu0 0
  %1427 = vmatmul.mubr.bf16.gmra.mxu0 %v988
  %v1428 = vpop.f32.mrf.mxu0
  %v1429 = vadd.f32 %v688, %v1428
  %v1430 = vpop.f32.mrf.mxu0
  %v1431 = vpop.f32.mrf.mxu0
  %v1432 = vadd.f32 %v688, %v1431
  %v1433 = vpop.f32.mrf.mxu0
  %1434 = vmatprep.mubr.bf16.mxu0 0
  %1435 = vmatmul.mubr.bf16.gmra.mxu0 %v989
  %v1436 = vpop.f32.mrf.mxu0
  %v1437 = vadd.f32 %v688, %v1436
  %v1438 = vpop.f32.mrf.mxu0
  %v1439 = vpop.f32.mrf.mxu0
  %v1440 = vadd.f32 %v688, %v1439
  %v1441 = vpop.f32.mrf.mxu0
  %1442 = vmatprep.mubr.bf16.mxu0 0
  %1443 = vmatmul.mubr.bf16.gmra.mxu0 %v990
  %v1444 = vpop.f32.mrf.mxu0
  %v1445 = vadd.f32 %v688, %v1444
  %v1446 = vpop.f32.mrf.mxu0
  %v1447 = vpop.f32.mrf.mxu0
  %v1448 = vadd.f32 %v688, %v1447
  %v1449 = vpop.f32.mrf.mxu0
  %1450 = vmatprep.mubr.bf16.mxu0 0
  %1451 = vmatmul.mubr.bf16.gmra.mxu0 %v991
  %v1452 = vpop.f32.mrf.mxu0
  %v1453 = vadd.f32 %v688, %v1452
  %v1454 = vpop.f32.mrf.mxu0
  %v1455 = vpop.f32.mrf.mxu0
  %v1456 = vadd.f32 %v688, %v1455
  %v1457 = vpop.f32.mrf.mxu0
  %1458 = vmatprep.mubr.bf16.mxu0 0
  %1459 = vmatmul.mubr.bf16.gmra.mxu0 %v992
  %v1460 = vpop.f32.mrf.mxu0
  %v1461 = vadd.f32 %v688, %v1460
  %v1462 = vpop.f32.mrf.mxu0
  %v1463 = vpop.f32.mrf.mxu0
  %v1464 = vadd.f32 %v688, %v1463
  %v1465 = vpop.f32.mrf.mxu0
  %1466 = vmatprep.mubr.bf16.mxu0 0
  %1467 = vmatmul.mubr.bf16.gmra.mxu0 %v993
  %v1468 = vpop.f32.mrf.mxu0
  %v1469 = vadd.f32 %v688, %v1468
  %v1470 = vpop.f32.mrf.mxu0
  %v1471 = vpop.f32.mrf.mxu0
  %v1472 = vadd.f32 %v688, %v1471
  %v1473 = vpop.f32.mrf.mxu0
  %1474 = vmatprep.mubr.bf16.mxu0 0
  %1475 = vmatmul.mubr.bf16.gmra.mxu0 %v994
  %v1476 = vpop.f32.mrf.mxu0
  %v1477 = vadd.f32 %v688, %v1476
  %v1478 = vpop.f32.mrf.mxu0
  %v1479 = vpop.f32.mrf.mxu0
  %v1480 = vadd.f32 %v688, %v1479
  %v1481 = vpop.f32.mrf.mxu0
  %1482 = vmatprep.mubr.bf16.mxu0 0
  %1483 = vmatmul.mubr.bf16.gmra.mxu0 %v995
  %v1484 = vpop.f32.mrf.mxu0
  %v1485 = vadd.f32 %v688, %v1484
  %v1486 = vpop.f32.mrf.mxu0
  %v1487 = vpop.f32.mrf.mxu0
  %v1488 = vadd.f32 %v688, %v1487
  %v1489 = vpop.f32.mrf.mxu0
  %1490 = vmatprep.mubr.bf16.mxu0 0
  %1491 = vmatmul.mubr.bf16.gmra.mxu0 %v996
  %v1492 = vpop.f32.mrf.mxu0
  %v1493 = vadd.f32 %v688, %v1492
  %v1494 = vpop.f32.mrf.mxu0
  %v1495 = vpop.f32.mrf.mxu0
  %v1496 = vadd.f32 %v688, %v1495
  %v1497 = vpop.f32.mrf.mxu0
  %1498 = vmatprep.mubr.bf16.mxu0 0
  %1499 = vmatmul.mubr.bf16.gmra.mxu0 %v997
  %v1500 = vpop.f32.mrf.mxu0
  %v1501 = vadd.f32 %v688, %v1500
  %v1502 = vpop.f32.mrf.mxu0
  %v1503 = vpop.f32.mrf.mxu0
  %v1504 = vadd.f32 %v688, %v1503
  %v1505 = vpop.f32.mrf.mxu0
  %1506 = vmatprep.mubr.bf16.mxu0 0
  %1507 = vmatmul.mubr.bf16.gmra.mxu0 %v998
  %v1508 = vpop.f32.mrf.mxu0
  %v1509 = vadd.f32 %v688, %v1508
  %v1510 = vpop.f32.mrf.mxu0
  %v1511 = vpop.f32.mrf.mxu0
  %v1512 = vadd.f32 %v688, %v1511
  %v1513 = vpop.f32.mrf.mxu0
  %1514 = vmatprep.mubr.bf16.mxu0 0
  %1515 = vmatmul.mubr.bf16.gmra.mxu0 %v999
  %v1516 = vpop.f32.mrf.mxu0
  %v1517 = vadd.f32 %v688, %v1516
  %v1518 = vpop.f32.mrf.mxu0
  %v1519 = vpop.f32.mrf.mxu0
  %v1520 = vadd.f32 %v688, %v1519
  %v1521 = vpop.f32.mrf.mxu0
  %1522 = vmatprep.mubr.bf16.mxu0 0
  %1523 = vmatmul.mubr.bf16.gmra.mxu0 %v1000
  %v1524 = vpop.f32.mrf.mxu0
  %v1525 = vadd.f32 %v688, %v1524
  %v1526 = vpop.f32.mrf.mxu0
  %v1527 = vpop.f32.mrf.mxu0
  %v1528 = vadd.f32 %v688, %v1527
  %v1529 = vpop.f32.mrf.mxu0
  %1530 = vmatprep.mubr.bf16.mxu0 0
  %1531 = vmatmul.mubr.bf16.gmra.mxu0 %v1001
  %v1532 = vpop.f32.mrf.mxu0
  %v1533 = vadd.f32 %v688, %v1532
  %v1534 = vpop.f32.mrf.mxu0
  %v1535 = vpop.f32.mrf.mxu0
  %v1536 = vadd.f32 %v688, %v1535
  %v1537 = vpop.f32.mrf.mxu0
  %1538 = vmatprep.mubr.bf16.mxu0 0
  %1539 = vmatmul.mubr.bf16.gmra.mxu0 %v1002
  %v1540 = vpop.f32.mrf.mxu0
  %v1541 = vadd.f32 %v688, %v1540
  %v1542 = vpop.f32.mrf.mxu0
  %v1543 = vpop.f32.mrf.mxu0
  %v1544 = vadd.f32 %v688, %v1543
  %v1545 = vpop.f32.mrf.mxu0
  %1546 = vmatprep.mubr.bf16.mxu0 0
  %1547 = vmatmul.mubr.bf16.gmra.mxu0 %v1003
  %v1548 = vpop.f32.mrf.mxu0
  %v1549 = vadd.f32 %v688, %v1548
  %v1550 = vpop.f32.mrf.mxu0
  %v1551 = vpop.f32.mrf.mxu0
  %v1552 = vadd.f32 %v688, %v1551
  %v1553 = vpop.f32.mrf.mxu0
  %1554 = vmatprep.mubr.bf16.mxu0 0
  %1555 = vmatmul.mubr.bf16.gmra.mxu0 %v1004
  %v1556 = vpop.f32.mrf.mxu0
  %v1557 = vadd.f32 %v688, %v1556
  %v1558 = vpop.f32.mrf.mxu0
  %v1559 = vpop.f32.mrf.mxu0
  %v1560 = vadd.f32 %v688, %v1559
  %v1561 = vpop.f32.mrf.mxu0
  %1562 = vmatprep.mubr.bf16.mxu0 0
  %1563 = vmatmul.mubr.bf16.gmra.mxu0 %v1005
  %v1564 = vpop.f32.mrf.mxu0
  %v1565 = vadd.f32 %v688, %v1564
  %v1566 = vpop.f32.mrf.mxu0
  %v1567 = vpop.f32.mrf.mxu0
  %v1568 = vadd.f32 %v688, %v1567
  %v1569 = vpop.f32.mrf.mxu0
  %1570 = vmatprep.mubr.bf16.mxu0 0
  %1571 = vmatmul.mubr.bf16.gmra.mxu0 %v1006
  %v1572 = vpop.f32.mrf.mxu0
  %v1573 = vadd.f32 %v688, %v1572
  %v1574 = vpop.f32.mrf.mxu0
  %v1575 = vpop.f32.mrf.mxu0
  %v1576 = vadd.f32 %v688, %v1575
  %v1577 = vpop.f32.mrf.mxu0
  %1578 = vmatprep.mubr.bf16.mxu0 0
  %1579 = vmatmul.mubr.bf16.gmra.mxu0 %v1007
  %v1580 = vpop.f32.mrf.mxu0
  %v1581 = vadd.f32 %v688, %v1580
  %v1582 = vpop.f32.mrf.mxu0
  %v1583 = vpop.f32.mrf.mxu0
  %v1584 = vadd.f32 %v688, %v1583
  %v1585 = vpop.f32.mrf.mxu0
  %1586 = vmatprep.mubr.bf16.mxu0 0
  %1587 = vmatmul.mubr.bf16.gmra.mxu0 %v1008
  %v1588 = vpop.f32.mrf.mxu0
  %v1589 = vadd.f32 %v688, %v1588
  %v1590 = vpop.f32.mrf.mxu0
  %v1591 = vpop.f32.mrf.mxu0
  %v1592 = vadd.f32 %v688, %v1591
  %v1593 = vpop.f32.mrf.mxu0
  %1594 = vmatprep.mubr.bf16.mxu0 0
  %1595 = vmatmul.mubr.bf16.gmra.mxu0 %v1009
  %v1596 = vpop.f32.mrf.mxu0
  %v1597 = vadd.f32 %v688, %v1596
  %v1598 = vpop.f32.mrf.mxu0
  %v1599 = vpop.f32.mrf.mxu0
  %v1600 = vadd.f32 %v688, %v1599
  %v1601 = vpop.f32.mrf.mxu0
  %1602 = vmatprep.mubr.bf16.mxu0 0
  %1603 = vmatmul.mubr.bf16.gmra.mxu0 %v1010
  %v1604 = vpop.f32.mrf.mxu0
  %v1605 = vadd.f32 %v688, %v1604
  %v1606 = vpop.f32.mrf.mxu0
  %v1607 = vpop.f32.mrf.mxu0
  %v1608 = vadd.f32 %v688, %v1607
  %v1609 = vpop.f32.mrf.mxu0
  %1610 = vmatprep.mubr.bf16.mxu0 0
  %1611 = vmatmul.mubr.bf16.gmra.mxu0 %v1011
  %v1612 = vpop.f32.mrf.mxu0
  %v1613 = vadd.f32 %v688, %v1612
  %v1614 = vpop.f32.mrf.mxu0
  %v1615 = vpop.f32.mrf.mxu0
  %v1616 = vadd.f32 %v688, %v1615
  %v1617 = vpop.f32.mrf.mxu0
  %1618 = vmatprep.mubr.bf16.mxu0 0
  %1619 = vmatmul.mubr.bf16.gmra.mxu0 %v1012
  %v1620 = vpop.f32.mrf.mxu0
  %v1621 = vadd.f32 %v688, %v1620
  %v1622 = vpop.f32.mrf.mxu0
  %v1623 = vpop.f32.mrf.mxu0
  %v1624 = vadd.f32 %v688, %v1623
  %v1625 = vpop.f32.mrf.mxu0
  %1626 = vmatprep.mubr.bf16.mxu0 0
  %1627 = vmatmul.mubr.bf16.gmra.mxu0 %v1013
  %v1628 = vpop.f32.mrf.mxu0
  %v1629 = vadd.f32 %v688, %v1628
  %v1630 = vpop.f32.mrf.mxu0
  %v1631 = vpop.f32.mrf.mxu0
  %v1632 = vadd.f32 %v688, %v1631
  %v1633 = vpop.f32.mrf.mxu0
  %1634 = vmatprep.mubr.bf16.mxu0 0
  %1635 = vmatmul.mubr.bf16.gmra.mxu0 %v1014
  %v1636 = vpop.f32.mrf.mxu0
  %v1637 = vadd.f32 %v688, %v1636
  %v1638 = vpop.f32.mrf.mxu0
  %v1639 = vpop.f32.mrf.mxu0
  %v1640 = vadd.f32 %v688, %v1639
  %v1641 = vpop.f32.mrf.mxu0
  %1642 = vmatprep.mubr.bf16.mxu0 0
  %1643 = vmatmul.mubr.bf16.gmra.mxu0 %v1015
  %v1644 = vpop.f32.mrf.mxu0
  %v1645 = vadd.f32 %v688, %v1644
  %v1646 = vpop.f32.mrf.mxu0
  %v1647 = vpop.f32.mrf.mxu0
  %v1648 = vadd.f32 %v688, %v1647
  %v1649 = vpop.f32.mrf.mxu0
  %1650 = vmatprep.mubr.bf16.mxu0 0
  %1651 = vmatmul.mubr.bf16.gmra.mxu0 %v1016
  %v1652 = vpop.f32.mrf.mxu0
  %v1653 = vadd.f32 %v688, %v1652
  %v1654 = vpop.f32.mrf.mxu0
  %v1655 = vpop.f32.mrf.mxu0
  %v1656 = vadd.f32 %v688, %v1655
  %v1657 = vpop.f32.mrf.mxu0
  %1658 = vmatprep.mubr.bf16.mxu0 0
  %1659 = vmatmul.mubr.bf16.gmra.mxu0 %v1017
  %v1660 = vpop.f32.mrf.mxu0
  %v1661 = vadd.f32 %v688, %v1660
  %v1662 = vpop.f32.mrf.mxu0
  %v1663 = vpop.f32.mrf.mxu0
  %v1664 = vadd.f32 %v688, %v1663
  %v1665 = vpop.f32.mrf.mxu0
  %1666 = vmatprep.mubr.bf16.mxu0 0
  %1667 = vmatmul.mubr.bf16.gmra.mxu0 %v1018
  %v1668 = vpop.f32.mrf.mxu0
  %v1669 = vadd.f32 %v688, %v1668
  %v1670 = vpop.f32.mrf.mxu0
  %v1671 = vpop.f32.mrf.mxu0
  %v1672 = vadd.f32 %v688, %v1671
  %v1673 = vpop.f32.mrf.mxu0
  %1674 = vmatprep.mubr.bf16.mxu0 0
  %1675 = vmatmul.mubr.bf16.gmra.mxu0 %v1019
  %v1676 = vpop.f32.mrf.mxu0
  %v1677 = vadd.f32 %v688, %v1676
  %v1678 = vpop.f32.mrf.mxu0
  %v1679 = vpop.f32.mrf.mxu0
  %v1680 = vadd.f32 %v688, %v1679
  %v1681 = vpop.f32.mrf.mxu0
  %1682 = vmatprep.mubr.bf16.mxu0 0
  %1683 = vmatmul.mubr.bf16.gmra.mxu0 %v1020
  %v1684 = vpop.f32.mrf.mxu0
  %v1685 = vadd.f32 %v688, %v1684
  %v1686 = vpop.f32.mrf.mxu0
  %v1687 = vpop.f32.mrf.mxu0
  %v1688 = vadd.f32 %v688, %v1687
  %v1689 = vpop.f32.mrf.mxu0
  %1690 = vmatprep.mubr.bf16.mxu0 0
  %1691 = vmatmul.mubr.bf16.gmra.mxu0 %v1021
  %v1692 = vpop.f32.mrf.mxu0
  %v1693 = vadd.f32 %v688, %v1692
  %v1694 = vpop.f32.mrf.mxu0
  %v1695 = vpop.f32.mrf.mxu0
  %v1696 = vadd.f32 %v688, %v1695
  %v1697 = vpop.f32.mrf.mxu0
  %1698 = vmatprep.mubr.bf16.mxu0 0
  %1699 = vmatmul.mubr.bf16.gmra.mxu0 %v1022
  %v1700 = vpop.f32.mrf.mxu0
  %v1701 = vadd.f32 %v688, %v1700
  %v1702 = vpop.f32.mrf.mxu0
  %v1703 = vpop.f32.mrf.mxu0
  %v1704 = vpop.f32.mrf.mxu0
  %1705 = vdwg.mxu0
  %vm1706 = vcmp.ge.f32.partialorder %v1173, 0.0
  %vm1707 = vcmp.ge.f32.partialorder %v1176, 0.0
  %vm1708 = vcmp.ge.f32.partialorder %v1181, 0.0
  %vm1709 = vcmp.ge.f32.partialorder %v1184, 0.0
  %vm1710 = vcmp.ge.f32.partialorder %v1189, 0.0
  %vm1711 = vcmp.ge.f32.partialorder %v1192, 0.0
  %vm1712 = vcmp.ge.f32.partialorder %v1197, 0.0
  %vm1713 = vcmp.ge.f32.partialorder %v1200, 0.0
  %vm1714 = vcmp.ge.f32.partialorder %v1205, 0.0
  %vm1715 = vcmp.ge.f32.partialorder %v1208, 0.0
  %vm1716 = vcmp.ge.f32.partialorder %v1213, 0.0
  %vm1717 = vcmp.ge.f32.partialorder %v1216, 0.0
  %vm1718 = vcmp.ge.f32.partialorder %v1221, 0.0
  %vm1719 = vcmp.ge.f32.partialorder %v1224, 0.0
  %vm1720 = vcmp.ge.f32.partialorder %v1229, 0.0
  %vm1721 = vcmp.ge.f32.partialorder %v1232, 0.0
  %vm1722 = vcmp.ge.f32.partialorder %v1237, 0.0
  %vm1723 = vcmp.ge.f32.partialorder %v1240, 0.0
  %vm1724 = vcmp.ge.f32.partialorder %v1245, 0.0
  %vm1725 = vcmp.ge.f32.partialorder %v1248, 0.0
  %vm1726 = vcmp.ge.f32.partialorder %v1253, 0.0
  %vm1727 = vcmp.ge.f32.partialorder %v1256, 0.0
  %vm1728 = vcmp.ge.f32.partialorder %v1261, 0.0
  %vm1729 = vcmp.ge.f32.partialorder %v1264, 0.0
  %vm1730 = vcmp.ge.f32.partialorder %v1269, 0.0
  %vm1731 = vcmp.ge.f32.partialorder %v1272, 0.0
  %vm1732 = vcmp.ge.f32.partialorder %v1277, 0.0
  %vm1733 = vcmp.ge.f32.partialorder %v1280, 0.0
  %vm1734 = vcmp.ge.f32.partialorder %v1285, 0.0
  %vm1735 = vcmp.ge.f32.partialorder %v1288, 0.0
  %vm1736 = vcmp.ge.f32.partialorder %v1293, 0.0
  %vm1737 = vcmp.ge.f32.partialorder %v1296, 0.0
  %vm1738 = vcmp.ge.f32.partialorder %v1301, 0.0
  %vm1739 = vcmp.ge.f32.partialorder %v1304, 0.0
  %vm1740 = vcmp.ge.f32.partialorder %v1309, 0.0
  %vm1741 = vcmp.ge.f32.partialorder %v1312, 0.0
  %vm1742 = vcmp.ge.f32.partialorder %v1317, 0.0
  %vm1743 = vcmp.ge.f32.partialorder %v1320, 0.0
  %vm1744 = vcmp.ge.f32.partialorder %v1325, 0.0
  %vm1745 = vcmp.ge.f32.partialorder %v1328, 0.0
  %vm1746 = vcmp.ge.f32.partialorder %v1333, 0.0
  %vm1747 = vcmp.ge.f32.partialorder %v1336, 0.0
  %vm1748 = vcmp.ge.f32.partialorder %v1341, 0.0
  %vm1749 = vcmp.ge.f32.partialorder %v1344, 0.0
  %vm1750 = vcmp.ge.f32.partialorder %v1349, 0.0
  %vm1751 = vcmp.ge.f32.partialorder %v1352, 0.0
  %vm1752 = vcmp.ge.f32.partialorder %v1357, 0.0
  %vm1753 = vcmp.ge.f32.partialorder %v1360, 0.0
  %vm1754 = vcmp.ge.f32.partialorder %v1365, 0.0
  %vm1755 = vcmp.ge.f32.partialorder %v1368, 0.0
  %vm1756 = vcmp.ge.f32.partialorder %v1373, 0.0
  %vm1757 = vcmp.ge.f32.partialorder %v1376, 0.0
  %vm1758 = vcmp.ge.f32.partialorder %v1381, 0.0
  %vm1759 = vcmp.ge.f32.partialorder %v1384, 0.0
  %vm1760 = vcmp.ge.f32.partialorder %v1389, 0.0
  %vm1761 = vcmp.ge.f32.partialorder %v1392, 0.0
  %vm1762 = vcmp.ge.f32.partialorder %v1397, 0.0
  %vm1763 = vcmp.ge.f32.partialorder %v1400, 0.0
  %vm1764 = vcmp.ge.f32.partialorder %v1405, 0.0
  %vm1765 = vcmp.ge.f32.partialorder %v1408, 0.0
  %vm1766 = vcmp.ge.f32.partialorder %v1413, 0.0
  %vm1767 = vcmp.ge.f32.partialorder %v1416, 0.0
  %vm1768 = vcmp.ge.f32.partialorder %v1421, 0.0
  %vm1769 = vcmp.ge.f32.partialorder %v1424, 0.0
  %vm1770 = vcmp.ge.f32.partialorder %v1429, 0.0
  %vm1771 = vcmp.ge.f32.partialorder %v1432, 0.0
  %vm1772 = vcmp.ge.f32.partialorder %v1437, 0.0
  %vm1773 = vcmp.ge.f32.partialorder %v1440, 0.0
  %vm1774 = vcmp.ge.f32.partialorder %v1445, 0.0
  %vm1775 = vcmp.ge.f32.partialorder %v1448, 0.0
  %vm1776 = vcmp.ge.f32.partialorder %v1453, 0.0
  %vm1777 = vcmp.ge.f32.partialorder %v1456, 0.0
  %vm1778 = vcmp.ge.f32.partialorder %v1461, 0.0
  %vm1779 = vcmp.ge.f32.partialorder %v1464, 0.0
  %vm1780 = vcmp.ge.f32.partialorder %v1469, 0.0
  %vm1781 = vcmp.ge.f32.partialorder %v1472, 0.0
  %vm1782 = vcmp.ge.f32.partialorder %v1477, 0.0
  %vm1783 = vcmp.ge.f32.partialorder %v1480, 0.0
  %vm1784 = vcmp.ge.f32.partialorder %v1485, 0.0
  %vm1785 = vcmp.ge.f32.partialorder %v1488, 0.0
  %vm1786 = vcmp.ge.f32.partialorder %v1493, 0.0
  %vm1787 = vcmp.ge.f32.partialorder %v1496, 0.0
  %vm1788 = vcmp.ge.f32.partialorder %v1501, 0.0
  %vm1789 = vcmp.ge.f32.partialorder %v1504, 0.0
  %vm1790 = vcmp.ge.f32.partialorder %v1509, 0.0
  %vm1791 = vcmp.ge.f32.partialorder %v1512, 0.0
  %vm1792 = vcmp.ge.f32.partialorder %v1517, 0.0
  %vm1793 = vcmp.ge.f32.partialorder %v1520, 0.0
  %vm1794 = vcmp.ge.f32.partialorder %v1525, 0.0
  %vm1795 = vcmp.ge.f32.partialorder %v1528, 0.0
  %vm1796 = vcmp.ge.f32.partialorder %v1533, 0.0
  %vm1797 = vcmp.ge.f32.partialorder %v1536, 0.0
  %vm1798 = vcmp.ge.f32.partialorder %v1541, 0.0
  %vm1799 = vcmp.ge.f32.partialorder %v1544, 0.0
  %vm1800 = vcmp.ge.f32.partialorder %v1549, 0.0
  %vm1801 = vcmp.ge.f32.partialorder %v1552, 0.0
  %vm1802 = vcmp.ge.f32.partialorder %v1557, 0.0
  %vm1803 = vcmp.ge.f32.partialorder %v1560, 0.0
  %vm1804 = vcmp.ge.f32.partialorder %v1565, 0.0
  %vm1805 = vcmp.ge.f32.partialorder %v1568, 0.0
  %vm1806 = vcmp.ge.f32.partialorder %v1573, 0.0
  %vm1807 = vcmp.ge.f32.partialorder %v1576, 0.0
  %vm1808 = vcmp.ge.f32.partialorder %v1581, 0.0
  %vm1809 = vcmp.ge.f32.partialorder %v1584, 0.0
  %vm1810 = vcmp.ge.f32.partialorder %v1589, 0.0
  %vm1811 = vcmp.ge.f32.partialorder %v1592, 0.0
  %vm1812 = vcmp.ge.f32.partialorder %v1597, 0.0
  %vm1813 = vcmp.ge.f32.partialorder %v1600, 0.0
  %vm1814 = vcmp.ge.f32.partialorder %v1605, 0.0
  %vm1815 = vcmp.ge.f32.partialorder %v1608, 0.0
  %vm1816 = vcmp.ge.f32.partialorder %v1613, 0.0
  %vm1817 = vcmp.ge.f32.partialorder %v1616, 0.0
  %vm1818 = vcmp.ge.f32.partialorder %v1621, 0.0
  %vm1819 = vcmp.ge.f32.partialorder %v1624, 0.0
  %vm1820 = vcmp.ge.f32.partialorder %v1629, 0.0
  %vm1821 = vcmp.ge.f32.partialorder %v1632, 0.0
  %vm1822 = vcmp.ge.f32.partialorder %v1637, 0.0
  %vm1823 = vcmp.ge.f32.partialorder %v1640, 0.0
  %vm1824 = vcmp.ge.f32.partialorder %v1645, 0.0
  %vm1825 = vcmp.ge.f32.partialorder %v1648, 0.0
  %vm1826 = vcmp.ge.f32.partialorder %v1653, 0.0
  %vm1827 = vcmp.ge.f32.partialorder %v1656, 0.0
  %vm1828 = vcmp.ge.f32.partialorder %v1661, 0.0
  %vm1829 = vcmp.ge.f32.partialorder %v1664, 0.0
  %vm1830 = vcmp.ge.f32.partialorder %v1669, 0.0
  %vm1831 = vcmp.ge.f32.partialorder %v1672, 0.0
  %vm1832 = vcmp.ge.f32.partialorder %v1677, 0.0
  %vm1833 = vcmp.ge.f32.partialorder %v1680, 0.0
  %vm1834 = vcmp.ge.f32.partialorder %v1685, 0.0
  %vm1835 = vcmp.ge.f32.partialorder %v1688, 0.0
  %vm1836 = vcmp.ge.f32.partialorder %v1693, 0.0
  %vm1837 = vcmp.ge.f32.partialorder %v1696, 0.0
  %vm1838 = vcmp.ge.f32.partialorder %v1701, 0.0
  %v1839 = vmul.f32 %v1173, 0.01
  %v1840 = vmul.f32 %v1176, 0.01
  %v1841 = vmul.f32 %v1181, 0.01
  %v1842 = vmul.f32 %v1184, 0.01
  %v1843 = vmul.f32 %v1189, 0.01
  %v1844 = vmul.f32 %v1192, 0.01
  %v1845 = vmul.f32 %v1197, 0.01
  %v1846 = vmul.f32 %v1200, 0.01
  %v1847 = vmul.f32 %v1205, 0.01
  %v1848 = vmul.f32 %v1208, 0.01
  %v1849 = vmul.f32 %v1213, 0.01
  %v1850 = vmul.f32 %v1216, 0.01
  %v1851 = vmul.f32 %v1221, 0.01
  %v1852 = vmul.f32 %v1224, 0.01
  %v1853 = vmul.f32 %v1229, 0.01
  %v1854 = vmul.f32 %v1232, 0.01
  %v1855 = vmul.f32 %v1237, 0.01
  %v1856 = vmul.f32 %v1240, 0.01
  %v1857 = vmul.f32 %v1245, 0.01
  %v1858 = vmul.f32 %v1248, 0.01
  %v1859 = vmul.f32 %v1253, 0.01
  %v1860 = vmul.f32 %v1256, 0.01
  %v1861 = vmul.f32 %v1261, 0.01
  %v1862 = vmul.f32 %v1264, 0.01
  %v1863 = vmul.f32 %v1269, 0.01
  %v1864 = vmul.f32 %v1272, 0.01
  %v1865 = vmul.f32 %v1277, 0.01
  %v1866 = vmul.f32 %v1280, 0.01
  %v1867 = vmul.f32 %v1285, 0.01
  %v1868 = vmul.f32 %v1288, 0.01
  %v1869 = vmul.f32 %v1293, 0.01
  %v1870 = vmul.f32 %v1296, 0.01
  %v1871 = vmul.f32 %v1301, 0.01
  %v1872 = vmul.f32 %v1304, 0.01
  %v1873 = vmul.f32 %v1309, 0.01
  %v1874 = vmul.f32 %v1312, 0.01
  %v1875 = vmul.f32 %v1317, 0.01
  %v1876 = vmul.f32 %v1320, 0.01
  %v1877 = vmul.f32 %v1325, 0.01
  %v1878 = vmul.f32 %v1328, 0.01
  %v1879 = vmul.f32 %v1333, 0.01
  %v1880 = vmul.f32 %v1336, 0.01
  %v1881 = vmul.f32 %v1341, 0.01
  %v1882 = vmul.f32 %v1344, 0.01
  %v1883 = vmul.f32 %v1349, 0.01
  %v1884 = vmul.f32 %v1352, 0.01
  %v1885 = vmul.f32 %v1357, 0.01
  %v1886 = vmul.f32 %v1360, 0.01
  %v1887 = vmul.f32 %v1365, 0.01
  %v1888 = vmul.f32 %v1368, 0.01
  %v1889 = vmul.f32 %v1373, 0.01
  %v1890 = vmul.f32 %v1376, 0.01
  %v1891 = vmul.f32 %v1381, 0.01
  %v1892 = vmul.f32 %v1384, 0.01
  %v1893 = vmul.f32 %v1389, 0.01
  %v1894 = vmul.f32 %v1392, 0.01
  %v1895 = vmul.f32 %v1397, 0.01
  %v1896 = vmul.f32 %v1400, 0.01
  %v1897 = vmul.f32 %v1405, 0.01
  %v1898 = vmul.f32 %v1408, 0.01
  %v1899 = vmul.f32 %v1413, 0.01
  %v1900 = vmul.f32 %v1416, 0.01
  %v1901 = vmul.f32 %v1421, 0.01
  %v1902 = vmul.f32 %v1424, 0.01
  %v1903 = vmul.f32 %v1429, 0.01
  %v1904 = vmul.f32 %v1432, 0.01
  %v1905 = vmul.f32 %v1437, 0.01
  %v1906 = vmul.f32 %v1440, 0.01
  %v1907 = vmul.f32 %v1445, 0.01
  %v1908 = vmul.f32 %v1448, 0.01
  %v1909 = vmul.f32 %v1453, 0.01
  %v1910 = vmul.f32 %v1456, 0.01
  %v1911 = vmul.f32 %v1461, 0.01
  %v1912 = vmul.f32 %v1464, 0.01
  %v1913 = vmul.f32 %v1469, 0.01
  %v1914 = vmul.f32 %v1472, 0.01
  %v1915 = vmul.f32 %v1477, 0.01
  %v1916 = vmul.f32 %v1480, 0.01
  %v1917 = vmul.f32 %v1485, 0.01
  %v1918 = vmul.f32 %v1488, 0.01
  %v1919 = vmul.f32 %v1493, 0.01
  %v1920 = vmul.f32 %v1496, 0.01
  %v1921 = vmul.f32 %v1501, 0.01
  %v1922 = vmul.f32 %v1504, 0.01
  %v1923 = vmul.f32 %v1509, 0.01
  %v1924 = vmul.f32 %v1512, 0.01
  %v1925 = vmul.f32 %v1517, 0.01
  %v1926 = vmul.f32 %v1520, 0.01
  %v1927 = vmul.f32 %v1525, 0.01
  %v1928 = vmul.f32 %v1528, 0.01
  %v1929 = vmul.f32 %v1533, 0.01
  %v1930 = vmul.f32 %v1536, 0.01
  %v1931 = vmul.f32 %v1541, 0.01
  %v1932 = vmul.f32 %v1544, 0.01
  %v1933 = vmul.f32 %v1549, 0.01
  %v1934 = vmul.f32 %v1552, 0.01
  %v1935 = vmul.f32 %v1557, 0.01
  %v1936 = vmul.f32 %v1560, 0.01
  %v1937 = vmul.f32 %v1565, 0.01
  %v1938 = vmul.f32 %v1568, 0.01
  %v1939 = vmul.f32 %v1573, 0.01
  %v1940 = vmul.f32 %v1576, 0.01
  %v1941 = vmul.f32 %v1581, 0.01
  %v1942 = vmul.f32 %v1584, 0.01
  %v1943 = vmul.f32 %v1589, 0.01
  %v1944 = vmul.f32 %v1592, 0.01
  %v1945 = vmul.f32 %v1597, 0.01
  %v1946 = vmul.f32 %v1600, 0.01
  %v1947 = vmul.f32 %v1605, 0.01
  %v1948 = vmul.f32 %v1608, 0.01
  %v1949 = vmul.f32 %v1613, 0.01
  %v1950 = vmul.f32 %v1616, 0.01
  %v1951 = vmul.f32 %v1621, 0.01
  %v1952 = vmul.f32 %v1624, 0.01
  %v1953 = vmul.f32 %v1629, 0.01
  %v1954 = vmul.f32 %v1632, 0.01
  %v1955 = vmul.f32 %v1637, 0.01
  %v1956 = vmul.f32 %v1640, 0.01
  %v1957 = vmul.f32 %v1645, 0.01
  %v1958 = vmul.f32 %v1648, 0.01
  %v1959 = vmul.f32 %v1653, 0.01
  %v1960 = vmul.f32 %v1656, 0.01
  %v1961 = vmul.f32 %v1661, 0.01
  %v1962 = vmul.f32 %v1664, 0.01
  %v1963 = vmul.f32 %v1669, 0.01
  %v1964 = vmul.f32 %v1672, 0.01
  %v1965 = vmul.f32 %v1677, 0.01
  %v1966 = vmul.f32 %v1680, 0.01
  %v1967 = vmul.f32 %v1685, 0.01
  %v1968 = vmul.f32 %v1688, 0.01
  %v1969 = vmul.f32 %v1693, 0.01
  %v1970 = vmul.f32 %v1696, 0.01
  %v1971 = vmul.f32 %v1701, 0.01
  %v1972 = vsel %vm1706, %v1173, %v1839
  %v1973 = vsel %vm1707, %v1176, %v1840
  %v1974 = vsel %vm1708, %v1181, %v1841
  %v1975 = vsel %vm1709, %v1184, %v1842
  %v1976 = vsel %vm1710, %v1189, %v1843
  %v1977 = vsel %vm1711, %v1192, %v1844
  %v1978 = vsel %vm1712, %v1197, %v1845
  %v1979 = vsel %vm1713, %v1200, %v1846
  %v1980 = vsel %vm1714, %v1205, %v1847
  %v1981 = vsel %vm1715, %v1208, %v1848
  %v1982 = vsel %vm1716, %v1213, %v1849
  %v1983 = vsel %vm1717, %v1216, %v1850
  %v1984 = vsel %vm1718, %v1221, %v1851
  %v1985 = vsel %vm1719, %v1224, %v1852
  %v1986 = vsel %vm1720, %v1229, %v1853
  %v1987 = vsel %vm1721, %v1232, %v1854
  %v1988 = vsel %vm1722, %v1237, %v1855
  %v1989 = vsel %vm1723, %v1240, %v1856
  %v1990 = vsel %vm1724, %v1245, %v1857
  %v1991 = vsel %vm1725, %v1248, %v1858
  %v1992 = vsel %vm1726, %v1253, %v1859
  %v1993 = vsel %vm1727, %v1256, %v1860
  %v1994 = vsel %vm1728, %v1261, %v1861
  %v1995 = vsel %vm1729, %v1264, %v1862
  %v1996 = vsel %vm1730, %v1269, %v1863
  %v1997 = vsel %vm1731, %v1272, %v1864
  %v1998 = vsel %vm1732, %v1277, %v1865
  %v1999 = vsel %vm1733, %v1280, %v1866
  %v2000 = vsel %vm1734, %v1285, %v1867
  %v2001 = vsel %vm1735, %v1288, %v1868
  %v2002 = vsel %vm1736, %v1293, %v1869
  %v2003 = vsel %vm1737, %v1296, %v1870
  %v2004 = vsel %vm1738, %v1301, %v1871
  %v2005 = vsel %vm1739, %v1304, %v1872
  %v2006 = vsel %vm1740, %v1309, %v1873
  %v2007 = vsel %vm1741, %v1312, %v1874
  %v2008 = vsel %vm1742, %v1317, %v1875
  %v2009 = vsel %vm1743, %v1320, %v1876
  %v2010 = vsel %vm1744, %v1325, %v1877
  %v2011 = vsel %vm1745, %v1328, %v1878
  %v2012 = vsel %vm1746, %v1333, %v1879
  %v2013 = vsel %vm1747, %v1336, %v1880
  %v2014 = vsel %vm1748, %v1341, %v1881
  %v2015 = vsel %vm1749, %v1344, %v1882
  %v2016 = vsel %vm1750, %v1349, %v1883
  %v2017 = vsel %vm1751, %v1352, %v1884
  %v2018 = vsel %vm1752, %v1357, %v1885
  %v2019 = vsel %vm1753, %v1360, %v1886
  %v2020 = vsel %vm1754, %v1365, %v1887
  %v2021 = vsel %vm1755, %v1368, %v1888
  %v2022 = vsel %vm1756, %v1373, %v1889
  %v2023 = vsel %vm1757, %v1376, %v1890
  %v2024 = vsel %vm1758, %v1381, %v1891
  %v2025 = vsel %vm1759, %v1384, %v1892
  %v2026 = vsel %vm1760, %v1389, %v1893
  %v2027 = vsel %vm1761, %v1392, %v1894
  %v2028 = vsel %vm1762, %v1397, %v1895
  %v2029 = vsel %vm1763, %v1400, %v1896
  %v2030 = vsel %vm1764, %v1405, %v1897
  %v2031 = vsel %vm1765, %v1408, %v1898
  %v2032 = vsel %vm1766, %v1413, %v1899
  %v2033 = vsel %vm1767, %v1416, %v1900
  %v2034 = vsel %vm1768, %v1421, %v1901
  %v2035 = vsel %vm1769, %v1424, %v1902
  %v2036 = vsel %vm1770, %v1429, %v1903
  %v2037 = vsel %vm1771, %v1432, %v1904
  %v2038 = vsel %vm1772, %v1437, %v1905
  %v2039 = vsel %vm1773, %v1440, %v1906
  %v2040 = vsel %vm1774, %v1445, %v1907
  %v2041 = vsel %vm1775, %v1448, %v1908
  %v2042 = vsel %vm1776, %v1453, %v1909
  %v2043 = vsel %vm1777, %v1456, %v1910
  %v2044 = vsel %vm1778, %v1461, %v1911
  %v2045 = vsel %vm1779, %v1464, %v1912
  %v2046 = vsel %vm1780, %v1469, %v1913
  %v2047 = vsel %vm1781, %v1472, %v1914
  %v2048 = vsel %vm1782, %v1477, %v1915
  %v2049 = vsel %vm1783, %v1480, %v1916
  %v2050 = vsel %vm1784, %v1485, %v1917
  %v2051 = vsel %vm1785, %v1488, %v1918
  %v2052 = vsel %vm1786, %v1493, %v1919
  %v2053 = vsel %vm1787, %v1496, %v1920
  %v2054 = vsel %vm1788, %v1501, %v1921
  %v2055 = vsel %vm1789, %v1504, %v1922
  %v2056 = vsel %vm1790, %v1509, %v1923
  %v2057 = vsel %vm1791, %v1512, %v1924
  %v2058 = vsel %vm1792, %v1517, %v1925
  %v2059 = vsel %vm1793, %v1520, %v1926
  %v2060 = vsel %vm1794, %v1525, %v1927
  %v2061 = vsel %vm1795, %v1528, %v1928
  %v2062 = vsel %vm1796, %v1533, %v1929
  %v2063 = vsel %vm1797, %v1536, %v1930
  %v2064 = vsel %vm1798, %v1541, %v1931
  %v2065 = vsel %vm1799, %v1544, %v1932
  %v2066 = vsel %vm1800, %v1549, %v1933
  %v2067 = vsel %vm1801, %v1552, %v1934
  %v2068 = vsel %vm1802, %v1557, %v1935
  %v2069 = vsel %vm1803, %v1560, %v1936
  %v2070 = vsel %vm1804, %v1565, %v1937
  %v2071 = vsel %vm1805, %v1568, %v1938
  %v2072 = vsel %vm1806, %v1573, %v1939
  %v2073 = vsel %vm1807, %v1576, %v1940
  %v2074 = vsel %vm1808, %v1581, %v1941
  %v2075 = vsel %vm1809, %v1584, %v1942
  %v2076 = vsel %vm1810, %v1589, %v1943
  %v2077 = vsel %vm1811, %v1592, %v1944
  %v2078 = vsel %vm1812, %v1597, %v1945
  %v2079 = vsel %vm1813, %v1600, %v1946
  %v2080 = vsel %vm1814, %v1605, %v1947
  %v2081 = vsel %vm1815, %v1608, %v1948
  %v2082 = vsel %vm1816, %v1613, %v1949
  %v2083 = vsel %vm1817, %v1616, %v1950
  %v2084 = vsel %vm1818, %v1621, %v1951
  %v2085 = vsel %vm1819, %v1624, %v1952
  %v2086 = vsel %vm1820, %v1629, %v1953
  %v2087 = vsel %vm1821, %v1632, %v1954
  %v2088 = vsel %vm1822, %v1637, %v1955
  %v2089 = vsel %vm1823, %v1640, %v1956
  %v2090 = vsel %vm1824, %v1645, %v1957
  %v2091 = vsel %vm1825, %v1648, %v1958
  %v2092 = vsel %vm1826, %v1653, %v1959
  %v2093 = vsel %vm1827, %v1656, %v1960
  %v2094 = vsel %vm1828, %v1661, %v1961
  %v2095 = vsel %vm1829, %v1664, %v1962
  %v2096 = vsel %vm1830, %v1669, %v1963
  %v2097 = vsel %vm1831, %v1672, %v1964
  %v2098 = vsel %vm1832, %v1677, %v1965
  %v2099 = vsel %vm1833, %v1680, %v1966
  %v2100 = vsel %vm1834, %v1685, %v1967
  %v2101 = vsel %vm1835, %v1688, %v1968
  %v2102 = vsel %vm1836, %v1693, %v1969
  %v2103 = vsel %vm1837, %v1696, %v1970
  %v2104 = vsel %vm1838, %v1701, %v1971
  %v2105 = vld [vmem:[%s2] sm:$0xff]
  %v2106 = vld [vmem:[%s2 + $0x8] sm:$0xff]
  %v2107 = vld [vmem:[%s7] sm:$0xff]
  %v2108 = vld [vmem:[%s7 + $0x8] sm:$0xff]
  %v2109 = vld [vmem:[%s7 + $0x10] sm:$0xff]
  %v2110 = vld [vmem:[%s7 + $0x18] sm:$0xff]
  %v2111 = vld [vmem:[%s7 + $0x20] sm:$0xff]
  %v2112 = vld [vmem:[%s7 + $0x28] sm:$0xff]
  %v2113 = vld [vmem:[%s7 + $0x30] sm:$0xff]
  %v2114 = vld [vmem:[%s7 + $0x38] sm:$0xff]
  %v2115 = vld [vmem:[%s7 + $0x40] sm:$0xff]
  %v2116 = vld [vmem:[%s7 + $0x48] sm:$0xff]
  %v2117 = vld [vmem:[%s7 + $0x50] sm:$0xff]
  %v2118 = vld [vmem:[%s7 + $0x58] sm:$0xff]
  %v2119 = vld [vmem:[%s7 + $0x60] sm:$0xff]
  %v2120 = vld [vmem:[%s7 + $0x68] sm:$0xff]
  %v2121 = vld [vmem:[%s7 + $0x70] sm:$0xff]
  %v2122 = vld [vmem:[%s7 + $0x78] sm:$0xff]
  %v2123 = vld [vmem:[%s7 + $0x80] sm:$0xff]
  %v2124 = vld [vmem:[%s7 + $0x88] sm:$0xff]
  %v2125 = vld [vmem:[%s7 + $0x90] sm:$0xff]
  %v2126 = vld [vmem:[%s7 + $0x98] sm:$0xff]
  %v2127 = vld [vmem:[%s7 + $0xa0] sm:$0xff]
  %v2128 = vld [vmem:[%s7 + $0xa8] sm:$0xff]
  %v2129 = vld [vmem:[%s7 + $0xb0] sm:$0xff]
  %v2130 = vld [vmem:[%s7 + $0xb8] sm:$0xff]
  %v2131 = vld [vmem:[%s7 + $0xc0] sm:$0xff]
  %v2132 = vld [vmem:[%s7 + $0xc8] sm:$0xff]
  %v2133 = vld [vmem:[%s7 + $0xd0] sm:$0xff]
  %v2134 = vld [vmem:[%s7 + $0xd8] sm:$0xff]
  %v2135 = vld [vmem:[%s7 + $0xe0] sm:$0xff]
  %v2136 = vld [vmem:[%s7 + $0xe8] sm:$0xff]
  %v2137 = vld [vmem:[%s7 + $0xf0] sm:$0xff]
  %v2138 = vld [vmem:[%s7 + $0xf8] sm:$0xff]
  %v2139 = vld [vmem:[%s7 + $0x100] sm:$0xff]
  %v2140 = vld [vmem:[%s7 + $0x108] sm:$0xff]
  %v2141 = vld [vmem:[%s7 + $0x110] sm:$0xff]
  %v2142 = vld [vmem:[%s7 + $0x118] sm:$0xff]
  %v2143 = vld [vmem:[%s7 + $0x120] sm:$0xff]
  %v2144 = vld [vmem:[%s7 + $0x128] sm:$0xff]
  %v2145 = vld [vmem:[%s7 + $0x130] sm:$0xff]
  %v2146 = vld [vmem:[%s7 + $0x138] sm:$0xff]
  %v2147 = vld [vmem:[%s7 + $0x140] sm:$0xff]
  %v2148 = vld [vmem:[%s7 + $0x148] sm:$0xff]
  %v2149 = vld [vmem:[%s7 + $0x150] sm:$0xff]
  %v2150 = vld [vmem:[%s7 + $0x158] sm:$0xff]
  %v2151 = vld [vmem:[%s7 + $0x160] sm:$0xff]
  %v2152 = vld [vmem:[%s7 + $0x168] sm:$0xff]
  %v2153 = vld [vmem:[%s7 + $0x170] sm:$0xff]
  %v2154 = vld [vmem:[%s7 + $0x178] sm:$0xff]
  %v2155 = vld [vmem:[%s7 + $0x180] sm:$0xff]
  %v2156 = vld [vmem:[%s7 + $0x188] sm:$0xff]
  %v2157 = vld [vmem:[%s7 + $0x190] sm:$0xff]
  %v2158 = vld [vmem:[%s7 + $0x198] sm:$0xff]
  %v2159 = vld [vmem:[%s7 + $0x1a0] sm:$0xff]
  %v2160 = vld [vmem:[%s7 + $0x1a8] sm:$0xff]
  %v2161 = vld [vmem:[%s7 + $0x1b0] sm:$0xff]
  %v2162 = vld [vmem:[%s7 + $0x1b8] sm:$0xff]
  %v2163 = vld [vmem:[%s7 + $0x1c0] sm:$0xff]
  %v2164 = vld [vmem:[%s7 + $0x1c8] sm:$0xff]
  %v2165 = vld [vmem:[%s7 + $0x1d0] sm:$0xff]
  %v2166 = vld [vmem:[%s7 + $0x1d8] sm:$0xff]
  %v2167 = vld [vmem:[%s7 + $0x1e0] sm:$0xff]
  %v2168 = vld [vmem:[%s7 + $0x1e8] sm:$0xff]
  %v2169 = vld [vmem:[%s7 + $0x1f0] sm:$0xff]
  %v2170 = vld [vmem:[%s7 + $0x1f8] sm:$0xff]
  %v2173 = vunpack.c.l.b16 %v2105
  %v2174 = vunpack.c.h.b16 %v2105
  %v2175 = vunpack.c.l.b16 %v2106
  %v2176 = vunpack.c.h.b16 %v2106
  %v2177 = vpack.c.b16 %v2175, %v2173
  %v2178 = vpack.c.b16 %v2176, %v2174
  %v2245 = vunpack.c.l.b16 %v2107
  %v2246 = vunpack.c.h.b16 %v2107
  %v2247 = vunpack.c.l.b16 %v2108
  %v2248 = vunpack.c.h.b16 %v2108
  %v2249 = vunpack.c.l.b16 %v2109
  %v2250 = vunpack.c.h.b16 %v2109
  %v2251 = vunpack.c.l.b16 %v2110
  %v2252 = vunpack.c.h.b16 %v2110
  %v2253 = vunpack.c.l.b16 %v2111
  %v2254 = vunpack.c.h.b16 %v2111
  %v2255 = vunpack.c.l.b16 %v2112
  %v2256 = vunpack.c.h.b16 %v2112
  %v2257 = vunpack.c.l.b16 %v2113
  %v2258 = vunpack.c.h.b16 %v2113
  %v2259 = vunpack.c.l.b16 %v2114
  %v2260 = vunpack.c.h.b16 %v2114
  %v2261 = vunpack.c.l.b16 %v2115
  %v2262 = vunpack.c.h.b16 %v2115
  %v2263 = vunpack.c.l.b16 %v2116
  %v2264 = vunpack.c.h.b16 %v2116
  %v2265 = vunpack.c.l.b16 %v2117
  %v2266 = vunpack.c.h.b16 %v2117
  %v2267 = vunpack.c.l.b16 %v2118
  %v2268 = vunpack.c.h.b16 %v2118
  %v2269 = vunpack.c.l.b16 %v2119
  %v2270 = vunpack.c.h.b16 %v2119
  %v2271 = vunpack.c.l.b16 %v2120
  %v2272 = vunpack.c.h.b16 %v2120
  %v2273 = vunpack.c.l.b16 %v2121
  %v2274 = vunpack.c.h.b16 %v2121
  %v2275 = vunpack.c.l.b16 %v2122
  %v2276 = vunpack.c.h.b16 %v2122
  %v2277 = vunpack.c.l.b16 %v2123
  %v2278 = vunpack.c.h.b16 %v2123
  %v2279 = vunpack.c.l.b16 %v2124
  %v2280 = vunpack.c.h.b16 %v2124
  %v2281 = vunpack.c.l.b16 %v2125
  %v2282 = vunpack.c.h.b16 %v2125
  %v2283 = vunpack.c.l.b16 %v2126
  %v2284 = vunpack.c.h.b16 %v2126
  %v2285 = vunpack.c.l.b16 %v2127
  %v2286 = vunpack.c.h.b16 %v2127
  %v2287 = vunpack.c.l.b16 %v2128
  %v2288 = vunpack.c.h.b16 %v2128
  %v2289 = vunpack.c.l.b16 %v2129
  %v2290 = vunpack.c.h.b16 %v2129
  %v2291 = vunpack.c.l.b16 %v2130
  %v2292 = vunpack.c.h.b16 %v2130
  %v2293 = vunpack.c.l.b16 %v2131
  %v2294 = vunpack.c.h.b16 %v2131
  %v2295 = vunpack.c.l.b16 %v2132
  %v2296 = vunpack.c.h.b16 %v2132
  %v2297 = vunpack.c.l.b16 %v2133
  %v2298 = vunpack.c.h.b16 %v2133
  %v2299 = vunpack.c.l.b16 %v2134
  %v2300 = vunpack.c.h.b16 %v2134
  %v2301 = vunpack.c.l.b16 %v2135
  %v2302 = vunpack.c.h.b16 %v2135
  %v2303 = vunpack.c.l.b16 %v2136
  %v2304 = vunpack.c.h.b16 %v2136
  %v2305 = vunpack.c.l.b16 %v2137
  %v2306 = vunpack.c.h.b16 %v2137
  %v2307 = vunpack.c.l.b16 %v2138
  %v2308 = vunpack.c.h.b16 %v2138
  %v2309 = vunpack.c.l.b16 %v2139
  %v2310 = vunpack.c.h.b16 %v2139
  %v2311 = vunpack.c.l.b16 %v2140
  %v2312 = vunpack.c.h.b16 %v2140
  %v2313 = vunpack.c.l.b16 %v2141
  %v2314 = vunpack.c.h.b16 %v2141
  %v2315 = vunpack.c.l.b16 %v2142
  %v2316 = vunpack.c.h.b16 %v2142
  %v2317 = vunpack.c.l.b16 %v2143
  %v2318 = vunpack.c.h.b16 %v2143
  %v2319 = vunpack.c.l.b16 %v2144
  %v2320 = vunpack.c.h.b16 %v2144
  %v2321 = vunpack.c.l.b16 %v2145
  %v2322 = vunpack.c.h.b16 %v2145
  %v2323 = vunpack.c.l.b16 %v2146
  %v2324 = vunpack.c.h.b16 %v2146
  %v2325 = vunpack.c.l.b16 %v2147
  %v2326 = vunpack.c.h.b16 %v2147
  %v2327 = vunpack.c.l.b16 %v2148
  %v2328 = vunpack.c.h.b16 %v2148
  %v2329 = vunpack.c.l.b16 %v2149
  %v2330 = vunpack.c.h.b16 %v2149
  %v2331 = vunpack.c.l.b16 %v2150
  %v2332 = vunpack.c.h.b16 %v2150
  %v2333 = vunpack.c.l.b16 %v2151
  %v2334 = vunpack.c.h.b16 %v2151
  %v2335 = vunpack.c.l.b16 %v2152
  %v2336 = vunpack.c.h.b16 %v2152
  %v2337 = vunpack.c.l.b16 %v2153
  %v2338 = vunpack.c.h.b16 %v2153
  %v2339 = vunpack.c.l.b16 %v2154
  %v2340 = vunpack.c.h.b16 %v2154
  %v2341 = vunpack.c.l.b16 %v2155
  %v2342 = vunpack.c.h.b16 %v2155
  %v2343 = vunpack.c.l.b16 %v2156
  %v2344 = vunpack.c.h.b16 %v2156
  %v2345 = vunpack.c.l.b16 %v2157
  %v2346 = vunpack.c.h.b16 %v2157
  %v2347 = vunpack.c.l.b16 %v2158
  %v2348 = vunpack.c.h.b16 %v2158
  %v2349 = vunpack.c.l.b16 %v2159
  %v2350 = vunpack.c.h.b16 %v2159
  %v2351 = vunpack.c.l.b16 %v2160
  %v2352 = vunpack.c.h.b16 %v2160
  %v2353 = vunpack.c.l.b16 %v2161
  %v2354 = vunpack.c.h.b16 %v2161
  %v2355 = vunpack.c.l.b16 %v2162
  %v2356 = vunpack.c.h.b16 %v2162
  %v2357 = vunpack.c.l.b16 %v2163
  %v2358 = vunpack.c.h.b16 %v2163
  %v2359 = vunpack.c.l.b16 %v2164
  %v2360 = vunpack.c.h.b16 %v2164
  %v2361 = vunpack.c.l.b16 %v2165
  %v2362 = vunpack.c.h.b16 %v2165
  %v2363 = vunpack.c.l.b16 %v2166
  %v2364 = vunpack.c.h.b16 %v2166
  %v2365 = vunpack.c.l.b16 %v2167
  %v2366 = vunpack.c.h.b16 %v2167
  %v2367 = vunpack.c.l.b16 %v2168
  %v2368 = vunpack.c.h.b16 %v2168
  %v2369 = vunpack.c.l.b16 %v2169
  %v2370 = vunpack.c.h.b16 %v2169
  %v2371 = vunpack.c.l.b16 %v2170
  %v2372 = vunpack.c.h.b16 %v2170
  %v2373 = vpack.c.b16 %v2249, %v2245
  %v2374 = vpack.c.b16 %v2250, %v2246
  %v2375 = vpack.c.b16 %v2251, %v2247
  %v2376 = vpack.c.b16 %v2252, %v2248
  %v2377 = vpack.c.b16 %v2257, %v2253
  %v2378 = vpack.c.b16 %v2258, %v2254
  %v2379 = vpack.c.b16 %v2259, %v2255
  %v2380 = vpack.c.b16 %v2260, %v2256
  %v2381 = vpack.c.b16 %v2265, %v2261
  %v2382 = vpack.c.b16 %v2266, %v2262
  %v2383 = vpack.c.b16 %v2267, %v2263
  %v2384 = vpack.c.b16 %v2268, %v2264
  %v2385 = vpack.c.b16 %v2273, %v2269
  %v2386 = vpack.c.b16 %v2274, %v2270
  %v2387 = vpack.c.b16 %v2275, %v2271
  %v2388 = vpack.c.b16 %v2276, %v2272
  %v2389 = vpack.c.b16 %v2281, %v2277
  %v2390 = vpack.c.b16 %v2282, %v2278
  %v2391 = vpack.c.b16 %v2283, %v2279
  %v2392 = vpack.c.b16 %v2284, %v2280
  %v2393 = vpack.c.b16 %v2289, %v2285
  %v2394 = vpack.c.b16 %v2290, %v2286
  %v2395 = vpack.c.b16 %v2291, %v2287
  %v2396 = vpack.c.b16 %v2292, %v2288
  %v2397 = vpack.c.b16 %v2297, %v2293
  %v2398 = vpack.c.b16 %v2298, %v2294
  %v2399 = vpack.c.b16 %v2299, %v2295
  %v2400 = vpack.c.b16 %v2300, %v2296
  %v2401 = vpack.c.b16 %v2305, %v2301
  %v2402 = vpack.c.b16 %v2306, %v2302
  %v2403 = vpack.c.b16 %v2307, %v2303
  %v2404 = vpack.c.b16 %v2308, %v2304
  %v2405 = vpack.c.b16 %v2313, %v2309
  %v2406 = vpack.c.b16 %v2314, %v2310
  %v2407 = vpack.c.b16 %v2315, %v2311
  %v2408 = vpack.c.b16 %v2316, %v2312
  %v2409 = vpack.c.b16 %v2321, %v2317
  %v2410 = vpack.c.b16 %v2322, %v2318
  %v2411 = vpack.c.b16 %v2323, %v2319
  %v2412 = vpack.c.b16 %v2324, %v2320
  %v2413 = vpack.c.b16 %v2329, %v2325
  %v2414 = vpack.c.b16 %v2330, %v2326
  %v2415 = vpack.c.b16 %v2331, %v2327
  %v2416 = vpack.c.b16 %v2332, %v2328
  %v2417 = vpack.c.b16 %v2337, %v2333
  %v2418 = vpack.c.b16 %v2338, %v2334
  %v2419 = vpack.c.b16 %v2339, %v2335
  %v2420 = vpack.c.b16 %v2340, %v2336
  %v2421 = vpack.c.b16 %v2345, %v2341
  %v2422 = vpack.c.b16 %v2346, %v2342
  %v2423 = vpack.c.b16 %v2347, %v2343
  %v2424 = vpack.c.b16 %v2348, %v2344
  %v2425 = vpack.c.b16 %v2353, %v2349
  %v2426 = vpack.c.b16 %v2354, %v2350
  %v2427 = vpack.c.b16 %v2355, %v2351
  %v2428 = vpack.c.b16 %v2356, %v2352
  %v2429 = vpack.c.b16 %v2361, %v2357
  %v2430 = vpack.c.b16 %v2362, %v2358
  %v2431 = vpack.c.b16 %v2363, %v2359
  %v2432 = vpack.c.b16 %v2364, %v2360
  %v2433 = vpack.c.b16 %v2369, %v2365
  %v2434 = vpack.c.b16 %v2370, %v2366
  %v2435 = vpack.c.b16 %v2371, %v2367
  %v2436 = vpack.c.b16 %v2372, %v2368
  %2501 = vmatprep.subr.bf16.mxu0 %v2402
  %2502 = vmatpush1.bf16.msra.mxu0 %v2401
  %2503 = vmatprep.subr.bf16.mxu0 %v2398
  %2504 = vmatpush1.bf16.msra.mxu0 %v2397
  %2505 = vmatprep.subr.bf16.mxu0 %v2394
  %2506 = vmatpush1.bf16.msra.mxu0 %v2393
  %2507 = vmatprep.subr.bf16.mxu0 %v2390
  %2508 = vmatpush1.bf16.msra.mxu0 %v2389
  %2509 = vmatprep.subr.bf16.mxu0 %v2386
  %2510 = vmatpush1.bf16.msra.mxu0 %v2385
  %2511 = vmatprep.subr.bf16.mxu0 %v2382
  %2512 = vmatpush1.bf16.msra.mxu0 %v2381
  %2513 = vmatprep.subr.bf16.mxu0 %v2378
  %2514 = vmatpush1.bf16.msra.mxu0 %v2377
  %2515 = vmatprep.subr.bf16.mxu0 %v2374
  %2516 = vmatpush1.bf16.msra.mxu0 %v2373
  %2517 = vmatprep.subr.bf16.mxu0 %v2434
  %2518 = vmatpush2.bf16.msra.mxu0 %v2433
  %2519 = vmatprep.subr.bf16.mxu0 %v2430
  %2520 = vmatpush2.bf16.msra.mxu0 %v2429
  %2521 = vmatprep.subr.bf16.mxu0 %v2426
  %2522 = vmatpush2.bf16.msra.mxu0 %v2425
  %2523 = vmatprep.subr.bf16.mxu0 %v2422
  %2524 = vmatpush2.bf16.msra.mxu0 %v2421
  %2525 = vmatprep.subr.bf16.mxu0 %v2418
  %2526 = vmatpush2.bf16.msra.mxu0 %v2417
  %2527 = vmatprep.subr.bf16.mxu0 %v2414
  %2528 = vmatpush2.bf16.msra.mxu0 %v2413
  %2529 = vmatprep.subr.bf16.mxu0 %v2410
  %2530 = vmatpush2.bf16.msra.mxu0 %v2409
  %2531 = vmatprep.subr.bf16.mxu0 %v2406
  %2532 = vmatpush2.bf16.msra.mxu0 %v2405
  %2533 = vmatprep.mubr.bf16.mxu0 %v2178
  %2534 = vmatmul.mubr.bf16.gmra.mxu0 %v2177
  %v2535 = vpop.f32.mrf.mxu0
  %v2536 = vadd.f32 0.0, %v2535
  %v2537 = vpop.f32.mrf.mxu0
  %v2538 = vadd.f32 0.0, %v2537
  %v2539 = vpop.f32.mrf.mxu0
  %v2540 = vadd.f32 0.0, %v2539
  %v2541 = vpop.f32.mrf.mxu0
  %v2542 = vadd.f32 0.0, %v2541
  %2543 = vdwg.mxu0
  %2544 = vmatprep.subr.bf16.mxu0 %v2404
  %2545 = vmatpush1.bf16.msra.mxu0 %v2403
  %2546 = vmatprep.subr.bf16.mxu0 %v2400
  %2547 = vmatpush1.bf16.msra.mxu0 %v2399
  %2548 = vmatprep.subr.bf16.mxu0 %v2396
  %2549 = vmatpush1.bf16.msra.mxu0 %v2395
  %2550 = vmatprep.subr.bf16.mxu0 %v2392
  %2551 = vmatpush1.bf16.msra.mxu0 %v2391
  %2552 = vmatprep.subr.bf16.mxu0 %v2388
  %2553 = vmatpush1.bf16.msra.mxu0 %v2387
  %2554 = vmatprep.subr.bf16.mxu0 %v2384
  %2555 = vmatpush1.bf16.msra.mxu0 %v2383
  %2556 = vmatprep.subr.bf16.mxu0 %v2380
  %2557 = vmatpush1.bf16.msra.mxu0 %v2379
  %2558 = vmatprep.subr.bf16.mxu0 %v2376
  %2559 = vmatpush1.bf16.msra.mxu0 %v2375
  %2560 = vmatprep.subr.bf16.mxu0 %v2436
  %2561 = vmatpush2.bf16.msra.mxu0 %v2435
  %2562 = vmatprep.subr.bf16.mxu0 %v2432
  %2563 = vmatpush2.bf16.msra.mxu0 %v2431
  %2564 = vmatprep.subr.bf16.mxu0 %v2428
  %2565 = vmatpush2.bf16.msra.mxu0 %v2427
  %2566 = vmatprep.subr.bf16.mxu0 %v2424
  %2567 = vmatpush2.bf16.msra.mxu0 %v2423
  %2568 = vmatprep.subr.bf16.mxu0 %v2420
  %2569 = vmatpush2.bf16.msra.mxu0 %v2419
  %2570 = vmatprep.subr.bf16.mxu0 %v2416
  %2571 = vmatpush2.bf16.msra.mxu0 %v2415
  %2572 = vmatprep.subr.bf16.mxu0 %v2412
  %2573 = vmatpush2.bf16.msra.mxu0 %v2411
  %2574 = vmatprep.subr.bf16.mxu0 %v2408
  %2575 = vmatpush2.bf16.msra.mxu0 %v2407
  %2576 = vmatprep.mubr.bf16.mxu0 %v2178
  %2577 = vmatmul.mubr.bf16.gmra.mxu0 %v2177
  %v2578 = vpop.f32.mrf.mxu0
  %v2579 = vadd.f32 0.0, %v2578
  %v2580 = vpop.f32.mrf.mxu0
  %v2581 = vadd.f32 0.0, %v2580
  %v2582 = vpop.f32.mrf.mxu0
  %v2583 = vadd.f32 0.0, %v2582
  %v2584 = vpop.f32.mrf.mxu0
  %v2585 = vadd.f32 0.0, %v2584
  %2586 = vdwg.mxu0
  %v2587 = vmul.f32 %v2536, %v2536
  %v2588 = vmul.f32 %v2538, %v2538
  %v2589 = vmul.f32 %v2540, %v2540
  %v2590 = vmul.f32 %v2542, %v2542
  %v2591 = vmul.f32 %v2579, %v2579
  %v2592 = vmul.f32 %v2581, %v2581
  %v2593 = vmul.f32 %v2583, %v2583
  %v2594 = vmul.f32 %v2585, %v2585
  %v2595 = vadd.f32 %v2587, %v2591
  %v2596 = vadd.f32 %v2588, %v2592
  %v2597 = vadd.f32 %v2589, %v2593
  %v2598 = vadd.f32 %v2590, %v2594
  %v2599 = vrsqrt.pop %v2595
  %v2600 = vmul.f32 %v2595, %v2599
  %vm2601 = vcmp.eq.f32.partialorder %v2595, inf
  %v2602 = vsel %vm2601, %v2595, %v2600
  %vm2603 = vcmp.eq.f32.partialorder %v2595, 0.0
  %v2604 = vand.u32 %v2595, 2147483648
  %v2605 = vsel %vm2603, %v2604, %v2602
  %v2606 = vrsqrt.pop %v2596
  %v2607 = vmul.f32 %v2596, %v2606
  %vm2608 = vcmp.eq.f32.partialorder %v2596, inf
  %v2609 = vsel %vm2608, %v2596, %v2607
  %vm2610 = vcmp.eq.f32.partialorder %v2596, 0.0
  %v2611 = vand.u32 %v2596, 2147483648
  %v2612 = vsel %vm2610, %v2611, %v2609
  %v2613 = vrsqrt.pop %v2597
  %v2614 = vmul.f32 %v2597, %v2613
  %vm2615 = vcmp.eq.f32.partialorder %v2597, inf
  %v2616 = vsel %vm2615, %v2597, %v2614
  %vm2617 = vcmp.eq.f32.partialorder %v2597, 0.0
  %v2618 = vand.u32 %v2597, 2147483648
  %v2619 = vsel %vm2617, %v2618, %v2616
  %v2620 = vrsqrt.pop %v2598
  %v2621 = vmul.f32 %v2598, %v2620
  %vm2622 = vcmp.eq.f32.partialorder %v2598, inf
  %v2623 = vsel %vm2622, %v2598, %v2621
  %vm2624 = vcmp.eq.f32.partialorder %v2598, 0.0
  %v2625 = vand.u32 %v2598, 2147483648
  %v2626 = vsel %vm2624, %v2625, %v2623
  %v2627 = vlaneseq
  %v2628 = vshrl.u32 %v2627, 7
  %v2629 = vadd.s32 %v2628, 8
  %v2630 = vadd.s32 %v2628, 16
  %v2631 = vadd.s32 %v2628, 24
  %v2632 = vadd.s32 %v2628, 32
  %v2633 = vadd.s32 %v2628, 40
  %v2634 = vadd.s32 %v2628, 48
  %v2635 = vadd.s32 %v2628, 56
  %v2636 = vadd.s32 %v2628, 64
  %v2637 = vadd.s32 %v2628, 72
  %v2638 = vadd.s32 %v2628, 80
  %v2639 = vadd.s32 %v2628, 88
  %v2640 = vadd.s32 %v2628, 96
  %v2641 = vadd.s32 %v2628, 104
  %v2642 = vadd.s32 %v2628, 112
  %v2643 = vadd.s32 %v2628, 120
  %v2644 = vadd.s32 %v2628, 128
  %v2645 = vadd.s32 %v2628, 136
  %v2646 = vadd.s32 %v2628, 144
  %v2647 = vadd.s32 %v2628, 152
  %v2648 = vadd.s32 %v2628, 160
  %v2649 = vadd.s32 %v2628, 168
  %v2650 = vadd.s32 %v2628, 176
  %v2651 = vadd.s32 %v2628, 184
  %v2652 = vadd.s32 %v2628, 192
  %v2653 = vadd.s32 %v2628, 200
  %v2654 = vadd.s32 %v2628, 208
  %v2655 = vadd.s32 %v2628, 216
  %v2656 = vadd.s32 %v2628, 224
  %v2657 = vadd.s32 %v2628, 232
  %v2658 = vadd.s32 %v2628, 240
  %v2659 = vadd.s32 %v2628, 248
  %v2660 = vadd.s32 %v2628, 256
  %v2661 = vadd.s32 %v2628, 264
  %v2662 = vadd.s32 %v2628, 272
  %v2663 = vadd.s32 %v2628, 280
  %v2664 = vadd.s32 %v2628, 288
  %v2665 = vadd.s32 %v2628, 296
  %v2666 = vadd.s32 %v2628, 304
  %v2667 = vadd.s32 %v2628, 312
  %v2668 = vadd.s32 %v2628, 320
  %v2669 = vadd.s32 %v2628, 328
  %v2670 = vadd.s32 %v2628, 336
  %v2671 = vadd.s32 %v2628, 344
  %v2672 = vadd.s32 %v2628, 352
  %v2673 = vadd.s32 %v2628, 360
  %v2674 = vadd.s32 %v2628, 368
  %v2675 = vadd.s32 %v2628, 376
  %v2676 = vadd.s32 %v2628, 384
  %v2677 = vadd.s32 %v2628, 392
  %v2678 = vadd.s32 %v2628, 400
  %v2679 = vadd.s32 %v2628, 408
  %v2680 = vadd.s32 %v2628, 416
  %v2681 = vadd.s32 %v2628, 424
  %v2682 = vadd.s32 %v2628, 432
  %v2683 = vadd.s32 %v2628, 440
  %v2684 = vadd.s32 %v2628, 448
  %v2685 = vadd.s32 %v2628, 456
  %v2686 = vadd.s32 %v2628, 464
  %v2687 = vadd.s32 %v2628, 472
  %v2688 = vadd.s32 %v2628, 480
  %v2689 = vadd.s32 %v2628, 488
  %v2690 = vadd.s32 %v2628, 496
  %v2691 = vadd.s32 %v2628, 504
  %v2692 = vadd.s32 %v2628, 512
  %v2693 = vadd.s32 %v2628, 520
  %v2694 = vadd.s32 %v2628, 528
  %v2695 = vadd.s32 %v2628, 536
  %v2696 = vadd.s32 %v2628, 544
  %v2697 = vadd.s32 %v2628, 552
  %v2698 = vadd.s32 %v2628, 560
  %v2699 = vadd.s32 %v2628, 568
  %v2700 = vadd.s32 %v2628, 576
  %v2701 = vadd.s32 %v2628, 584
  %v2702 = vadd.s32 %v2628, 592
  %v2703 = vadd.s32 %v2628, 600
  %v2704 = vadd.s32 %v2628, 608
  %v2705 = vadd.s32 %v2628, 616
  %v2706 = vadd.s32 %v2628, 624
  %v2707 = vadd.s32 %v2628, 632
  %v2708 = vadd.s32 %v2628, 640
  %v2709 = vadd.s32 %v2628, 648
  %v2710 = vadd.s32 %v2628, 656
  %v2711 = vadd.s32 %v2628, 664
  %v2712 = vadd.s32 %v2628, 672
  %v2713 = vadd.s32 %v2628, 680
  %v2714 = vadd.s32 %v2628, 688
  %v2715 = vadd.s32 %v2628, 696
  %v2716 = vadd.s32 %v2628, 704
  %v2717 = vadd.s32 %v2628, 712
  %v2718 = vadd.s32 %v2628, 720
  %v2719 = vadd.s32 %v2628, 728
  %v2720 = vadd.s32 %v2628, 736
  %v2721 = vadd.s32 %v2628, 744
  %v2722 = vadd.s32 %v2628, 752
  %v2723 = vadd.s32 %v2628, 760
  %v2724 = vadd.s32 %v2628, 768
  %v2725 = vadd.s32 %v2628, 776
  %v2726 = vadd.s32 %v2628, 784
  %v2727 = vadd.s32 %v2628, 792
  %v2728 = vadd.s32 %v2628, 800
  %v2729 = vadd.s32 %v2628, 808
  %v2730 = vadd.s32 %v2628, 816
  %v2731 = vadd.s32 %v2628, 824
  %v2732 = vadd.s32 %v2628, 832
  %v2733 = vadd.s32 %v2628, 840
  %v2734 = vadd.s32 %v2628, 848
  %v2735 = vadd.s32 %v2628, 856
  %v2736 = vadd.s32 %v2628, 864
  %v2737 = vadd.s32 %v2628, 872
  %v2738 = vadd.s32 %v2628, 880
  %v2739 = vadd.s32 %v2628, 888
  %v2740 = vadd.s32 %v2628, 896
  %v2741 = vadd.s32 %v2628, 904
  %v2742 = vadd.s32 %v2628, 912
  %v2743 = vadd.s32 %v2628, 920
  %v2744 = vadd.s32 %v2628, 928
  %v2745 = vadd.s32 %v2628, 936
  %v2746 = vadd.s32 %v2628, 944
  %v2747 = vadd.s32 %v2628, 952
  %v2748 = vadd.s32 %v2628, 960
  %v2749 = vadd.s32 %v2628, 968
  %v2750 = vadd.s32 %v2628, 976
  %v2751 = vadd.s32 %v2628, 984
  %v2752 = vadd.s32 %v2628, 992
  %v2753 = vadd.s32 %v2628, 1000
  %v2754 = vadd.s32 %v2628, 1008
  %v2755 = vadd.s32 %v2628, 1016
  %v2756 = vadd.s32 %v2628, 1024
  %v2757 = vadd.s32 %v2628, 1032
  %v2758 = vadd.s32 %v2628, 1040
  %v2759 = vadd.s32 %v2628, 1048
  %v2760 = vadd.s32 %v2628, 1056
  %vm2761 = vcmp.ge.s32.totalorder %v2628, 0
  %vm2762 = vcmp.ge.s32.totalorder %v2629, 0
  %vm2763 = vcmp.ge.s32.totalorder %v2630, 0
  %vm2764 = vcmp.ge.s32.totalorder %v2631, 0
  %vm2765 = vcmp.ge.s32.totalorder %v2632, 0
  %vm2766 = vcmp.ge.s32.totalorder %v2633, 0
  %vm2767 = vcmp.ge.s32.totalorder %v2634, 0
  %vm2768 = vcmp.ge.s32.totalorder %v2635, 0
  %vm2769 = vcmp.ge.s32.totalorder %v2636, 0
  %vm2770 = vcmp.ge.s32.totalorder %v2637, 0
  %vm2771 = vcmp.ge.s32.totalorder %v2638, 0
  %vm2772 = vcmp.ge.s32.totalorder %v2639, 0
  %vm2773 = vcmp.ge.s32.totalorder %v2640, 0
  %vm2774 = vcmp.ge.s32.totalorder %v2641, 0
  %vm2775 = vcmp.ge.s32.totalorder %v2642, 0
  %vm2776 = vcmp.ge.s32.totalorder %v2643, 0
  %vm2777 = vcmp.ge.s32.totalorder %v2644, 0
  %vm2778 = vcmp.ge.s32.totalorder %v2645, 0
  %vm2779 = vcmp.ge.s32.totalorder %v2646, 0
  %vm2780 = vcmp.ge.s32.totalorder %v2647, 0
  %vm2781 = vcmp.ge.s32.totalorder %v2648, 0
  %vm2782 = vcmp.ge.s32.totalorder %v2649, 0
  %vm2783 = vcmp.ge.s32.totalorder %v2650, 0
  %vm2784 = vcmp.ge.s32.totalorder %v2651, 0
  %vm2785 = vcmp.ge.s32.totalorder %v2652, 0
  %vm2786 = vcmp.lt.s32.totalorder %v2628, 65
  %vm2787 = vcmp.lt.s32.totalorder %v2629, 65
  %vm2788 = vcmp.lt.s32.totalorder %v2630, 65
  %vm2789 = vcmp.lt.s32.totalorder %v2631, 65
  %vm2790 = vcmp.lt.s32.totalorder %v2632, 65
  %vm2791 = vcmp.lt.s32.totalorder %v2633, 65
  %vm2792 = vcmp.lt.s32.totalorder %v2634, 65
  %vm2793 = vcmp.lt.s32.totalorder %v2635, 65
  %vm2794 = vcmp.lt.s32.totalorder %v2636, 65
  %vm2795 = vcmp.lt.s32.totalorder %v2637, 65
  %vm2796 = vcmp.lt.s32.totalorder %v2638, 65
  %vm2797 = vcmp.lt.s32.totalorder %v2639, 65
  %vm2798 = vcmp.lt.s32.totalorder %v2640, 65
  %vm2799 = vcmp.lt.s32.totalorder %v2641, 65
  %vm2800 = vcmp.lt.s32.totalorder %v2642, 65
  %vm2801 = vcmp.lt.s32.totalorder %v2643, 65
  %vm2802 = vcmp.lt.s32.totalorder %v2644, 65
  %vm2803 = vcmp.lt.s32.totalorder %v2645, 65
  %vm2804 = vcmp.lt.s32.totalorder %v2646, 65
  %vm2805 = vcmp.lt.s32.totalorder %v2647, 65
  %vm2806 = vcmp.lt.s32.totalorder %v2648, 65
  %vm2807 = vcmp.lt.s32.totalorder %v2649, 65
  %vm2808 = vcmp.lt.s32.totalorder %v2650, 65
  %vm2809 = vcmp.lt.s32.totalorder %v2651, 65
  %vm2810 = vcmp.lt.s32.totalorder %v2652, 65
  %vm2811 = vmand %vm2761, %vm2786
  %vm2812 = vmand %vm2762, %vm2787
  %vm2813 = vmand %vm2763, %vm2788
  %vm2814 = vmand %vm2764, %vm2789
  %vm2815 = vmand %vm2765, %vm2790
  %vm2816 = vmand %vm2766, %vm2791
  %vm2817 = vmand %vm2767, %vm2792
  %vm2818 = vmand %vm2768, %vm2793
  %vm2819 = vmand %vm2769, %vm2794
  %vm2820 = vmand %vm2770, %vm2795
  %vm2821 = vmand %vm2771, %vm2796
  %vm2822 = vmand %vm2772, %vm2797
  %vm2823 = vmand %vm2773, %vm2798
  %vm2824 = vmand %vm2774, %vm2799
  %vm2825 = vmand %vm2775, %vm2800
  %vm2826 = vmand %vm2776, %vm2801
  %vm2827 = vmand %vm2777, %vm2802
  %vm2828 = vmand %vm2778, %vm2803
  %vm2829 = vmand %vm2779, %vm2804
  %vm2830 = vmand %vm2780, %vm2805
  %vm2831 = vmand %vm2781, %vm2806
  %vm2832 = vmand %vm2782, %vm2807
  %vm2833 = vmand %vm2783, %vm2808
  %vm2834 = vmand %vm2784, %vm2809
  %vm2835 = vmand %vm2785, %vm2810
  %v2836 = vsel %vm2811, %v509, 0.0
  %v2837 = vsel %vm2812, %v510, 0.0
  %v2838 = vsel %vm2813, %v511, 0.0
  %v2839 = vsel %vm2814, %v512, 0.0
  %v2840 = vsel %vm2815, %v513, 0.0
  %v2841 = vsel %vm2816, %v514, 0.0
  %v2842 = vsel %vm2817, %v515, 0.0
  %v2843 = vsel %vm2818, %v516, 0.0
  %v2844 = vsel %vm2819, %v517, 0.0
  %v2845 = vsel %vm2820, %v518, 0.0
  %v2846 = vsel %vm2821, %v519, 0.0
  %v2847 = vsel %vm2822, %v520, 0.0
  %v2848 = vsel %vm2823, %v521, 0.0
  %v2849 = vsel %vm2824, %v522, 0.0
  %v2850 = vsel %vm2825, %v523, 0.0
  %v2851 = vsel %vm2826, %v524, 0.0
  %v2852 = vsel %vm2827, %v525, 0.0
  %v2853 = vsel %vm2828, %v526, 0.0
  %v2854 = vsel %vm2829, %v527, 0.0
  %v2855 = vsel %vm2830, %v528, 0.0
  %v2856 = vsel %vm2831, %v529, 0.0
  %v2857 = vsel %vm2832, %v530, 0.0
  %v2858 = vsel %vm2833, %v531, 0.0
  %v2859 = vsel %vm2834, %v532, 0.0
  %v2860 = vsel %vm2835, %v533, 0.0
  %vm2861 = vcmask 64512
  %v2862 = vsel %vm2861, %v2836, 0.0
  %v2863 = vsel %vm2861, %v2837, 0.0
  %v2864 = vadd.f32 %v2862, %v2863
  %v2865 = vsel %vm2861, %v2838, 0.0
  %v2866 = vadd.f32 %v2864, %v2865
  %v2867 = vsel %vm2861, %v2839, 0.0
  %v2868 = vadd.f32 %v2866, %v2867
  %v2869 = vsel %vm2861, %v2840, 0.0
  %v2870 = vadd.f32 %v2868, %v2869
  %v2871 = vsel %vm2861, %v2841, 0.0
  %v2872 = vadd.f32 %v2870, %v2871
  %v2873 = vsel %vm2861, %v2842, 0.0
  %v2874 = vadd.f32 %v2872, %v2873
  %v2875 = vsel %vm2861, %v2843, 0.0
  %v2876 = vadd.f32 %v2874, %v2875
  %v2877 = vsel %vm2861, %v2844, 0.0
  %v2878 = vadd.f32 %v2876, %v2877
  %v2879 = vsel %vm2861, %v2845, 0.0
  %v2880 = vadd.f32 %v2878, %v2879
  %v2881 = vsel %vm2861, %v2846, 0.0
  %v2882 = vadd.f32 %v2880, %v2881
  %v2883 = vsel %vm2861, %v2847, 0.0
  %v2884 = vadd.f32 %v2882, %v2883
  %v2885 = vsel %vm2861, %v2848, 0.0
  %v2886 = vadd.f32 %v2884, %v2885
  %v2887 = vsel %vm2861, %v2849, 0.0
  %v2888 = vadd.f32 %v2886, %v2887
  %v2889 = vsel %vm2861, %v2850, 0.0
  %v2890 = vadd.f32 %v2888, %v2889
  %v2891 = vsel %vm2861, %v2851, 0.0
  %v2892 = vadd.f32 %v2890, %v2891
  %v2893 = vsel %vm2861, %v2852, 0.0
  %v2894 = vadd.f32 %v2892, %v2893
  %v2895 = vsel %vm2861, %v2853, 0.0
  %v2896 = vadd.f32 %v2894, %v2895
  %v2897 = vsel %vm2861, %v2854, 0.0
  %v2898 = vadd.f32 %v2896, %v2897
  %v2899 = vsel %vm2861, %v2855, 0.0
  %v2900 = vadd.f32 %v2898, %v2899
  %v2901 = vsel %vm2861, %v2856, 0.0
  %v2902 = vadd.f32 %v2900, %v2901
  %v2903 = vsel %vm2861, %v2857, 0.0
  %v2904 = vadd.f32 %v2902, %v2903
  %v2905 = vsel %vm2861, %v2858, 0.0
  %v2906 = vadd.f32 %v2904, %v2905
  %v2907 = vsel %vm2861, %v2859, 0.0
  %v2908 = vadd.f32 %v2906, %v2907
  %vm2909 = vcmask 59392
  %v2910 = vsel %vm2909, %v2860, 0.0
  %v2911 = vadd.f32 %v2908, %v2910
  %v2912 = vrot.slane %v2911, 4
  %v2913 = vadd.f32 %v2911, %v2912
  %v2914 = vrot.slane %v2913, 2
  %v2915 = vadd.f32 %v2913, %v2914
  %v2916 = vrot.slane %v2915, 1
  %v2917 = vadd.f32 %v2915, %v2916
  %v2918 = vmul.f32 %v2917, 0.015384615
  %vm2919 = vcmp.ge.s32.totalorder %v2653, 0
  %vm2920 = vcmp.ge.s32.totalorder %v2654, 0
  %vm2921 = vcmp.ge.s32.totalorder %v2655, 0
  %vm2922 = vcmp.ge.s32.totalorder %v2656, 0
  %vm2923 = vcmp.ge.s32.totalorder %v2657, 0
  %vm2924 = vcmp.ge.s32.totalorder %v2658, 0
  %vm2925 = vcmp.ge.s32.totalorder %v2659, 0
  %vm2926 = vcmp.ge.s32.totalorder %v2660, 0
  %vm2927 = vcmp.ge.s32.totalorder %v2661, 0
  %vm2928 = vcmp.ge.s32.totalorder %v2662, 0
  %vm2929 = vcmp.ge.s32.totalorder %v2663, 0
  %vm2930 = vcmp.ge.s32.totalorder %v2664, 0
  %vm2931 = vcmp.ge.s32.totalorder %v2665, 0
  %vm2932 = vcmp.ge.s32.totalorder %v2666, 0
  %vm2933 = vcmp.ge.s32.totalorder %v2667, 0
  %vm2934 = vcmp.ge.s32.totalorder %v2668, 0
  %vm2935 = vcmp.ge.s32.totalorder %v2669, 0
  %vm2936 = vcmp.ge.s32.totalorder %v2670, 0
  %vm2937 = vcmp.ge.s32.totalorder %v2671, 0
  %vm2938 = vcmp.ge.s32.totalorder %v2672, 0
  %vm2939 = vcmp.ge.s32.totalorder %v2673, 0
  %vm2940 = vcmp.ge.s32.totalorder %v2674, 0
  %vm2941 = vcmp.ge.s32.totalorder %v2675, 0
  %vm2942 = vcmp.ge.s32.totalorder %v2676, 0
  %vm2943 = vcmp.ge.s32.totalorder %v2677, 0
  %vm2944 = vcmp.ge.s32.totalorder %v2678, 0
  %vm2945 = vcmp.ge.s32.totalorder %v2679, 0
  %vm2946 = vcmp.ge.s32.totalorder %v2680, 0
  %vm2947 = vcmp.ge.s32.totalorder %v2681, 0
  %vm2948 = vcmp.ge.s32.totalorder %v2682, 0
  %vm2949 = vcmp.ge.s32.totalorder %v2683, 0
  %vm2950 = vcmp.ge.s32.totalorder %v2684, 0
  %vm2951 = vcmp.ge.s32.totalorder %v2685, 0
  %vm2952 = vcmp.ge.s32.totalorder %v2686, 0
  %vm2953 = vcmp.ge.s32.totalorder %v2687, 0
  %vm2954 = vcmp.ge.s32.totalorder %v2688, 0
  %vm2955 = vcmp.ge.s32.totalorder %v2689, 0
  %vm2956 = vcmp.ge.s32.totalorder %v2690, 0
  %vm2957 = vcmp.ge.s32.totalorder %v2691, 0
  %vm2958 = vcmp.ge.s32.totalorder %v2692, 0
  %vm2959 = vcmp.ge.s32.totalorder %v2693, 0
  %vm2960 = vcmp.ge.s32.totalorder %v2694, 0
  %vm2961 = vcmp.ge.s32.totalorder %v2695, 0
  %vm2962 = vcmp.ge.s32.totalorder %v2696, 0
  %vm2963 = vcmp.ge.s32.totalorder %v2697, 0
  %vm2964 = vcmp.ge.s32.totalorder %v2698, 0
  %vm2965 = vcmp.ge.s32.totalorder %v2699, 0
  %vm2966 = vcmp.ge.s32.totalorder %v2700, 0
  %vm2967 = vcmp.ge.s32.totalorder %v2701, 0
  %vm2968 = vcmp.ge.s32.totalorder %v2702, 0
  %vm2969 = vcmp.ge.s32.totalorder %v2703, 0
  %vm2970 = vcmp.ge.s32.totalorder %v2704, 0
  %vm2971 = vcmp.ge.s32.totalorder %v2705, 0
  %vm2972 = vcmp.ge.s32.totalorder %v2706, 0
  %vm2973 = vcmp.ge.s32.totalorder %v2707, 0
  %vm2974 = vcmp.ge.s32.totalorder %v2708, 0
  %vm2975 = vcmp.ge.s32.totalorder %v2709, 0
  %vm2976 = vcmp.ge.s32.totalorder %v2710, 0
  %vm2977 = vcmp.ge.s32.totalorder %v2711, 0
  %vm2978 = vcmp.ge.s32.totalorder %v2712, 0
  %vm2979 = vcmp.ge.s32.totalorder %v2713, 0
  %vm2980 = vcmp.ge.s32.totalorder %v2714, 0
  %vm2981 = vcmp.ge.s32.totalorder %v2715, 0
  %vm2982 = vcmp.ge.s32.totalorder %v2716, 0
  %vm2983 = vcmp.ge.s32.totalorder %v2717, 0
  %vm2984 = vcmp.ge.s32.totalorder %v2718, 0
  %vm2985 = vcmp.ge.s32.totalorder %v2719, 0
  %vm2986 = vcmp.ge.s32.totalorder %v2720, 0
  %vm2987 = vcmp.ge.s32.totalorder %v2721, 0
  %vm2988 = vcmp.ge.s32.totalorder %v2722, 0
  %vm2989 = vcmp.ge.s32.totalorder %v2723, 0
  %vm2990 = vcmp.ge.s32.totalorder %v2724, 0
  %vm2991 = vcmp.ge.s32.totalorder %v2725, 0
  %vm2992 = vcmp.ge.s32.totalorder %v2726, 0
  %vm2993 = vcmp.ge.s32.totalorder %v2727, 0
  %vm2994 = vcmp.ge.s32.totalorder %v2728, 0
  %vm2995 = vcmp.ge.s32.totalorder %v2729, 0
  %vm2996 = vcmp.ge.s32.totalorder %v2730, 0
  %vm2997 = vcmp.ge.s32.totalorder %v2731, 0
  %vm2998 = vcmp.ge.s32.totalorder %v2732, 0
  %vm2999 = vcmp.ge.s32.totalorder %v2733, 0
  %vm3000 = vcmp.ge.s32.totalorder %v2734, 0
  %vm3001 = vcmp.ge.s32.totalorder %v2735, 0
  %vm3002 = vcmp.ge.s32.totalorder %v2736, 0
  %vm3003 = vcmp.ge.s32.totalorder %v2737, 0
  %vm3004 = vcmp.ge.s32.totalorder %v2738, 0
  %vm3005 = vcmp.ge.s32.totalorder %v2739, 0
  %vm3006 = vcmp.ge.s32.totalorder %v2740, 0
  %vm3007 = vcmp.ge.s32.totalorder %v2741, 0
  %vm3008 = vcmp.ge.s32.totalorder %v2742, 0
  %vm3009 = vcmp.ge.s32.totalorder %v2743, 0
  %vm3010 = vcmp.ge.s32.totalorder %v2744, 0
  %vm3011 = vcmp.ge.s32.totalorder %v2745, 0
  %vm3012 = vcmp.ge.s32.totalorder %v2746, 0
  %vm3013 = vcmp.ge.s32.totalorder %v2747, 0
  %vm3014 = vcmp.ge.s32.totalorder %v2748, 0
  %vm3015 = vcmp.ge.s32.totalorder %v2749, 0
  %vm3016 = vcmp.ge.s32.totalorder %v2750, 0
  %vm3017 = vcmp.ge.s32.totalorder %v2751, 0
  %vm3018 = vcmp.ge.s32.totalorder %v2752, 0
  %vm3019 = vcmp.ge.s32.totalorder %v2753, 0
  %vm3020 = vcmp.ge.s32.totalorder %v2754, 0
  %vm3021 = vcmp.ge.s32.totalorder %v2755, 0
  %vm3022 = vcmp.ge.s32.totalorder %v2756, 0
  %vm3023 = vcmp.ge.s32.totalorder %v2757, 0
  %vm3024 = vcmp.ge.s32.totalorder %v2758, 0
  %vm3025 = vcmp.ge.s32.totalorder %v2759, 0
  %vm3026 = vcmp.ge.s32.totalorder %v2760, 0
  %vm3027 = vcmp.lt.s32.totalorder %v2628, 161
  %vm3028 = vcmp.lt.s32.totalorder %v2629, 161
  %vm3029 = vcmp.lt.s32.totalorder %v2630, 161
  %vm3030 = vcmp.lt.s32.totalorder %v2631, 161
  %vm3031 = vcmp.lt.s32.totalorder %v2632, 161
  %vm3032 = vcmp.lt.s32.totalorder %v2633, 161
  %vm3033 = vcmp.lt.s32.totalorder %v2634, 161
  %vm3034 = vcmp.lt.s32.totalorder %v2635, 161
  %vm3035 = vcmp.lt.s32.totalorder %v2636, 161
  %vm3036 = vcmp.lt.s32.totalorder %v2637, 161
  %vm3037 = vcmp.lt.s32.totalorder %v2638, 161
  %vm3038 = vcmp.lt.s32.totalorder %v2639, 161
  %vm3039 = vcmp.lt.s32.totalorder %v2640, 161
  %vm3040 = vcmp.lt.s32.totalorder %v2641, 161
  %vm3041 = vcmp.lt.s32.totalorder %v2642, 161
  %vm3042 = vcmp.lt.s32.totalorder %v2643, 161
  %vm3043 = vcmp.lt.s32.totalorder %v2644, 161
  %vm3044 = vcmp.lt.s32.totalorder %v2645, 161
  %vm3045 = vcmp.lt.s32.totalorder %v2646, 161
  %vm3046 = vcmp.lt.s32.totalorder %v2647, 161
  %vm3047 = vcmp.lt.s32.totalorder %v2648, 161
  %vm3048 = vcmp.lt.s32.totalorder %v2649, 161
  %vm3049 = vcmp.lt.s32.totalorder %v2650, 161
  %vm3050 = vcmp.lt.s32.totalorder %v2651, 161
  %vm3051 = vcmp.lt.s32.totalorder %v2652, 161
  %vm3052 = vcmp.lt.s32.totalorder %v2653, 161
  %vm3053 = vcmp.lt.s32.totalorder %v2654, 161
  %vm3054 = vcmp.lt.s32.totalorder %v2655, 161
  %vm3055 = vcmp.lt.s32.totalorder %v2656, 161
  %vm3056 = vcmp.lt.s32.totalorder %v2657, 161
  %vm3057 = vcmp.lt.s32.totalorder %v2658, 161
  %vm3058 = vcmp.lt.s32.totalorder %v2659, 161
  %vm3059 = vcmp.lt.s32.totalorder %v2660, 161
  %vm3060 = vcmp.lt.s32.totalorder %v2661, 161
  %vm3061 = vcmp.lt.s32.totalorder %v2662, 161
  %vm3062 = vcmp.lt.s32.totalorder %v2663, 161
  %vm3063 = vcmp.lt.s32.totalorder %v2664, 161
  %vm3064 = vcmp.lt.s32.totalorder %v2665, 161
  %vm3065 = vcmp.lt.s32.totalorder %v2666, 161
  %vm3066 = vcmp.lt.s32.totalorder %v2667, 161
  %vm3067 = vcmp.lt.s32.totalorder %v2668, 161
  %vm3068 = vcmp.lt.s32.totalorder %v2669, 161
  %vm3069 = vcmp.lt.s32.totalorder %v2670, 161
  %vm3070 = vcmp.lt.s32.totalorder %v2671, 161
  %vm3071 = vcmp.lt.s32.totalorder %v2672, 161
  %vm3072 = vcmp.lt.s32.totalorder %v2673, 161
  %vm3073 = vcmp.lt.s32.totalorder %v2674, 161
  %vm3074 = vcmp.lt.s32.totalorder %v2675, 161
  %vm3075 = vcmp.lt.s32.totalorder %v2676, 161
  %vm3076 = vcmp.lt.s32.totalorder %v2677, 161
  %vm3077 = vcmp.lt.s32.totalorder %v2678, 161
  %vm3078 = vcmp.lt.s32.totalorder %v2679, 161
  %vm3079 = vcmp.lt.s32.totalorder %v2680, 161
  %vm3080 = vcmp.lt.s32.totalorder %v2681, 161
  %vm3081 = vcmp.lt.s32.totalorder %v2682, 161
  %vm3082 = vcmp.lt.s32.totalorder %v2683, 161
  %vm3083 = vcmp.lt.s32.totalorder %v2684, 161
  %vm3084 = vcmp.lt.s32.totalorder %v2685, 161
  %vm3085 = vcmp.lt.s32.totalorder %v2686, 161
  %vm3086 = vcmp.lt.s32.totalorder %v2687, 161
  %vm3087 = vcmp.lt.s32.totalorder %v2688, 161
  %vm3088 = vcmp.lt.s32.totalorder %v2689, 161
  %vm3089 = vcmp.lt.s32.totalorder %v2690, 161
  %vm3090 = vcmp.lt.s32.totalorder %v2691, 161
  %vm3091 = vcmp.lt.s32.totalorder %v2692, 161
  %vm3092 = vcmp.lt.s32.totalorder %v2693, 161
  %vm3093 = vcmp.lt.s32.totalorder %v2694, 161
  %vm3094 = vcmp.lt.s32.totalorder %v2695, 161
  %vm3095 = vcmp.lt.s32.totalorder %v2696, 161
  %vm3096 = vcmp.lt.s32.totalorder %v2697, 161
  %vm3097 = vcmp.lt.s32.totalorder %v2698, 161
  %vm3098 = vcmp.lt.s32.totalorder %v2699, 161
  %vm3099 = vcmp.lt.s32.totalorder %v2700, 161
  %vm3100 = vcmp.lt.s32.totalorder %v2701, 161
  %vm3101 = vcmp.lt.s32.totalorder %v2702, 161
  %vm3102 = vcmp.lt.s32.totalorder %v2703, 161
  %vm3103 = vcmp.lt.s32.totalorder %v2704, 161
  %vm3104 = vcmp.lt.s32.totalorder %v2705, 161
  %vm3105 = vcmp.lt.s32.totalorder %v2706, 161
  %vm3106 = vcmp.lt.s32.totalorder %v2707, 161
  %vm3107 = vcmp.lt.s32.totalorder %v2708, 161
  %vm3108 = vcmp.lt.s32.totalorder %v2709, 161
  %vm3109 = vcmp.lt.s32.totalorder %v2710, 161
  %vm3110 = vcmp.lt.s32.totalorder %v2711, 161
  %vm3111 = vcmp.lt.s32.totalorder %v2712, 161
  %vm3112 = vcmp.lt.s32.totalorder %v2713, 161
  %vm3113 = vcmp.lt.s32.totalorder %v2714, 161
  %vm3114 = vcmp.lt.s32.totalorder %v2715, 161
  %vm3115 = vcmp.lt.s32.totalorder %v2716, 161
  %vm3116 = vcmp.lt.s32.totalorder %v2717, 161
  %vm3117 = vcmp.lt.s32.totalorder %v2718, 161
  %vm3118 = vcmp.lt.s32.totalorder %v2719, 161
  %vm3119 = vcmp.lt.s32.totalorder %v2720, 161
  %vm3120 = vcmp.lt.s32.totalorder %v2721, 161
  %vm3121 = vcmp.lt.s32.totalorder %v2722, 161
  %vm3122 = vcmp.lt.s32.totalorder %v2723, 161
  %vm3123 = vcmp.lt.s32.totalorder %v2724, 161
  %vm3124 = vcmp.lt.s32.totalorder %v2725, 161
  %vm3125 = vcmp.lt.s32.totalorder %v2726, 161
  %vm3126 = vcmp.lt.s32.totalorder %v2727, 161
  %vm3127 = vcmp.lt.s32.totalorder %v2728, 161
  %vm3128 = vcmp.lt.s32.totalorder %v2729, 161
  %vm3129 = vcmp.lt.s32.totalorder %v2730, 161
  %vm3130 = vcmp.lt.s32.totalorder %v2731, 161
  %vm3131 = vcmp.lt.s32.totalorder %v2732, 161
  %vm3132 = vcmp.lt.s32.totalorder %v2733, 161
  %vm3133 = vcmp.lt.s32.totalorder %v2734, 161
  %vm3134 = vcmp.lt.s32.totalorder %v2735, 161
  %vm3135 = vcmp.lt.s32.totalorder %v2736, 161
  %vm3136 = vcmp.lt.s32.totalorder %v2737, 161
  %vm3137 = vcmp.lt.s32.totalorder %v2738, 161
  %vm3138 = vcmp.lt.s32.totalorder %v2739, 161
  %vm3139 = vcmp.lt.s32.totalorder %v2740, 161
  %vm3140 = vcmp.lt.s32.totalorder %v2741, 161
  %vm3141 = vcmp.lt.s32.totalorder %v2742, 161
  %vm3142 = vcmp.lt.s32.totalorder %v2743, 161
  %vm3143 = vcmp.lt.s32.totalorder %v2744, 161
  %vm3144 = vcmp.lt.s32.totalorder %v2745, 161
  %vm3145 = vcmp.lt.s32.totalorder %v2746, 161
  %vm3146 = vcmp.lt.s32.totalorder %v2747, 161
  %vm3147 = vcmp.lt.s32.totalorder %v2748, 161
  %vm3148 = vcmp.lt.s32.totalorder %v2749, 161
  %vm3149 = vcmp.lt.s32.totalorder %v2750, 161
  %vm3150 = vcmp.lt.s32.totalorder %v2751, 161
  %vm3151 = vcmp.lt.s32.totalorder %v2752, 161
  %vm3152 = vcmp.lt.s32.totalorder %v2753, 161
  %vm3153 = vcmp.lt.s32.totalorder %v2754, 161
  %vm3154 = vcmp.lt.s32.totalorder %v2755, 161
  %vm3155 = vcmp.lt.s32.totalorder %v2756, 161
  %vm3156 = vcmp.lt.s32.totalorder %v2757, 161
  %vm3157 = vcmp.lt.s32.totalorder %v2758, 161
  %vm3158 = vcmp.lt.s32.totalorder %v2759, 161
  %vm3159 = vcmp.lt.s32.totalorder %v2760, 161
  %vm3160 = vmand %vm2761, %vm3027
  %vm3161 = vmand %vm2762, %vm3028
  %vm3162 = vmand %vm2763, %vm3029
  %vm3163 = vmand %vm2764, %vm3030
  %vm3164 = vmand %vm2765, %vm3031
  %vm3165 = vmand %vm2766, %vm3032
  %vm3166 = vmand %vm2767, %vm3033
  %vm3167 = vmand %vm2768, %vm3034
  %vm3168 = vmand %vm2769, %vm3035
  %vm3169 = vmand %vm2770, %vm3036
  %vm3170 = vmand %vm2771, %vm3037
  %vm3171 = vmand %vm2772, %vm3038
  %vm3172 = vmand %vm2773, %vm3039
  %vm3173 = vmand %vm2774, %vm3040
  %vm3174 = vmand %vm2775, %vm3041
  %vm3175 = vmand %vm2776, %vm3042
  %vm3176 = vmand %vm2777, %vm3043
  %vm3177 = vmand %vm2778, %vm3044
  %vm3178 = vmand %vm2779, %vm3045
  %vm3179 = vmand %vm2780, %vm3046
  %vm3180 = vmand %vm2781, %vm3047
  %vm3181 = vmand %vm2782, %vm3048
  %vm3182 = vmand %vm2783, %vm3049
  %vm3183 = vmand %vm2784, %vm3050
  %vm3184 = vmand %vm2785, %vm3051
  %vm3185 = vmand %vm2919, %vm3052
  %vm3186 = vmand %vm2920, %vm3053
  %vm3187 = vmand %vm2921, %vm3054
  %vm3188 = vmand %vm2922, %vm3055
  %vm3189 = vmand %vm2923, %vm3056
  %vm3190 = vmand %vm2924, %vm3057
  %vm3191 = vmand %vm2925, %vm3058
  %vm3192 = vmand %vm2926, %vm3059
  %vm3193 = vmand %vm2927, %vm3060
  %vm3194 = vmand %vm2928, %vm3061
  %vm3195 = vmand %vm2929, %vm3062
  %vm3196 = vmand %vm2930, %vm3063
  %vm3197 = vmand %vm2931, %vm3064
  %vm3198 = vmand %vm2932, %vm3065
  %vm3199 = vmand %vm2933, %vm3066
  %vm3200 = vmand %vm2934, %vm3067
  %vm3201 = vmand %vm2935, %vm3068
  %vm3202 = vmand %vm2936, %vm3069
  %vm3203 = vmand %vm2937, %vm3070
  %vm3204 = vmand %vm2938, %vm3071
  %vm3205 = vmand %vm2939, %vm3072
  %vm3206 = vmand %vm2940, %vm3073
  %vm3207 = vmand %vm2941, %vm3074
  %vm3208 = vmand %vm2942, %vm3075
  %vm3209 = vmand %vm2943, %vm3076
  %vm3210 = vmand %vm2944, %vm3077
  %vm3211 = vmand %vm2945, %vm3078
  %vm3212 = vmand %vm2946, %vm3079
  %vm3213 = vmand %vm2947, %vm3080
  %vm3214 = vmand %vm2948, %vm3081
  %vm3215 = vmand %vm2949, %vm3082
  %vm3216 = vmand %vm2950, %vm3083
  %vm3217 = vmand %vm2951, %vm3084
  %vm3218 = vmand %vm2952, %vm3085
  %vm3219 = vmand %vm2953, %vm3086
  %vm3220 = vmand %vm2954, %vm3087
  %vm3221 = vmand %vm2955, %vm3088
  %vm3222 = vmand %vm2956, %vm3089
  %vm3223 = vmand %vm2957, %vm3090
  %vm3224 = vmand %vm2958, %vm3091
  %vm3225 = vmand %vm2959, %vm3092
  %vm3226 = vmand %vm2960, %vm3093
  %vm3227 = vmand %vm2961, %vm3094
  %vm3228 = vmand %vm2962, %vm3095
  %vm3229 = vmand %vm2963, %vm3096
  %vm3230 = vmand %vm2964, %vm3097
  %vm3231 = vmand %vm2965, %vm3098
  %vm3232 = vmand %vm2966, %vm3099
  %vm3233 = vmand %vm2967, %vm3100
  %vm3234 = vmand %vm2968, %vm3101
  %vm3235 = vmand %vm2969, %vm3102
  %vm3236 = vmand %vm2970, %vm3103
  %vm3237 = vmand %vm2971, %vm3104
  %vm3238 = vmand %vm2972, %vm3105
  %vm3239 = vmand %vm2973, %vm3106
  %vm3240 = vmand %vm2974, %vm3107
  %vm3241 = vmand %vm2975, %vm3108
  %vm3242 = vmand %vm2976, %vm3109
  %vm3243 = vmand %vm2977, %vm3110
  %vm3244 = vmand %vm2978, %vm3111
  %vm3245 = vmand %vm2979, %vm3112
  %vm3246 = vmand %vm2980, %vm3113
  %vm3247 = vmand %vm2981, %vm3114
  %vm3248 = vmand %vm2982, %vm3115
  %vm3249 = vmand %vm2983, %vm3116
  %vm3250 = vmand %vm2984, %vm3117
  %vm3251 = vmand %vm2985, %vm3118
  %vm3252 = vmand %vm2986, %vm3119
  %vm3253 = vmand %vm2987, %vm3120
  %vm3254 = vmand %vm2988, %vm3121
  %vm3255 = vmand %vm2989, %vm3122
  %vm3256 = vmand %vm2990, %vm3123
  %vm3257 = vmand %vm2991, %vm3124
  %vm3258 = vmand %vm2992, %vm3125
  %vm3259 = vmand %vm2993, %vm3126
  %vm3260 = vmand %vm2994, %vm3127
  %vm3261 = vmand %vm2995, %vm3128
  %vm3262 = vmand %vm2996, %vm3129
  %vm3263 = vmand %vm2997, %vm3130
  %vm3264 = vmand %vm2998, %vm3131
  %vm3265 = vmand %vm2999, %vm3132
  %vm3266 = vmand %vm3000, %vm3133
  %vm3267 = vmand %vm3001, %vm3134
  %vm3268 = vmand %vm3002, %vm3135
  %vm3269 = vmand %vm3003, %vm3136
  %vm3270 = vmand %vm3004, %vm3137
  %vm3271 = vmand %vm3005, %vm3138
  %vm3272 = vmand %vm3006, %vm3139
  %vm3273 = vmand %vm3007, %vm3140
  %vm3274 = vmand %vm3008, %vm3141
  %vm3275 = vmand %vm3009, %vm3142
  %vm3276 = vmand %vm3010, %vm3143
  %vm3277 = vmand %vm3011, %vm3144
  %vm3278 = vmand %vm3012, %vm3145
  %vm3279 = vmand %vm3013, %vm3146
  %vm3280 = vmand %vm3014, %vm3147
  %vm3281 = vmand %vm3015, %vm3148
  %vm3282 = vmand %vm3016, %vm3149
  %vm3283 = vmand %vm3017, %vm3150
  %vm3284 = vmand %vm3018, %vm3151
  %vm3285 = vmand %vm3019, %vm3152
  %vm3286 = vmand %vm3020, %vm3153
  %vm3287 = vmand %vm3021, %vm3154
  %vm3288 = vmand %vm3022, %vm3155
  %vm3289 = vmand %vm3023, %vm3156
  %vm3290 = vmand %vm3024, %vm3157
  %vm3291 = vmand %vm3025, %vm3158
  %vm3292 = vmand %vm3026, %vm3159
  %v3293 = vsel %vm3160, %v1972, 0.0
  %v3294 = vsel %vm3161, %v1973, 0.0
  %v3295 = vsel %vm3162, %v1974, 0.0
  %v3296 = vsel %vm3163, %v1975, 0.0
  %v3297 = vsel %vm3164, %v1976, 0.0
  %v3298 = vsel %vm3165, %v1977, 0.0
  %v3299 = vsel %vm3166, %v1978, 0.0
  %v3300 = vsel %vm3167, %v1979, 0.0
  %v3301 = vsel %vm3168, %v1980, 0.0
  %v3302 = vsel %vm3169, %v1981, 0.0
  %v3303 = vsel %vm3170, %v1982, 0.0
  %v3304 = vsel %vm3171, %v1983, 0.0
  %v3305 = vsel %vm3172, %v1984, 0.0
  %v3306 = vsel %vm3173, %v1985, 0.0
  %v3307 = vsel %vm3174, %v1986, 0.0
  %v3308 = vsel %vm3175, %v1987, 0.0
  %v3309 = vsel %vm3176, %v1988, 0.0
  %v3310 = vsel %vm3177, %v1989, 0.0
  %v3311 = vsel %vm3178, %v1990, 0.0
  %v3312 = vsel %vm3179, %v1991, 0.0
  %v3313 = vsel %vm3180, %v1992, 0.0
  %v3314 = vsel %vm3181, %v1993, 0.0
  %v3315 = vsel %vm3182, %v1994, 0.0
  %v3316 = vsel %vm3183, %v1995, 0.0
  %v3317 = vsel %vm3184, %v1996, 0.0
  %v3318 = vsel %vm3185, %v1997, 0.0
  %v3319 = vsel %vm3186, %v1998, 0.0
  %v3320 = vsel %vm3187, %v1999, 0.0
  %v3321 = vsel %vm3188, %v2000, 0.0
  %v3322 = vsel %vm3189, %v2001, 0.0
  %v3323 = vsel %vm3190, %v2002, 0.0
  %v3324 = vsel %vm3191, %v2003, 0.0
  %v3325 = vsel %vm3192, %v2004, 0.0
  %v3326 = vsel %vm3193, %v2005, 0.0
  %v3327 = vsel %vm3194, %v2006, 0.0
  %v3328 = vsel %vm3195, %v2007, 0.0
  %v3329 = vsel %vm3196, %v2008, 0.0
  %v3330 = vsel %vm3197, %v2009, 0.0
  %v3331 = vsel %vm3198, %v2010, 0.0
  %v3332 = vsel %vm3199, %v2011, 0.0
  %v3333 = vsel %vm3200, %v2012, 0.0
  %v3334 = vsel %vm3201, %v2013, 0.0
  %v3335 = vsel %vm3202, %v2014, 0.0
  %v3336 = vsel %vm3203, %v2015, 0.0
  %v3337 = vsel %vm3204, %v2016, 0.0
  %v3338 = vsel %vm3205, %v2017, 0.0
  %v3339 = vsel %vm3206, %v2018, 0.0
  %v3340 = vsel %vm3207, %v2019, 0.0
  %v3341 = vsel %vm3208, %v2020, 0.0
  %v3342 = vsel %vm3209, %v2021, 0.0
  %v3343 = vsel %vm3210, %v2022, 0.0
  %v3344 = vsel %vm3211, %v2023, 0.0
  %v3345 = vsel %vm3212, %v2024, 0.0
  %v3346 = vsel %vm3213, %v2025, 0.0
  %v3347 = vsel %vm3214, %v2026, 0.0
  %v3348 = vsel %vm3215, %v2027, 0.0
  %v3349 = vsel %vm3216, %v2028, 0.0
  %v3350 = vsel %vm3217, %v2029, 0.0
  %v3351 = vsel %vm3218, %v2030, 0.0
  %v3352 = vsel %vm3219, %v2031, 0.0
  %v3353 = vsel %vm3220, %v2032, 0.0
  %v3354 = vsel %vm3221, %v2033, 0.0
  %v3355 = vsel %vm3222, %v2034, 0.0
  %v3356 = vsel %vm3223, %v2035, 0.0
  %v3357 = vsel %vm3224, %v2036, 0.0
  %v3358 = vsel %vm3225, %v2037, 0.0
  %v3359 = vsel %vm3226, %v2038, 0.0
  %v3360 = vsel %vm3227, %v2039, 0.0
  %v3361 = vsel %vm3228, %v2040, 0.0
  %v3362 = vsel %vm3229, %v2041, 0.0
  %v3363 = vsel %vm3230, %v2042, 0.0
  %v3364 = vsel %vm3231, %v2043, 0.0
  %v3365 = vsel %vm3232, %v2044, 0.0
  %v3366 = vsel %vm3233, %v2045, 0.0
  %v3367 = vsel %vm3234, %v2046, 0.0
  %v3368 = vsel %vm3235, %v2047, 0.0
  %v3369 = vsel %vm3236, %v2048, 0.0
  %v3370 = vsel %vm3237, %v2049, 0.0
  %v3371 = vsel %vm3238, %v2050, 0.0
  %v3372 = vsel %vm3239, %v2051, 0.0
  %v3373 = vsel %vm3240, %v2052, 0.0
  %v3374 = vsel %vm3241, %v2053, 0.0
  %v3375 = vsel %vm3242, %v2054, 0.0
  %v3376 = vsel %vm3243, %v2055, 0.0
  %v3377 = vsel %vm3244, %v2056, 0.0
  %v3378 = vsel %vm3245, %v2057, 0.0
  %v3379 = vsel %vm3246, %v2058, 0.0
  %v3380 = vsel %vm3247, %v2059, 0.0
  %v3381 = vsel %vm3248, %v2060, 0.0
  %v3382 = vsel %vm3249, %v2061, 0.0
  %v3383 = vsel %vm3250, %v2062, 0.0
  %v3384 = vsel %vm3251, %v2063, 0.0
  %v3385 = vsel %vm3252, %v2064, 0.0
  %v3386 = vsel %vm3253, %v2065, 0.0
  %v3387 = vsel %vm3254, %v2066, 0.0
  %v3388 = vsel %vm3255, %v2067, 0.0
  %v3389 = vsel %vm3256, %v2068, 0.0
  %v3390 = vsel %vm3257, %v2069, 0.0
  %v3391 = vsel %vm3258, %v2070, 0.0
  %v3392 = vsel %vm3259, %v2071, 0.0
  %v3393 = vsel %vm3260, %v2072, 0.0
  %v3394 = vsel %vm3261, %v2073, 0.0
  %v3395 = vsel %vm3262, %v2074, 0.0
  %v3396 = vsel %vm3263, %v2075, 0.0
  %v3397 = vsel %vm3264, %v2076, 0.0
  %v3398 = vsel %vm3265, %v2077, 0.0
  %v3399 = vsel %vm3266, %v2078, 0.0
  %v3400 = vsel %vm3267, %v2079, 0.0
  %v3401 = vsel %vm3268, %v2080, 0.0
  %v3402 = vsel %vm3269, %v2081, 0.0
  %v3403 = vsel %vm3270, %v2082, 0.0
  %v3404 = vsel %vm3271, %v2083, 0.0
  %v3405 = vsel %vm3272, %v2084, 0.0
  %v3406 = vsel %vm3273, %v2085, 0.0
  %v3407 = vsel %vm3274, %v2086, 0.0
  %v3408 = vsel %vm3275, %v2087, 0.0
  %v3409 = vsel %vm3276, %v2088, 0.0
  %v3410 = vsel %vm3277, %v2089, 0.0
  %v3411 = vsel %vm3278, %v2090, 0.0
  %v3412 = vsel %vm3279, %v2091, 0.0
  %v3413 = vsel %vm3280, %v2092, 0.0
  %v3414 = vsel %vm3281, %v2093, 0.0
  %v3415 = vsel %vm3282, %v2094, 0.0
  %v3416 = vsel %vm3283, %v2095, 0.0
  %v3417 = vsel %vm3284, %v2096, 0.0
  %v3418 = vsel %vm3285, %v2097, 0.0
  %v3419 = vsel %vm3286, %v2098, 0.0
  %v3420 = vsel %vm3287, %v2099, 0.0
  %v3421 = vsel %vm3288, %v2100, 0.0
  %v3422 = vsel %vm3289, %v2101, 0.0
  %v3423 = vsel %vm3290, %v2102, 0.0
  %v3424 = vsel %vm3291, %v2103, 0.0
  %v3425 = vsel %vm3292, %v2104, 0.0
  %vm3426 = vcmask 130048
  %v3427 = vsel %vm3426, %v3293, 0.0
  %v3428 = vsel %vm3426, %v3294, 0.0
  %v3429 = vadd.f32 %v3427, %v3428
  %v3430 = vsel %vm3426, %v3295, 0.0
  %v3431 = vadd.f32 %v3429, %v3430
  %v3432 = vsel %vm3426, %v3296, 0.0
  %v3433 = vadd.f32 %v3431, %v3432
  %v3434 = vsel %vm3426, %v3297, 0.0
  %v3435 = vadd.f32 %v3433, %v3434
  %v3436 = vsel %vm3426, %v3298, 0.0
  %v3437 = vadd.f32 %v3435, %v3436
  %v3438 = vsel %vm3426, %v3299, 0.0
  %v3439 = vadd.f32 %v3437, %v3438
  %v3440 = vsel %vm3426, %v3300, 0.0
  %v3441 = vadd.f32 %v3439, %v3440
  %v3442 = vsel %vm3426, %v3301, 0.0
  %v3443 = vadd.f32 %v3441, %v3442
  %v3444 = vsel %vm3426, %v3302, 0.0
  %v3445 = vadd.f32 %v3443, %v3444
  %v3446 = vsel %vm3426, %v3303, 0.0
  %v3447 = vadd.f32 %v3445, %v3446
  %v3448 = vsel %vm3426, %v3304, 0.0
  %v3449 = vadd.f32 %v3447, %v3448
  %v3450 = vsel %vm3426, %v3305, 0.0
  %v3451 = vadd.f32 %v3449, %v3450
  %v3452 = vsel %vm3426, %v3306, 0.0
  %v3453 = vadd.f32 %v3451, %v3452
  %v3454 = vsel %vm3426, %v3307, 0.0
  %v3455 = vadd.f32 %v3453, %v3454
  %v3456 = vsel %vm3426, %v3308, 0.0
  %v3457 = vadd.f32 %v3455, %v3456
  %v3458 = vsel %vm3426, %v3309, 0.0
  %v3459 = vadd.f32 %v3457, %v3458
  %v3460 = vsel %vm3426, %v3310, 0.0
  %v3461 = vadd.f32 %v3459, %v3460
  %v3462 = vsel %vm3426, %v3311, 0.0
  %v3463 = vadd.f32 %v3461, %v3462
  %v3464 = vsel %vm3426, %v3312, 0.0
  %v3465 = vadd.f32 %v3463, %v3464
  %v3466 = vsel %vm3426, %v3313, 0.0
  %v3467 = vadd.f32 %v3465, %v3466
  %v3468 = vsel %vm3426, %v3314, 0.0
  %v3469 = vadd.f32 %v3467, %v3468
  %v3470 = vsel %vm3426, %v3315, 0.0
  %v3471 = vadd.f32 %v3469, %v3470
  %v3472 = vsel %vm3426, %v3316, 0.0
  %v3473 = vadd.f32 %v3471, %v3472
  %v3474 = vsel %vm3426, %v3317, 0.0
  %v3475 = vadd.f32 %v3473, %v3474
  %v3476 = vsel %vm3426, %v3318, 0.0
  %v3477 = vadd.f32 %v3475, %v3476
  %v3478 = vsel %vm3426, %v3319, 0.0
  %v3479 = vadd.f32 %v3477, %v3478
  %v3480 = vsel %vm3426, %v3320, 0.0
  %v3481 = vadd.f32 %v3479, %v3480
  %v3482 = vsel %vm3426, %v3321, 0.0
  %v3483 = vadd.f32 %v3481, %v3482
  %v3484 = vsel %vm3426, %v3322, 0.0
  %v3485 = vadd.f32 %v3483, %v3484
  %v3486 = vsel %vm3426, %v3323, 0.0
  %v3487 = vadd.f32 %v3485, %v3486
  %v3488 = vsel %vm3426, %v3324, 0.0
  %v3489 = vadd.f32 %v3487, %v3488
  %v3490 = vsel %vm3426, %v3325, 0.0
  %v3491 = vadd.f32 %v3489, %v3490
  %v3492 = vsel %vm3426, %v3326, 0.0
  %v3493 = vadd.f32 %v3491, %v3492
  %v3494 = vsel %vm3426, %v3327, 0.0
  %v3495 = vadd.f32 %v3493, %v3494
  %v3496 = vsel %vm3426, %v3328, 0.0
  %v3497 = vadd.f32 %v3495, %v3496
  %v3498 = vsel %vm3426, %v3329, 0.0
  %v3499 = vadd.f32 %v3497, %v3498
  %v3500 = vsel %vm3426, %v3330, 0.0
  %v3501 = vadd.f32 %v3499, %v3500
  %v3502 = vsel %vm3426, %v3331, 0.0
  %v3503 = vadd.f32 %v3501, %v3502
  %v3504 = vsel %vm3426, %v3332, 0.0
  %v3505 = vadd.f32 %v3503, %v3504
  %v3506 = vsel %vm3426, %v3333, 0.0
  %v3507 = vadd.f32 %v3505, %v3506
  %v3508 = vsel %vm3426, %v3334, 0.0
  %v3509 = vadd.f32 %v3507, %v3508
  %v3510 = vsel %vm3426, %v3335, 0.0
  %v3511 = vadd.f32 %v3509, %v3510
  %v3512 = vsel %vm3426, %v3336, 0.0
  %v3513 = vadd.f32 %v3511, %v3512
  %v3514 = vsel %vm3426, %v3337, 0.0
  %v3515 = vadd.f32 %v3513, %v3514
  %v3516 = vsel %vm3426, %v3338, 0.0
  %v3517 = vadd.f32 %v3515, %v3516
  %v3518 = vsel %vm3426, %v3339, 0.0
  %v3519 = vadd.f32 %v3517, %v3518
  %v3520 = vsel %vm3426, %v3340, 0.0
  %v3521 = vadd.f32 %v3519, %v3520
  %v3522 = vsel %vm3426, %v3341, 0.0
  %v3523 = vadd.f32 %v3521, %v3522
  %v3524 = vsel %vm3426, %v3342, 0.0
  %v3525 = vadd.f32 %v3523, %v3524
  %v3526 = vsel %vm3426, %v3343, 0.0
  %v3527 = vadd.f32 %v3525, %v3526
  %v3528 = vsel %vm3426, %v3344, 0.0
  %v3529 = vadd.f32 %v3527, %v3528
  %v3530 = vsel %vm3426, %v3345, 0.0
  %v3531 = vadd.f32 %v3529, %v3530
  %v3532 = vsel %vm3426, %v3346, 0.0
  %v3533 = vadd.f32 %v3531, %v3532
  %v3534 = vsel %vm3426, %v3347, 0.0
  %v3535 = vadd.f32 %v3533, %v3534
  %v3536 = vsel %vm3426, %v3348, 0.0
  %v3537 = vadd.f32 %v3535, %v3536
  %v3538 = vsel %vm3426, %v3349, 0.0
  %v3539 = vadd.f32 %v3537, %v3538
  %v3540 = vsel %vm3426, %v3350, 0.0
  %v3541 = vadd.f32 %v3539, %v3540
  %v3542 = vsel %vm3426, %v3351, 0.0
  %v3543 = vadd.f32 %v3541, %v3542
  %v3544 = vsel %vm3426, %v3352, 0.0
  %v3545 = vadd.f32 %v3543, %v3544
  %v3546 = vsel %vm3426, %v3353, 0.0
  %v3547 = vadd.f32 %v3545, %v3546
  %v3548 = vsel %vm3426, %v3354, 0.0
  %v3549 = vadd.f32 %v3547, %v3548
  %v3550 = vsel %vm3426, %v3355, 0.0
  %v3551 = vadd.f32 %v3549, %v3550
  %v3552 = vsel %vm3426, %v3356, 0.0
  %v3553 = vadd.f32 %v3551, %v3552
  %v3554 = vsel %vm3426, %v3357, 0.0
  %v3555 = vadd.f32 %v3553, %v3554
  %v3556 = vsel %vm3426, %v3358, 0.0
  %v3557 = vadd.f32 %v3555, %v3556
  %v3558 = vsel %vm3426, %v3359, 0.0
  %v3559 = vadd.f32 %v3557, %v3558
  %v3560 = vsel %vm3426, %v3360, 0.0
  %v3561 = vadd.f32 %v3559, %v3560
  %v3562 = vsel %vm3426, %v3361, 0.0
  %v3563 = vadd.f32 %v3561, %v3562
  %v3564 = vsel %vm3426, %v3362, 0.0
  %v3565 = vadd.f32 %v3563, %v3564
  %v3566 = vsel %vm3426, %v3363, 0.0
  %v3567 = vadd.f32 %v3565, %v3566
  %v3568 = vsel %vm3426, %v3364, 0.0
  %v3569 = vadd.f32 %v3567, %v3568
  %v3570 = vsel %vm3426, %v3365, 0.0
  %v3571 = vadd.f32 %v3569, %v3570
  %v3572 = vsel %vm3426, %v3366, 0.0
  %v3573 = vadd.f32 %v3571, %v3572
  %v3574 = vsel %vm3426, %v3367, 0.0
  %v3575 = vadd.f32 %v3573, %v3574
  %v3576 = vsel %vm3426, %v3368, 0.0
  %v3577 = vadd.f32 %v3575, %v3576
  %v3578 = vsel %vm3426, %v3369, 0.0
  %v3579 = vadd.f32 %v3577, %v3578
  %v3580 = vsel %vm3426, %v3370, 0.0
  %v3581 = vadd.f32 %v3579, %v3580
  %v3582 = vsel %vm3426, %v3371, 0.0
  %v3583 = vadd.f32 %v3581, %v3582
  %v3584 = vsel %vm3426, %v3372, 0.0
  %v3585 = vadd.f32 %v3583, %v3584
  %v3586 = vsel %vm3426, %v3373, 0.0
  %v3587 = vadd.f32 %v3585, %v3586
  %v3588 = vsel %vm3426, %v3374, 0.0
  %v3589 = vadd.f32 %v3587, %v3588
  %v3590 = vsel %vm3426, %v3375, 0.0
  %v3591 = vadd.f32 %v3589, %v3590
  %v3592 = vsel %vm3426, %v3376, 0.0
  %v3593 = vadd.f32 %v3591, %v3592
  %v3594 = vsel %vm3426, %v3377, 0.0
  %v3595 = vadd.f32 %v3593, %v3594
  %v3596 = vsel %vm3426, %v3378, 0.0
  %v3597 = vadd.f32 %v3595, %v3596
  %v3598 = vsel %vm3426, %v3379, 0.0
  %v3599 = vadd.f32 %v3597, %v3598
  %v3600 = vsel %vm3426, %v3380, 0.0
  %v3601 = vadd.f32 %v3599, %v3600
  %v3602 = vsel %vm3426, %v3381, 0.0
  %v3603 = vadd.f32 %v3601, %v3602
  %v3604 = vsel %vm3426, %v3382, 0.0
  %v3605 = vadd.f32 %v3603, %v3604
  %v3606 = vsel %vm3426, %v3383, 0.0
  %v3607 = vadd.f32 %v3605, %v3606
  %v3608 = vsel %vm3426, %v3384, 0.0
  %v3609 = vadd.f32 %v3607, %v3608
  %v3610 = vsel %vm3426, %v3385, 0.0
  %v3611 = vadd.f32 %v3609, %v3610
  %v3612 = vsel %vm3426, %v3386, 0.0
  %v3613 = vadd.f32 %v3611, %v3612
  %v3614 = vsel %vm3426, %v3387, 0.0
  %v3615 = vadd.f32 %v3613, %v3614
  %v3616 = vsel %vm3426, %v3388, 0.0
  %v3617 = vadd.f32 %v3615, %v3616
  %v3618 = vsel %vm3426, %v3389, 0.0
  %v3619 = vadd.f32 %v3617, %v3618
  %v3620 = vsel %vm3426, %v3390, 0.0
  %v3621 = vadd.f32 %v3619, %v3620
  %v3622 = vsel %vm3426, %v3391, 0.0
  %v3623 = vadd.f32 %v3621, %v3622
  %v3624 = vsel %vm3426, %v3392, 0.0
  %v3625 = vadd.f32 %v3623, %v3624
  %v3626 = vsel %vm3426, %v3393, 0.0
  %v3627 = vadd.f32 %v3625, %v3626
  %v3628 = vsel %vm3426, %v3394, 0.0
  %v3629 = vadd.f32 %v3627, %v3628
  %v3630 = vsel %vm3426, %v3395, 0.0
  %v3631 = vadd.f32 %v3629, %v3630
  %v3632 = vsel %vm3426, %v3396, 0.0
  %v3633 = vadd.f32 %v3631, %v3632
  %v3634 = vsel %vm3426, %v3397, 0.0
  %v3635 = vadd.f32 %v3633, %v3634
  %v3636 = vsel %vm3426, %v3398, 0.0
  %v3637 = vadd.f32 %v3635, %v3636
  %v3638 = vsel %vm3426, %v3399, 0.0
  %v3639 = vadd.f32 %v3637, %v3638
  %v3640 = vsel %vm3426, %v3400, 0.0
  %v3641 = vadd.f32 %v3639, %v3640
  %v3642 = vsel %vm3426, %v3401, 0.0
  %v3643 = vadd.f32 %v3641, %v3642
  %v3644 = vsel %vm3426, %v3402, 0.0
  %v3645 = vadd.f32 %v3643, %v3644
  %v3646 = vsel %vm3426, %v3403, 0.0
  %v3647 = vadd.f32 %v3645, %v3646
  %v3648 = vsel %vm3426, %v3404, 0.0
  %v3649 = vadd.f32 %v3647, %v3648
  %v3650 = vsel %vm3426, %v3405, 0.0
  %v3651 = vadd.f32 %v3649, %v3650
  %v3652 = vsel %vm3426, %v3406, 0.0
  %v3653 = vadd.f32 %v3651, %v3652
  %v3654 = vsel %vm3426, %v3407, 0.0
  %v3655 = vadd.f32 %v3653, %v3654
  %v3656 = vsel %vm3426, %v3408, 0.0
  %v3657 = vadd.f32 %v3655, %v3656
  %v3658 = vsel %vm3426, %v3409, 0.0
  %v3659 = vadd.f32 %v3657, %v3658
  %v3660 = vsel %vm3426, %v3410, 0.0
  %v3661 = vadd.f32 %v3659, %v3660
  %v3662 = vsel %vm3426, %v3411, 0.0
  %v3663 = vadd.f32 %v3661, %v3662
  %v3664 = vsel %vm3426, %v3412, 0.0
  %v3665 = vadd.f32 %v3663, %v3664
  %v3666 = vsel %vm3426, %v3413, 0.0
  %v3667 = vadd.f32 %v3665, %v3666
  %v3668 = vsel %vm3426, %v3414, 0.0
  %v3669 = vadd.f32 %v3667, %v3668
  %v3670 = vsel %vm3426, %v3415, 0.0
  %v3671 = vadd.f32 %v3669, %v3670
  %v3672 = vsel %vm3426, %v3416, 0.0
  %v3673 = vadd.f32 %v3671, %v3672
  %v3674 = vsel %vm3426, %v3417, 0.0
  %v3675 = vadd.f32 %v3673, %v3674
  %v3676 = vsel %vm3426, %v3418, 0.0
  %v3677 = vadd.f32 %v3675, %v3676
  %v3678 = vsel %vm3426, %v3419, 0.0
  %v3679 = vadd.f32 %v3677, %v3678
  %v3680 = vsel %vm3426, %v3420, 0.0
  %v3681 = vadd.f32 %v3679, %v3680
  %v3682 = vsel %vm3426, %v3421, 0.0
  %v3683 = vadd.f32 %v3681, %v3682
  %v3684 = vsel %vm3426, %v3422, 0.0
  %v3685 = vadd.f32 %v3683, %v3684
  %v3686 = vsel %vm3426, %v3423, 0.0
  %v3687 = vadd.f32 %v3685, %v3686
  %v3688 = vsel %vm3426, %v3424, 0.0
  %v3689 = vadd.f32 %v3687, %v3688
  %vm3690 = vcmask 128000
  %v3691 = vsel %vm3690, %v3425, 0.0
  %v3692 = vadd.f32 %v3689, %v3691
  %v3693 = vrot.slane %v3692, 4
  %v3694 = vadd.f32 %v3692, %v3693
  %v3695 = vrot.slane %v3694, 2
  %v3696 = vadd.f32 %v3694, %v3695
  %v3697 = vrot.slane %v3696, 1
  %v3698 = vadd.f32 %v3696, %v3697
  %v3699 = vmul.f32 %v3698, 0.0062111802
  %vm3700 = vcmp.ge.s32.totalorder %v2628, 483
  %vm3701 = vcmp.ge.s32.totalorder %v2629, 483
  %vm3702 = vcmp.ge.s32.totalorder %v2630, 483
  %vm3703 = vcmp.ge.s32.totalorder %v2631, 483
  %vm3704 = vcmp.ge.s32.totalorder %v2632, 483
  %vm3705 = vcmp.ge.s32.totalorder %v2633, 483
  %vm3706 = vcmp.ge.s32.totalorder %v2634, 483
  %vm3707 = vcmp.ge.s32.totalorder %v2635, 483
  %vm3708 = vcmp.ge.s32.totalorder %v2636, 483
  %vm3709 = vcmp.ge.s32.totalorder %v2637, 483
  %vm3710 = vcmp.ge.s32.totalorder %v2638, 483
  %vm3711 = vcmp.ge.s32.totalorder %v2639, 483
  %vm3712 = vcmp.ge.s32.totalorder %v2640, 483
  %vm3713 = vcmp.ge.s32.totalorder %v2641, 483
  %vm3714 = vcmp.ge.s32.totalorder %v2642, 483
  %vm3715 = vcmp.ge.s32.totalorder %v2643, 483
  %vm3716 = vcmp.ge.s32.totalorder %v2644, 483
  %vm3717 = vcmp.ge.s32.totalorder %v2645, 483
  %vm3718 = vcmp.ge.s32.totalorder %v2646, 483
  %vm3719 = vcmp.ge.s32.totalorder %v2647, 483
  %vm3720 = vcmp.ge.s32.totalorder %v2648, 483
  %vm3721 = vcmp.ge.s32.totalorder %v2649, 483
  %vm3722 = vcmp.ge.s32.totalorder %v2650, 483
  %vm3723 = vcmp.ge.s32.totalorder %v2651, 483
  %vm3724 = vcmp.ge.s32.totalorder %v2652, 483
  %vm3725 = vcmp.ge.s32.totalorder %v2653, 483
  %vm3726 = vcmp.ge.s32.totalorder %v2654, 483
  %vm3727 = vcmp.ge.s32.totalorder %v2655, 483
  %vm3728 = vcmp.ge.s32.totalorder %v2656, 483
  %vm3729 = vcmp.ge.s32.totalorder %v2657, 483
  %vm3730 = vcmp.ge.s32.totalorder %v2658, 483
  %vm3731 = vcmp.ge.s32.totalorder %v2659, 483
  %vm3732 = vcmp.ge.s32.totalorder %v2660, 483
  %vm3733 = vcmp.ge.s32.totalorder %v2661, 483
  %vm3734 = vcmp.ge.s32.totalorder %v2662, 483
  %vm3735 = vcmp.ge.s32.totalorder %v2663, 483
  %vm3736 = vcmp.ge.s32.totalorder %v2664, 483
  %vm3737 = vcmp.ge.s32.totalorder %v2665, 483
  %vm3738 = vcmp.ge.s32.totalorder %v2666, 483
  %vm3739 = vcmp.ge.s32.totalorder %v2667, 483
  %vm3740 = vcmp.ge.s32.totalorder %v2668, 483
  %vm3741 = vcmp.ge.s32.totalorder %v2669, 483
  %vm3742 = vcmp.ge.s32.totalorder %v2670, 483
  %vm3743 = vcmp.ge.s32.totalorder %v2671, 483
  %vm3744 = vcmp.ge.s32.totalorder %v2672, 483
  %vm3745 = vcmp.ge.s32.totalorder %v2673, 483
  %vm3746 = vcmp.ge.s32.totalorder %v2674, 483
  %vm3747 = vcmp.ge.s32.totalorder %v2675, 483
  %vm3748 = vcmp.ge.s32.totalorder %v2676, 483
  %vm3749 = vcmp.ge.s32.totalorder %v2677, 483
  %vm3750 = vcmp.ge.s32.totalorder %v2678, 483
  %vm3751 = vcmp.ge.s32.totalorder %v2679, 483
  %vm3752 = vcmp.ge.s32.totalorder %v2680, 483
  %vm3753 = vcmp.ge.s32.totalorder %v2681, 483
  %vm3754 = vcmp.ge.s32.totalorder %v2682, 483
  %vm3755 = vcmp.ge.s32.totalorder %v2683, 483
  %vm3756 = vcmp.ge.s32.totalorder %v2684, 483
  %vm3757 = vcmp.ge.s32.totalorder %v2685, 483
  %vm3758 = vcmp.ge.s32.totalorder %v2686, 483
  %vm3759 = vcmp.ge.s32.totalorder %v2687, 483
  %vm3760 = vcmp.ge.s32.totalorder %v2688, 483
  %vm3761 = vcmp.ge.s32.totalorder %v2689, 483
  %vm3762 = vcmp.ge.s32.totalorder %v2690, 483
  %vm3763 = vcmp.ge.s32.totalorder %v2691, 483
  %vm3764 = vcmp.ge.s32.totalorder %v2692, 483
  %vm3765 = vcmp.ge.s32.totalorder %v2693, 483
  %vm3766 = vcmp.ge.s32.totalorder %v2694, 483
  %vm3767 = vcmp.ge.s32.totalorder %v2695, 483
  %vm3768 = vcmp.ge.s32.totalorder %v2696, 483
  %vm3769 = vcmp.ge.s32.totalorder %v2697, 483
  %vm3770 = vcmp.ge.s32.totalorder %v2698, 483
  %vm3771 = vcmp.ge.s32.totalorder %v2699, 483
  %vm3772 = vcmp.ge.s32.totalorder %v2700, 483
  %vm3773 = vcmp.ge.s32.totalorder %v2701, 483
  %vm3774 = vcmp.ge.s32.totalorder %v2702, 483
  %vm3775 = vcmp.ge.s32.totalorder %v2703, 483
  %vm3776 = vcmp.ge.s32.totalorder %v2704, 483
  %vm3777 = vcmp.ge.s32.totalorder %v2705, 483
  %vm3778 = vcmp.ge.s32.totalorder %v2706, 483
  %vm3779 = vcmp.ge.s32.totalorder %v2707, 483
  %vm3780 = vcmp.ge.s32.totalorder %v2708, 483
  %vm3781 = vcmp.ge.s32.totalorder %v2709, 483
  %vm3782 = vcmp.ge.s32.totalorder %v2710, 483
  %vm3783 = vcmp.ge.s32.totalorder %v2711, 483
  %vm3784 = vcmp.ge.s32.totalorder %v2712, 483
  %vm3785 = vcmp.ge.s32.totalorder %v2713, 483
  %vm3786 = vcmp.ge.s32.totalorder %v2714, 483
  %vm3787 = vcmp.ge.s32.totalorder %v2715, 483
  %vm3788 = vcmp.ge.s32.totalorder %v2716, 483
  %vm3789 = vcmp.ge.s32.totalorder %v2717, 483
  %vm3790 = vcmp.ge.s32.totalorder %v2718, 483
  %vm3791 = vcmp.ge.s32.totalorder %v2719, 483
  %vm3792 = vcmp.ge.s32.totalorder %v2720, 483
  %vm3793 = vcmp.ge.s32.totalorder %v2721, 483
  %vm3794 = vcmp.ge.s32.totalorder %v2722, 483
  %vm3795 = vcmp.ge.s32.totalorder %v2723, 483
  %vm3796 = vcmp.ge.s32.totalorder %v2724, 483
  %vm3797 = vcmp.ge.s32.totalorder %v2725, 483
  %vm3798 = vcmp.ge.s32.totalorder %v2726, 483
  %vm3799 = vcmp.ge.s32.totalorder %v2727, 483
  %vm3800 = vcmp.ge.s32.totalorder %v2728, 483
  %vm3801 = vcmp.ge.s32.totalorder %v2729, 483
  %vm3802 = vcmp.ge.s32.totalorder %v2730, 483
  %vm3803 = vcmp.ge.s32.totalorder %v2731, 483
  %vm3804 = vcmp.ge.s32.totalorder %v2732, 483
  %vm3805 = vcmp.ge.s32.totalorder %v2733, 483
  %vm3806 = vcmp.ge.s32.totalorder %v2734, 483
  %vm3807 = vcmp.ge.s32.totalorder %v2735, 483
  %vm3808 = vcmp.ge.s32.totalorder %v2736, 483
  %vm3809 = vcmp.ge.s32.totalorder %v2737, 483
  %vm3810 = vcmp.ge.s32.totalorder %v2738, 483
  %vm3811 = vcmp.ge.s32.totalorder %v2739, 483
  %vm3812 = vcmp.ge.s32.totalorder %v2740, 483
  %vm3813 = vcmp.ge.s32.totalorder %v2741, 483
  %vm3814 = vcmp.ge.s32.totalorder %v2742, 483
  %vm3815 = vcmp.ge.s32.totalorder %v2743, 483
  %vm3816 = vcmp.ge.s32.totalorder %v2744, 483
  %vm3817 = vcmp.ge.s32.totalorder %v2745, 483
  %vm3818 = vcmp.ge.s32.totalorder %v2746, 483
  %vm3819 = vcmp.ge.s32.totalorder %v2747, 483
  %vm3820 = vcmp.ge.s32.totalorder %v2748, 483
  %vm3821 = vcmp.ge.s32.totalorder %v2749, 483
  %vm3822 = vcmp.ge.s32.totalorder %v2750, 483
  %vm3823 = vcmp.ge.s32.totalorder %v2751, 483
  %vm3824 = vcmp.ge.s32.totalorder %v2752, 483
  %vm3825 = vcmp.ge.s32.totalorder %v2753, 483
  %vm3826 = vcmp.ge.s32.totalorder %v2754, 483
  %vm3827 = vcmp.ge.s32.totalorder %v2755, 483
  %vm3828 = vcmp.ge.s32.totalorder %v2756, 483
  %vm3829 = vcmp.ge.s32.totalorder %v2757, 483
  %vm3830 = vcmp.ge.s32.totalorder %v2758, 483
  %vm3831 = vcmp.ge.s32.totalorder %v2759, 483
  %vm3832 = vcmp.ge.s32.totalorder %v2760, 483
  %vm3833 = vcmp.lt.s32.totalorder %v2628, 676
  %vm3834 = vcmp.lt.s32.totalorder %v2629, 676
  %vm3835 = vcmp.lt.s32.totalorder %v2630, 676
  %vm3836 = vcmp.lt.s32.totalorder %v2631, 676
  %vm3837 = vcmp.lt.s32.totalorder %v2632, 676
  %vm3838 = vcmp.lt.s32.totalorder %v2633, 676
  %vm3839 = vcmp.lt.s32.totalorder %v2634, 676
  %vm3840 = vcmp.lt.s32.totalorder %v2635, 676
  %vm3841 = vcmp.lt.s32.totalorder %v2636, 676
  %vm3842 = vcmp.lt.s32.totalorder %v2637, 676
  %vm3843 = vcmp.lt.s32.totalorder %v2638, 676
  %vm3844 = vcmp.lt.s32.totalorder %v2639, 676
  %vm3845 = vcmp.lt.s32.totalorder %v2640, 676
  %vm3846 = vcmp.lt.s32.totalorder %v2641, 676
  %vm3847 = vcmp.lt.s32.totalorder %v2642, 676
  %vm3848 = vcmp.lt.s32.totalorder %v2643, 676
  %vm3849 = vcmp.lt.s32.totalorder %v2644, 676
  %vm3850 = vcmp.lt.s32.totalorder %v2645, 676
  %vm3851 = vcmp.lt.s32.totalorder %v2646, 676
  %vm3852 = vcmp.lt.s32.totalorder %v2647, 676
  %vm3853 = vcmp.lt.s32.totalorder %v2648, 676
  %vm3854 = vcmp.lt.s32.totalorder %v2649, 676
  %vm3855 = vcmp.lt.s32.totalorder %v2650, 676
  %vm3856 = vcmp.lt.s32.totalorder %v2651, 676
  %vm3857 = vcmp.lt.s32.totalorder %v2652, 676
  %vm3858 = vcmp.lt.s32.totalorder %v2653, 676
  %vm3859 = vcmp.lt.s32.totalorder %v2654, 676
  %vm3860 = vcmp.lt.s32.totalorder %v2655, 676
  %vm3861 = vcmp.lt.s32.totalorder %v2656, 676
  %vm3862 = vcmp.lt.s32.totalorder %v2657, 676
  %vm3863 = vcmp.lt.s32.totalorder %v2658, 676
  %vm3864 = vcmp.lt.s32.totalorder %v2659, 676
  %vm3865 = vcmp.lt.s32.totalorder %v2660, 676
  %vm3866 = vcmp.lt.s32.totalorder %v2661, 676
  %vm3867 = vcmp.lt.s32.totalorder %v2662, 676
  %vm3868 = vcmp.lt.s32.totalorder %v2663, 676
  %vm3869 = vcmp.lt.s32.totalorder %v2664, 676
  %vm3870 = vcmp.lt.s32.totalorder %v2665, 676
  %vm3871 = vcmp.lt.s32.totalorder %v2666, 676
  %vm3872 = vcmp.lt.s32.totalorder %v2667, 676
  %vm3873 = vcmp.lt.s32.totalorder %v2668, 676
  %vm3874 = vcmp.lt.s32.totalorder %v2669, 676
  %vm3875 = vcmp.lt.s32.totalorder %v2670, 676
  %vm3876 = vcmp.lt.s32.totalorder %v2671, 676
  %vm3877 = vcmp.lt.s32.totalorder %v2672, 676
  %vm3878 = vcmp.lt.s32.totalorder %v2673, 676
  %vm3879 = vcmp.lt.s32.totalorder %v2674, 676
  %vm3880 = vcmp.lt.s32.totalorder %v2675, 676
  %vm3881 = vcmp.lt.s32.totalorder %v2676, 676
  %vm3882 = vcmp.lt.s32.totalorder %v2677, 676
  %vm3883 = vcmp.lt.s32.totalorder %v2678, 676
  %vm3884 = vcmp.lt.s32.totalorder %v2679, 676
  %vm3885 = vcmp.lt.s32.totalorder %v2680, 676
  %vm3886 = vcmp.lt.s32.totalorder %v2681, 676
  %vm3887 = vcmp.lt.s32.totalorder %v2682, 676
  %vm3888 = vcmp.lt.s32.totalorder %v2683, 676
  %vm3889 = vcmp.lt.s32.totalorder %v2684, 676
  %vm3890 = vcmp.lt.s32.totalorder %v2685, 676
  %vm3891 = vcmp.lt.s32.totalorder %v2686, 676
  %vm3892 = vcmp.lt.s32.totalorder %v2687, 676
  %vm3893 = vcmp.lt.s32.totalorder %v2688, 676
  %vm3894 = vcmp.lt.s32.totalorder %v2689, 676
  %vm3895 = vcmp.lt.s32.totalorder %v2690, 676
  %vm3896 = vcmp.lt.s32.totalorder %v2691, 676
  %vm3897 = vcmp.lt.s32.totalorder %v2692, 676
  %vm3898 = vcmp.lt.s32.totalorder %v2693, 676
  %vm3899 = vcmp.lt.s32.totalorder %v2694, 676
  %vm3900 = vcmp.lt.s32.totalorder %v2695, 676
  %vm3901 = vcmp.lt.s32.totalorder %v2696, 676
  %vm3902 = vcmp.lt.s32.totalorder %v2697, 676
  %vm3903 = vcmp.lt.s32.totalorder %v2698, 676
  %vm3904 = vcmp.lt.s32.totalorder %v2699, 676
  %vm3905 = vcmp.lt.s32.totalorder %v2700, 676
  %vm3906 = vcmp.lt.s32.totalorder %v2701, 676
  %vm3907 = vcmp.lt.s32.totalorder %v2702, 676
  %vm3908 = vcmp.lt.s32.totalorder %v2703, 676
  %vm3909 = vcmp.lt.s32.totalorder %v2704, 676
  %vm3910 = vcmp.lt.s32.totalorder %v2705, 676
  %vm3911 = vcmp.lt.s32.totalorder %v2706, 676
  %vm3912 = vcmp.lt.s32.totalorder %v2707, 676
  %vm3913 = vcmp.lt.s32.totalorder %v2708, 676
  %vm3914 = vcmp.lt.s32.totalorder %v2709, 676
  %vm3915 = vcmp.lt.s32.totalorder %v2710, 676
  %vm3916 = vcmp.lt.s32.totalorder %v2711, 676
  %vm3917 = vcmp.lt.s32.totalorder %v2712, 676
  %vm3918 = vcmp.lt.s32.totalorder %v2713, 676
  %vm3919 = vcmp.lt.s32.totalorder %v2714, 676
  %vm3920 = vcmp.lt.s32.totalorder %v2715, 676
  %vm3921 = vcmp.lt.s32.totalorder %v2716, 676
  %vm3922 = vcmp.lt.s32.totalorder %v2717, 676
  %vm3923 = vcmp.lt.s32.totalorder %v2718, 676
  %vm3924 = vcmp.lt.s32.totalorder %v2719, 676
  %vm3925 = vcmp.lt.s32.totalorder %v2720, 676
  %vm3926 = vcmp.lt.s32.totalorder %v2721, 676
  %vm3927 = vcmp.lt.s32.totalorder %v2722, 676
  %vm3928 = vcmp.lt.s32.totalorder %v2723, 676
  %vm3929 = vcmp.lt.s32.totalorder %v2724, 676
  %vm3930 = vcmp.lt.s32.totalorder %v2725, 676
  %vm3931 = vcmp.lt.s32.totalorder %v2726, 676
  %vm3932 = vcmp.lt.s32.totalorder %v2727, 676
  %vm3933 = vcmp.lt.s32.totalorder %v2728, 676
  %vm3934 = vcmp.lt.s32.totalorder %v2729, 676
  %vm3935 = vcmp.lt.s32.totalorder %v2730, 676
  %vm3936 = vcmp.lt.s32.totalorder %v2731, 676
  %vm3937 = vcmp.lt.s32.totalorder %v2732, 676
  %vm3938 = vcmp.lt.s32.totalorder %v2733, 676
  %vm3939 = vcmp.lt.s32.totalorder %v2734, 676
  %vm3940 = vcmp.lt.s32.totalorder %v2735, 676
  %vm3941 = vcmp.lt.s32.totalorder %v2736, 676
  %vm3942 = vcmp.lt.s32.totalorder %v2737, 676
  %vm3943 = vcmp.lt.s32.totalorder %v2738, 676
  %vm3944 = vcmp.lt.s32.totalorder %v2739, 676
  %vm3945 = vcmp.lt.s32.totalorder %v2740, 676
  %vm3946 = vcmp.lt.s32.totalorder %v2741, 676
  %vm3947 = vcmp.lt.s32.totalorder %v2742, 676
  %vm3948 = vcmp.lt.s32.totalorder %v2743, 676
  %vm3949 = vcmp.lt.s32.totalorder %v2744, 676
  %vm3950 = vcmp.lt.s32.totalorder %v2745, 676
  %vm3951 = vcmp.lt.s32.totalorder %v2746, 676
  %vm3952 = vcmp.lt.s32.totalorder %v2747, 676
  %vm3953 = vcmp.lt.s32.totalorder %v2748, 676
  %vm3954 = vcmp.lt.s32.totalorder %v2749, 676
  %vm3955 = vcmp.lt.s32.totalorder %v2750, 676
  %vm3956 = vcmp.lt.s32.totalorder %v2751, 676
  %vm3957 = vcmp.lt.s32.totalorder %v2752, 676
  %vm3958 = vcmp.lt.s32.totalorder %v2753, 676
  %vm3959 = vcmp.lt.s32.totalorder %v2754, 676
  %vm3960 = vcmp.lt.s32.totalorder %v2755, 676
  %vm3961 = vcmp.lt.s32.totalorder %v2756, 676
  %vm3962 = vcmp.lt.s32.totalorder %v2757, 676
  %vm3963 = vcmp.lt.s32.totalorder %v2758, 676
  %vm3964 = vcmp.lt.s32.totalorder %v2759, 676
  %vm3965 = vcmp.lt.s32.totalorder %v2760, 676
  %vm3966 = vmand %vm3700, %vm3833
  %vm3967 = vmand %vm3701, %vm3834
  %vm3968 = vmand %vm3702, %vm3835
  %vm3969 = vmand %vm3703, %vm3836
  %vm3970 = vmand %vm3704, %vm3837
  %vm3971 = vmand %vm3705, %vm3838
  %vm3972 = vmand %vm3706, %vm3839
  %vm3973 = vmand %vm3707, %vm3840
  %vm3974 = vmand %vm3708, %vm3841
  %vm3975 = vmand %vm3709, %vm3842
  %vm3976 = vmand %vm3710, %vm3843
  %vm3977 = vmand %vm3711, %vm3844
  %vm3978 = vmand %vm3712, %vm3845
  %vm3979 = vmand %vm3713, %vm3846
  %vm3980 = vmand %vm3714, %vm3847
  %vm3981 = vmand %vm3715, %vm3848
  %vm3982 = vmand %vm3716, %vm3849
  %vm3983 = vmand %vm3717, %vm3850
  %vm3984 = vmand %vm3718, %vm3851
  %vm3985 = vmand %vm3719, %vm3852
  %vm3986 = vmand %vm3720, %vm3853
  %vm3987 = vmand %vm3721, %vm3854
  %vm3988 = vmand %vm3722, %vm3855
  %vm3989 = vmand %vm3723, %vm3856
  %vm3990 = vmand %vm3724, %vm3857
  %vm3991 = vmand %vm3725, %vm3858
  %vm3992 = vmand %vm3726, %vm3859
  %vm3993 = vmand %vm3727, %vm3860
  %vm3994 = vmand %vm3728, %vm3861
  %vm3995 = vmand %vm3729, %vm3862
  %vm3996 = vmand %vm3730, %vm3863
  %vm3997 = vmand %vm3731, %vm3864
  %vm3998 = vmand %vm3732, %vm3865
  %vm3999 = vmand %vm3733, %vm3866
  %vm4000 = vmand %vm3734, %vm3867
  %vm4001 = vmand %vm3735, %vm3868
  %vm4002 = vmand %vm3736, %vm3869
  %vm4003 = vmand %vm3737, %vm3870
  %vm4004 = vmand %vm3738, %vm3871
  %vm4005 = vmand %vm3739, %vm3872
  %vm4006 = vmand %vm3740, %vm3873
  %vm4007 = vmand %vm3741, %vm3874
  %vm4008 = vmand %vm3742, %vm3875
  %vm4009 = vmand %vm3743, %vm3876
  %vm4010 = vmand %vm3744, %vm3877
  %vm4011 = vmand %vm3745, %vm3878
  %vm4012 = vmand %vm3746, %vm3879
  %vm4013 = vmand %vm3747, %vm3880
  %vm4014 = vmand %vm3748, %vm3881
  %vm4015 = vmand %vm3749, %vm3882
  %vm4016 = vmand %vm3750, %vm3883
  %vm4017 = vmand %vm3751, %vm3884
  %vm4018 = vmand %vm3752, %vm3885
  %vm4019 = vmand %vm3753, %vm3886
  %vm4020 = vmand %vm3754, %vm3887
  %vm4021 = vmand %vm3755, %vm3888
  %vm4022 = vmand %vm3756, %vm3889
  %vm4023 = vmand %vm3757, %vm3890
  %vm4024 = vmand %vm3758, %vm3891
  %vm4025 = vmand %vm3759, %vm3892
  %vm4026 = vmand %vm3760, %vm3893
  %vm4027 = vmand %vm3761, %vm3894
  %vm4028 = vmand %vm3762, %vm3895
  %vm4029 = vmand %vm3763, %vm3896
  %vm4030 = vmand %vm3764, %vm3897
  %vm4031 = vmand %vm3765, %vm3898
  %vm4032 = vmand %vm3766, %vm3899
  %vm4033 = vmand %vm3767, %vm3900
  %vm4034 = vmand %vm3768, %vm3901
  %vm4035 = vmand %vm3769, %vm3902
  %vm4036 = vmand %vm3770, %vm3903
  %vm4037 = vmand %vm3771, %vm3904
  %vm4038 = vmand %vm3772, %vm3905
  %vm4039 = vmand %vm3773, %vm3906
  %vm4040 = vmand %vm3774, %vm3907
  %vm4041 = vmand %vm3775, %vm3908
  %vm4042 = vmand %vm3776, %vm3909
  %vm4043 = vmand %vm3777, %vm3910
  %vm4044 = vmand %vm3778, %vm3911
  %vm4045 = vmand %vm3779, %vm3912
  %vm4046 = vmand %vm3780, %vm3913
  %vm4047 = vmand %vm3781, %vm3914
  %vm4048 = vmand %vm3782, %vm3915
  %vm4049 = vmand %vm3783, %vm3916
  %vm4050 = vmand %vm3784, %vm3917
  %vm4051 = vmand %vm3785, %vm3918
  %vm4052 = vmand %vm3786, %vm3919
  %vm4053 = vmand %vm3787, %vm3920
  %vm4054 = vmand %vm3788, %vm3921
  %vm4055 = vmand %vm3789, %vm3922
  %vm4056 = vmand %vm3790, %vm3923
  %vm4057 = vmand %vm3791, %vm3924
  %vm4058 = vmand %vm3792, %vm3925
  %vm4059 = vmand %vm3793, %vm3926
  %vm4060 = vmand %vm3794, %vm3927
  %vm4061 = vmand %vm3795, %vm3928
  %vm4062 = vmand %vm3796, %vm3929
  %vm4063 = vmand %vm3797, %vm3930
  %vm4064 = vmand %vm3798, %vm3931
  %vm4065 = vmand %vm3799, %vm3932
  %vm4066 = vmand %vm3800, %vm3933
  %vm4067 = vmand %vm3801, %vm3934
  %vm4068 = vmand %vm3802, %vm3935
  %vm4069 = vmand %vm3803, %vm3936
  %vm4070 = vmand %vm3804, %vm3937
  %vm4071 = vmand %vm3805, %vm3938
  %vm4072 = vmand %vm3806, %vm3939
  %vm4073 = vmand %vm3807, %vm3940
  %vm4074 = vmand %vm3808, %vm3941
  %vm4075 = vmand %vm3809, %vm3942
  %vm4076 = vmand %vm3810, %vm3943
  %vm4077 = vmand %vm3811, %vm3944
  %vm4078 = vmand %vm3812, %vm3945
  %vm4079 = vmand %vm3813, %vm3946
  %vm4080 = vmand %vm3814, %vm3947
  %vm4081 = vmand %vm3815, %vm3948
  %vm4082 = vmand %vm3816, %vm3949
  %vm4083 = vmand %vm3817, %vm3950
  %vm4084 = vmand %vm3818, %vm3951
  %vm4085 = vmand %vm3819, %vm3952
  %vm4086 = vmand %vm3820, %vm3953
  %vm4087 = vmand %vm3821, %vm3954
  %vm4088 = vmand %vm3822, %vm3955
  %vm4089 = vmand %vm3823, %vm3956
  %vm4090 = vmand %vm3824, %vm3957
  %vm4091 = vmand %vm3825, %vm3958
  %vm4092 = vmand %vm3826, %vm3959
  %vm4093 = vmand %vm3827, %vm3960
  %vm4094 = vmand %vm3828, %vm3961
  %vm4095 = vmand %vm3829, %vm3962
  %vm4096 = vmand %vm3830, %vm3963
  %vm4097 = vmand %vm3831, %vm3964
  %vm4098 = vmand %vm3832, %vm3965
  %v4099 = vsel %vm3966, %v1972, 0.0
  %v4100 = vsel %vm3967, %v1973, 0.0
  %v4101 = vsel %vm3968, %v1974, 0.0
  %v4102 = vsel %vm3969, %v1975, 0.0
  %v4103 = vsel %vm3970, %v1976, 0.0
  %v4104 = vsel %vm3971, %v1977, 0.0
  %v4105 = vsel %vm3972, %v1978, 0.0
  %v4106 = vsel %vm3973, %v1979, 0.0
  %v4107 = vsel %vm3974, %v1980, 0.0
  %v4108 = vsel %vm3975, %v1981, 0.0
  %v4109 = vsel %vm3976, %v1982, 0.0
  %v4110 = vsel %vm3977, %v1983, 0.0
  %v4111 = vsel %vm3978, %v1984, 0.0
  %v4112 = vsel %vm3979, %v1985, 0.0
  %v4113 = vsel %vm3980, %v1986, 0.0
  %v4114 = vsel %vm3981, %v1987, 0.0
  %v4115 = vsel %vm3982, %v1988, 0.0
  %v4116 = vsel %vm3983, %v1989, 0.0
  %v4117 = vsel %vm3984, %v1990, 0.0
  %v4118 = vsel %vm3985, %v1991, 0.0
  %v4119 = vsel %vm3986, %v1992, 0.0
  %v4120 = vsel %vm3987, %v1993, 0.0
  %v4121 = vsel %vm3988, %v1994, 0.0
  %v4122 = vsel %vm3989, %v1995, 0.0
  %v4123 = vsel %vm3990, %v1996, 0.0
  %v4124 = vsel %vm3991, %v1997, 0.0
  %v4125 = vsel %vm3992, %v1998, 0.0
  %v4126 = vsel %vm3993, %v1999, 0.0
  %v4127 = vsel %vm3994, %v2000, 0.0
  %v4128 = vsel %vm3995, %v2001, 0.0
  %v4129 = vsel %vm3996, %v2002, 0.0
  %v4130 = vsel %vm3997, %v2003, 0.0
  %v4131 = vsel %vm3998, %v2004, 0.0
  %v4132 = vsel %vm3999, %v2005, 0.0
  %v4133 = vsel %vm4000, %v2006, 0.0
  %v4134 = vsel %vm4001, %v2007, 0.0
  %v4135 = vsel %vm4002, %v2008, 0.0
  %v4136 = vsel %vm4003, %v2009, 0.0
  %v4137 = vsel %vm4004, %v2010, 0.0
  %v4138 = vsel %vm4005, %v2011, 0.0
  %v4139 = vsel %vm4006, %v2012, 0.0
  %v4140 = vsel %vm4007, %v2013, 0.0
  %v4141 = vsel %vm4008, %v2014, 0.0
  %v4142 = vsel %vm4009, %v2015, 0.0
  %v4143 = vsel %vm4010, %v2016, 0.0
  %v4144 = vsel %vm4011, %v2017, 0.0
  %v4145 = vsel %vm4012, %v2018, 0.0
  %v4146 = vsel %vm4013, %v2019, 0.0
  %v4147 = vsel %vm4014, %v2020, 0.0
  %v4148 = vsel %vm4015, %v2021, 0.0
  %v4149 = vsel %vm4016, %v2022, 0.0
  %v4150 = vsel %vm4017, %v2023, 0.0
  %v4151 = vsel %vm4018, %v2024, 0.0
  %v4152 = vsel %vm4019, %v2025, 0.0
  %v4153 = vsel %vm4020, %v2026, 0.0
  %v4154 = vsel %vm4021, %v2027, 0.0
  %v4155 = vsel %vm4022, %v2028, 0.0
  %v4156 = vsel %vm4023, %v2029, 0.0
  %v4157 = vsel %vm4024, %v2030, 0.0
  %v4158 = vsel %vm4025, %v2031, 0.0
  %v4159 = vsel %vm4026, %v2032, 0.0
  %v4160 = vsel %vm4027, %v2033, 0.0
  %v4161 = vsel %vm4028, %v2034, 0.0
  %v4162 = vsel %vm4029, %v2035, 0.0
  %v4163 = vsel %vm4030, %v2036, 0.0
  %v4164 = vsel %vm4031, %v2037, 0.0
  %v4165 = vsel %vm4032, %v2038, 0.0
  %v4166 = vsel %vm4033, %v2039, 0.0
  %v4167 = vsel %vm4034, %v2040, 0.0
  %v4168 = vsel %vm4035, %v2041, 0.0
  %v4169 = vsel %vm4036, %v2042, 0.0
  %v4170 = vsel %vm4037, %v2043, 0.0
  %v4171 = vsel %vm4038, %v2044, 0.0
  %v4172 = vsel %vm4039, %v2045, 0.0
  %v4173 = vsel %vm4040, %v2046, 0.0
  %v4174 = vsel %vm4041, %v2047, 0.0
  %v4175 = vsel %vm4042, %v2048, 0.0
  %v4176 = vsel %vm4043, %v2049, 0.0
  %v4177 = vsel %vm4044, %v2050, 0.0
  %v4178 = vsel %vm4045, %v2051, 0.0
  %v4179 = vsel %vm4046, %v2052, 0.0
  %v4180 = vsel %vm4047, %v2053, 0.0
  %v4181 = vsel %vm4048, %v2054, 0.0
  %v4182 = vsel %vm4049, %v2055, 0.0
  %v4183 = vsel %vm4050, %v2056, 0.0
  %v4184 = vsel %vm4051, %v2057, 0.0
  %v4185 = vsel %vm4052, %v2058, 0.0
  %v4186 = vsel %vm4053, %v2059, 0.0
  %v4187 = vsel %vm4054, %v2060, 0.0
  %v4188 = vsel %vm4055, %v2061, 0.0
  %v4189 = vsel %vm4056, %v2062, 0.0
  %v4190 = vsel %vm4057, %v2063, 0.0
  %v4191 = vsel %vm4058, %v2064, 0.0
  %v4192 = vsel %vm4059, %v2065, 0.0
  %v4193 = vsel %vm4060, %v2066, 0.0
  %v4194 = vsel %vm4061, %v2067, 0.0
  %v4195 = vsel %vm4062, %v2068, 0.0
  %v4196 = vsel %vm4063, %v2069, 0.0
  %v4197 = vsel %vm4064, %v2070, 0.0
  %v4198 = vsel %vm4065, %v2071, 0.0
  %v4199 = vsel %vm4066, %v2072, 0.0
  %v4200 = vsel %vm4067, %v2073, 0.0
  %v4201 = vsel %vm4068, %v2074, 0.0
  %v4202 = vsel %vm4069, %v2075, 0.0
  %v4203 = vsel %vm4070, %v2076, 0.0
  %v4204 = vsel %vm4071, %v2077, 0.0
  %v4205 = vsel %vm4072, %v2078, 0.0
  %v4206 = vsel %vm4073, %v2079, 0.0
  %v4207 = vsel %vm4074, %v2080, 0.0
  %v4208 = vsel %vm4075, %v2081, 0.0
  %v4209 = vsel %vm4076, %v2082, 0.0
  %v4210 = vsel %vm4077, %v2083, 0.0
  %v4211 = vsel %vm4078, %v2084, 0.0
  %v4212 = vsel %vm4079, %v2085, 0.0
  %v4213 = vsel %vm4080, %v2086, 0.0
  %v4214 = vsel %vm4081, %v2087, 0.0
  %v4215 = vsel %vm4082, %v2088, 0.0
  %v4216 = vsel %vm4083, %v2089, 0.0
  %v4217 = vsel %vm4084, %v2090, 0.0
  %v4218 = vsel %vm4085, %v2091, 0.0
  %v4219 = vsel %vm4086, %v2092, 0.0
  %v4220 = vsel %vm4087, %v2093, 0.0
  %v4221 = vsel %vm4088, %v2094, 0.0
  %v4222 = vsel %vm4089, %v2095, 0.0
  %v4223 = vsel %vm4090, %v2096, 0.0
  %v4224 = vsel %vm4091, %v2097, 0.0
  %v4225 = vsel %vm4092, %v2098, 0.0
  %v4226 = vsel %vm4093, %v2099, 0.0
  %v4227 = vsel %vm4094, %v2100, 0.0
  %v4228 = vsel %vm4095, %v2101, 0.0
  %v4229 = vsel %vm4096, %v2102, 0.0
  %v4230 = vsel %vm4097, %v2103, 0.0
  %v4231 = vsel %vm4098, %v2104, 0.0
  %v4232 = vsel %vm3426, %v4099, 0.0
  %v4233 = vsel %vm3426, %v4100, 0.0
  %v4234 = vadd.f32 %v4232, %v4233
  %v4235 = vsel %vm3426, %v4101, 0.0
  %v4236 = vadd.f32 %v4234, %v4235
  %v4237 = vsel %vm3426, %v4102, 0.0
  %v4238 = vadd.f32 %v4236, %v4237
  %v4239 = vsel %vm3426, %v4103, 0.0
  %v4240 = vadd.f32 %v4238, %v4239
  %v4241 = vsel %vm3426, %v4104, 0.0
  %v4242 = vadd.f32 %v4240, %v4241
  %v4243 = vsel %vm3426, %v4105, 0.0
  %v4244 = vadd.f32 %v4242, %v4243
  %v4245 = vsel %vm3426, %v4106, 0.0
  %v4246 = vadd.f32 %v4244, %v4245
  %v4247 = vsel %vm3426, %v4107, 0.0
  %v4248 = vadd.f32 %v4246, %v4247
  %v4249 = vsel %vm3426, %v4108, 0.0
  %v4250 = vadd.f32 %v4248, %v4249
  %v4251 = vsel %vm3426, %v4109, 0.0
  %v4252 = vadd.f32 %v4250, %v4251
  %v4253 = vsel %vm3426, %v4110, 0.0
  %v4254 = vadd.f32 %v4252, %v4253
  %v4255 = vsel %vm3426, %v4111, 0.0
  %v4256 = vadd.f32 %v4254, %v4255
  %v4257 = vsel %vm3426, %v4112, 0.0
  %v4258 = vadd.f32 %v4256, %v4257
  %v4259 = vsel %vm3426, %v4113, 0.0
  %v4260 = vadd.f32 %v4258, %v4259
  %v4261 = vsel %vm3426, %v4114, 0.0
  %v4262 = vadd.f32 %v4260, %v4261
  %v4263 = vsel %vm3426, %v4115, 0.0
  %v4264 = vadd.f32 %v4262, %v4263
  %v4265 = vsel %vm3426, %v4116, 0.0
  %v4266 = vadd.f32 %v4264, %v4265
  %v4267 = vsel %vm3426, %v4117, 0.0
  %v4268 = vadd.f32 %v4266, %v4267
  %v4269 = vsel %vm3426, %v4118, 0.0
  %v4270 = vadd.f32 %v4268, %v4269
  %v4271 = vsel %vm3426, %v4119, 0.0
  %v4272 = vadd.f32 %v4270, %v4271
  %v4273 = vsel %vm3426, %v4120, 0.0
  %v4274 = vadd.f32 %v4272, %v4273
  %v4275 = vsel %vm3426, %v4121, 0.0
  %v4276 = vadd.f32 %v4274, %v4275
  %v4277 = vsel %vm3426, %v4122, 0.0
  %v4278 = vadd.f32 %v4276, %v4277
  %v4279 = vsel %vm3426, %v4123, 0.0
  %v4280 = vadd.f32 %v4278, %v4279
  %v4281 = vsel %vm3426, %v4124, 0.0
  %v4282 = vadd.f32 %v4280, %v4281
  %v4283 = vsel %vm3426, %v4125, 0.0
  %v4284 = vadd.f32 %v4282, %v4283
  %v4285 = vsel %vm3426, %v4126, 0.0
  %v4286 = vadd.f32 %v4284, %v4285
  %v4287 = vsel %vm3426, %v4127, 0.0
  %v4288 = vadd.f32 %v4286, %v4287
  %v4289 = vsel %vm3426, %v4128, 0.0
  %v4290 = vadd.f32 %v4288, %v4289
  %v4291 = vsel %vm3426, %v4129, 0.0
  %v4292 = vadd.f32 %v4290, %v4291
  %v4293 = vsel %vm3426, %v4130, 0.0
  %v4294 = vadd.f32 %v4292, %v4293
  %v4295 = vsel %vm3426, %v4131, 0.0
  %v4296 = vadd.f32 %v4294, %v4295
  %v4297 = vsel %vm3426, %v4132, 0.0
  %v4298 = vadd.f32 %v4296, %v4297
  %v4299 = vsel %vm3426, %v4133, 0.0
  %v4300 = vadd.f32 %v4298, %v4299
  %v4301 = vsel %vm3426, %v4134, 0.0
  %v4302 = vadd.f32 %v4300, %v4301
  %v4303 = vsel %vm3426, %v4135, 0.0
  %v4304 = vadd.f32 %v4302, %v4303
  %v4305 = vsel %vm3426, %v4136, 0.0
  %v4306 = vadd.f32 %v4304, %v4305
  %v4307 = vsel %vm3426, %v4137, 0.0
  %v4308 = vadd.f32 %v4306, %v4307
  %v4309 = vsel %vm3426, %v4138, 0.0
  %v4310 = vadd.f32 %v4308, %v4309
  %v4311 = vsel %vm3426, %v4139, 0.0
  %v4312 = vadd.f32 %v4310, %v4311
  %v4313 = vsel %vm3426, %v4140, 0.0
  %v4314 = vadd.f32 %v4312, %v4313
  %v4315 = vsel %vm3426, %v4141, 0.0
  %v4316 = vadd.f32 %v4314, %v4315
  %v4317 = vsel %vm3426, %v4142, 0.0
  %v4318 = vadd.f32 %v4316, %v4317
  %v4319 = vsel %vm3426, %v4143, 0.0
  %v4320 = vadd.f32 %v4318, %v4319
  %v4321 = vsel %vm3426, %v4144, 0.0
  %v4322 = vadd.f32 %v4320, %v4321
  %v4323 = vsel %vm3426, %v4145, 0.0
  %v4324 = vadd.f32 %v4322, %v4323
  %v4325 = vsel %vm3426, %v4146, 0.0
  %v4326 = vadd.f32 %v4324, %v4325
  %v4327 = vsel %vm3426, %v4147, 0.0
  %v4328 = vadd.f32 %v4326, %v4327
  %v4329 = vsel %vm3426, %v4148, 0.0
  %v4330 = vadd.f32 %v4328, %v4329
  %v4331 = vsel %vm3426, %v4149, 0.0
  %v4332 = vadd.f32 %v4330, %v4331
  %v4333 = vsel %vm3426, %v4150, 0.0
  %v4334 = vadd.f32 %v4332, %v4333
  %v4335 = vsel %vm3426, %v4151, 0.0
  %v4336 = vadd.f32 %v4334, %v4335
  %v4337 = vsel %vm3426, %v4152, 0.0
  %v4338 = vadd.f32 %v4336, %v4337
  %v4339 = vsel %vm3426, %v4153, 0.0
  %v4340 = vadd.f32 %v4338, %v4339
  %v4341 = vsel %vm3426, %v4154, 0.0
  %v4342 = vadd.f32 %v4340, %v4341
  %v4343 = vsel %vm3426, %v4155, 0.0
  %v4344 = vadd.f32 %v4342, %v4343
  %v4345 = vsel %vm3426, %v4156, 0.0
  %v4346 = vadd.f32 %v4344, %v4345
  %v4347 = vsel %vm3426, %v4157, 0.0
  %v4348 = vadd.f32 %v4346, %v4347
  %v4349 = vsel %vm3426, %v4158, 0.0
  %v4350 = vadd.f32 %v4348, %v4349
  %v4351 = vsel %vm3426, %v4159, 0.0
  %v4352 = vadd.f32 %v4350, %v4351
  %v4353 = vsel %vm3426, %v4160, 0.0
  %v4354 = vadd.f32 %v4352, %v4353
  %v4355 = vsel %vm3426, %v4161, 0.0
  %v4356 = vadd.f32 %v4354, %v4355
  %v4357 = vsel %vm3426, %v4162, 0.0
  %v4358 = vadd.f32 %v4356, %v4357
  %v4359 = vsel %vm3426, %v4163, 0.0
  %v4360 = vadd.f32 %v4358, %v4359
  %v4361 = vsel %vm3426, %v4164, 0.0
  %v4362 = vadd.f32 %v4360, %v4361
  %v4363 = vsel %vm3426, %v4165, 0.0
  %v4364 = vadd.f32 %v4362, %v4363
  %v4365 = vsel %vm3426, %v4166, 0.0
  %v4366 = vadd.f32 %v4364, %v4365
  %v4367 = vsel %vm3426, %v4167, 0.0
  %v4368 = vadd.f32 %v4366, %v4367
  %v4369 = vsel %vm3426, %v4168, 0.0
  %v4370 = vadd.f32 %v4368, %v4369
  %v4371 = vsel %vm3426, %v4169, 0.0
  %v4372 = vadd.f32 %v4370, %v4371
  %v4373 = vsel %vm3426, %v4170, 0.0
  %v4374 = vadd.f32 %v4372, %v4373
  %v4375 = vsel %vm3426, %v4171, 0.0
  %v4376 = vadd.f32 %v4374, %v4375
  %v4377 = vsel %vm3426, %v4172, 0.0
  %v4378 = vadd.f32 %v4376, %v4377
  %v4379 = vsel %vm3426, %v4173, 0.0
  %v4380 = vadd.f32 %v4378, %v4379
  %v4381 = vsel %vm3426, %v4174, 0.0
  %v4382 = vadd.f32 %v4380, %v4381
  %v4383 = vsel %vm3426, %v4175, 0.0
  %v4384 = vadd.f32 %v4382, %v4383
  %v4385 = vsel %vm3426, %v4176, 0.0
  %v4386 = vadd.f32 %v4384, %v4385
  %v4387 = vsel %vm3426, %v4177, 0.0
  %v4388 = vadd.f32 %v4386, %v4387
  %v4389 = vsel %vm3426, %v4178, 0.0
  %v4390 = vadd.f32 %v4388, %v4389
  %v4391 = vsel %vm3426, %v4179, 0.0
  %v4392 = vadd.f32 %v4390, %v4391
  %v4393 = vsel %vm3426, %v4180, 0.0
  %v4394 = vadd.f32 %v4392, %v4393
  %v4395 = vsel %vm3426, %v4181, 0.0
  %v4396 = vadd.f32 %v4394, %v4395
  %v4397 = vsel %vm3426, %v4182, 0.0
  %v4398 = vadd.f32 %v4396, %v4397
  %v4399 = vsel %vm3426, %v4183, 0.0
  %v4400 = vadd.f32 %v4398, %v4399
  %v4401 = vsel %vm3426, %v4184, 0.0
  %v4402 = vadd.f32 %v4400, %v4401
  %v4403 = vsel %vm3426, %v4185, 0.0
  %v4404 = vadd.f32 %v4402, %v4403
  %v4405 = vsel %vm3426, %v4186, 0.0
  %v4406 = vadd.f32 %v4404, %v4405
  %v4407 = vsel %vm3426, %v4187, 0.0
  %v4408 = vadd.f32 %v4406, %v4407
  %v4409 = vsel %vm3426, %v4188, 0.0
  %v4410 = vadd.f32 %v4408, %v4409
  %v4411 = vsel %vm3426, %v4189, 0.0
  %v4412 = vadd.f32 %v4410, %v4411
  %v4413 = vsel %vm3426, %v4190, 0.0
  %v4414 = vadd.f32 %v4412, %v4413
  %v4415 = vsel %vm3426, %v4191, 0.0
  %v4416 = vadd.f32 %v4414, %v4415
  %v4417 = vsel %vm3426, %v4192, 0.0
  %v4418 = vadd.f32 %v4416, %v4417
  %v4419 = vsel %vm3426, %v4193, 0.0
  %v4420 = vadd.f32 %v4418, %v4419
  %v4421 = vsel %vm3426, %v4194, 0.0
  %v4422 = vadd.f32 %v4420, %v4421
  %v4423 = vsel %vm3426, %v4195, 0.0
  %v4424 = vadd.f32 %v4422, %v4423
  %v4425 = vsel %vm3426, %v4196, 0.0
  %v4426 = vadd.f32 %v4424, %v4425
  %v4427 = vsel %vm3426, %v4197, 0.0
  %v4428 = vadd.f32 %v4426, %v4427
  %v4429 = vsel %vm3426, %v4198, 0.0
  %v4430 = vadd.f32 %v4428, %v4429
  %v4431 = vsel %vm3426, %v4199, 0.0
  %v4432 = vadd.f32 %v4430, %v4431
  %v4433 = vsel %vm3426, %v4200, 0.0
  %v4434 = vadd.f32 %v4432, %v4433
  %v4435 = vsel %vm3426, %v4201, 0.0
  %v4436 = vadd.f32 %v4434, %v4435
  %v4437 = vsel %vm3426, %v4202, 0.0
  %v4438 = vadd.f32 %v4436, %v4437
  %v4439 = vsel %vm3426, %v4203, 0.0
  %v4440 = vadd.f32 %v4438, %v4439
  %v4441 = vsel %vm3426, %v4204, 0.0
  %v4442 = vadd.f32 %v4440, %v4441
  %v4443 = vsel %vm3426, %v4205, 0.0
  %v4444 = vadd.f32 %v4442, %v4443
  %v4445 = vsel %vm3426, %v4206, 0.0
  %v4446 = vadd.f32 %v4444, %v4445
  %v4447 = vsel %vm3426, %v4207, 0.0
  %v4448 = vadd.f32 %v4446, %v4447
  %v4449 = vsel %vm3426, %v4208, 0.0
  %v4450 = vadd.f32 %v4448, %v4449
  %v4451 = vsel %vm3426, %v4209, 0.0
  %v4452 = vadd.f32 %v4450, %v4451
  %v4453 = vsel %vm3426, %v4210, 0.0
  %v4454 = vadd.f32 %v4452, %v4453
  %v4455 = vsel %vm3426, %v4211, 0.0
  %v4456 = vadd.f32 %v4454, %v4455
  %v4457 = vsel %vm3426, %v4212, 0.0
  %v4458 = vadd.f32 %v4456, %v4457
  %v4459 = vsel %vm3426, %v4213, 0.0
  %v4460 = vadd.f32 %v4458, %v4459
  %v4461 = vsel %vm3426, %v4214, 0.0
  %v4462 = vadd.f32 %v4460, %v4461
  %v4463 = vsel %vm3426, %v4215, 0.0
  %v4464 = vadd.f32 %v4462, %v4463
  %v4465 = vsel %vm3426, %v4216, 0.0
  %v4466 = vadd.f32 %v4464, %v4465
  %v4467 = vsel %vm3426, %v4217, 0.0
  %v4468 = vadd.f32 %v4466, %v4467
  %v4469 = vsel %vm3426, %v4218, 0.0
  %v4470 = vadd.f32 %v4468, %v4469
  %v4471 = vsel %vm3426, %v4219, 0.0
  %v4472 = vadd.f32 %v4470, %v4471
  %v4473 = vsel %vm3426, %v4220, 0.0
  %v4474 = vadd.f32 %v4472, %v4473
  %v4475 = vsel %vm3426, %v4221, 0.0
  %v4476 = vadd.f32 %v4474, %v4475
  %v4477 = vsel %vm3426, %v4222, 0.0
  %v4478 = vadd.f32 %v4476, %v4477
  %v4479 = vsel %vm3426, %v4223, 0.0
  %v4480 = vadd.f32 %v4478, %v4479
  %v4481 = vsel %vm3426, %v4224, 0.0
  %v4482 = vadd.f32 %v4480, %v4481
  %v4483 = vsel %vm3426, %v4225, 0.0
  %v4484 = vadd.f32 %v4482, %v4483
  %v4485 = vsel %vm3426, %v4226, 0.0
  %v4486 = vadd.f32 %v4484, %v4485
  %v4487 = vsel %vm3426, %v4227, 0.0
  %v4488 = vadd.f32 %v4486, %v4487
  %v4489 = vsel %vm3426, %v4228, 0.0
  %v4490 = vadd.f32 %v4488, %v4489
  %v4491 = vsel %vm3426, %v4229, 0.0
  %v4492 = vadd.f32 %v4490, %v4491
  %v4493 = vsel %vm3426, %v4230, 0.0
  %v4494 = vadd.f32 %v4492, %v4493
  %v4495 = vsel %vm3690, %v4231, 0.0
  %v4496 = vadd.f32 %v4494, %v4495
  %v4497 = vrot.slane %v4496, 4
  %v4498 = vadd.f32 %v4496, %v4497
  %v4499 = vrot.slane %v4498, 2
  %v4500 = vadd.f32 %v4498, %v4499
  %v4501 = vrot.slane %v4500, 1
  %v4502 = vadd.f32 %v4500, %v4501
  %v4503 = vmul.f32 %v4502, 0.005181347
  %vm4504 = vcmp.lt.s32.totalorder %v2628, 5
  %vm4505 = vcmp.lt.s32.totalorder %v2629, 5
  %vm4506 = vmand %vm2761, %vm4504
  %vm4507 = vmand %vm2762, %vm4505
  %v4508 = vsel %vm4506, %v2605, 0.0
  %v4509 = vsel %vm4506, %v2612, 0.0
  %v4510 = vsel %vm4507, %v2619, 0.0
  %v4511 = vsel %vm4507, %v2626, 0.0
  %vm4512 = vcmask 1046528
  %v4513 = vsel %vm4512, %v4510, 0.0
  %v4514 = vadd.f32 %v4508, %v4513
  %v4515 = vrot.slane %v4514, 4
  %v4516 = vadd.f32 %v4514, %v4515
  %v4517 = vrot.slane %v4516, 2
  %v4518 = vadd.f32 %v4516, %v4517
  %v4519 = vrot.slane %v4518, 1
  %v4520 = vadd.f32 %v4518, %v4519
  %v4521 = vsel %vm4512, %v4511, 0.0
  %v4522 = vadd.f32 %v4509, %v4521
  %v4523 = vrot.slane %v4522, 4
  %v4524 = vadd.f32 %v4522, %v4523
  %v4525 = vrot.slane %v4524, 2
  %v4526 = vadd.f32 %v4524, %v4525
  %v4527 = vrot.slane %v4526, 1
  %v4528 = vadd.f32 %v4526, %v4527
  %v4529 = vmul.f32 %v4520, 0.2
  %v4530 = vmul.f32 %v4528, 0.2
  %4532 = vrot.lane.b32.xlu0 %v3699, 8
  %v4533 = vpop.permute.xlu0 %4532
  %4536 = vrot.lane.b32.xlu0 %v4503, 8
  %v4537 = vpop.permute.xlu0 %4536
  %4541 = vrot.lane.b32.xlu0 %v4529, 24
  %v4542 = vpop.permute.xlu0 %4541
  %4543 = vrot.lane.b32.xlu0 %v4530, 24
  %v4544 = vpop.permute.xlu0 %4543
  %vm4545 = vcmask 195584
  %v4546 = vsel %vm4545, %v4542, %v4544
  %v4550 = vsel %vm2861, %v2918, %v4533
  %v4551 = vsel %vm3426, %v4550, %v4537
  %v4552 = vsel %vm4545, %v4551, %v4542
  %vm4553 = vcmp.eq.s32.totalorder %v2628, 0
  %v4554 = vlaneseq
  %v4555 = vshrl.u32 %v4554, 7
  %v4556 = vsub.s32 0, %v4555
  %v4557 = vrot.slane %v4552, %v4556
  %v4558 = vlaneseq
  %v4559 = vshrl.u32 %v4558, 7
  %v4560 = vsub.s32 0, %v4559
  %v4561 = vrot.slane %v4546, %v4560
  %v4562 = vlaneseq
  %v4563 = vshrl.u32 %v4562, 7
  %v4564 = vsub.s32 0, %v4563
  %v4565 = vrot.slane %v4544, %v4564
  %v4566 = vsel %vm4553, %v4557, 0.0
  %v4567 = vsel %vm4553, %v4561, 0.0
  %v4568 = vsel %vm4553, %v4565, 0.0
  %v4569 = vadd.f32 %v4566, 0.0
  %v4570 = vadd.f32 %v4567, 0.0
  %v4571 = vadd.f32 %v4568, 0.0
  %vm4572 = vcmp.ge.s32.totalorder %v2628, 65
  %vm4573 = vcmp.ge.s32.totalorder %v2629, 65
  %vm4574 = vcmp.ge.s32.totalorder %v2630, 65
  %vm4575 = vcmp.ge.s32.totalorder %v2631, 65
  %vm4576 = vcmp.ge.s32.totalorder %v2632, 65
  %vm4577 = vcmp.ge.s32.totalorder %v2633, 65
  %vm4578 = vcmp.ge.s32.totalorder %v2634, 65
  %vm4579 = vcmp.ge.s32.totalorder %v2635, 65
  %vm4580 = vcmp.ge.s32.totalorder %v2636, 65
  %vm4581 = vcmp.ge.s32.totalorder %v2637, 65
  %vm4582 = vcmp.ge.s32.totalorder %v2638, 65
  %vm4583 = vcmp.ge.s32.totalorder %v2639, 65
  %vm4584 = vcmp.ge.s32.totalorder %v2640, 65
  %vm4585 = vcmp.ge.s32.totalorder %v2641, 65
  %vm4586 = vcmp.ge.s32.totalorder %v2642, 65
  %vm4587 = vcmp.ge.s32.totalorder %v2643, 65
  %vm4588 = vcmp.ge.s32.totalorder %v2644, 65
  %vm4589 = vcmp.ge.s32.totalorder %v2645, 65
  %vm4590 = vcmp.ge.s32.totalorder %v2646, 65
  %vm4591 = vcmp.ge.s32.totalorder %v2647, 65
  %vm4592 = vcmp.ge.s32.totalorder %v2648, 65
  %vm4593 = vcmp.ge.s32.totalorder %v2649, 65
  %vm4594 = vcmp.ge.s32.totalorder %v2650, 65
  %vm4595 = vcmp.ge.s32.totalorder %v2651, 65
  %vm4596 = vcmp.ge.s32.totalorder %v2652, 65
  %vm4597 = vcmp.lt.s32.totalorder %v2628, 130
  %vm4598 = vcmp.lt.s32.totalorder %v2629, 130
  %vm4599 = vcmp.lt.s32.totalorder %v2630, 130
  %vm4600 = vcmp.lt.s32.totalorder %v2631, 130
  %vm4601 = vcmp.lt.s32.totalorder %v2632, 130
  %vm4602 = vcmp.lt.s32.totalorder %v2633, 130
  %vm4603 = vcmp.lt.s32.totalorder %v2634, 130
  %vm4604 = vcmp.lt.s32.totalorder %v2635, 130
  %vm4605 = vcmp.lt.s32.totalorder %v2636, 130
  %vm4606 = vcmp.lt.s32.totalorder %v2637, 130
  %vm4607 = vcmp.lt.s32.totalorder %v2638, 130
  %vm4608 = vcmp.lt.s32.totalorder %v2639, 130
  %vm4609 = vcmp.lt.s32.totalorder %v2640, 130
  %vm4610 = vcmp.lt.s32.totalorder %v2641, 130
  %vm4611 = vcmp.lt.s32.totalorder %v2642, 130
  %vm4612 = vcmp.lt.s32.totalorder %v2643, 130
  %vm4613 = vcmp.lt.s32.totalorder %v2644, 130
  %vm4614 = vcmp.lt.s32.totalorder %v2645, 130
  %vm4615 = vcmp.lt.s32.totalorder %v2646, 130
  %vm4616 = vcmp.lt.s32.totalorder %v2647, 130
  %vm4617 = vcmp.lt.s32.totalorder %v2648, 130
  %vm4618 = vcmp.lt.s32.totalorder %v2649, 130
  %vm4619 = vcmp.lt.s32.totalorder %v2650, 130
  %vm4620 = vcmp.lt.s32.totalorder %v2651, 130
  %vm4621 = vcmp.lt.s32.totalorder %v2652, 130
  %vm4622 = vmand %vm4572, %vm4597
  %vm4623 = vmand %vm4573, %vm4598
  %vm4624 = vmand %vm4574, %vm4599
  %vm4625 = vmand %vm4575, %vm4600
  %vm4626 = vmand %vm4576, %vm4601
  %vm4627 = vmand %vm4577, %vm4602
  %vm4628 = vmand %vm4578, %vm4603
  %vm4629 = vmand %vm4579, %vm4604
  %vm4630 = vmand %vm4580, %vm4605
  %vm4631 = vmand %vm4581, %vm4606
  %vm4632 = vmand %vm4582, %vm4607
  %vm4633 = vmand %vm4583, %vm4608
  %vm4634 = vmand %vm4584, %vm4609
  %vm4635 = vmand %vm4585, %vm4610
  %vm4636 = vmand %vm4586, %vm4611
  %vm4637 = vmand %vm4587, %vm4612
  %vm4638 = vmand %vm4588, %vm4613
  %vm4639 = vmand %vm4589, %vm4614
  %vm4640 = vmand %vm4590, %vm4615
  %vm4641 = vmand %vm4591, %vm4616
  %vm4642 = vmand %vm4592, %vm4617
  %vm4643 = vmand %vm4593, %vm4618
  %vm4644 = vmand %vm4594, %vm4619
  %vm4645 = vmand %vm4595, %vm4620
  %vm4646 = vmand %vm4596, %vm4621
  %v4647 = vsel %vm4622, %v509, 0.0
  %v4648 = vsel %vm4623, %v510, 0.0
  %v4649 = vsel %vm4624, %v511, 0.0
  %v4650 = vsel %vm4625, %v512, 0.0
  %v4651 = vsel %vm4626, %v513, 0.0
  %v4652 = vsel %vm4627, %v514, 0.0
  %v4653 = vsel %vm4628, %v515, 0.0
  %v4654 = vsel %vm4629, %v516, 0.0
  %v4655 = vsel %vm4630, %v517, 0.0
  %v4656 = vsel %vm4631, %v518, 0.0
  %v4657 = vsel %vm4632, %v519, 0.0
  %v4658 = vsel %vm4633, %v520, 0.0
  %v4659 = vsel %vm4634, %v521, 0.0
  %v4660 = vsel %vm4635, %v522, 0.0
  %v4661 = vsel %vm4636, %v523, 0.0
  %v4662 = vsel %vm4637, %v524, 0.0
  %v4663 = vsel %vm4638, %v525, 0.0
  %v4664 = vsel %vm4639, %v526, 0.0
  %v4665 = vsel %vm4640, %v527, 0.0
  %v4666 = vsel %vm4641, %v528, 0.0
  %v4667 = vsel %vm4642, %v529, 0.0
  %v4668 = vsel %vm4643, %v530, 0.0
  %v4669 = vsel %vm4644, %v531, 0.0
  %v4670 = vsel %vm4645, %v532, 0.0
  %v4671 = vsel %vm4646, %v533, 0.0
  %v4672 = vsel %vm2861, %v4647, 0.0
  %v4673 = vsel %vm2861, %v4648, 0.0
  %v4674 = vadd.f32 %v4672, %v4673
  %v4675 = vsel %vm2861, %v4649, 0.0
  %v4676 = vadd.f32 %v4674, %v4675
  %v4677 = vsel %vm2861, %v4650, 0.0
  %v4678 = vadd.f32 %v4676, %v4677
  %v4679 = vsel %vm2861, %v4651, 0.0
  %v4680 = vadd.f32 %v4678, %v4679
  %v4681 = vsel %vm2861, %v4652, 0.0
  %v4682 = vadd.f32 %v4680, %v4681
  %v4683 = vsel %vm2861, %v4653, 0.0
  %v4684 = vadd.f32 %v4682, %v4683
  %v4685 = vsel %vm2861, %v4654, 0.0
  %v4686 = vadd.f32 %v4684, %v4685
  %v4687 = vsel %vm2861, %v4655, 0.0
  %v4688 = vadd.f32 %v4686, %v4687
  %v4689 = vsel %vm2861, %v4656, 0.0
  %v4690 = vadd.f32 %v4688, %v4689
  %v4691 = vsel %vm2861, %v4657, 0.0
  %v4692 = vadd.f32 %v4690, %v4691
  %v4693 = vsel %vm2861, %v4658, 0.0
  %v4694 = vadd.f32 %v4692, %v4693
  %v4695 = vsel %vm2861, %v4659, 0.0
  %v4696 = vadd.f32 %v4694, %v4695
  %v4697 = vsel %vm2861, %v4660, 0.0
  %v4698 = vadd.f32 %v4696, %v4697
  %v4699 = vsel %vm2861, %v4661, 0.0
  %v4700 = vadd.f32 %v4698, %v4699
  %v4701 = vsel %vm2861, %v4662, 0.0
  %v4702 = vadd.f32 %v4700, %v4701
  %v4703 = vsel %vm2861, %v4663, 0.0
  %v4704 = vadd.f32 %v4702, %v4703
  %v4705 = vsel %vm2861, %v4664, 0.0
  %v4706 = vadd.f32 %v4704, %v4705
  %v4707 = vsel %vm2861, %v4665, 0.0
  %v4708 = vadd.f32 %v4706, %v4707
  %v4709 = vsel %vm2861, %v4666, 0.0
  %v4710 = vadd.f32 %v4708, %v4709
  %v4711 = vsel %vm2861, %v4667, 0.0
  %v4712 = vadd.f32 %v4710, %v4711
  %v4713 = vsel %vm2861, %v4668, 0.0
  %v4714 = vadd.f32 %v4712, %v4713
  %v4715 = vsel %vm2861, %v4669, 0.0
  %v4716 = vadd.f32 %v4714, %v4715
  %v4717 = vsel %vm2861, %v4670, 0.0
  %v4718 = vadd.f32 %v4716, %v4717
  %v4719 = vsel %vm2909, %v4671, 0.0
  %v4720 = vadd.f32 %v4718, %v4719
  %v4721 = vrot.slane %v4720, 4
  %v4722 = vadd.f32 %v4720, %v4721
  %v4723 = vrot.slane %v4722, 2
  %v4724 = vadd.f32 %v4722, %v4723
  %v4725 = vrot.slane %v4724, 1
  %v4726 = vadd.f32 %v4724, %v4725
  %v4727 = vmul.f32 %v4726, 0.015384615
  %vm4728 = vcmp.ge.s32.totalorder %v2628, 161
  %vm4729 = vcmp.ge.s32.totalorder %v2629, 161
  %vm4730 = vcmp.ge.s32.totalorder %v2630, 161
  %vm4731 = vcmp.ge.s32.totalorder %v2631, 161
  %vm4732 = vcmp.ge.s32.totalorder %v2632, 161
  %vm4733 = vcmp.ge.s32.totalorder %v2633, 161
  %vm4734 = vcmp.ge.s32.totalorder %v2634, 161
  %vm4735 = vcmp.ge.s32.totalorder %v2635, 161
  %vm4736 = vcmp.ge.s32.totalorder %v2636, 161
  %vm4737 = vcmp.ge.s32.totalorder %v2637, 161
  %vm4738 = vcmp.ge.s32.totalorder %v2638, 161
  %vm4739 = vcmp.ge.s32.totalorder %v2639, 161
  %vm4740 = vcmp.ge.s32.totalorder %v2640, 161
  %vm4741 = vcmp.ge.s32.totalorder %v2641, 161
  %vm4742 = vcmp.ge.s32.totalorder %v2642, 161
  %vm4743 = vcmp.ge.s32.totalorder %v2643, 161
  %vm4744 = vcmp.ge.s32.totalorder %v2644, 161
  %vm4745 = vcmp.ge.s32.totalorder %v2645, 161
  %vm4746 = vcmp.ge.s32.totalorder %v2646, 161
  %vm4747 = vcmp.ge.s32.totalorder %v2647, 161
  %vm4748 = vcmp.ge.s32.totalorder %v2648, 161
  %vm4749 = vcmp.ge.s32.totalorder %v2649, 161
  %vm4750 = vcmp.ge.s32.totalorder %v2650, 161
  %vm4751 = vcmp.ge.s32.totalorder %v2651, 161
  %vm4752 = vcmp.ge.s32.totalorder %v2652, 161
  %vm4753 = vcmp.ge.s32.totalorder %v2653, 161
  %vm4754 = vcmp.ge.s32.totalorder %v2654, 161
  %vm4755 = vcmp.ge.s32.totalorder %v2655, 161
  %vm4756 = vcmp.ge.s32.totalorder %v2656, 161
  %vm4757 = vcmp.ge.s32.totalorder %v2657, 161
  %vm4758 = vcmp.ge.s32.totalorder %v2658, 161
  %vm4759 = vcmp.ge.s32.totalorder %v2659, 161
  %vm4760 = vcmp.ge.s32.totalorder %v2660, 161
  %vm4761 = vcmp.ge.s32.totalorder %v2661, 161
  %vm4762 = vcmp.ge.s32.totalorder %v2662, 161
  %vm4763 = vcmp.ge.s32.totalorder %v2663, 161
  %vm4764 = vcmp.ge.s32.totalorder %v2664, 161
  %vm4765 = vcmp.ge.s32.totalorder %v2665, 161
  %vm4766 = vcmp.ge.s32.totalorder %v2666, 161
  %vm4767 = vcmp.ge.s32.totalorder %v2667, 161
  %vm4768 = vcmp.ge.s32.totalorder %v2668, 161
  %vm4769 = vcmp.ge.s32.totalorder %v2669, 161
  %vm4770 = vcmp.ge.s32.totalorder %v2670, 161
  %vm4771 = vcmp.ge.s32.totalorder %v2671, 161
  %vm4772 = vcmp.ge.s32.totalorder %v2672, 161
  %vm4773 = vcmp.ge.s32.totalorder %v2673, 161
  %vm4774 = vcmp.ge.s32.totalorder %v2674, 161
  %vm4775 = vcmp.ge.s32.totalorder %v2675, 161
  %vm4776 = vcmp.ge.s32.totalorder %v2676, 161
  %vm4777 = vcmp.ge.s32.totalorder %v2677, 161
  %vm4778 = vcmp.ge.s32.totalorder %v2678, 161
  %vm4779 = vcmp.ge.s32.totalorder %v2679, 161
  %vm4780 = vcmp.ge.s32.totalorder %v2680, 161
  %vm4781 = vcmp.ge.s32.totalorder %v2681, 161
  %vm4782 = vcmp.ge.s32.totalorder %v2682, 161
  %vm4783 = vcmp.ge.s32.totalorder %v2683, 161
  %vm4784 = vcmp.ge.s32.totalorder %v2684, 161
  %vm4785 = vcmp.ge.s32.totalorder %v2685, 161
  %vm4786 = vcmp.ge.s32.totalorder %v2686, 161
  %vm4787 = vcmp.ge.s32.totalorder %v2687, 161
  %vm4788 = vcmp.ge.s32.totalorder %v2688, 161
  %vm4789 = vcmp.ge.s32.totalorder %v2689, 161
  %vm4790 = vcmp.ge.s32.totalorder %v2690, 161
  %vm4791 = vcmp.ge.s32.totalorder %v2691, 161
  %vm4792 = vcmp.ge.s32.totalorder %v2692, 161
  %vm4793 = vcmp.ge.s32.totalorder %v2693, 161
  %vm4794 = vcmp.ge.s32.totalorder %v2694, 161
  %vm4795 = vcmp.ge.s32.totalorder %v2695, 161
  %vm4796 = vcmp.ge.s32.totalorder %v2696, 161
  %vm4797 = vcmp.ge.s32.totalorder %v2697, 161
  %vm4798 = vcmp.ge.s32.totalorder %v2698, 161
  %vm4799 = vcmp.ge.s32.totalorder %v2699, 161
  %vm4800 = vcmp.ge.s32.totalorder %v2700, 161
  %vm4801 = vcmp.ge.s32.totalorder %v2701, 161
  %vm4802 = vcmp.ge.s32.totalorder %v2702, 161
  %vm4803 = vcmp.ge.s32.totalorder %v2703, 161
  %vm4804 = vcmp.ge.s32.totalorder %v2704, 161
  %vm4805 = vcmp.ge.s32.totalorder %v2705, 161
  %vm4806 = vcmp.ge.s32.totalorder %v2706, 161
  %vm4807 = vcmp.ge.s32.totalorder %v2707, 161
  %vm4808 = vcmp.ge.s32.totalorder %v2708, 161
  %vm4809 = vcmp.ge.s32.totalorder %v2709, 161
  %vm4810 = vcmp.ge.s32.totalorder %v2710, 161
  %vm4811 = vcmp.ge.s32.totalorder %v2711, 161
  %vm4812 = vcmp.ge.s32.totalorder %v2712, 161
  %vm4813 = vcmp.ge.s32.totalorder %v2713, 161
  %vm4814 = vcmp.ge.s32.totalorder %v2714, 161
  %vm4815 = vcmp.ge.s32.totalorder %v2715, 161
  %vm4816 = vcmp.ge.s32.totalorder %v2716, 161
  %vm4817 = vcmp.ge.s32.totalorder %v2717, 161
  %vm4818 = vcmp.ge.s32.totalorder %v2718, 161
  %vm4819 = vcmp.ge.s32.totalorder %v2719, 161
  %vm4820 = vcmp.ge.s32.totalorder %v2720, 161
  %vm4821 = vcmp.ge.s32.totalorder %v2721, 161
  %vm4822 = vcmp.ge.s32.totalorder %v2722, 161
  %vm4823 = vcmp.ge.s32.totalorder %v2723, 161
  %vm4824 = vcmp.ge.s32.totalorder %v2724, 161
  %vm4825 = vcmp.ge.s32.totalorder %v2725, 161
  %vm4826 = vcmp.ge.s32.totalorder %v2726, 161
  %vm4827 = vcmp.ge.s32.totalorder %v2727, 161
  %vm4828 = vcmp.ge.s32.totalorder %v2728, 161
  %vm4829 = vcmp.ge.s32.totalorder %v2729, 161
  %vm4830 = vcmp.ge.s32.totalorder %v2730, 161
  %vm4831 = vcmp.ge.s32.totalorder %v2731, 161
  %vm4832 = vcmp.ge.s32.totalorder %v2732, 161
  %vm4833 = vcmp.ge.s32.totalorder %v2733, 161
  %vm4834 = vcmp.ge.s32.totalorder %v2734, 161
  %vm4835 = vcmp.ge.s32.totalorder %v2735, 161
  %vm4836 = vcmp.ge.s32.totalorder %v2736, 161
  %vm4837 = vcmp.ge.s32.totalorder %v2737, 161
  %vm4838 = vcmp.ge.s32.totalorder %v2738, 161
  %vm4839 = vcmp.ge.s32.totalorder %v2739, 161
  %vm4840 = vcmp.ge.s32.totalorder %v2740, 161
  %vm4841 = vcmp.ge.s32.totalorder %v2741, 161
  %vm4842 = vcmp.ge.s32.totalorder %v2742, 161
  %vm4843 = vcmp.ge.s32.totalorder %v2743, 161
  %vm4844 = vcmp.ge.s32.totalorder %v2744, 161
  %vm4845 = vcmp.ge.s32.totalorder %v2745, 161
  %vm4846 = vcmp.ge.s32.totalorder %v2746, 161
  %vm4847 = vcmp.ge.s32.totalorder %v2747, 161
  %vm4848 = vcmp.ge.s32.totalorder %v2748, 161
  %vm4849 = vcmp.ge.s32.totalorder %v2749, 161
  %vm4850 = vcmp.ge.s32.totalorder %v2750, 161
  %vm4851 = vcmp.ge.s32.totalorder %v2751, 161
  %vm4852 = vcmp.ge.s32.totalorder %v2752, 161
  %vm4853 = vcmp.ge.s32.totalorder %v2753, 161
  %vm4854 = vcmp.ge.s32.totalorder %v2754, 161
  %vm4855 = vcmp.ge.s32.totalorder %v2755, 161
  %vm4856 = vcmp.ge.s32.totalorder %v2756, 161
  %vm4857 = vcmp.ge.s32.totalorder %v2757, 161
  %vm4858 = vcmp.ge.s32.totalorder %v2758, 161
  %vm4859 = vcmp.ge.s32.totalorder %v2759, 161
  %vm4860 = vcmp.ge.s32.totalorder %v2760, 161
  %vm4861 = vcmp.lt.s32.totalorder %v2628, 322
  %vm4862 = vcmp.lt.s32.totalorder %v2629, 322
  %vm4863 = vcmp.lt.s32.totalorder %v2630, 322
  %vm4864 = vcmp.lt.s32.totalorder %v2631, 322
  %vm4865 = vcmp.lt.s32.totalorder %v2632, 322
  %vm4866 = vcmp.lt.s32.totalorder %v2633, 322
  %vm4867 = vcmp.lt.s32.totalorder %v2634, 322
  %vm4868 = vcmp.lt.s32.totalorder %v2635, 322
  %vm4869 = vcmp.lt.s32.totalorder %v2636, 322
  %vm4870 = vcmp.lt.s32.totalorder %v2637, 322
  %vm4871 = vcmp.lt.s32.totalorder %v2638, 322
  %vm4872 = vcmp.lt.s32.totalorder %v2639, 322
  %vm4873 = vcmp.lt.s32.totalorder %v2640, 322
  %vm4874 = vcmp.lt.s32.totalorder %v2641, 322
  %vm4875 = vcmp.lt.s32.totalorder %v2642, 322
  %vm4876 = vcmp.lt.s32.totalorder %v2643, 322
  %vm4877 = vcmp.lt.s32.totalorder %v2644, 322
  %vm4878 = vcmp.lt.s32.totalorder %v2645, 322
  %vm4879 = vcmp.lt.s32.totalorder %v2646, 322
  %vm4880 = vcmp.lt.s32.totalorder %v2647, 322
  %vm4881 = vcmp.lt.s32.totalorder %v2648, 322
  %vm4882 = vcmp.lt.s32.totalorder %v2649, 322
  %vm4883 = vcmp.lt.s32.totalorder %v2650, 322
  %vm4884 = vcmp.lt.s32.totalorder %v2651, 322
  %vm4885 = vcmp.lt.s32.totalorder %v2652, 322
  %vm4886 = vcmp.lt.s32.totalorder %v2653, 322
  %vm4887 = vcmp.lt.s32.totalorder %v2654, 322
  %vm4888 = vcmp.lt.s32.totalorder %v2655, 322
  %vm4889 = vcmp.lt.s32.totalorder %v2656, 322
  %vm4890 = vcmp.lt.s32.totalorder %v2657, 322
  %vm4891 = vcmp.lt.s32.totalorder %v2658, 322
  %vm4892 = vcmp.lt.s32.totalorder %v2659, 322
  %vm4893 = vcmp.lt.s32.totalorder %v2660, 322
  %vm4894 = vcmp.lt.s32.totalorder %v2661, 322
  %vm4895 = vcmp.lt.s32.totalorder %v2662, 322
  %vm4896 = vcmp.lt.s32.totalorder %v2663, 322
  %vm4897 = vcmp.lt.s32.totalorder %v2664, 322
  %vm4898 = vcmp.lt.s32.totalorder %v2665, 322
  %vm4899 = vcmp.lt.s32.totalorder %v2666, 322
  %vm4900 = vcmp.lt.s32.totalorder %v2667, 322
  %vm4901 = vcmp.lt.s32.totalorder %v2668, 322
  %vm4902 = vcmp.lt.s32.totalorder %v2669, 322
  %vm4903 = vcmp.lt.s32.totalorder %v2670, 322
  %vm4904 = vcmp.lt.s32.totalorder %v2671, 322
  %vm4905 = vcmp.lt.s32.totalorder %v2672, 322
  %vm4906 = vcmp.lt.s32.totalorder %v2673, 322
  %vm4907 = vcmp.lt.s32.totalorder %v2674, 322
  %vm4908 = vcmp.lt.s32.totalorder %v2675, 322
  %vm4909 = vcmp.lt.s32.totalorder %v2676, 322
  %vm4910 = vcmp.lt.s32.totalorder %v2677, 322
  %vm4911 = vcmp.lt.s32.totalorder %v2678, 322
  %vm4912 = vcmp.lt.s32.totalorder %v2679, 322
  %vm4913 = vcmp.lt.s32.totalorder %v2680, 322
  %vm4914 = vcmp.lt.s32.totalorder %v2681, 322
  %vm4915 = vcmp.lt.s32.totalorder %v2682, 322
  %vm4916 = vcmp.lt.s32.totalorder %v2683, 322
  %vm4917 = vcmp.lt.s32.totalorder %v2684, 322
  %vm4918 = vcmp.lt.s32.totalorder %v2685, 322
  %vm4919 = vcmp.lt.s32.totalorder %v2686, 322
  %vm4920 = vcmp.lt.s32.totalorder %v2687, 322
  %vm4921 = vcmp.lt.s32.totalorder %v2688, 322
  %vm4922 = vcmp.lt.s32.totalorder %v2689, 322
  %vm4923 = vcmp.lt.s32.totalorder %v2690, 322
  %vm4924 = vcmp.lt.s32.totalorder %v2691, 322
  %vm4925 = vcmp.lt.s32.totalorder %v2692, 322
  %vm4926 = vcmp.lt.s32.totalorder %v2693, 322
  %vm4927 = vcmp.lt.s32.totalorder %v2694, 322
  %vm4928 = vcmp.lt.s32.totalorder %v2695, 322
  %vm4929 = vcmp.lt.s32.totalorder %v2696, 322
  %vm4930 = vcmp.lt.s32.totalorder %v2697, 322
  %vm4931 = vcmp.lt.s32.totalorder %v2698, 322
  %vm4932 = vcmp.lt.s32.totalorder %v2699, 322
  %vm4933 = vcmp.lt.s32.totalorder %v2700, 322
  %vm4934 = vcmp.lt.s32.totalorder %v2701, 322
  %vm4935 = vcmp.lt.s32.totalorder %v2702, 322
  %vm4936 = vcmp.lt.s32.totalorder %v2703, 322
  %vm4937 = vcmp.lt.s32.totalorder %v2704, 322
  %vm4938 = vcmp.lt.s32.totalorder %v2705, 322
  %vm4939 = vcmp.lt.s32.totalorder %v2706, 322
  %vm4940 = vcmp.lt.s32.totalorder %v2707, 322
  %vm4941 = vcmp.lt.s32.totalorder %v2708, 322
  %vm4942 = vcmp.lt.s32.totalorder %v2709, 322
  %vm4943 = vcmp.lt.s32.totalorder %v2710, 322
  %vm4944 = vcmp.lt.s32.totalorder %v2711, 322
  %vm4945 = vcmp.lt.s32.totalorder %v2712, 322
  %vm4946 = vcmp.lt.s32.totalorder %v2713, 322
  %vm4947 = vcmp.lt.s32.totalorder %v2714, 322
  %vm4948 = vcmp.lt.s32.totalorder %v2715, 322
  %vm4949 = vcmp.lt.s32.totalorder %v2716, 322
  %vm4950 = vcmp.lt.s32.totalorder %v2717, 322
  %vm4951 = vcmp.lt.s32.totalorder %v2718, 322
  %vm4952 = vcmp.lt.s32.totalorder %v2719, 322
  %vm4953 = vcmp.lt.s32.totalorder %v2720, 322
  %vm4954 = vcmp.lt.s32.totalorder %v2721, 322
  %vm4955 = vcmp.lt.s32.totalorder %v2722, 322
  %vm4956 = vcmp.lt.s32.totalorder %v2723, 322
  %vm4957 = vcmp.lt.s32.totalorder %v2724, 322
  %vm4958 = vcmp.lt.s32.totalorder %v2725, 322
  %vm4959 = vcmp.lt.s32.totalorder %v2726, 322
  %vm4960 = vcmp.lt.s32.totalorder %v2727, 322
  %vm4961 = vcmp.lt.s32.totalorder %v2728, 322
  %vm4962 = vcmp.lt.s32.totalorder %v2729, 322
  %vm4963 = vcmp.lt.s32.totalorder %v2730, 322
  %vm4964 = vcmp.lt.s32.totalorder %v2731, 322
  %vm4965 = vcmp.lt.s32.totalorder %v2732, 322
  %vm4966 = vcmp.lt.s32.totalorder %v2733, 322
  %vm4967 = vcmp.lt.s32.totalorder %v2734, 322
  %vm4968 = vcmp.lt.s32.totalorder %v2735, 322
  %vm4969 = vcmp.lt.s32.totalorder %v2736, 322
  %vm4970 = vcmp.lt.s32.totalorder %v2737, 322
  %vm4971 = vcmp.lt.s32.totalorder %v2738, 322
  %vm4972 = vcmp.lt.s32.totalorder %v2739, 322
  %vm4973 = vcmp.lt.s32.totalorder %v2740, 322
  %vm4974 = vcmp.lt.s32.totalorder %v2741, 322
  %vm4975 = vcmp.lt.s32.totalorder %v2742, 322
  %vm4976 = vcmp.lt.s32.totalorder %v2743, 322
  %vm4977 = vcmp.lt.s32.totalorder %v2744, 322
  %vm4978 = vcmp.lt.s32.totalorder %v2745, 322
  %vm4979 = vcmp.lt.s32.totalorder %v2746, 322
  %vm4980 = vcmp.lt.s32.totalorder %v2747, 322
  %vm4981 = vcmp.lt.s32.totalorder %v2748, 322
  %vm4982 = vcmp.lt.s32.totalorder %v2749, 322
  %vm4983 = vcmp.lt.s32.totalorder %v2750, 322
  %vm4984 = vcmp.lt.s32.totalorder %v2751, 322
  %vm4985 = vcmp.lt.s32.totalorder %v2752, 322
  %vm4986 = vcmp.lt.s32.totalorder %v2753, 322
  %vm4987 = vcmp.lt.s32.totalorder %v2754, 322
  %vm4988 = vcmp.lt.s32.totalorder %v2755, 322
  %vm4989 = vcmp.lt.s32.totalorder %v2756, 322
  %vm4990 = vcmp.lt.s32.totalorder %v2757, 322
  %vm4991 = vcmp.lt.s32.totalorder %v2758, 322
  %vm4992 = vcmp.lt.s32.totalorder %v2759, 322
  %vm4993 = vcmp.lt.s32.totalorder %v2760, 322
  %vm4994 = vmand %vm4728, %vm4861
  %vm4995 = vmand %vm4729, %vm4862
  %vm4996 = vmand %vm4730, %vm4863
  %vm4997 = vmand %vm4731, %vm4864
  %vm4998 = vmand %vm4732, %vm4865
  %vm4999 = vmand %vm4733, %vm4866
  %vm5000 = vmand %vm4734, %vm4867
  %vm5001 = vmand %vm4735, %vm4868
  %vm5002 = vmand %vm4736, %vm4869
  %vm5003 = vmand %vm4737, %vm4870
  %vm5004 = vmand %vm4738, %vm4871
  %vm5005 = vmand %vm4739, %vm4872
  %vm5006 = vmand %vm4740, %vm4873
  %vm5007 = vmand %vm4741, %vm4874
  %vm5008 = vmand %vm4742, %vm4875
  %vm5009 = vmand %vm4743, %vm4876
  %vm5010 = vmand %vm4744, %vm4877
  %vm5011 = vmand %vm4745, %vm4878
  %vm5012 = vmand %vm4746, %vm4879
  %vm5013 = vmand %vm4747, %vm4880
  %vm5014 = vmand %vm4748, %vm4881
  %vm5015 = vmand %vm4749, %vm4882
  %vm5016 = vmand %vm4750, %vm4883
  %vm5017 = vmand %vm4751, %vm4884
  %vm5018 = vmand %vm4752, %vm4885
  %vm5019 = vmand %vm4753, %vm4886
  %vm5020 = vmand %vm4754, %vm4887
  %vm5021 = vmand %vm4755, %vm4888
  %vm5022 = vmand %vm4756, %vm4889
  %vm5023 = vmand %vm4757, %vm4890
  %vm5024 = vmand %vm4758, %vm4891
  %vm5025 = vmand %vm4759, %vm4892
  %vm5026 = vmand %vm4760, %vm4893
  %vm5027 = vmand %vm4761, %vm4894
  %vm5028 = vmand %vm4762, %vm4895
  %vm5029 = vmand %vm4763, %vm4896
  %vm5030 = vmand %vm4764, %vm4897
  %vm5031 = vmand %vm4765, %vm4898
  %vm5032 = vmand %vm4766, %vm4899
  %vm5033 = vmand %vm4767, %vm4900
  %vm5034 = vmand %vm4768, %vm4901
  %vm5035 = vmand %vm4769, %vm4902
  %vm5036 = vmand %vm4770, %vm4903
  %vm5037 = vmand %vm4771, %vm4904
  %vm5038 = vmand %vm4772, %vm4905
  %vm5039 = vmand %vm4773, %vm4906
  %vm5040 = vmand %vm4774, %vm4907
  %vm5041 = vmand %vm4775, %vm4908
  %vm5042 = vmand %vm4776, %vm4909
  %vm5043 = vmand %vm4777, %vm4910
  %vm5044 = vmand %vm4778, %vm4911
  %vm5045 = vmand %vm4779, %vm4912
  %vm5046 = vmand %vm4780, %vm4913
  %vm5047 = vmand %vm4781, %vm4914
  %vm5048 = vmand %vm4782, %vm4915
  %vm5049 = vmand %vm4783, %vm4916
  %vm5050 = vmand %vm4784, %vm4917
  %vm5051 = vmand %vm4785, %vm4918
  %vm5052 = vmand %vm4786, %vm4919
  %vm5053 = vmand %vm4787, %vm4920
  %vm5054 = vmand %vm4788, %vm4921
  %vm5055 = vmand %vm4789, %vm4922
  %vm5056 = vmand %vm4790, %vm4923
  %vm5057 = vmand %vm4791, %vm4924
  %vm5058 = vmand %vm4792, %vm4925
  %vm5059 = vmand %vm4793, %vm4926
  %vm5060 = vmand %vm4794, %vm4927
  %vm5061 = vmand %vm4795, %vm4928
  %vm5062 = vmand %vm4796, %vm4929
  %vm5063 = vmand %vm4797, %vm4930
  %vm5064 = vmand %vm4798, %vm4931
  %vm5065 = vmand %vm4799, %vm4932
  %vm5066 = vmand %vm4800, %vm4933
  %vm5067 = vmand %vm4801, %vm4934
  %vm5068 = vmand %vm4802, %vm4935
  %vm5069 = vmand %vm4803, %vm4936
  %vm5070 = vmand %vm4804, %vm4937
  %vm5071 = vmand %vm4805, %vm4938
  %vm5072 = vmand %vm4806, %vm4939
  %vm5073 = vmand %vm4807, %vm4940
  %vm5074 = vmand %vm4808, %vm4941
  %vm5075 = vmand %vm4809, %vm4942
  %vm5076 = vmand %vm4810, %vm4943
  %vm5077 = vmand %vm4811, %vm4944
  %vm5078 = vmand %vm4812, %vm4945
  %vm5079 = vmand %vm4813, %vm4946
  %vm5080 = vmand %vm4814, %vm4947
  %vm5081 = vmand %vm4815, %vm4948
  %vm5082 = vmand %vm4816, %vm4949
  %vm5083 = vmand %vm4817, %vm4950
  %vm5084 = vmand %vm4818, %vm4951
  %vm5085 = vmand %vm4819, %vm4952
  %vm5086 = vmand %vm4820, %vm4953
  %vm5087 = vmand %vm4821, %vm4954
  %vm5088 = vmand %vm4822, %vm4955
  %vm5089 = vmand %vm4823, %vm4956
  %vm5090 = vmand %vm4824, %vm4957
  %vm5091 = vmand %vm4825, %vm4958
  %vm5092 = vmand %vm4826, %vm4959
  %vm5093 = vmand %vm4827, %vm4960
  %vm5094 = vmand %vm4828, %vm4961
  %vm5095 = vmand %vm4829, %vm4962
  %vm5096 = vmand %vm4830, %vm4963
  %vm5097 = vmand %vm4831, %vm4964
  %vm5098 = vmand %vm4832, %vm4965
  %vm5099 = vmand %vm4833, %vm4966
  %vm5100 = vmand %vm4834, %vm4967
  %vm5101 = vmand %vm4835, %vm4968
  %vm5102 = vmand %vm4836, %vm4969
  %vm5103 = vmand %vm4837, %vm4970
  %vm5104 = vmand %vm4838, %vm4971
  %vm5105 = vmand %vm4839, %vm4972
  %vm5106 = vmand %vm4840, %vm4973
  %vm5107 = vmand %vm4841, %vm4974
  %vm5108 = vmand %vm4842, %vm4975
  %vm5109 = vmand %vm4843, %vm4976
  %vm5110 = vmand %vm4844, %vm4977
  %vm5111 = vmand %vm4845, %vm4978
  %vm5112 = vmand %vm4846, %vm4979
  %vm5113 = vmand %vm4847, %vm4980
  %vm5114 = vmand %vm4848, %vm4981
  %vm5115 = vmand %vm4849, %vm4982
  %vm5116 = vmand %vm4850, %vm4983
  %vm5117 = vmand %vm4851, %vm4984
  %vm5118 = vmand %vm4852, %vm4985
  %vm5119 = vmand %vm4853, %vm4986
  %vm5120 = vmand %vm4854, %vm4987
  %vm5121 = vmand %vm4855, %vm4988
  %vm5122 = vmand %vm4856, %vm4989
  %vm5123 = vmand %vm4857, %vm4990
  %vm5124 = vmand %vm4858, %vm4991
  %vm5125 = vmand %vm4859, %vm4992
  %vm5126 = vmand %vm4860, %vm4993
  %v5127 = vsel %vm4994, %v1972, 0.0
  %v5128 = vsel %vm4995, %v1973, 0.0
  %v5129 = vsel %vm4996, %v1974, 0.0
  %v5130 = vsel %vm4997, %v1975, 0.0
  %v5131 = vsel %vm4998, %v1976, 0.0
  %v5132 = vsel %vm4999, %v1977, 0.0
  %v5133 = vsel %vm5000, %v1978, 0.0
  %v5134 = vsel %vm5001, %v1979, 0.0
  %v5135 = vsel %vm5002, %v1980, 0.0
  %v5136 = vsel %vm5003, %v1981, 0.0
  %v5137 = vsel %vm5004, %v1982, 0.0
  %v5138 = vsel %vm5005, %v1983, 0.0
  %v5139 = vsel %vm5006, %v1984, 0.0
  %v5140 = vsel %vm5007, %v1985, 0.0
  %v5141 = vsel %vm5008, %v1986, 0.0
  %v5142 = vsel %vm5009, %v1987, 0.0
  %v5143 = vsel %vm5010, %v1988, 0.0
  %v5144 = vsel %vm5011, %v1989, 0.0
  %v5145 = vsel %vm5012, %v1990, 0.0
  %v5146 = vsel %vm5013, %v1991, 0.0
  %v5147 = vsel %vm5014, %v1992, 0.0
  %v5148 = vsel %vm5015, %v1993, 0.0
  %v5149 = vsel %vm5016, %v1994, 0.0
  %v5150 = vsel %vm5017, %v1995, 0.0
  %v5151 = vsel %vm5018, %v1996, 0.0
  %v5152 = vsel %vm5019, %v1997, 0.0
  %v5153 = vsel %vm5020, %v1998, 0.0
  %v5154 = vsel %vm5021, %v1999, 0.0
  %v5155 = vsel %vm5022, %v2000, 0.0
  %v5156 = vsel %vm5023, %v2001, 0.0
  %v5157 = vsel %vm5024, %v2002, 0.0
  %v5158 = vsel %vm5025, %v2003, 0.0
  %v5159 = vsel %vm5026, %v2004, 0.0
  %v5160 = vsel %vm5027, %v2005, 0.0
  %v5161 = vsel %vm5028, %v2006, 0.0
  %v5162 = vsel %vm5029, %v2007, 0.0
  %v5163 = vsel %vm5030, %v2008, 0.0
  %v5164 = vsel %vm5031, %v2009, 0.0
  %v5165 = vsel %vm5032, %v2010, 0.0
  %v5166 = vsel %vm5033, %v2011, 0.0
  %v5167 = vsel %vm5034, %v2012, 0.0
  %v5168 = vsel %vm5035, %v2013, 0.0
  %v5169 = vsel %vm5036, %v2014, 0.0
  %v5170 = vsel %vm5037, %v2015, 0.0
  %v5171 = vsel %vm5038, %v2016, 0.0
  %v5172 = vsel %vm5039, %v2017, 0.0
  %v5173 = vsel %vm5040, %v2018, 0.0
  %v5174 = vsel %vm5041, %v2019, 0.0
  %v5175 = vsel %vm5042, %v2020, 0.0
  %v5176 = vsel %vm5043, %v2021, 0.0
  %v5177 = vsel %vm5044, %v2022, 0.0
  %v5178 = vsel %vm5045, %v2023, 0.0
  %v5179 = vsel %vm5046, %v2024, 0.0
  %v5180 = vsel %vm5047, %v2025, 0.0
  %v5181 = vsel %vm5048, %v2026, 0.0
  %v5182 = vsel %vm5049, %v2027, 0.0
  %v5183 = vsel %vm5050, %v2028, 0.0
  %v5184 = vsel %vm5051, %v2029, 0.0
  %v5185 = vsel %vm5052, %v2030, 0.0
  %v5186 = vsel %vm5053, %v2031, 0.0
  %v5187 = vsel %vm5054, %v2032, 0.0
  %v5188 = vsel %vm5055, %v2033, 0.0
  %v5189 = vsel %vm5056, %v2034, 0.0
  %v5190 = vsel %vm5057, %v2035, 0.0
  %v5191 = vsel %vm5058, %v2036, 0.0
  %v5192 = vsel %vm5059, %v2037, 0.0
  %v5193 = vsel %vm5060, %v2038, 0.0
  %v5194 = vsel %vm5061, %v2039, 0.0
  %v5195 = vsel %vm5062, %v2040, 0.0
  %v5196 = vsel %vm5063, %v2041, 0.0
  %v5197 = vsel %vm5064, %v2042, 0.0
  %v5198 = vsel %vm5065, %v2043, 0.0
  %v5199 = vsel %vm5066, %v2044, 0.0
  %v5200 = vsel %vm5067, %v2045, 0.0
  %v5201 = vsel %vm5068, %v2046, 0.0
  %v5202 = vsel %vm5069, %v2047, 0.0
  %v5203 = vsel %vm5070, %v2048, 0.0
  %v5204 = vsel %vm5071, %v2049, 0.0
  %v5205 = vsel %vm5072, %v2050, 0.0
  %v5206 = vsel %vm5073, %v2051, 0.0
  %v5207 = vsel %vm5074, %v2052, 0.0
  %v5208 = vsel %vm5075, %v2053, 0.0
  %v5209 = vsel %vm5076, %v2054, 0.0
  %v5210 = vsel %vm5077, %v2055, 0.0
  %v5211 = vsel %vm5078, %v2056, 0.0
  %v5212 = vsel %vm5079, %v2057, 0.0
  %v5213 = vsel %vm5080, %v2058, 0.0
  %v5214 = vsel %vm5081, %v2059, 0.0
  %v5215 = vsel %vm5082, %v2060, 0.0
  %v5216 = vsel %vm5083, %v2061, 0.0
  %v5217 = vsel %vm5084, %v2062, 0.0
  %v5218 = vsel %vm5085, %v2063, 0.0
  %v5219 = vsel %vm5086, %v2064, 0.0
  %v5220 = vsel %vm5087, %v2065, 0.0
  %v5221 = vsel %vm5088, %v2066, 0.0
  %v5222 = vsel %vm5089, %v2067, 0.0
  %v5223 = vsel %vm5090, %v2068, 0.0
  %v5224 = vsel %vm5091, %v2069, 0.0
  %v5225 = vsel %vm5092, %v2070, 0.0
  %v5226 = vsel %vm5093, %v2071, 0.0
  %v5227 = vsel %vm5094, %v2072, 0.0
  %v5228 = vsel %vm5095, %v2073, 0.0
  %v5229 = vsel %vm5096, %v2074, 0.0
  %v5230 = vsel %vm5097, %v2075, 0.0
  %v5231 = vsel %vm5098, %v2076, 0.0
  %v5232 = vsel %vm5099, %v2077, 0.0
  %v5233 = vsel %vm5100, %v2078, 0.0
  %v5234 = vsel %vm5101, %v2079, 0.0
  %v5235 = vsel %vm5102, %v2080, 0.0
  %v5236 = vsel %vm5103, %v2081, 0.0
  %v5237 = vsel %vm5104, %v2082, 0.0
  %v5238 = vsel %vm5105, %v2083, 0.0
  %v5239 = vsel %vm5106, %v2084, 0.0
  %v5240 = vsel %vm5107, %v2085, 0.0
  %v5241 = vsel %vm5108, %v2086, 0.0
  %v5242 = vsel %vm5109, %v2087, 0.0
  %v5243 = vsel %vm5110, %v2088, 0.0
  %v5244 = vsel %vm5111, %v2089, 0.0
  %v5245 = vsel %vm5112, %v2090, 0.0
  %v5246 = vsel %vm5113, %v2091, 0.0
  %v5247 = vsel %vm5114, %v2092, 0.0
  %v5248 = vsel %vm5115, %v2093, 0.0
  %v5249 = vsel %vm5116, %v2094, 0.0
  %v5250 = vsel %vm5117, %v2095, 0.0
  %v5251 = vsel %vm5118, %v2096, 0.0
  %v5252 = vsel %vm5119, %v2097, 0.0
  %v5253 = vsel %vm5120, %v2098, 0.0
  %v5254 = vsel %vm5121, %v2099, 0.0
  %v5255 = vsel %vm5122, %v2100, 0.0
  %v5256 = vsel %vm5123, %v2101, 0.0
  %v5257 = vsel %vm5124, %v2102, 0.0
  %v5258 = vsel %vm5125, %v2103, 0.0
  %v5259 = vsel %vm5126, %v2104, 0.0
  %v5260 = vsel %vm3426, %v5127, 0.0
  %v5261 = vsel %vm3426, %v5128, 0.0
  %v5262 = vadd.f32 %v5260, %v5261
  %v5263 = vsel %vm3426, %v5129, 0.0
  %v5264 = vadd.f32 %v5262, %v5263
  %v5265 = vsel %vm3426, %v5130, 0.0
  %v5266 = vadd.f32 %v5264, %v5265
  %v5267 = vsel %vm3426, %v5131, 0.0
  %v5268 = vadd.f32 %v5266, %v5267
  %v5269 = vsel %vm3426, %v5132, 0.0
  %v5270 = vadd.f32 %v5268, %v5269
  %v5271 = vsel %vm3426, %v5133, 0.0
  %v5272 = vadd.f32 %v5270, %v5271
  %v5273 = vsel %vm3426, %v5134, 0.0
  %v5274 = vadd.f32 %v5272, %v5273
  %v5275 = vsel %vm3426, %v5135, 0.0
  %v5276 = vadd.f32 %v5274, %v5275
  %v5277 = vsel %vm3426, %v5136, 0.0
  %v5278 = vadd.f32 %v5276, %v5277
  %v5279 = vsel %vm3426, %v5137, 0.0
  %v5280 = vadd.f32 %v5278, %v5279
  %v5281 = vsel %vm3426, %v5138, 0.0
  %v5282 = vadd.f32 %v5280, %v5281
  %v5283 = vsel %vm3426, %v5139, 0.0
  %v5284 = vadd.f32 %v5282, %v5283
  %v5285 = vsel %vm3426, %v5140, 0.0
  %v5286 = vadd.f32 %v5284, %v5285
  %v5287 = vsel %vm3426, %v5141, 0.0
  %v5288 = vadd.f32 %v5286, %v5287
  %v5289 = vsel %vm3426, %v5142, 0.0
  %v5290 = vadd.f32 %v5288, %v5289
  %v5291 = vsel %vm3426, %v5143, 0.0
  %v5292 = vadd.f32 %v5290, %v5291
  %v5293 = vsel %vm3426, %v5144, 0.0
  %v5294 = vadd.f32 %v5292, %v5293
  %v5295 = vsel %vm3426, %v5145, 0.0
  %v5296 = vadd.f32 %v5294, %v5295
  %v5297 = vsel %vm3426, %v5146, 0.0
  %v5298 = vadd.f32 %v5296, %v5297
  %v5299 = vsel %vm3426, %v5147, 0.0
  %v5300 = vadd.f32 %v5298, %v5299
  %v5301 = vsel %vm3426, %v5148, 0.0
  %v5302 = vadd.f32 %v5300, %v5301
  %v5303 = vsel %vm3426, %v5149, 0.0
  %v5304 = vadd.f32 %v5302, %v5303
  %v5305 = vsel %vm3426, %v5150, 0.0
  %v5306 = vadd.f32 %v5304, %v5305
  %v5307 = vsel %vm3426, %v5151, 0.0
  %v5308 = vadd.f32 %v5306, %v5307
  %v5309 = vsel %vm3426, %v5152, 0.0
  %v5310 = vadd.f32 %v5308, %v5309
  %v5311 = vsel %vm3426, %v5153, 0.0
  %v5312 = vadd.f32 %v5310, %v5311
  %v5313 = vsel %vm3426, %v5154, 0.0
  %v5314 = vadd.f32 %v5312, %v5313
  %v5315 = vsel %vm3426, %v5155, 0.0
  %v5316 = vadd.f32 %v5314, %v5315
  %v5317 = vsel %vm3426, %v5156, 0.0
  %v5318 = vadd.f32 %v5316, %v5317
  %v5319 = vsel %vm3426, %v5157, 0.0
  %v5320 = vadd.f32 %v5318, %v5319
  %v5321 = vsel %vm3426, %v5158, 0.0
  %v5322 = vadd.f32 %v5320, %v5321
  %v5323 = vsel %vm3426, %v5159, 0.0
  %v5324 = vadd.f32 %v5322, %v5323
  %v5325 = vsel %vm3426, %v5160, 0.0
  %v5326 = vadd.f32 %v5324, %v5325
  %v5327 = vsel %vm3426, %v5161, 0.0
  %v5328 = vadd.f32 %v5326, %v5327
  %v5329 = vsel %vm3426, %v5162, 0.0
  %v5330 = vadd.f32 %v5328, %v5329
  %v5331 = vsel %vm3426, %v5163, 0.0
  %v5332 = vadd.f32 %v5330, %v5331
  %v5333 = vsel %vm3426, %v5164, 0.0
  %v5334 = vadd.f32 %v5332, %v5333
  %v5335 = vsel %vm3426, %v5165, 0.0
  %v5336 = vadd.f32 %v5334, %v5335
  %v5337 = vsel %vm3426, %v5166, 0.0
  %v5338 = vadd.f32 %v5336, %v5337
  %v5339 = vsel %vm3426, %v5167, 0.0
  %v5340 = vadd.f32 %v5338, %v5339
  %v5341 = vsel %vm3426, %v5168, 0.0
  %v5342 = vadd.f32 %v5340, %v5341
  %v5343 = vsel %vm3426, %v5169, 0.0
  %v5344 = vadd.f32 %v5342, %v5343
  %v5345 = vsel %vm3426, %v5170, 0.0
  %v5346 = vadd.f32 %v5344, %v5345
  %v5347 = vsel %vm3426, %v5171, 0.0
  %v5348 = vadd.f32 %v5346, %v5347
  %v5349 = vsel %vm3426, %v5172, 0.0
  %v5350 = vadd.f32 %v5348, %v5349
  %v5351 = vsel %vm3426, %v5173, 0.0
  %v5352 = vadd.f32 %v5350, %v5351
  %v5353 = vsel %vm3426, %v5174, 0.0
  %v5354 = vadd.f32 %v5352, %v5353
  %v5355 = vsel %vm3426, %v5175, 0.0
  %v5356 = vadd.f32 %v5354, %v5355
  %v5357 = vsel %vm3426, %v5176, 0.0
  %v5358 = vadd.f32 %v5356, %v5357
  %v5359 = vsel %vm3426, %v5177, 0.0
  %v5360 = vadd.f32 %v5358, %v5359
  %v5361 = vsel %vm3426, %v5178, 0.0
  %v5362 = vadd.f32 %v5360, %v5361
  %v5363 = vsel %vm3426, %v5179, 0.0
  %v5364 = vadd.f32 %v5362, %v5363
  %v5365 = vsel %vm3426, %v5180, 0.0
  %v5366 = vadd.f32 %v5364, %v5365
  %v5367 = vsel %vm3426, %v5181, 0.0
  %v5368 = vadd.f32 %v5366, %v5367
  %v5369 = vsel %vm3426, %v5182, 0.0
  %v5370 = vadd.f32 %v5368, %v5369
  %v5371 = vsel %vm3426, %v5183, 0.0
  %v5372 = vadd.f32 %v5370, %v5371
  %v5373 = vsel %vm3426, %v5184, 0.0
  %v5374 = vadd.f32 %v5372, %v5373
  %v5375 = vsel %vm3426, %v5185, 0.0
  %v5376 = vadd.f32 %v5374, %v5375
  %v5377 = vsel %vm3426, %v5186, 0.0
  %v5378 = vadd.f32 %v5376, %v5377
  %v5379 = vsel %vm3426, %v5187, 0.0
  %v5380 = vadd.f32 %v5378, %v5379
  %v5381 = vsel %vm3426, %v5188, 0.0
  %v5382 = vadd.f32 %v5380, %v5381
  %v5383 = vsel %vm3426, %v5189, 0.0
  %v5384 = vadd.f32 %v5382, %v5383
  %v5385 = vsel %vm3426, %v5190, 0.0
  %v5386 = vadd.f32 %v5384, %v5385
  %v5387 = vsel %vm3426, %v5191, 0.0
  %v5388 = vadd.f32 %v5386, %v5387
  %v5389 = vsel %vm3426, %v5192, 0.0
  %v5390 = vadd.f32 %v5388, %v5389
  %v5391 = vsel %vm3426, %v5193, 0.0
  %v5392 = vadd.f32 %v5390, %v5391
  %v5393 = vsel %vm3426, %v5194, 0.0
  %v5394 = vadd.f32 %v5392, %v5393
  %v5395 = vsel %vm3426, %v5195, 0.0
  %v5396 = vadd.f32 %v5394, %v5395
  %v5397 = vsel %vm3426, %v5196, 0.0
  %v5398 = vadd.f32 %v5396, %v5397
  %v5399 = vsel %vm3426, %v5197, 0.0
  %v5400 = vadd.f32 %v5398, %v5399
  %v5401 = vsel %vm3426, %v5198, 0.0
  %v5402 = vadd.f32 %v5400, %v5401
  %v5403 = vsel %vm3426, %v5199, 0.0
  %v5404 = vadd.f32 %v5402, %v5403
  %v5405 = vsel %vm3426, %v5200, 0.0
  %v5406 = vadd.f32 %v5404, %v5405
  %v5407 = vsel %vm3426, %v5201, 0.0
  %v5408 = vadd.f32 %v5406, %v5407
  %v5409 = vsel %vm3426, %v5202, 0.0
  %v5410 = vadd.f32 %v5408, %v5409
  %v5411 = vsel %vm3426, %v5203, 0.0
  %v5412 = vadd.f32 %v5410, %v5411
  %v5413 = vsel %vm3426, %v5204, 0.0
  %v5414 = vadd.f32 %v5412, %v5413
  %v5415 = vsel %vm3426, %v5205, 0.0
  %v5416 = vadd.f32 %v5414, %v5415
  %v5417 = vsel %vm3426, %v5206, 0.0
  %v5418 = vadd.f32 %v5416, %v5417
  %v5419 = vsel %vm3426, %v5207, 0.0
  %v5420 = vadd.f32 %v5418, %v5419
  %v5421 = vsel %vm3426, %v5208, 0.0
  %v5422 = vadd.f32 %v5420, %v5421
  %v5423 = vsel %vm3426, %v5209, 0.0
  %v5424 = vadd.f32 %v5422, %v5423
  %v5425 = vsel %vm3426, %v5210, 0.0
  %v5426 = vadd.f32 %v5424, %v5425
  %v5427 = vsel %vm3426, %v5211, 0.0
  %v5428 = vadd.f32 %v5426, %v5427
  %v5429 = vsel %vm3426, %v5212, 0.0
  %v5430 = vadd.f32 %v5428, %v5429
  %v5431 = vsel %vm3426, %v5213, 0.0
  %v5432 = vadd.f32 %v5430, %v5431
  %v5433 = vsel %vm3426, %v5214, 0.0
  %v5434 = vadd.f32 %v5432, %v5433
  %v5435 = vsel %vm3426, %v5215, 0.0
  %v5436 = vadd.f32 %v5434, %v5435
  %v5437 = vsel %vm3426, %v5216, 0.0
  %v5438 = vadd.f32 %v5436, %v5437
  %v5439 = vsel %vm3426, %v5217, 0.0
  %v5440 = vadd.f32 %v5438, %v5439
  %v5441 = vsel %vm3426, %v5218, 0.0
  %v5442 = vadd.f32 %v5440, %v5441
  %v5443 = vsel %vm3426, %v5219, 0.0
  %v5444 = vadd.f32 %v5442, %v5443
  %v5445 = vsel %vm3426, %v5220, 0.0
  %v5446 = vadd.f32 %v5444, %v5445
  %v5447 = vsel %vm3426, %v5221, 0.0
  %v5448 = vadd.f32 %v5446, %v5447
  %v5449 = vsel %vm3426, %v5222, 0.0
  %v5450 = vadd.f32 %v5448, %v5449
  %v5451 = vsel %vm3426, %v5223, 0.0
  %v5452 = vadd.f32 %v5450, %v5451
  %v5453 = vsel %vm3426, %v5224, 0.0
  %v5454 = vadd.f32 %v5452, %v5453
  %v5455 = vsel %vm3426, %v5225, 0.0
  %v5456 = vadd.f32 %v5454, %v5455
  %v5457 = vsel %vm3426, %v5226, 0.0
  %v5458 = vadd.f32 %v5456, %v5457
  %v5459 = vsel %vm3426, %v5227, 0.0
  %v5460 = vadd.f32 %v5458, %v5459
  %v5461 = vsel %vm3426, %v5228, 0.0
  %v5462 = vadd.f32 %v5460, %v5461
  %v5463 = vsel %vm3426, %v5229, 0.0
  %v5464 = vadd.f32 %v5462, %v5463
  %v5465 = vsel %vm3426, %v5230, 0.0
  %v5466 = vadd.f32 %v5464, %v5465
  %v5467 = vsel %vm3426, %v5231, 0.0
  %v5468 = vadd.f32 %v5466, %v5467
  %v5469 = vsel %vm3426, %v5232, 0.0
  %v5470 = vadd.f32 %v5468, %v5469
  %v5471 = vsel %vm3426, %v5233, 0.0
  %v5472 = vadd.f32 %v5470, %v5471
  %v5473 = vsel %vm3426, %v5234, 0.0
  %v5474 = vadd.f32 %v5472, %v5473
  %v5475 = vsel %vm3426, %v5235, 0.0
  %v5476 = vadd.f32 %v5474, %v5475
  %v5477 = vsel %vm3426, %v5236, 0.0
  %v5478 = vadd.f32 %v5476, %v5477
  %v5479 = vsel %vm3426, %v5237, 0.0
  %v5480 = vadd.f32 %v5478, %v5479
  %v5481 = vsel %vm3426, %v5238, 0.0
  %v5482 = vadd.f32 %v5480, %v5481
  %v5483 = vsel %vm3426, %v5239, 0.0
  %v5484 = vadd.f32 %v5482, %v5483
  %v5485 = vsel %vm3426, %v5240, 0.0
  %v5486 = vadd.f32 %v5484, %v5485
  %v5487 = vsel %vm3426, %v5241, 0.0
  %v5488 = vadd.f32 %v5486, %v5487
  %v5489 = vsel %vm3426, %v5242, 0.0
  %v5490 = vadd.f32 %v5488, %v5489
  %v5491 = vsel %vm3426, %v5243, 0.0
  %v5492 = vadd.f32 %v5490, %v5491
  %v5493 = vsel %vm3426, %v5244, 0.0
  %v5494 = vadd.f32 %v5492, %v5493
  %v5495 = vsel %vm3426, %v5245, 0.0
  %v5496 = vadd.f32 %v5494, %v5495
  %v5497 = vsel %vm3426, %v5246, 0.0
  %v5498 = vadd.f32 %v5496, %v5497
  %v5499 = vsel %vm3426, %v5247, 0.0
  %v5500 = vadd.f32 %v5498, %v5499
  %v5501 = vsel %vm3426, %v5248, 0.0
  %v5502 = vadd.f32 %v5500, %v5501
  %v5503 = vsel %vm3426, %v5249, 0.0
  %v5504 = vadd.f32 %v5502, %v5503
  %v5505 = vsel %vm3426, %v5250, 0.0
  %v5506 = vadd.f32 %v5504, %v5505
  %v5507 = vsel %vm3426, %v5251, 0.0
  %v5508 = vadd.f32 %v5506, %v5507
  %v5509 = vsel %vm3426, %v5252, 0.0
  %v5510 = vadd.f32 %v5508, %v5509
  %v5511 = vsel %vm3426, %v5253, 0.0
  %v5512 = vadd.f32 %v5510, %v5511
  %v5513 = vsel %vm3426, %v5254, 0.0
  %v5514 = vadd.f32 %v5512, %v5513
  %v5515 = vsel %vm3426, %v5255, 0.0
  %v5516 = vadd.f32 %v5514, %v5515
  %v5517 = vsel %vm3426, %v5256, 0.0
  %v5518 = vadd.f32 %v5516, %v5517
  %v5519 = vsel %vm3426, %v5257, 0.0
  %v5520 = vadd.f32 %v5518, %v5519
  %v5521 = vsel %vm3426, %v5258, 0.0
  %v5522 = vadd.f32 %v5520, %v5521
  %v5523 = vsel %vm3690, %v5259, 0.0
  %v5524 = vadd.f32 %v5522, %v5523
  %v5525 = vrot.slane %v5524, 4
  %v5526 = vadd.f32 %v5524, %v5525
  %v5527 = vrot.slane %v5526, 2
  %v5528 = vadd.f32 %v5526, %v5527
  %v5529 = vrot.slane %v5528, 1
  %v5530 = vadd.f32 %v5528, %v5529
  %v5531 = vmul.f32 %v5530, 0.0062111802
  %vm5532 = vcmp.ge.s32.totalorder %v2628, 676
  %vm5533 = vcmp.ge.s32.totalorder %v2629, 676
  %vm5534 = vcmp.ge.s32.totalorder %v2630, 676
  %vm5535 = vcmp.ge.s32.totalorder %v2631, 676
  %vm5536 = vcmp.ge.s32.totalorder %v2632, 676
  %vm5537 = vcmp.ge.s32.totalorder %v2633, 676
  %vm5538 = vcmp.ge.s32.totalorder %v2634, 676
  %vm5539 = vcmp.ge.s32.totalorder %v2635, 676
  %vm5540 = vcmp.ge.s32.totalorder %v2636, 676
  %vm5541 = vcmp.ge.s32.totalorder %v2637, 676
  %vm5542 = vcmp.ge.s32.totalorder %v2638, 676
  %vm5543 = vcmp.ge.s32.totalorder %v2639, 676
  %vm5544 = vcmp.ge.s32.totalorder %v2640, 676
  %vm5545 = vcmp.ge.s32.totalorder %v2641, 676
  %vm5546 = vcmp.ge.s32.totalorder %v2642, 676
  %vm5547 = vcmp.ge.s32.totalorder %v2643, 676
  %vm5548 = vcmp.ge.s32.totalorder %v2644, 676
  %vm5549 = vcmp.ge.s32.totalorder %v2645, 676
  %vm5550 = vcmp.ge.s32.totalorder %v2646, 676
  %vm5551 = vcmp.ge.s32.totalorder %v2647, 676
  %vm5552 = vcmp.ge.s32.totalorder %v2648, 676
  %vm5553 = vcmp.ge.s32.totalorder %v2649, 676
  %vm5554 = vcmp.ge.s32.totalorder %v2650, 676
  %vm5555 = vcmp.ge.s32.totalorder %v2651, 676
  %vm5556 = vcmp.ge.s32.totalorder %v2652, 676
  %vm5557 = vcmp.ge.s32.totalorder %v2653, 676
  %vm5558 = vcmp.ge.s32.totalorder %v2654, 676
  %vm5559 = vcmp.ge.s32.totalorder %v2655, 676
  %vm5560 = vcmp.ge.s32.totalorder %v2656, 676
  %vm5561 = vcmp.ge.s32.totalorder %v2657, 676
  %vm5562 = vcmp.ge.s32.totalorder %v2658, 676
  %vm5563 = vcmp.ge.s32.totalorder %v2659, 676
  %vm5564 = vcmp.ge.s32.totalorder %v2660, 676
  %vm5565 = vcmp.ge.s32.totalorder %v2661, 676
  %vm5566 = vcmp.ge.s32.totalorder %v2662, 676
  %vm5567 = vcmp.ge.s32.totalorder %v2663, 676
  %vm5568 = vcmp.ge.s32.totalorder %v2664, 676
  %vm5569 = vcmp.ge.s32.totalorder %v2665, 676
  %vm5570 = vcmp.ge.s32.totalorder %v2666, 676
  %vm5571 = vcmp.ge.s32.totalorder %v2667, 676
  %vm5572 = vcmp.ge.s32.totalorder %v2668, 676
  %vm5573 = vcmp.ge.s32.totalorder %v2669, 676
  %vm5574 = vcmp.ge.s32.totalorder %v2670, 676
  %vm5575 = vcmp.ge.s32.totalorder %v2671, 676
  %vm5576 = vcmp.ge.s32.totalorder %v2672, 676
  %vm5577 = vcmp.ge.s32.totalorder %v2673, 676
  %vm5578 = vcmp.ge.s32.totalorder %v2674, 676
  %vm5579 = vcmp.ge.s32.totalorder %v2675, 676
  %vm5580 = vcmp.ge.s32.totalorder %v2676, 676
  %vm5581 = vcmp.ge.s32.totalorder %v2677, 676
  %vm5582 = vcmp.ge.s32.totalorder %v2678, 676
  %vm5583 = vcmp.ge.s32.totalorder %v2679, 676
  %vm5584 = vcmp.ge.s32.totalorder %v2680, 676
  %vm5585 = vcmp.ge.s32.totalorder %v2681, 676
  %vm5586 = vcmp.ge.s32.totalorder %v2682, 676
  %vm5587 = vcmp.ge.s32.totalorder %v2683, 676
  %vm5588 = vcmp.ge.s32.totalorder %v2684, 676
  %vm5589 = vcmp.ge.s32.totalorder %v2685, 676
  %vm5590 = vcmp.ge.s32.totalorder %v2686, 676
  %vm5591 = vcmp.ge.s32.totalorder %v2687, 676
  %vm5592 = vcmp.ge.s32.totalorder %v2688, 676
  %vm5593 = vcmp.ge.s32.totalorder %v2689, 676
  %vm5594 = vcmp.ge.s32.totalorder %v2690, 676
  %vm5595 = vcmp.ge.s32.totalorder %v2691, 676
  %vm5596 = vcmp.ge.s32.totalorder %v2692, 676
  %vm5597 = vcmp.ge.s32.totalorder %v2693, 676
  %vm5598 = vcmp.ge.s32.totalorder %v2694, 676
  %vm5599 = vcmp.ge.s32.totalorder %v2695, 676
  %vm5600 = vcmp.ge.s32.totalorder %v2696, 676
  %vm5601 = vcmp.ge.s32.totalorder %v2697, 676
  %vm5602 = vcmp.ge.s32.totalorder %v2698, 676
  %vm5603 = vcmp.ge.s32.totalorder %v2699, 676
  %vm5604 = vcmp.ge.s32.totalorder %v2700, 676
  %vm5605 = vcmp.ge.s32.totalorder %v2701, 676
  %vm5606 = vcmp.ge.s32.totalorder %v2702, 676
  %vm5607 = vcmp.ge.s32.totalorder %v2703, 676
  %vm5608 = vcmp.ge.s32.totalorder %v2704, 676
  %vm5609 = vcmp.ge.s32.totalorder %v2705, 676
  %vm5610 = vcmp.ge.s32.totalorder %v2706, 676
  %vm5611 = vcmp.ge.s32.totalorder %v2707, 676
  %vm5612 = vcmp.ge.s32.totalorder %v2708, 676
  %vm5613 = vcmp.ge.s32.totalorder %v2709, 676
  %vm5614 = vcmp.ge.s32.totalorder %v2710, 676
  %vm5615 = vcmp.ge.s32.totalorder %v2711, 676
  %vm5616 = vcmp.ge.s32.totalorder %v2712, 676
  %vm5617 = vcmp.ge.s32.totalorder %v2713, 676
  %vm5618 = vcmp.ge.s32.totalorder %v2714, 676
  %vm5619 = vcmp.ge.s32.totalorder %v2715, 676
  %vm5620 = vcmp.ge.s32.totalorder %v2716, 676
  %vm5621 = vcmp.ge.s32.totalorder %v2717, 676
  %vm5622 = vcmp.ge.s32.totalorder %v2718, 676
  %vm5623 = vcmp.ge.s32.totalorder %v2719, 676
  %vm5624 = vcmp.ge.s32.totalorder %v2720, 676
  %vm5625 = vcmp.ge.s32.totalorder %v2721, 676
  %vm5626 = vcmp.ge.s32.totalorder %v2722, 676
  %vm5627 = vcmp.ge.s32.totalorder %v2723, 676
  %vm5628 = vcmp.ge.s32.totalorder %v2724, 676
  %vm5629 = vcmp.ge.s32.totalorder %v2725, 676
  %vm5630 = vcmp.ge.s32.totalorder %v2726, 676
  %vm5631 = vcmp.ge.s32.totalorder %v2727, 676
  %vm5632 = vcmp.ge.s32.totalorder %v2728, 676
  %vm5633 = vcmp.ge.s32.totalorder %v2729, 676
  %vm5634 = vcmp.ge.s32.totalorder %v2730, 676
  %vm5635 = vcmp.ge.s32.totalorder %v2731, 676
  %vm5636 = vcmp.ge.s32.totalorder %v2732, 676
  %vm5637 = vcmp.ge.s32.totalorder %v2733, 676
  %vm5638 = vcmp.ge.s32.totalorder %v2734, 676
  %vm5639 = vcmp.ge.s32.totalorder %v2735, 676
  %vm5640 = vcmp.ge.s32.totalorder %v2736, 676
  %vm5641 = vcmp.ge.s32.totalorder %v2737, 676
  %vm5642 = vcmp.ge.s32.totalorder %v2738, 676
  %vm5643 = vcmp.ge.s32.totalorder %v2739, 676
  %vm5644 = vcmp.ge.s32.totalorder %v2740, 676
  %vm5645 = vcmp.ge.s32.totalorder %v2741, 676
  %vm5646 = vcmp.ge.s32.totalorder %v2742, 676
  %vm5647 = vcmp.ge.s32.totalorder %v2743, 676
  %vm5648 = vcmp.ge.s32.totalorder %v2744, 676
  %vm5649 = vcmp.ge.s32.totalorder %v2745, 676
  %vm5650 = vcmp.ge.s32.totalorder %v2746, 676
  %vm5651 = vcmp.ge.s32.totalorder %v2747, 676
  %vm5652 = vcmp.ge.s32.totalorder %v2748, 676
  %vm5653 = vcmp.ge.s32.totalorder %v2749, 676
  %vm5654 = vcmp.ge.s32.totalorder %v2750, 676
  %vm5655 = vcmp.ge.s32.totalorder %v2751, 676
  %vm5656 = vcmp.ge.s32.totalorder %v2752, 676
  %vm5657 = vcmp.ge.s32.totalorder %v2753, 676
  %vm5658 = vcmp.ge.s32.totalorder %v2754, 676
  %vm5659 = vcmp.ge.s32.totalorder %v2755, 676
  %vm5660 = vcmp.ge.s32.totalorder %v2756, 676
  %vm5661 = vcmp.ge.s32.totalorder %v2757, 676
  %vm5662 = vcmp.ge.s32.totalorder %v2758, 676
  %vm5663 = vcmp.ge.s32.totalorder %v2759, 676
  %vm5664 = vcmp.ge.s32.totalorder %v2760, 676
  %vm5665 = vcmp.lt.s32.totalorder %v2628, 869
  %vm5666 = vcmp.lt.s32.totalorder %v2629, 869
  %vm5667 = vcmp.lt.s32.totalorder %v2630, 869
  %vm5668 = vcmp.lt.s32.totalorder %v2631, 869
  %vm5669 = vcmp.lt.s32.totalorder %v2632, 869
  %vm5670 = vcmp.lt.s32.totalorder %v2633, 869
  %vm5671 = vcmp.lt.s32.totalorder %v2634, 869
  %vm5672 = vcmp.lt.s32.totalorder %v2635, 869
  %vm5673 = vcmp.lt.s32.totalorder %v2636, 869
  %vm5674 = vcmp.lt.s32.totalorder %v2637, 869
  %vm5675 = vcmp.lt.s32.totalorder %v2638, 869
  %vm5676 = vcmp.lt.s32.totalorder %v2639, 869
  %vm5677 = vcmp.lt.s32.totalorder %v2640, 869
  %vm5678 = vcmp.lt.s32.totalorder %v2641, 869
  %vm5679 = vcmp.lt.s32.totalorder %v2642, 869
  %vm5680 = vcmp.lt.s32.totalorder %v2643, 869
  %vm5681 = vcmp.lt.s32.totalorder %v2644, 869
  %vm5682 = vcmp.lt.s32.totalorder %v2645, 869
  %vm5683 = vcmp.lt.s32.totalorder %v2646, 869
  %vm5684 = vcmp.lt.s32.totalorder %v2647, 869
  %vm5685 = vcmp.lt.s32.totalorder %v2648, 869
  %vm5686 = vcmp.lt.s32.totalorder %v2649, 869
  %vm5687 = vcmp.lt.s32.totalorder %v2650, 869
  %vm5688 = vcmp.lt.s32.totalorder %v2651, 869
  %vm5689 = vcmp.lt.s32.totalorder %v2652, 869
  %vm5690 = vcmp.lt.s32.totalorder %v2653, 869
  %vm5691 = vcmp.lt.s32.totalorder %v2654, 869
  %vm5692 = vcmp.lt.s32.totalorder %v2655, 869
  %vm5693 = vcmp.lt.s32.totalorder %v2656, 869
  %vm5694 = vcmp.lt.s32.totalorder %v2657, 869
  %vm5695 = vcmp.lt.s32.totalorder %v2658, 869
  %vm5696 = vcmp.lt.s32.totalorder %v2659, 869
  %vm5697 = vcmp.lt.s32.totalorder %v2660, 869
  %vm5698 = vcmp.lt.s32.totalorder %v2661, 869
  %vm5699 = vcmp.lt.s32.totalorder %v2662, 869
  %vm5700 = vcmp.lt.s32.totalorder %v2663, 869
  %vm5701 = vcmp.lt.s32.totalorder %v2664, 869
  %vm5702 = vcmp.lt.s32.totalorder %v2665, 869
  %vm5703 = vcmp.lt.s32.totalorder %v2666, 869
  %vm5704 = vcmp.lt.s32.totalorder %v2667, 869
  %vm5705 = vcmp.lt.s32.totalorder %v2668, 869
  %vm5706 = vcmp.lt.s32.totalorder %v2669, 869
  %vm5707 = vcmp.lt.s32.totalorder %v2670, 869
  %vm5708 = vcmp.lt.s32.totalorder %v2671, 869
  %vm5709 = vcmp.lt.s32.totalorder %v2672, 869
  %vm5710 = vcmp.lt.s32.totalorder %v2673, 869
  %vm5711 = vcmp.lt.s32.totalorder %v2674, 869
  %vm5712 = vcmp.lt.s32.totalorder %v2675, 869
  %vm5713 = vcmp.lt.s32.totalorder %v2676, 869
  %vm5714 = vcmp.lt.s32.totalorder %v2677, 869
  %vm5715 = vcmp.lt.s32.totalorder %v2678, 869
  %vm5716 = vcmp.lt.s32.totalorder %v2679, 869
  %vm5717 = vcmp.lt.s32.totalorder %v2680, 869
  %vm5718 = vcmp.lt.s32.totalorder %v2681, 869
  %vm5719 = vcmp.lt.s32.totalorder %v2682, 869
  %vm5720 = vcmp.lt.s32.totalorder %v2683, 869
  %vm5721 = vcmp.lt.s32.totalorder %v2684, 869
  %vm5722 = vcmp.lt.s32.totalorder %v2685, 869
  %vm5723 = vcmp.lt.s32.totalorder %v2686, 869
  %vm5724 = vcmp.lt.s32.totalorder %v2687, 869
  %vm5725 = vcmp.lt.s32.totalorder %v2688, 869
  %vm5726 = vcmp.lt.s32.totalorder %v2689, 869
  %vm5727 = vcmp.lt.s32.totalorder %v2690, 869
  %vm5728 = vcmp.lt.s32.totalorder %v2691, 869
  %vm5729 = vcmp.lt.s32.totalorder %v2692, 869
  %vm5730 = vcmp.lt.s32.totalorder %v2693, 869
  %vm5731 = vcmp.lt.s32.totalorder %v2694, 869
  %vm5732 = vcmp.lt.s32.totalorder %v2695, 869
  %vm5733 = vcmp.lt.s32.totalorder %v2696, 869
  %vm5734 = vcmp.lt.s32.totalorder %v2697, 869
  %vm5735 = vcmp.lt.s32.totalorder %v2698, 869
  %vm5736 = vcmp.lt.s32.totalorder %v2699, 869
  %vm5737 = vcmp.lt.s32.totalorder %v2700, 869
  %vm5738 = vcmp.lt.s32.totalorder %v2701, 869
  %vm5739 = vcmp.lt.s32.totalorder %v2702, 869
  %vm5740 = vcmp.lt.s32.totalorder %v2703, 869
  %vm5741 = vcmp.lt.s32.totalorder %v2704, 869
  %vm5742 = vcmp.lt.s32.totalorder %v2705, 869
  %vm5743 = vcmp.lt.s32.totalorder %v2706, 869
  %vm5744 = vcmp.lt.s32.totalorder %v2707, 869
  %vm5745 = vcmp.lt.s32.totalorder %v2708, 869
  %vm5746 = vcmp.lt.s32.totalorder %v2709, 869
  %vm5747 = vcmp.lt.s32.totalorder %v2710, 869
  %vm5748 = vcmp.lt.s32.totalorder %v2711, 869
  %vm5749 = vcmp.lt.s32.totalorder %v2712, 869
  %vm5750 = vcmp.lt.s32.totalorder %v2713, 869
  %vm5751 = vcmp.lt.s32.totalorder %v2714, 869
  %vm5752 = vcmp.lt.s32.totalorder %v2715, 869
  %vm5753 = vcmp.lt.s32.totalorder %v2716, 869
  %vm5754 = vcmp.lt.s32.totalorder %v2717, 869
  %vm5755 = vcmp.lt.s32.totalorder %v2718, 869
  %vm5756 = vcmp.lt.s32.totalorder %v2719, 869
  %vm5757 = vcmp.lt.s32.totalorder %v2720, 869
  %vm5758 = vcmp.lt.s32.totalorder %v2721, 869
  %vm5759 = vcmp.lt.s32.totalorder %v2722, 869
  %vm5760 = vcmp.lt.s32.totalorder %v2723, 869
  %vm5761 = vcmp.lt.s32.totalorder %v2724, 869
  %vm5762 = vcmp.lt.s32.totalorder %v2725, 869
  %vm5763 = vcmp.lt.s32.totalorder %v2726, 869
  %vm5764 = vcmp.lt.s32.totalorder %v2727, 869
  %vm5765 = vcmp.lt.s32.totalorder %v2728, 869
  %vm5766 = vcmp.lt.s32.totalorder %v2729, 869
  %vm5767 = vcmp.lt.s32.totalorder %v2730, 869
  %vm5768 = vcmp.lt.s32.totalorder %v2731, 869
  %vm5769 = vcmp.lt.s32.totalorder %v2732, 869
  %vm5770 = vcmp.lt.s32.totalorder %v2733, 869
  %vm5771 = vcmp.lt.s32.totalorder %v2734, 869
  %vm5772 = vcmp.lt.s32.totalorder %v2735, 869
  %vm5773 = vcmp.lt.s32.totalorder %v2736, 869
  %vm5774 = vcmp.lt.s32.totalorder %v2737, 869
  %vm5775 = vcmp.lt.s32.totalorder %v2738, 869
  %vm5776 = vcmp.lt.s32.totalorder %v2739, 869
  %vm5777 = vcmp.lt.s32.totalorder %v2740, 869
  %vm5778 = vcmp.lt.s32.totalorder %v2741, 869
  %vm5779 = vcmp.lt.s32.totalorder %v2742, 869
  %vm5780 = vcmp.lt.s32.totalorder %v2743, 869
  %vm5781 = vcmp.lt.s32.totalorder %v2744, 869
  %vm5782 = vcmp.lt.s32.totalorder %v2745, 869
  %vm5783 = vcmp.lt.s32.totalorder %v2746, 869
  %vm5784 = vcmp.lt.s32.totalorder %v2747, 869
  %vm5785 = vcmp.lt.s32.totalorder %v2748, 869
  %vm5786 = vcmp.lt.s32.totalorder %v2749, 869
  %vm5787 = vcmp.lt.s32.totalorder %v2750, 869
  %vm5788 = vcmp.lt.s32.totalorder %v2751, 869
  %vm5789 = vcmp.lt.s32.totalorder %v2752, 869
  %vm5790 = vcmp.lt.s32.totalorder %v2753, 869
  %vm5791 = vcmp.lt.s32.totalorder %v2754, 869
  %vm5792 = vcmp.lt.s32.totalorder %v2755, 869
  %vm5793 = vcmp.lt.s32.totalorder %v2756, 869
  %vm5794 = vcmp.lt.s32.totalorder %v2757, 869
  %vm5795 = vcmp.lt.s32.totalorder %v2758, 869
  %vm5796 = vcmp.lt.s32.totalorder %v2759, 869
  %vm5797 = vcmp.lt.s32.totalorder %v2760, 869
  %vm5798 = vmand %vm5532, %vm5665
  %vm5799 = vmand %vm5533, %vm5666
  %vm5800 = vmand %vm5534, %vm5667
  %vm5801 = vmand %vm5535, %vm5668
  %vm5802 = vmand %vm5536, %vm5669
  %vm5803 = vmand %vm5537, %vm5670
  %vm5804 = vmand %vm5538, %vm5671
  %vm5805 = vmand %vm5539, %vm5672
  %vm5806 = vmand %vm5540, %vm5673
  %vm5807 = vmand %vm5541, %vm5674
  %vm5808 = vmand %vm5542, %vm5675
  %vm5809 = vmand %vm5543, %vm5676
  %vm5810 = vmand %vm5544, %vm5677
  %vm5811 = vmand %vm5545, %vm5678
  %vm5812 = vmand %vm5546, %vm5679
  %vm5813 = vmand %vm5547, %vm5680
  %vm5814 = vmand %vm5548, %vm5681
  %vm5815 = vmand %vm5549, %vm5682
  %vm5816 = vmand %vm5550, %vm5683
  %vm5817 = vmand %vm5551, %vm5684
  %vm5818 = vmand %vm5552, %vm5685
  %vm5819 = vmand %vm5553, %vm5686
  %vm5820 = vmand %vm5554, %vm5687
  %vm5821 = vmand %vm5555, %vm5688
  %vm5822 = vmand %vm5556, %vm5689
  %vm5823 = vmand %vm5557, %vm5690
  %vm5824 = vmand %vm5558, %vm5691
  %vm5825 = vmand %vm5559, %vm5692
  %vm5826 = vmand %vm5560, %vm5693
  %vm5827 = vmand %vm5561, %vm5694
  %vm5828 = vmand %vm5562, %vm5695
  %vm5829 = vmand %vm5563, %vm5696
  %vm5830 = vmand %vm5564, %vm5697
  %vm5831 = vmand %vm5565, %vm5698
  %vm5832 = vmand %vm5566, %vm5699
  %vm5833 = vmand %vm5567, %vm5700
  %vm5834 = vmand %vm5568, %vm5701
  %vm5835 = vmand %vm5569, %vm5702
  %vm5836 = vmand %vm5570, %vm5703
  %vm5837 = vmand %vm5571, %vm5704
  %vm5838 = vmand %vm5572, %vm5705
  %vm5839 = vmand %vm5573, %vm5706
  %vm5840 = vmand %vm5574, %vm5707
  %vm5841 = vmand %vm5575, %vm5708
  %vm5842 = vmand %vm5576, %vm5709
  %vm5843 = vmand %vm5577, %vm5710
  %vm5844 = vmand %vm5578, %vm5711
  %vm5845 = vmand %vm5579, %vm5712
  %vm5846 = vmand %vm5580, %vm5713
  %vm5847 = vmand %vm5581, %vm5714
  %vm5848 = vmand %vm5582, %vm5715
  %vm5849 = vmand %vm5583, %vm5716
  %vm5850 = vmand %vm5584, %vm5717
  %vm5851 = vmand %vm5585, %vm5718
  %vm5852 = vmand %vm5586, %vm5719
  %vm5853 = vmand %vm5587, %vm5720
  %vm5854 = vmand %vm5588, %vm5721
  %vm5855 = vmand %vm5589, %vm5722
  %vm5856 = vmand %vm5590, %vm5723
  %vm5857 = vmand %vm5591, %vm5724
  %vm5858 = vmand %vm5592, %vm5725
  %vm5859 = vmand %vm5593, %vm5726
  %vm5860 = vmand %vm5594, %vm5727
  %vm5861 = vmand %vm5595, %vm5728
  %vm5862 = vmand %vm5596, %vm5729
  %vm5863 = vmand %vm5597, %vm5730
  %vm5864 = vmand %vm5598, %vm5731
  %vm5865 = vmand %vm5599, %vm5732
  %vm5866 = vmand %vm5600, %vm5733
  %vm5867 = vmand %vm5601, %vm5734
  %vm5868 = vmand %vm5602, %vm5735
  %vm5869 = vmand %vm5603, %vm5736
  %vm5870 = vmand %vm5604, %vm5737
  %vm5871 = vmand %vm5605, %vm5738
  %vm5872 = vmand %vm5606, %vm5739
  %vm5873 = vmand %vm5607, %vm5740
  %vm5874 = vmand %vm5608, %vm5741
  %vm5875 = vmand %vm5609, %vm5742
  %vm5876 = vmand %vm5610, %vm5743
  %vm5877 = vmand %vm5611, %vm5744
  %vm5878 = vmand %vm5612, %vm5745
  %vm5879 = vmand %vm5613, %vm5746
  %vm5880 = vmand %vm5614, %vm5747
  %vm5881 = vmand %vm5615, %vm5748
  %vm5882 = vmand %vm5616, %vm5749
  %vm5883 = vmand %vm5617, %vm5750
  %vm5884 = vmand %vm5618, %vm5751
  %vm5885 = vmand %vm5619, %vm5752
  %vm5886 = vmand %vm5620, %vm5753
  %vm5887 = vmand %vm5621, %vm5754
  %vm5888 = vmand %vm5622, %vm5755
  %vm5889 = vmand %vm5623, %vm5756
  %vm5890 = vmand %vm5624, %vm5757
  %vm5891 = vmand %vm5625, %vm5758
  %vm5892 = vmand %vm5626, %vm5759
  %vm5893 = vmand %vm5627, %vm5760
  %vm5894 = vmand %vm5628, %vm5761
  %vm5895 = vmand %vm5629, %vm5762
  %vm5896 = vmand %vm5630, %vm5763
  %vm5897 = vmand %vm5631, %vm5764
  %vm5898 = vmand %vm5632, %vm5765
  %vm5899 = vmand %vm5633, %vm5766
  %vm5900 = vmand %vm5634, %vm5767
  %vm5901 = vmand %vm5635, %vm5768
  %vm5902 = vmand %vm5636, %vm5769
  %vm5903 = vmand %vm5637, %vm5770
  %vm5904 = vmand %vm5638, %vm5771
  %vm5905 = vmand %vm5639, %vm5772
  %vm5906 = vmand %vm5640, %vm5773
  %vm5907 = vmand %vm5641, %vm5774
  %vm5908 = vmand %vm5642, %vm5775
  %vm5909 = vmand %vm5643, %vm5776
  %vm5910 = vmand %vm5644, %vm5777
  %vm5911 = vmand %vm5645, %vm5778
  %vm5912 = vmand %vm5646, %vm5779
  %vm5913 = vmand %vm5647, %vm5780
  %vm5914 = vmand %vm5648, %vm5781
  %vm5915 = vmand %vm5649, %vm5782
  %vm5916 = vmand %vm5650, %vm5783
  %vm5917 = vmand %vm5651, %vm5784
  %vm5918 = vmand %vm5652, %vm5785
  %vm5919 = vmand %vm5653, %vm5786
  %vm5920 = vmand %vm5654, %vm5787
  %vm5921 = vmand %vm5655, %vm5788
  %vm5922 = vmand %vm5656, %vm5789
  %vm5923 = vmand %vm5657, %vm5790
  %vm5924 = vmand %vm5658, %vm5791
  %vm5925 = vmand %vm5659, %vm5792
  %vm5926 = vmand %vm5660, %vm5793
  %vm5927 = vmand %vm5661, %vm5794
  %vm5928 = vmand %vm5662, %vm5795
  %vm5929 = vmand %vm5663, %vm5796
  %vm5930 = vmand %vm5664, %vm5797
  %v5931 = vsel %vm5798, %v1972, 0.0
  %v5932 = vsel %vm5799, %v1973, 0.0
  %v5933 = vsel %vm5800, %v1974, 0.0
  %v5934 = vsel %vm5801, %v1975, 0.0
  %v5935 = vsel %vm5802, %v1976, 0.0
  %v5936 = vsel %vm5803, %v1977, 0.0
  %v5937 = vsel %vm5804, %v1978, 0.0
  %v5938 = vsel %vm5805, %v1979, 0.0
  %v5939 = vsel %vm5806, %v1980, 0.0
  %v5940 = vsel %vm5807, %v1981, 0.0
  %v5941 = vsel %vm5808, %v1982, 0.0
  %v5942 = vsel %vm5809, %v1983, 0.0
  %v5943 = vsel %vm5810, %v1984, 0.0
  %v5944 = vsel %vm5811, %v1985, 0.0
  %v5945 = vsel %vm5812, %v1986, 0.0
  %v5946 = vsel %vm5813, %v1987, 0.0
  %v5947 = vsel %vm5814, %v1988, 0.0
  %v5948 = vsel %vm5815, %v1989, 0.0
  %v5949 = vsel %vm5816, %v1990, 0.0
  %v5950 = vsel %vm5817, %v1991, 0.0
  %v5951 = vsel %vm5818, %v1992, 0.0
  %v5952 = vsel %vm5819, %v1993, 0.0
  %v5953 = vsel %vm5820, %v1994, 0.0
  %v5954 = vsel %vm5821, %v1995, 0.0
  %v5955 = vsel %vm5822, %v1996, 0.0
  %v5956 = vsel %vm5823, %v1997, 0.0
  %v5957 = vsel %vm5824, %v1998, 0.0
  %v5958 = vsel %vm5825, %v1999, 0.0
  %v5959 = vsel %vm5826, %v2000, 0.0
  %v5960 = vsel %vm5827, %v2001, 0.0
  %v5961 = vsel %vm5828, %v2002, 0.0
  %v5962 = vsel %vm5829, %v2003, 0.0
  %v5963 = vsel %vm5830, %v2004, 0.0
  %v5964 = vsel %vm5831, %v2005, 0.0
  %v5965 = vsel %vm5832, %v2006, 0.0
  %v5966 = vsel %vm5833, %v2007, 0.0
  %v5967 = vsel %vm5834, %v2008, 0.0
  %v5968 = vsel %vm5835, %v2009, 0.0
  %v5969 = vsel %vm5836, %v2010, 0.0
  %v5970 = vsel %vm5837, %v2011, 0.0
  %v5971 = vsel %vm5838, %v2012, 0.0
  %v5972 = vsel %vm5839, %v2013, 0.0
  %v5973 = vsel %vm5840, %v2014, 0.0
  %v5974 = vsel %vm5841, %v2015, 0.0
  %v5975 = vsel %vm5842, %v2016, 0.0
  %v5976 = vsel %vm5843, %v2017, 0.0
  %v5977 = vsel %vm5844, %v2018, 0.0
  %v5978 = vsel %vm5845, %v2019, 0.0
  %v5979 = vsel %vm5846, %v2020, 0.0
  %v5980 = vsel %vm5847, %v2021, 0.0
  %v5981 = vsel %vm5848, %v2022, 0.0
  %v5982 = vsel %vm5849, %v2023, 0.0
  %v5983 = vsel %vm5850, %v2024, 0.0
  %v5984 = vsel %vm5851, %v2025, 0.0
  %v5985 = vsel %vm5852, %v2026, 0.0
  %v5986 = vsel %vm5853, %v2027, 0.0
  %v5987 = vsel %vm5854, %v2028, 0.0
  %v5988 = vsel %vm5855, %v2029, 0.0
  %v5989 = vsel %vm5856, %v2030, 0.0
  %v5990 = vsel %vm5857, %v2031, 0.0
  %v5991 = vsel %vm5858, %v2032, 0.0
  %v5992 = vsel %vm5859, %v2033, 0.0
  %v5993 = vsel %vm5860, %v2034, 0.0
  %v5994 = vsel %vm5861, %v2035, 0.0
  %v5995 = vsel %vm5862, %v2036, 0.0
  %v5996 = vsel %vm5863, %v2037, 0.0
  %v5997 = vsel %vm5864, %v2038, 0.0
  %v5998 = vsel %vm5865, %v2039, 0.0
  %v5999 = vsel %vm5866, %v2040, 0.0
  %v6000 = vsel %vm5867, %v2041, 0.0
  %v6001 = vsel %vm5868, %v2042, 0.0
  %v6002 = vsel %vm5869, %v2043, 0.0
  %v6003 = vsel %vm5870, %v2044, 0.0
  %v6004 = vsel %vm5871, %v2045, 0.0
  %v6005 = vsel %vm5872, %v2046, 0.0
  %v6006 = vsel %vm5873, %v2047, 0.0
  %v6007 = vsel %vm5874, %v2048, 0.0
  %v6008 = vsel %vm5875, %v2049, 0.0
  %v6009 = vsel %vm5876, %v2050, 0.0
  %v6010 = vsel %vm5877, %v2051, 0.0
  %v6011 = vsel %vm5878, %v2052, 0.0
  %v6012 = vsel %vm5879, %v2053, 0.0
  %v6013 = vsel %vm5880, %v2054, 0.0
  %v6014 = vsel %vm5881, %v2055, 0.0
  %v6015 = vsel %vm5882, %v2056, 0.0
  %v6016 = vsel %vm5883, %v2057, 0.0
  %v6017 = vsel %vm5884, %v2058, 0.0
  %v6018 = vsel %vm5885, %v2059, 0.0
  %v6019 = vsel %vm5886, %v2060, 0.0
  %v6020 = vsel %vm5887, %v2061, 0.0
  %v6021 = vsel %vm5888, %v2062, 0.0
  %v6022 = vsel %vm5889, %v2063, 0.0
  %v6023 = vsel %vm5890, %v2064, 0.0
  %v6024 = vsel %vm5891, %v2065, 0.0
  %v6025 = vsel %vm5892, %v2066, 0.0
  %v6026 = vsel %vm5893, %v2067, 0.0
  %v6027 = vsel %vm5894, %v2068, 0.0
  %v6028 = vsel %vm5895, %v2069, 0.0
  %v6029 = vsel %vm5896, %v2070, 0.0
  %v6030 = vsel %vm5897, %v2071, 0.0
  %v6031 = vsel %vm5898, %v2072, 0.0
  %v6032 = vsel %vm5899, %v2073, 0.0
  %v6033 = vsel %vm5900, %v2074, 0.0
  %v6034 = vsel %vm5901, %v2075, 0.0
  %v6035 = vsel %vm5902, %v2076, 0.0
  %v6036 = vsel %vm5903, %v2077, 0.0
  %v6037 = vsel %vm5904, %v2078, 0.0
  %v6038 = vsel %vm5905, %v2079, 0.0
  %v6039 = vsel %vm5906, %v2080, 0.0
  %v6040 = vsel %vm5907, %v2081, 0.0
  %v6041 = vsel %vm5908, %v2082, 0.0
  %v6042 = vsel %vm5909, %v2083, 0.0
  %v6043 = vsel %vm5910, %v2084, 0.0
  %v6044 = vsel %vm5911, %v2085, 0.0
  %v6045 = vsel %vm5912, %v2086, 0.0
  %v6046 = vsel %vm5913, %v2087, 0.0
  %v6047 = vsel %vm5914, %v2088, 0.0
  %v6048 = vsel %vm5915, %v2089, 0.0
  %v6049 = vsel %vm5916, %v2090, 0.0
  %v6050 = vsel %vm5917, %v2091, 0.0
  %v6051 = vsel %vm5918, %v2092, 0.0
  %v6052 = vsel %vm5919, %v2093, 0.0
  %v6053 = vsel %vm5920, %v2094, 0.0
  %v6054 = vsel %vm5921, %v2095, 0.0
  %v6055 = vsel %vm5922, %v2096, 0.0
  %v6056 = vsel %vm5923, %v2097, 0.0
  %v6057 = vsel %vm5924, %v2098, 0.0
  %v6058 = vsel %vm5925, %v2099, 0.0
  %v6059 = vsel %vm5926, %v2100, 0.0
  %v6060 = vsel %vm5927, %v2101, 0.0
  %v6061 = vsel %vm5928, %v2102, 0.0
  %v6062 = vsel %vm5929, %v2103, 0.0
  %v6063 = vsel %vm5930, %v2104, 0.0
  %v6064 = vsel %vm3426, %v5931, 0.0
  %v6065 = vsel %vm3426, %v5932, 0.0
  %v6066 = vadd.f32 %v6064, %v6065
  %v6067 = vsel %vm3426, %v5933, 0.0
  %v6068 = vadd.f32 %v6066, %v6067
  %v6069 = vsel %vm3426, %v5934, 0.0
  %v6070 = vadd.f32 %v6068, %v6069
  %v6071 = vsel %vm3426, %v5935, 0.0
  %v6072 = vadd.f32 %v6070, %v6071
  %v6073 = vsel %vm3426, %v5936, 0.0
  %v6074 = vadd.f32 %v6072, %v6073
  %v6075 = vsel %vm3426, %v5937, 0.0
  %v6076 = vadd.f32 %v6074, %v6075
  %v6077 = vsel %vm3426, %v5938, 0.0
  %v6078 = vadd.f32 %v6076, %v6077
  %v6079 = vsel %vm3426, %v5939, 0.0
  %v6080 = vadd.f32 %v6078, %v6079
  %v6081 = vsel %vm3426, %v5940, 0.0
  %v6082 = vadd.f32 %v6080, %v6081
  %v6083 = vsel %vm3426, %v5941, 0.0
  %v6084 = vadd.f32 %v6082, %v6083
  %v6085 = vsel %vm3426, %v5942, 0.0
  %v6086 = vadd.f32 %v6084, %v6085
  %v6087 = vsel %vm3426, %v5943, 0.0
  %v6088 = vadd.f32 %v6086, %v6087
  %v6089 = vsel %vm3426, %v5944, 0.0
  %v6090 = vadd.f32 %v6088, %v6089
  %v6091 = vsel %vm3426, %v5945, 0.0
  %v6092 = vadd.f32 %v6090, %v6091
  %v6093 = vsel %vm3426, %v5946, 0.0
  %v6094 = vadd.f32 %v6092, %v6093
  %v6095 = vsel %vm3426, %v5947, 0.0
  %v6096 = vadd.f32 %v6094, %v6095
  %v6097 = vsel %vm3426, %v5948, 0.0
  %v6098 = vadd.f32 %v6096, %v6097
  %v6099 = vsel %vm3426, %v5949, 0.0
  %v6100 = vadd.f32 %v6098, %v6099
  %v6101 = vsel %vm3426, %v5950, 0.0
  %v6102 = vadd.f32 %v6100, %v6101
  %v6103 = vsel %vm3426, %v5951, 0.0
  %v6104 = vadd.f32 %v6102, %v6103
  %v6105 = vsel %vm3426, %v5952, 0.0
  %v6106 = vadd.f32 %v6104, %v6105
  %v6107 = vsel %vm3426, %v5953, 0.0
  %v6108 = vadd.f32 %v6106, %v6107
  %v6109 = vsel %vm3426, %v5954, 0.0
  %v6110 = vadd.f32 %v6108, %v6109
  %v6111 = vsel %vm3426, %v5955, 0.0
  %v6112 = vadd.f32 %v6110, %v6111
  %v6113 = vsel %vm3426, %v5956, 0.0
  %v6114 = vadd.f32 %v6112, %v6113
  %v6115 = vsel %vm3426, %v5957, 0.0
  %v6116 = vadd.f32 %v6114, %v6115
  %v6117 = vsel %vm3426, %v5958, 0.0
  %v6118 = vadd.f32 %v6116, %v6117
  %v6119 = vsel %vm3426, %v5959, 0.0
  %v6120 = vadd.f32 %v6118, %v6119
  %v6121 = vsel %vm3426, %v5960, 0.0
  %v6122 = vadd.f32 %v6120, %v6121
  %v6123 = vsel %vm3426, %v5961, 0.0
  %v6124 = vadd.f32 %v6122, %v6123
  %v6125 = vsel %vm3426, %v5962, 0.0
  %v6126 = vadd.f32 %v6124, %v6125
  %v6127 = vsel %vm3426, %v5963, 0.0
  %v6128 = vadd.f32 %v6126, %v6127
  %v6129 = vsel %vm3426, %v5964, 0.0
  %v6130 = vadd.f32 %v6128, %v6129
  %v6131 = vsel %vm3426, %v5965, 0.0
  %v6132 = vadd.f32 %v6130, %v6131
  %v6133 = vsel %vm3426, %v5966, 0.0
  %v6134 = vadd.f32 %v6132, %v6133
  %v6135 = vsel %vm3426, %v5967, 0.0
  %v6136 = vadd.f32 %v6134, %v6135
  %v6137 = vsel %vm3426, %v5968, 0.0
  %v6138 = vadd.f32 %v6136, %v6137
  %v6139 = vsel %vm3426, %v5969, 0.0
  %v6140 = vadd.f32 %v6138, %v6139
  %v6141 = vsel %vm3426, %v5970, 0.0
  %v6142 = vadd.f32 %v6140, %v6141
  %v6143 = vsel %vm3426, %v5971, 0.0
  %v6144 = vadd.f32 %v6142, %v6143
  %v6145 = vsel %vm3426, %v5972, 0.0
  %v6146 = vadd.f32 %v6144, %v6145
  %v6147 = vsel %vm3426, %v5973, 0.0
  %v6148 = vadd.f32 %v6146, %v6147
  %v6149 = vsel %vm3426, %v5974, 0.0
  %v6150 = vadd.f32 %v6148, %v6149
  %v6151 = vsel %vm3426, %v5975, 0.0
  %v6152 = vadd.f32 %v6150, %v6151
  %v6153 = vsel %vm3426, %v5976, 0.0
  %v6154 = vadd.f32 %v6152, %v6153
  %v6155 = vsel %vm3426, %v5977, 0.0
  %v6156 = vadd.f32 %v6154, %v6155
  %v6157 = vsel %vm3426, %v5978, 0.0
  %v6158 = vadd.f32 %v6156, %v6157
  %v6159 = vsel %vm3426, %v5979, 0.0
  %v6160 = vadd.f32 %v6158, %v6159
  %v6161 = vsel %vm3426, %v5980, 0.0
  %v6162 = vadd.f32 %v6160, %v6161
  %v6163 = vsel %vm3426, %v5981, 0.0
  %v6164 = vadd.f32 %v6162, %v6163
  %v6165 = vsel %vm3426, %v5982, 0.0
  %v6166 = vadd.f32 %v6164, %v6165
  %v6167 = vsel %vm3426, %v5983, 0.0
  %v6168 = vadd.f32 %v6166, %v6167
  %v6169 = vsel %vm3426, %v5984, 0.0
  %v6170 = vadd.f32 %v6168, %v6169
  %v6171 = vsel %vm3426, %v5985, 0.0
  %v6172 = vadd.f32 %v6170, %v6171
  %v6173 = vsel %vm3426, %v5986, 0.0
  %v6174 = vadd.f32 %v6172, %v6173
  %v6175 = vsel %vm3426, %v5987, 0.0
  %v6176 = vadd.f32 %v6174, %v6175
  %v6177 = vsel %vm3426, %v5988, 0.0
  %v6178 = vadd.f32 %v6176, %v6177
  %v6179 = vsel %vm3426, %v5989, 0.0
  %v6180 = vadd.f32 %v6178, %v6179
  %v6181 = vsel %vm3426, %v5990, 0.0
  %v6182 = vadd.f32 %v6180, %v6181
  %v6183 = vsel %vm3426, %v5991, 0.0
  %v6184 = vadd.f32 %v6182, %v6183
  %v6185 = vsel %vm3426, %v5992, 0.0
  %v6186 = vadd.f32 %v6184, %v6185
  %v6187 = vsel %vm3426, %v5993, 0.0
  %v6188 = vadd.f32 %v6186, %v6187
  %v6189 = vsel %vm3426, %v5994, 0.0
  %v6190 = vadd.f32 %v6188, %v6189
  %v6191 = vsel %vm3426, %v5995, 0.0
  %v6192 = vadd.f32 %v6190, %v6191
  %v6193 = vsel %vm3426, %v5996, 0.0
  %v6194 = vadd.f32 %v6192, %v6193
  %v6195 = vsel %vm3426, %v5997, 0.0
  %v6196 = vadd.f32 %v6194, %v6195
  %v6197 = vsel %vm3426, %v5998, 0.0
  %v6198 = vadd.f32 %v6196, %v6197
  %v6199 = vsel %vm3426, %v5999, 0.0
  %v6200 = vadd.f32 %v6198, %v6199
  %v6201 = vsel %vm3426, %v6000, 0.0
  %v6202 = vadd.f32 %v6200, %v6201
  %v6203 = vsel %vm3426, %v6001, 0.0
  %v6204 = vadd.f32 %v6202, %v6203
  %v6205 = vsel %vm3426, %v6002, 0.0
  %v6206 = vadd.f32 %v6204, %v6205
  %v6207 = vsel %vm3426, %v6003, 0.0
  %v6208 = vadd.f32 %v6206, %v6207
  %v6209 = vsel %vm3426, %v6004, 0.0
  %v6210 = vadd.f32 %v6208, %v6209
  %v6211 = vsel %vm3426, %v6005, 0.0
  %v6212 = vadd.f32 %v6210, %v6211
  %v6213 = vsel %vm3426, %v6006, 0.0
  %v6214 = vadd.f32 %v6212, %v6213
  %v6215 = vsel %vm3426, %v6007, 0.0
  %v6216 = vadd.f32 %v6214, %v6215
  %v6217 = vsel %vm3426, %v6008, 0.0
  %v6218 = vadd.f32 %v6216, %v6217
  %v6219 = vsel %vm3426, %v6009, 0.0
  %v6220 = vadd.f32 %v6218, %v6219
  %v6221 = vsel %vm3426, %v6010, 0.0
  %v6222 = vadd.f32 %v6220, %v6221
  %v6223 = vsel %vm3426, %v6011, 0.0
  %v6224 = vadd.f32 %v6222, %v6223
  %v6225 = vsel %vm3426, %v6012, 0.0
  %v6226 = vadd.f32 %v6224, %v6225
  %v6227 = vsel %vm3426, %v6013, 0.0
  %v6228 = vadd.f32 %v6226, %v6227
  %v6229 = vsel %vm3426, %v6014, 0.0
  %v6230 = vadd.f32 %v6228, %v6229
  %v6231 = vsel %vm3426, %v6015, 0.0
  %v6232 = vadd.f32 %v6230, %v6231
  %v6233 = vsel %vm3426, %v6016, 0.0
  %v6234 = vadd.f32 %v6232, %v6233
  %v6235 = vsel %vm3426, %v6017, 0.0
  %v6236 = vadd.f32 %v6234, %v6235
  %v6237 = vsel %vm3426, %v6018, 0.0
  %v6238 = vadd.f32 %v6236, %v6237
  %v6239 = vsel %vm3426, %v6019, 0.0
  %v6240 = vadd.f32 %v6238, %v6239
  %v6241 = vsel %vm3426, %v6020, 0.0
  %v6242 = vadd.f32 %v6240, %v6241
  %v6243 = vsel %vm3426, %v6021, 0.0
  %v6244 = vadd.f32 %v6242, %v6243
  %v6245 = vsel %vm3426, %v6022, 0.0
  %v6246 = vadd.f32 %v6244, %v6245
  %v6247 = vsel %vm3426, %v6023, 0.0
  %v6248 = vadd.f32 %v6246, %v6247
  %v6249 = vsel %vm3426, %v6024, 0.0
  %v6250 = vadd.f32 %v6248, %v6249
  %v6251 = vsel %vm3426, %v6025, 0.0
  %v6252 = vadd.f32 %v6250, %v6251
  %v6253 = vsel %vm3426, %v6026, 0.0
  %v6254 = vadd.f32 %v6252, %v6253
  %v6255 = vsel %vm3426, %v6027, 0.0
  %v6256 = vadd.f32 %v6254, %v6255
  %v6257 = vsel %vm3426, %v6028, 0.0
  %v6258 = vadd.f32 %v6256, %v6257
  %v6259 = vsel %vm3426, %v6029, 0.0
  %v6260 = vadd.f32 %v6258, %v6259
  %v6261 = vsel %vm3426, %v6030, 0.0
  %v6262 = vadd.f32 %v6260, %v6261
  %v6263 = vsel %vm3426, %v6031, 0.0
  %v6264 = vadd.f32 %v6262, %v6263
  %v6265 = vsel %vm3426, %v6032, 0.0
  %v6266 = vadd.f32 %v6264, %v6265
  %v6267 = vsel %vm3426, %v6033, 0.0
  %v6268 = vadd.f32 %v6266, %v6267
  %v6269 = vsel %vm3426, %v6034, 0.0
  %v6270 = vadd.f32 %v6268, %v6269
  %v6271 = vsel %vm3426, %v6035, 0.0
  %v6272 = vadd.f32 %v6270, %v6271
  %v6273 = vsel %vm3426, %v6036, 0.0
  %v6274 = vadd.f32 %v6272, %v6273
  %v6275 = vsel %vm3426, %v6037, 0.0
  %v6276 = vadd.f32 %v6274, %v6275
  %v6277 = vsel %vm3426, %v6038, 0.0
  %v6278 = vadd.f32 %v6276, %v6277
  %v6279 = vsel %vm3426, %v6039, 0.0
  %v6280 = vadd.f32 %v6278, %v6279
  %v6281 = vsel %vm3426, %v6040, 0.0
  %v6282 = vadd.f32 %v6280, %v6281
  %v6283 = vsel %vm3426, %v6041, 0.0
  %v6284 = vadd.f32 %v6282, %v6283
  %v6285 = vsel %vm3426, %v6042, 0.0
  %v6286 = vadd.f32 %v6284, %v6285
  %v6287 = vsel %vm3426, %v6043, 0.0
  %v6288 = vadd.f32 %v6286, %v6287
  %v6289 = vsel %vm3426, %v6044, 0.0
  %v6290 = vadd.f32 %v6288, %v6289
  %v6291 = vsel %vm3426, %v6045, 0.0
  %v6292 = vadd.f32 %v6290, %v6291
  %v6293 = vsel %vm3426, %v6046, 0.0
  %v6294 = vadd.f32 %v6292, %v6293
  %v6295 = vsel %vm3426, %v6047, 0.0
  %v6296 = vadd.f32 %v6294, %v6295
  %v6297 = vsel %vm3426, %v6048, 0.0
  %v6298 = vadd.f32 %v6296, %v6297
  %v6299 = vsel %vm3426, %v6049, 0.0
  %v6300 = vadd.f32 %v6298, %v6299
  %v6301 = vsel %vm3426, %v6050, 0.0
  %v6302 = vadd.f32 %v6300, %v6301
  %v6303 = vsel %vm3426, %v6051, 0.0
  %v6304 = vadd.f32 %v6302, %v6303
  %v6305 = vsel %vm3426, %v6052, 0.0
  %v6306 = vadd.f32 %v6304, %v6305
  %v6307 = vsel %vm3426, %v6053, 0.0
  %v6308 = vadd.f32 %v6306, %v6307
  %v6309 = vsel %vm3426, %v6054, 0.0
  %v6310 = vadd.f32 %v6308, %v6309
  %v6311 = vsel %vm3426, %v6055, 0.0
  %v6312 = vadd.f32 %v6310, %v6311
  %v6313 = vsel %vm3426, %v6056, 0.0
  %v6314 = vadd.f32 %v6312, %v6313
  %v6315 = vsel %vm3426, %v6057, 0.0
  %v6316 = vadd.f32 %v6314, %v6315
  %v6317 = vsel %vm3426, %v6058, 0.0
  %v6318 = vadd.f32 %v6316, %v6317
  %v6319 = vsel %vm3426, %v6059, 0.0
  %v6320 = vadd.f32 %v6318, %v6319
  %v6321 = vsel %vm3426, %v6060, 0.0
  %v6322 = vadd.f32 %v6320, %v6321
  %v6323 = vsel %vm3426, %v6061, 0.0
  %v6324 = vadd.f32 %v6322, %v6323
  %v6325 = vsel %vm3426, %v6062, 0.0
  %v6326 = vadd.f32 %v6324, %v6325
  %v6327 = vsel %vm3690, %v6063, 0.0
  %v6328 = vadd.f32 %v6326, %v6327
  %v6329 = vrot.slane %v6328, 4
  %v6330 = vadd.f32 %v6328, %v6329
  %v6331 = vrot.slane %v6330, 2
  %v6332 = vadd.f32 %v6330, %v6331
  %v6333 = vrot.slane %v6332, 1
  %v6334 = vadd.f32 %v6332, %v6333
  %v6335 = vmul.f32 %v6334, 0.005181347
  %vm6336 = vcmp.ge.s32.totalorder %v2628, 5
  %vm6337 = vcmp.ge.s32.totalorder %v2629, 5
  %vm6338 = vcmp.lt.s32.totalorder %v2628, 10
  %vm6339 = vcmp.lt.s32.totalorder %v2629, 10
  %vm6340 = vmand %vm6336, %vm6338
  %vm6341 = vmand %vm6337, %vm6339
  %v6342 = vsel %vm6340, %v2605, 0.0
  %v6343 = vsel %vm6340, %v2612, 0.0
  %v6344 = vsel %vm6341, %v2619, 0.0
  %v6345 = vsel %vm6341, %v2626, 0.0
  %v6346 = vsel %vm4512, %v6344, 0.0
  %v6347 = vadd.f32 %v6342, %v6346
  %v6348 = vrot.slane %v6347, 4
  %v6349 = vadd.f32 %v6347, %v6348
  %v6350 = vrot.slane %v6349, 2
  %v6351 = vadd.f32 %v6349, %v6350
  %v6352 = vrot.slane %v6351, 1
  %v6353 = vadd.f32 %v6351, %v6352
  %v6354 = vsel %vm4512, %v6345, 0.0
  %v6355 = vadd.f32 %v6343, %v6354
  %v6356 = vrot.slane %v6355, 4
  %v6357 = vadd.f32 %v6355, %v6356
  %v6358 = vrot.slane %v6357, 2
  %v6359 = vadd.f32 %v6357, %v6358
  %v6360 = vrot.slane %v6359, 1
  %v6361 = vadd.f32 %v6359, %v6360
  %v6362 = vmul.f32 %v6353, 0.2
  %v6363 = vmul.f32 %v6361, 0.2
  %6365 = vrot.lane.b32.xlu0 %v5531, 8
  %v6366 = vpop.permute.xlu0 %6365
  %6369 = vrot.lane.b32.xlu0 %v6335, 8
  %v6370 = vpop.permute.xlu0 %6369
  %6374 = vrot.lane.b32.xlu0 %v6362, 24
  %v6375 = vpop.permute.xlu0 %6374
  %6376 = vrot.lane.b32.xlu0 %v6363, 24
  %v6377 = vpop.permute.xlu0 %6376
  %v6378 = vsel %vm4545, %v6375, %v6377
  %v6382 = vsel %vm2861, %v4727, %v6366
  %v6383 = vsel %vm3426, %v6382, %v6370
  %v6384 = vsel %vm4545, %v6383, %v6375
  %vm6385 = vcmp.eq.s32.totalorder %v2628, 1
  %v6386 = vlaneseq
  %v6387 = vshrl.u32 %v6386, 7
  %v6388 = vsub.s32 0, %v6387
  %v6389 = vrot.slane %v6384, %v6388
  %v6390 = vlaneseq
  %v6391 = vshrl.u32 %v6390, 7
  %v6392 = vsub.s32 0, %v6391
  %v6393 = vrot.slane %v6378, %v6392
  %v6394 = vlaneseq
  %v6395 = vshrl.u32 %v6394, 7
  %v6396 = vsub.s32 0, %v6395
  %v6397 = vrot.slane %v6377, %v6396
  %v6398 = vsel %vm6385, %v6389, 0.0
  %v6399 = vsel %vm6385, %v6393, 0.0
  %v6400 = vsel %vm6385, %v6397, 0.0
  %v6401 = vadd.f32 %v4569, %v6398
  %v6402 = vadd.f32 %v4570, %v6399
  %v6403 = vadd.f32 %v4571, %v6400
  %vm6404 = vcmp.ge.s32.totalorder %v2628, 130
  %vm6405 = vcmp.ge.s32.totalorder %v2629, 130
  %vm6406 = vcmp.ge.s32.totalorder %v2630, 130
  %vm6407 = vcmp.ge.s32.totalorder %v2631, 130
  %vm6408 = vcmp.ge.s32.totalorder %v2632, 130
  %vm6409 = vcmp.ge.s32.totalorder %v2633, 130
  %vm6410 = vcmp.ge.s32.totalorder %v2634, 130
  %vm6411 = vcmp.ge.s32.totalorder %v2635, 130
  %vm6412 = vcmp.ge.s32.totalorder %v2636, 130
  %vm6413 = vcmp.ge.s32.totalorder %v2637, 130
  %vm6414 = vcmp.ge.s32.totalorder %v2638, 130
  %vm6415 = vcmp.ge.s32.totalorder %v2639, 130
  %vm6416 = vcmp.ge.s32.totalorder %v2640, 130
  %vm6417 = vcmp.ge.s32.totalorder %v2641, 130
  %vm6418 = vcmp.ge.s32.totalorder %v2642, 130
  %vm6419 = vcmp.ge.s32.totalorder %v2643, 130
  %vm6420 = vcmp.ge.s32.totalorder %v2644, 130
  %vm6421 = vcmp.ge.s32.totalorder %v2645, 130
  %vm6422 = vcmp.ge.s32.totalorder %v2646, 130
  %vm6423 = vcmp.ge.s32.totalorder %v2647, 130
  %vm6424 = vcmp.ge.s32.totalorder %v2648, 130
  %vm6425 = vcmp.ge.s32.totalorder %v2649, 130
  %vm6426 = vcmp.ge.s32.totalorder %v2650, 130
  %vm6427 = vcmp.ge.s32.totalorder %v2651, 130
  %vm6428 = vcmp.ge.s32.totalorder %v2652, 130
  %vm6429 = vcmp.lt.s32.totalorder %v2628, 195
  %vm6430 = vcmp.lt.s32.totalorder %v2629, 195
  %vm6431 = vcmp.lt.s32.totalorder %v2630, 195
  %vm6432 = vcmp.lt.s32.totalorder %v2631, 195
  %vm6433 = vcmp.lt.s32.totalorder %v2632, 195
  %vm6434 = vcmp.lt.s32.totalorder %v2633, 195
  %vm6435 = vcmp.lt.s32.totalorder %v2634, 195
  %vm6436 = vcmp.lt.s32.totalorder %v2635, 195
  %vm6437 = vcmp.lt.s32.totalorder %v2636, 195
  %vm6438 = vcmp.lt.s32.totalorder %v2637, 195
  %vm6439 = vcmp.lt.s32.totalorder %v2638, 195
  %vm6440 = vcmp.lt.s32.totalorder %v2639, 195
  %vm6441 = vcmp.lt.s32.totalorder %v2640, 195
  %vm6442 = vcmp.lt.s32.totalorder %v2641, 195
  %vm6443 = vcmp.lt.s32.totalorder %v2642, 195
  %vm6444 = vcmp.lt.s32.totalorder %v2643, 195
  %vm6445 = vcmp.lt.s32.totalorder %v2644, 195
  %vm6446 = vcmp.lt.s32.totalorder %v2645, 195
  %vm6447 = vcmp.lt.s32.totalorder %v2646, 195
  %vm6448 = vcmp.lt.s32.totalorder %v2647, 195
  %vm6449 = vcmp.lt.s32.totalorder %v2648, 195
  %vm6450 = vcmp.lt.s32.totalorder %v2649, 195
  %vm6451 = vcmp.lt.s32.totalorder %v2650, 195
  %vm6452 = vcmp.lt.s32.totalorder %v2651, 195
  %vm6453 = vcmp.lt.s32.totalorder %v2652, 195
  %vm6454 = vmand %vm6404, %vm6429
  %vm6455 = vmand %vm6405, %vm6430
  %vm6456 = vmand %vm6406, %vm6431
  %vm6457 = vmand %vm6407, %vm6432
  %vm6458 = vmand %vm6408, %vm6433
  %vm6459 = vmand %vm6409, %vm6434
  %vm6460 = vmand %vm6410, %vm6435
  %vm6461 = vmand %vm6411, %vm6436
  %vm6462 = vmand %vm6412, %vm6437
  %vm6463 = vmand %vm6413, %vm6438
  %vm6464 = vmand %vm6414, %vm6439
  %vm6465 = vmand %vm6415, %vm6440
  %vm6466 = vmand %vm6416, %vm6441
  %vm6467 = vmand %vm6417, %vm6442
  %vm6468 = vmand %vm6418, %vm6443
  %vm6469 = vmand %vm6419, %vm6444
  %vm6470 = vmand %vm6420, %vm6445
  %vm6471 = vmand %vm6421, %vm6446
  %vm6472 = vmand %vm6422, %vm6447
  %vm6473 = vmand %vm6423, %vm6448
  %vm6474 = vmand %vm6424, %vm6449
  %vm6475 = vmand %vm6425, %vm6450
  %vm6476 = vmand %vm6426, %vm6451
  %vm6477 = vmand %vm6427, %vm6452
  %vm6478 = vmand %vm6428, %vm6453
  %v6479 = vsel %vm6454, %v509, 0.0
  %v6480 = vsel %vm6455, %v510, 0.0
  %v6481 = vsel %vm6456, %v511, 0.0
  %v6482 = vsel %vm6457, %v512, 0.0
  %v6483 = vsel %vm6458, %v513, 0.0
  %v6484 = vsel %vm6459, %v514, 0.0
  %v6485 = vsel %vm6460, %v515, 0.0
  %v6486 = vsel %vm6461, %v516, 0.0
  %v6487 = vsel %vm6462, %v517, 0.0
  %v6488 = vsel %vm6463, %v518, 0.0
  %v6489 = vsel %vm6464, %v519, 0.0
  %v6490 = vsel %vm6465, %v520, 0.0
  %v6491 = vsel %vm6466, %v521, 0.0
  %v6492 = vsel %vm6467, %v522, 0.0
  %v6493 = vsel %vm6468, %v523, 0.0
  %v6494 = vsel %vm6469, %v524, 0.0
  %v6495 = vsel %vm6470, %v525, 0.0
  %v6496 = vsel %vm6471, %v526, 0.0
  %v6497 = vsel %vm6472, %v527, 0.0
  %v6498 = vsel %vm6473, %v528, 0.0
  %v6499 = vsel %vm6474, %v529, 0.0
  %v6500 = vsel %vm6475, %v530, 0.0
  %v6501 = vsel %vm6476, %v531, 0.0
  %v6502 = vsel %vm6477, %v532, 0.0
  %v6503 = vsel %vm6478, %v533, 0.0
  %v6504 = vsel %vm2861, %v6479, 0.0
  %v6505 = vsel %vm2861, %v6480, 0.0
  %v6506 = vadd.f32 %v6504, %v6505
  %v6507 = vsel %vm2861, %v6481, 0.0
  %v6508 = vadd.f32 %v6506, %v6507
  %v6509 = vsel %vm2861, %v6482, 0.0
  %v6510 = vadd.f32 %v6508, %v6509
  %v6511 = vsel %vm2861, %v6483, 0.0
  %v6512 = vadd.f32 %v6510, %v6511
  %v6513 = vsel %vm2861, %v6484, 0.0
  %v6514 = vadd.f32 %v6512, %v6513
  %v6515 = vsel %vm2861, %v6485, 0.0
  %v6516 = vadd.f32 %v6514, %v6515
  %v6517 = vsel %vm2861, %v6486, 0.0
  %v6518 = vadd.f32 %v6516, %v6517
  %v6519 = vsel %vm2861, %v6487, 0.0
  %v6520 = vadd.f32 %v6518, %v6519
  %v6521 = vsel %vm2861, %v6488, 0.0
  %v6522 = vadd.f32 %v6520, %v6521
  %v6523 = vsel %vm2861, %v6489, 0.0
  %v6524 = vadd.f32 %v6522, %v6523
  %v6525 = vsel %vm2861, %v6490, 0.0
  %v6526 = vadd.f32 %v6524, %v6525
  %v6527 = vsel %vm2861, %v6491, 0.0
  %v6528 = vadd.f32 %v6526, %v6527
  %v6529 = vsel %vm2861, %v6492, 0.0
  %v6530 = vadd.f32 %v6528, %v6529
  %v6531 = vsel %vm2861, %v6493, 0.0
  %v6532 = vadd.f32 %v6530, %v6531
  %v6533 = vsel %vm2861, %v6494, 0.0
  %v6534 = vadd.f32 %v6532, %v6533
  %v6535 = vsel %vm2861, %v6495, 0.0
  %v6536 = vadd.f32 %v6534, %v6535
  %v6537 = vsel %vm2861, %v6496, 0.0
  %v6538 = vadd.f32 %v6536, %v6537
  %v6539 = vsel %vm2861, %v6497, 0.0
  %v6540 = vadd.f32 %v6538, %v6539
  %v6541 = vsel %vm2861, %v6498, 0.0
  %v6542 = vadd.f32 %v6540, %v6541
  %v6543 = vsel %vm2861, %v6499, 0.0
  %v6544 = vadd.f32 %v6542, %v6543
  %v6545 = vsel %vm2861, %v6500, 0.0
  %v6546 = vadd.f32 %v6544, %v6545
  %v6547 = vsel %vm2861, %v6501, 0.0
  %v6548 = vadd.f32 %v6546, %v6547
  %v6549 = vsel %vm2861, %v6502, 0.0
  %v6550 = vadd.f32 %v6548, %v6549
  %v6551 = vsel %vm2909, %v6503, 0.0
  %v6552 = vadd.f32 %v6550, %v6551
  %v6553 = vrot.slane %v6552, 4
  %v6554 = vadd.f32 %v6552, %v6553
  %v6555 = vrot.slane %v6554, 2
  %v6556 = vadd.f32 %v6554, %v6555
  %v6557 = vrot.slane %v6556, 1
  %v6558 = vadd.f32 %v6556, %v6557
  %v6559 = vmul.f32 %v6558, 0.015384615
  %vm6560 = vcmp.ge.s32.totalorder %v2628, 322
  %vm6561 = vcmp.ge.s32.totalorder %v2629, 322
  %vm6562 = vcmp.ge.s32.totalorder %v2630, 322
  %vm6563 = vcmp.ge.s32.totalorder %v2631, 322
  %vm6564 = vcmp.ge.s32.totalorder %v2632, 322
  %vm6565 = vcmp.ge.s32.totalorder %v2633, 322
  %vm6566 = vcmp.ge.s32.totalorder %v2634, 322
  %vm6567 = vcmp.ge.s32.totalorder %v2635, 322
  %vm6568 = vcmp.ge.s32.totalorder %v2636, 322
  %vm6569 = vcmp.ge.s32.totalorder %v2637, 322
  %vm6570 = vcmp.ge.s32.totalorder %v2638, 322
  %vm6571 = vcmp.ge.s32.totalorder %v2639, 322
  %vm6572 = vcmp.ge.s32.totalorder %v2640, 322
  %vm6573 = vcmp.ge.s32.totalorder %v2641, 322
  %vm6574 = vcmp.ge.s32.totalorder %v2642, 322
  %vm6575 = vcmp.ge.s32.totalorder %v2643, 322
  %vm6576 = vcmp.ge.s32.totalorder %v2644, 322
  %vm6577 = vcmp.ge.s32.totalorder %v2645, 322
  %vm6578 = vcmp.ge.s32.totalorder %v2646, 322
  %vm6579 = vcmp.ge.s32.totalorder %v2647, 322
  %vm6580 = vcmp.ge.s32.totalorder %v2648, 322
  %vm6581 = vcmp.ge.s32.totalorder %v2649, 322
  %vm6582 = vcmp.ge.s32.totalorder %v2650, 322
  %vm6583 = vcmp.ge.s32.totalorder %v2651, 322
  %vm6584 = vcmp.ge.s32.totalorder %v2652, 322
  %vm6585 = vcmp.ge.s32.totalorder %v2653, 322
  %vm6586 = vcmp.ge.s32.totalorder %v2654, 322
  %vm6587 = vcmp.ge.s32.totalorder %v2655, 322
  %vm6588 = vcmp.ge.s32.totalorder %v2656, 322
  %vm6589 = vcmp.ge.s32.totalorder %v2657, 322
  %vm6590 = vcmp.ge.s32.totalorder %v2658, 322
  %vm6591 = vcmp.ge.s32.totalorder %v2659, 322
  %vm6592 = vcmp.ge.s32.totalorder %v2660, 322
  %vm6593 = vcmp.ge.s32.totalorder %v2661, 322
  %vm6594 = vcmp.ge.s32.totalorder %v2662, 322
  %vm6595 = vcmp.ge.s32.totalorder %v2663, 322
  %vm6596 = vcmp.ge.s32.totalorder %v2664, 322
  %vm6597 = vcmp.ge.s32.totalorder %v2665, 322
  %vm6598 = vcmp.ge.s32.totalorder %v2666, 322
  %vm6599 = vcmp.ge.s32.totalorder %v2667, 322
  %vm6600 = vcmp.ge.s32.totalorder %v2668, 322
  %vm6601 = vcmp.ge.s32.totalorder %v2669, 322
  %vm6602 = vcmp.ge.s32.totalorder %v2670, 322
  %vm6603 = vcmp.ge.s32.totalorder %v2671, 322
  %vm6604 = vcmp.ge.s32.totalorder %v2672, 322
  %vm6605 = vcmp.ge.s32.totalorder %v2673, 322
  %vm6606 = vcmp.ge.s32.totalorder %v2674, 322
  %vm6607 = vcmp.ge.s32.totalorder %v2675, 322
  %vm6608 = vcmp.ge.s32.totalorder %v2676, 322
  %vm6609 = vcmp.ge.s32.totalorder %v2677, 322
  %vm6610 = vcmp.ge.s32.totalorder %v2678, 322
  %vm6611 = vcmp.ge.s32.totalorder %v2679, 322
  %vm6612 = vcmp.ge.s32.totalorder %v2680, 322
  %vm6613 = vcmp.ge.s32.totalorder %v2681, 322
  %vm6614 = vcmp.ge.s32.totalorder %v2682, 322
  %vm6615 = vcmp.ge.s32.totalorder %v2683, 322
  %vm6616 = vcmp.ge.s32.totalorder %v2684, 322
  %vm6617 = vcmp.ge.s32.totalorder %v2685, 322
  %vm6618 = vcmp.ge.s32.totalorder %v2686, 322
  %vm6619 = vcmp.ge.s32.totalorder %v2687, 322
  %vm6620 = vcmp.ge.s32.totalorder %v2688, 322
  %vm6621 = vcmp.ge.s32.totalorder %v2689, 322
  %vm6622 = vcmp.ge.s32.totalorder %v2690, 322
  %vm6623 = vcmp.ge.s32.totalorder %v2691, 322
  %vm6624 = vcmp.ge.s32.totalorder %v2692, 322
  %vm6625 = vcmp.ge.s32.totalorder %v2693, 322
  %vm6626 = vcmp.ge.s32.totalorder %v2694, 322
  %vm6627 = vcmp.ge.s32.totalorder %v2695, 322
  %vm6628 = vcmp.ge.s32.totalorder %v2696, 322
  %vm6629 = vcmp.ge.s32.totalorder %v2697, 322
  %vm6630 = vcmp.ge.s32.totalorder %v2698, 322
  %vm6631 = vcmp.ge.s32.totalorder %v2699, 322
  %vm6632 = vcmp.ge.s32.totalorder %v2700, 322
  %vm6633 = vcmp.ge.s32.totalorder %v2701, 322
  %vm6634 = vcmp.ge.s32.totalorder %v2702, 322
  %vm6635 = vcmp.ge.s32.totalorder %v2703, 322
  %vm6636 = vcmp.ge.s32.totalorder %v2704, 322
  %vm6637 = vcmp.ge.s32.totalorder %v2705, 322
  %vm6638 = vcmp.ge.s32.totalorder %v2706, 322
  %vm6639 = vcmp.ge.s32.totalorder %v2707, 322
  %vm6640 = vcmp.ge.s32.totalorder %v2708, 322
  %vm6641 = vcmp.ge.s32.totalorder %v2709, 322
  %vm6642 = vcmp.ge.s32.totalorder %v2710, 322
  %vm6643 = vcmp.ge.s32.totalorder %v2711, 322
  %vm6644 = vcmp.ge.s32.totalorder %v2712, 322
  %vm6645 = vcmp.ge.s32.totalorder %v2713, 322
  %vm6646 = vcmp.ge.s32.totalorder %v2714, 322
  %vm6647 = vcmp.ge.s32.totalorder %v2715, 322
  %vm6648 = vcmp.ge.s32.totalorder %v2716, 322
  %vm6649 = vcmp.ge.s32.totalorder %v2717, 322
  %vm6650 = vcmp.ge.s32.totalorder %v2718, 322
  %vm6651 = vcmp.ge.s32.totalorder %v2719, 322
  %vm6652 = vcmp.ge.s32.totalorder %v2720, 322
  %vm6653 = vcmp.ge.s32.totalorder %v2721, 322
  %vm6654 = vcmp.ge.s32.totalorder %v2722, 322
  %vm6655 = vcmp.ge.s32.totalorder %v2723, 322
  %vm6656 = vcmp.ge.s32.totalorder %v2724, 322
  %vm6657 = vcmp.ge.s32.totalorder %v2725, 322
  %vm6658 = vcmp.ge.s32.totalorder %v2726, 322
  %vm6659 = vcmp.ge.s32.totalorder %v2727, 322
  %vm6660 = vcmp.ge.s32.totalorder %v2728, 322
  %vm6661 = vcmp.ge.s32.totalorder %v2729, 322
  %vm6662 = vcmp.ge.s32.totalorder %v2730, 322
  %vm6663 = vcmp.ge.s32.totalorder %v2731, 322
  %vm6664 = vcmp.ge.s32.totalorder %v2732, 322
  %vm6665 = vcmp.ge.s32.totalorder %v2733, 322
  %vm6666 = vcmp.ge.s32.totalorder %v2734, 322
  %vm6667 = vcmp.ge.s32.totalorder %v2735, 322
  %vm6668 = vcmp.ge.s32.totalorder %v2736, 322
  %vm6669 = vcmp.ge.s32.totalorder %v2737, 322
  %vm6670 = vcmp.ge.s32.totalorder %v2738, 322
  %vm6671 = vcmp.ge.s32.totalorder %v2739, 322
  %vm6672 = vcmp.ge.s32.totalorder %v2740, 322
  %vm6673 = vcmp.ge.s32.totalorder %v2741, 322
  %vm6674 = vcmp.ge.s32.totalorder %v2742, 322
  %vm6675 = vcmp.ge.s32.totalorder %v2743, 322
  %vm6676 = vcmp.ge.s32.totalorder %v2744, 322
  %vm6677 = vcmp.ge.s32.totalorder %v2745, 322
  %vm6678 = vcmp.ge.s32.totalorder %v2746, 322
  %vm6679 = vcmp.ge.s32.totalorder %v2747, 322
  %vm6680 = vcmp.ge.s32.totalorder %v2748, 322
  %vm6681 = vcmp.ge.s32.totalorder %v2749, 322
  %vm6682 = vcmp.ge.s32.totalorder %v2750, 322
  %vm6683 = vcmp.ge.s32.totalorder %v2751, 322
  %vm6684 = vcmp.ge.s32.totalorder %v2752, 322
  %vm6685 = vcmp.ge.s32.totalorder %v2753, 322
  %vm6686 = vcmp.ge.s32.totalorder %v2754, 322
  %vm6687 = vcmp.ge.s32.totalorder %v2755, 322
  %vm6688 = vcmp.ge.s32.totalorder %v2756, 322
  %vm6689 = vcmp.ge.s32.totalorder %v2757, 322
  %vm6690 = vcmp.ge.s32.totalorder %v2758, 322
  %vm6691 = vcmp.ge.s32.totalorder %v2759, 322
  %vm6692 = vcmp.ge.s32.totalorder %v2760, 322
  %vm6693 = vcmp.lt.s32.totalorder %v2628, 483
  %vm6694 = vcmp.lt.s32.totalorder %v2629, 483
  %vm6695 = vcmp.lt.s32.totalorder %v2630, 483
  %vm6696 = vcmp.lt.s32.totalorder %v2631, 483
  %vm6697 = vcmp.lt.s32.totalorder %v2632, 483
  %vm6698 = vcmp.lt.s32.totalorder %v2633, 483
  %vm6699 = vcmp.lt.s32.totalorder %v2634, 483
  %vm6700 = vcmp.lt.s32.totalorder %v2635, 483
  %vm6701 = vcmp.lt.s32.totalorder %v2636, 483
  %vm6702 = vcmp.lt.s32.totalorder %v2637, 483
  %vm6703 = vcmp.lt.s32.totalorder %v2638, 483
  %vm6704 = vcmp.lt.s32.totalorder %v2639, 483
  %vm6705 = vcmp.lt.s32.totalorder %v2640, 483
  %vm6706 = vcmp.lt.s32.totalorder %v2641, 483
  %vm6707 = vcmp.lt.s32.totalorder %v2642, 483
  %vm6708 = vcmp.lt.s32.totalorder %v2643, 483
  %vm6709 = vcmp.lt.s32.totalorder %v2644, 483
  %vm6710 = vcmp.lt.s32.totalorder %v2645, 483
  %vm6711 = vcmp.lt.s32.totalorder %v2646, 483
  %vm6712 = vcmp.lt.s32.totalorder %v2647, 483
  %vm6713 = vcmp.lt.s32.totalorder %v2648, 483
  %vm6714 = vcmp.lt.s32.totalorder %v2649, 483
  %vm6715 = vcmp.lt.s32.totalorder %v2650, 483
  %vm6716 = vcmp.lt.s32.totalorder %v2651, 483
  %vm6717 = vcmp.lt.s32.totalorder %v2652, 483
  %vm6718 = vcmp.lt.s32.totalorder %v2653, 483
  %vm6719 = vcmp.lt.s32.totalorder %v2654, 483
  %vm6720 = vcmp.lt.s32.totalorder %v2655, 483
  %vm6721 = vcmp.lt.s32.totalorder %v2656, 483
  %vm6722 = vcmp.lt.s32.totalorder %v2657, 483
  %vm6723 = vcmp.lt.s32.totalorder %v2658, 483
  %vm6724 = vcmp.lt.s32.totalorder %v2659, 483
  %vm6725 = vcmp.lt.s32.totalorder %v2660, 483
  %vm6726 = vcmp.lt.s32.totalorder %v2661, 483
  %vm6727 = vcmp.lt.s32.totalorder %v2662, 483
  %vm6728 = vcmp.lt.s32.totalorder %v2663, 483
  %vm6729 = vcmp.lt.s32.totalorder %v2664, 483
  %vm6730 = vcmp.lt.s32.totalorder %v2665, 483
  %vm6731 = vcmp.lt.s32.totalorder %v2666, 483
  %vm6732 = vcmp.lt.s32.totalorder %v2667, 483
  %vm6733 = vcmp.lt.s32.totalorder %v2668, 483
  %vm6734 = vcmp.lt.s32.totalorder %v2669, 483
  %vm6735 = vcmp.lt.s32.totalorder %v2670, 483
  %vm6736 = vcmp.lt.s32.totalorder %v2671, 483
  %vm6737 = vcmp.lt.s32.totalorder %v2672, 483
  %vm6738 = vcmp.lt.s32.totalorder %v2673, 483
  %vm6739 = vcmp.lt.s32.totalorder %v2674, 483
  %vm6740 = vcmp.lt.s32.totalorder %v2675, 483
  %vm6741 = vcmp.lt.s32.totalorder %v2676, 483
  %vm6742 = vcmp.lt.s32.totalorder %v2677, 483
  %vm6743 = vcmp.lt.s32.totalorder %v2678, 483
  %vm6744 = vcmp.lt.s32.totalorder %v2679, 483
  %vm6745 = vcmp.lt.s32.totalorder %v2680, 483
  %vm6746 = vcmp.lt.s32.totalorder %v2681, 483
  %vm6747 = vcmp.lt.s32.totalorder %v2682, 483
  %vm6748 = vcmp.lt.s32.totalorder %v2683, 483
  %vm6749 = vcmp.lt.s32.totalorder %v2684, 483
  %vm6750 = vcmp.lt.s32.totalorder %v2685, 483
  %vm6751 = vcmp.lt.s32.totalorder %v2686, 483
  %vm6752 = vcmp.lt.s32.totalorder %v2687, 483
  %vm6753 = vcmp.lt.s32.totalorder %v2688, 483
  %vm6754 = vcmp.lt.s32.totalorder %v2689, 483
  %vm6755 = vcmp.lt.s32.totalorder %v2690, 483
  %vm6756 = vcmp.lt.s32.totalorder %v2691, 483
  %vm6757 = vcmp.lt.s32.totalorder %v2692, 483
  %vm6758 = vcmp.lt.s32.totalorder %v2693, 483
  %vm6759 = vcmp.lt.s32.totalorder %v2694, 483
  %vm6760 = vcmp.lt.s32.totalorder %v2695, 483
  %vm6761 = vcmp.lt.s32.totalorder %v2696, 483
  %vm6762 = vcmp.lt.s32.totalorder %v2697, 483
  %vm6763 = vcmp.lt.s32.totalorder %v2698, 483
  %vm6764 = vcmp.lt.s32.totalorder %v2699, 483
  %vm6765 = vcmp.lt.s32.totalorder %v2700, 483
  %vm6766 = vcmp.lt.s32.totalorder %v2701, 483
  %vm6767 = vcmp.lt.s32.totalorder %v2702, 483
  %vm6768 = vcmp.lt.s32.totalorder %v2703, 483
  %vm6769 = vcmp.lt.s32.totalorder %v2704, 483
  %vm6770 = vcmp.lt.s32.totalorder %v2705, 483
  %vm6771 = vcmp.lt.s32.totalorder %v2706, 483
  %vm6772 = vcmp.lt.s32.totalorder %v2707, 483
  %vm6773 = vcmp.lt.s32.totalorder %v2708, 483
  %vm6774 = vcmp.lt.s32.totalorder %v2709, 483
  %vm6775 = vcmp.lt.s32.totalorder %v2710, 483
  %vm6776 = vcmp.lt.s32.totalorder %v2711, 483
  %vm6777 = vcmp.lt.s32.totalorder %v2712, 483
  %vm6778 = vcmp.lt.s32.totalorder %v2713, 483
  %vm6779 = vcmp.lt.s32.totalorder %v2714, 483
  %vm6780 = vcmp.lt.s32.totalorder %v2715, 483
  %vm6781 = vcmp.lt.s32.totalorder %v2716, 483
  %vm6782 = vcmp.lt.s32.totalorder %v2717, 483
  %vm6783 = vcmp.lt.s32.totalorder %v2718, 483
  %vm6784 = vcmp.lt.s32.totalorder %v2719, 483
  %vm6785 = vcmp.lt.s32.totalorder %v2720, 483
  %vm6786 = vcmp.lt.s32.totalorder %v2721, 483
  %vm6787 = vcmp.lt.s32.totalorder %v2722, 483
  %vm6788 = vcmp.lt.s32.totalorder %v2723, 483
  %vm6789 = vcmp.lt.s32.totalorder %v2724, 483
  %vm6790 = vcmp.lt.s32.totalorder %v2725, 483
  %vm6791 = vcmp.lt.s32.totalorder %v2726, 483
  %vm6792 = vcmp.lt.s32.totalorder %v2727, 483
  %vm6793 = vcmp.lt.s32.totalorder %v2728, 483
  %vm6794 = vcmp.lt.s32.totalorder %v2729, 483
  %vm6795 = vcmp.lt.s32.totalorder %v2730, 483
  %vm6796 = vcmp.lt.s32.totalorder %v2731, 483
  %vm6797 = vcmp.lt.s32.totalorder %v2732, 483
  %vm6798 = vcmp.lt.s32.totalorder %v2733, 483
  %vm6799 = vcmp.lt.s32.totalorder %v2734, 483
  %vm6800 = vcmp.lt.s32.totalorder %v2735, 483
  %vm6801 = vcmp.lt.s32.totalorder %v2736, 483
  %vm6802 = vcmp.lt.s32.totalorder %v2737, 483
  %vm6803 = vcmp.lt.s32.totalorder %v2738, 483
  %vm6804 = vcmp.lt.s32.totalorder %v2739, 483
  %vm6805 = vcmp.lt.s32.totalorder %v2740, 483
  %vm6806 = vcmp.lt.s32.totalorder %v2741, 483
  %vm6807 = vcmp.lt.s32.totalorder %v2742, 483
  %vm6808 = vcmp.lt.s32.totalorder %v2743, 483
  %vm6809 = vcmp.lt.s32.totalorder %v2744, 483
  %vm6810 = vcmp.lt.s32.totalorder %v2745, 483
  %vm6811 = vcmp.lt.s32.totalorder %v2746, 483
  %vm6812 = vcmp.lt.s32.totalorder %v2747, 483
  %vm6813 = vcmp.lt.s32.totalorder %v2748, 483
  %vm6814 = vcmp.lt.s32.totalorder %v2749, 483
  %vm6815 = vcmp.lt.s32.totalorder %v2750, 483
  %vm6816 = vcmp.lt.s32.totalorder %v2751, 483
  %vm6817 = vcmp.lt.s32.totalorder %v2752, 483
  %vm6818 = vcmp.lt.s32.totalorder %v2753, 483
  %vm6819 = vcmp.lt.s32.totalorder %v2754, 483
  %vm6820 = vcmp.lt.s32.totalorder %v2755, 483
  %vm6821 = vcmp.lt.s32.totalorder %v2756, 483
  %vm6822 = vcmp.lt.s32.totalorder %v2757, 483
  %vm6823 = vcmp.lt.s32.totalorder %v2758, 483
  %vm6824 = vcmp.lt.s32.totalorder %v2759, 483
  %vm6825 = vcmp.lt.s32.totalorder %v2760, 483
  %vm6826 = vmand %vm6560, %vm6693
  %vm6827 = vmand %vm6561, %vm6694
  %vm6828 = vmand %vm6562, %vm6695
  %vm6829 = vmand %vm6563, %vm6696
  %vm6830 = vmand %vm6564, %vm6697
  %vm6831 = vmand %vm6565, %vm6698
  %vm6832 = vmand %vm6566, %vm6699
  %vm6833 = vmand %vm6567, %vm6700
  %vm6834 = vmand %vm6568, %vm6701
  %vm6835 = vmand %vm6569, %vm6702
  %vm6836 = vmand %vm6570, %vm6703
  %vm6837 = vmand %vm6571, %vm6704
  %vm6838 = vmand %vm6572, %vm6705
  %vm6839 = vmand %vm6573, %vm6706
  %vm6840 = vmand %vm6574, %vm6707
  %vm6841 = vmand %vm6575, %vm6708
  %vm6842 = vmand %vm6576, %vm6709
  %vm6843 = vmand %vm6577, %vm6710
  %vm6844 = vmand %vm6578, %vm6711
  %vm6845 = vmand %vm6579, %vm6712
  %vm6846 = vmand %vm6580, %vm6713
  %vm6847 = vmand %vm6581, %vm6714
  %vm6848 = vmand %vm6582, %vm6715
  %vm6849 = vmand %vm6583, %vm6716
  %vm6850 = vmand %vm6584, %vm6717
  %vm6851 = vmand %vm6585, %vm6718
  %vm6852 = vmand %vm6586, %vm6719
  %vm6853 = vmand %vm6587, %vm6720
  %vm6854 = vmand %vm6588, %vm6721
  %vm6855 = vmand %vm6589, %vm6722
  %vm6856 = vmand %vm6590, %vm6723
  %vm6857 = vmand %vm6591, %vm6724
  %vm6858 = vmand %vm6592, %vm6725
  %vm6859 = vmand %vm6593, %vm6726
  %vm6860 = vmand %vm6594, %vm6727
  %vm6861 = vmand %vm6595, %vm6728
  %vm6862 = vmand %vm6596, %vm6729
  %vm6863 = vmand %vm6597, %vm6730
  %vm6864 = vmand %vm6598, %vm6731
  %vm6865 = vmand %vm6599, %vm6732
  %vm6866 = vmand %vm6600, %vm6733
  %vm6867 = vmand %vm6601, %vm6734
  %vm6868 = vmand %vm6602, %vm6735
  %vm6869 = vmand %vm6603, %vm6736
  %vm6870 = vmand %vm6604, %vm6737
  %vm6871 = vmand %vm6605, %vm6738
  %vm6872 = vmand %vm6606, %vm6739
  %vm6873 = vmand %vm6607, %vm6740
  %vm6874 = vmand %vm6608, %vm6741
  %vm6875 = vmand %vm6609, %vm6742
  %vm6876 = vmand %vm6610, %vm6743
  %vm6877 = vmand %vm6611, %vm6744
  %vm6878 = vmand %vm6612, %vm6745
  %vm6879 = vmand %vm6613, %vm6746
  %vm6880 = vmand %vm6614, %vm6747
  %vm6881 = vmand %vm6615, %vm6748
  %vm6882 = vmand %vm6616, %vm6749
  %vm6883 = vmand %vm6617, %vm6750
  %vm6884 = vmand %vm6618, %vm6751
  %vm6885 = vmand %vm6619, %vm6752
  %vm6886 = vmand %vm6620, %vm6753
  %vm6887 = vmand %vm6621, %vm6754
  %vm6888 = vmand %vm6622, %vm6755
  %vm6889 = vmand %vm6623, %vm6756
  %vm6890 = vmand %vm6624, %vm6757
  %vm6891 = vmand %vm6625, %vm6758
  %vm6892 = vmand %vm6626, %vm6759
  %vm6893 = vmand %vm6627, %vm6760
  %vm6894 = vmand %vm6628, %vm6761
  %vm6895 = vmand %vm6629, %vm6762
  %vm6896 = vmand %vm6630, %vm6763
  %vm6897 = vmand %vm6631, %vm6764
  %vm6898 = vmand %vm6632, %vm6765
  %vm6899 = vmand %vm6633, %vm6766
  %vm6900 = vmand %vm6634, %vm6767
  %vm6901 = vmand %vm6635, %vm6768
  %vm6902 = vmand %vm6636, %vm6769
  %vm6903 = vmand %vm6637, %vm6770
  %vm6904 = vmand %vm6638, %vm6771
  %vm6905 = vmand %vm6639, %vm6772
  %vm6906 = vmand %vm6640, %vm6773
  %vm6907 = vmand %vm6641, %vm6774
  %vm6908 = vmand %vm6642, %vm6775
  %vm6909 = vmand %vm6643, %vm6776
  %vm6910 = vmand %vm6644, %vm6777
  %vm6911 = vmand %vm6645, %vm6778
  %vm6912 = vmand %vm6646, %vm6779
  %vm6913 = vmand %vm6647, %vm6780
  %vm6914 = vmand %vm6648, %vm6781
  %vm6915 = vmand %vm6649, %vm6782
  %vm6916 = vmand %vm6650, %vm6783
  %vm6917 = vmand %vm6651, %vm6784
  %vm6918 = vmand %vm6652, %vm6785
  %vm6919 = vmand %vm6653, %vm6786
  %vm6920 = vmand %vm6654, %vm6787
  %vm6921 = vmand %vm6655, %vm6788
  %vm6922 = vmand %vm6656, %vm6789
  %vm6923 = vmand %vm6657, %vm6790
  %vm6924 = vmand %vm6658, %vm6791
  %vm6925 = vmand %vm6659, %vm6792
  %vm6926 = vmand %vm6660, %vm6793
  %vm6927 = vmand %vm6661, %vm6794
  %vm6928 = vmand %vm6662, %vm6795
  %vm6929 = vmand %vm6663, %vm6796
  %vm6930 = vmand %vm6664, %vm6797
  %vm6931 = vmand %vm6665, %vm6798
  %vm6932 = vmand %vm6666, %vm6799
  %vm6933 = vmand %vm6667, %vm6800
  %vm6934 = vmand %vm6668, %vm6801
  %vm6935 = vmand %vm6669, %vm6802
  %vm6936 = vmand %vm6670, %vm6803
  %vm6937 = vmand %vm6671, %vm6804
  %vm6938 = vmand %vm6672, %vm6805
  %vm6939 = vmand %vm6673, %vm6806
  %vm6940 = vmand %vm6674, %vm6807
  %vm6941 = vmand %vm6675, %vm6808
  %vm6942 = vmand %vm6676, %vm6809
  %vm6943 = vmand %vm6677, %vm6810
  %vm6944 = vmand %vm6678, %vm6811
  %vm6945 = vmand %vm6679, %vm6812
  %vm6946 = vmand %vm6680, %vm6813
  %vm6947 = vmand %vm6681, %vm6814
  %vm6948 = vmand %vm6682, %vm6815
  %vm6949 = vmand %vm6683, %vm6816
  %vm6950 = vmand %vm6684, %vm6817
  %vm6951 = vmand %vm6685, %vm6818
  %vm6952 = vmand %vm6686, %vm6819
  %vm6953 = vmand %vm6687, %vm6820
  %vm6954 = vmand %vm6688, %vm6821
  %vm6955 = vmand %vm6689, %vm6822
  %vm6956 = vmand %vm6690, %vm6823
  %vm6957 = vmand %vm6691, %vm6824
  %vm6958 = vmand %vm6692, %vm6825
  %v6959 = vsel %vm6826, %v1972, 0.0
  %v6960 = vsel %vm6827, %v1973, 0.0
  %v6961 = vsel %vm6828, %v1974, 0.0
  %v6962 = vsel %vm6829, %v1975, 0.0
  %v6963 = vsel %vm6830, %v1976, 0.0
  %v6964 = vsel %vm6831, %v1977, 0.0
  %v6965 = vsel %vm6832, %v1978, 0.0
  %v6966 = vsel %vm6833, %v1979, 0.0
  %v6967 = vsel %vm6834, %v1980, 0.0
  %v6968 = vsel %vm6835, %v1981, 0.0
  %v6969 = vsel %vm6836, %v1982, 0.0
  %v6970 = vsel %vm6837, %v1983, 0.0
  %v6971 = vsel %vm6838, %v1984, 0.0
  %v6972 = vsel %vm6839, %v1985, 0.0
  %v6973 = vsel %vm6840, %v1986, 0.0
  %v6974 = vsel %vm6841, %v1987, 0.0
  %v6975 = vsel %vm6842, %v1988, 0.0
  %v6976 = vsel %vm6843, %v1989, 0.0
  %v6977 = vsel %vm6844, %v1990, 0.0
  %v6978 = vsel %vm6845, %v1991, 0.0
  %v6979 = vsel %vm6846, %v1992, 0.0
  %v6980 = vsel %vm6847, %v1993, 0.0
  %v6981 = vsel %vm6848, %v1994, 0.0
  %v6982 = vsel %vm6849, %v1995, 0.0
  %v6983 = vsel %vm6850, %v1996, 0.0
  %v6984 = vsel %vm6851, %v1997, 0.0
  %v6985 = vsel %vm6852, %v1998, 0.0
  %v6986 = vsel %vm6853, %v1999, 0.0
  %v6987 = vsel %vm6854, %v2000, 0.0
  %v6988 = vsel %vm6855, %v2001, 0.0
  %v6989 = vsel %vm6856, %v2002, 0.0
  %v6990 = vsel %vm6857, %v2003, 0.0
  %v6991 = vsel %vm6858, %v2004, 0.0
  %v6992 = vsel %vm6859, %v2005, 0.0
  %v6993 = vsel %vm6860, %v2006, 0.0
  %v6994 = vsel %vm6861, %v2007, 0.0
  %v6995 = vsel %vm6862, %v2008, 0.0
  %v6996 = vsel %vm6863, %v2009, 0.0
  %v6997 = vsel %vm6864, %v2010, 0.0
  %v6998 = vsel %vm6865, %v2011, 0.0
  %v6999 = vsel %vm6866, %v2012, 0.0
  %v7000 = vsel %vm6867, %v2013, 0.0
  %v7001 = vsel %vm6868, %v2014, 0.0
  %v7002 = vsel %vm6869, %v2015, 0.0
  %v7003 = vsel %vm6870, %v2016, 0.0
  %v7004 = vsel %vm6871, %v2017, 0.0
  %v7005 = vsel %vm6872, %v2018, 0.0
  %v7006 = vsel %vm6873, %v2019, 0.0
  %v7007 = vsel %vm6874, %v2020, 0.0
  %v7008 = vsel %vm6875, %v2021, 0.0
  %v7009 = vsel %vm6876, %v2022, 0.0
  %v7010 = vsel %vm6877, %v2023, 0.0
  %v7011 = vsel %vm6878, %v2024, 0.0
  %v7012 = vsel %vm6879, %v2025, 0.0
  %v7013 = vsel %vm6880, %v2026, 0.0
  %v7014 = vsel %vm6881, %v2027, 0.0
  %v7015 = vsel %vm6882, %v2028, 0.0
  %v7016 = vsel %vm6883, %v2029, 0.0
  %v7017 = vsel %vm6884, %v2030, 0.0
  %v7018 = vsel %vm6885, %v2031, 0.0
  %v7019 = vsel %vm6886, %v2032, 0.0
  %v7020 = vsel %vm6887, %v2033, 0.0
  %v7021 = vsel %vm6888, %v2034, 0.0
  %v7022 = vsel %vm6889, %v2035, 0.0
  %v7023 = vsel %vm6890, %v2036, 0.0
  %v7024 = vsel %vm6891, %v2037, 0.0
  %v7025 = vsel %vm6892, %v2038, 0.0
  %v7026 = vsel %vm6893, %v2039, 0.0
  %v7027 = vsel %vm6894, %v2040, 0.0
  %v7028 = vsel %vm6895, %v2041, 0.0
  %v7029 = vsel %vm6896, %v2042, 0.0
  %v7030 = vsel %vm6897, %v2043, 0.0
  %v7031 = vsel %vm6898, %v2044, 0.0
  %v7032 = vsel %vm6899, %v2045, 0.0
  %v7033 = vsel %vm6900, %v2046, 0.0
  %v7034 = vsel %vm6901, %v2047, 0.0
  %v7035 = vsel %vm6902, %v2048, 0.0
  %v7036 = vsel %vm6903, %v2049, 0.0
  %v7037 = vsel %vm6904, %v2050, 0.0
  %v7038 = vsel %vm6905, %v2051, 0.0
  %v7039 = vsel %vm6906, %v2052, 0.0
  %v7040 = vsel %vm6907, %v2053, 0.0
  %v7041 = vsel %vm6908, %v2054, 0.0
  %v7042 = vsel %vm6909, %v2055, 0.0
  %v7043 = vsel %vm6910, %v2056, 0.0
  %v7044 = vsel %vm6911, %v2057, 0.0
  %v7045 = vsel %vm6912, %v2058, 0.0
  %v7046 = vsel %vm6913, %v2059, 0.0
  %v7047 = vsel %vm6914, %v2060, 0.0
  %v7048 = vsel %vm6915, %v2061, 0.0
  %v7049 = vsel %vm6916, %v2062, 0.0
  %v7050 = vsel %vm6917, %v2063, 0.0
  %v7051 = vsel %vm6918, %v2064, 0.0
  %v7052 = vsel %vm6919, %v2065, 0.0
  %v7053 = vsel %vm6920, %v2066, 0.0
  %v7054 = vsel %vm6921, %v2067, 0.0
  %v7055 = vsel %vm6922, %v2068, 0.0
  %v7056 = vsel %vm6923, %v2069, 0.0
  %v7057 = vsel %vm6924, %v2070, 0.0
  %v7058 = vsel %vm6925, %v2071, 0.0
  %v7059 = vsel %vm6926, %v2072, 0.0
  %v7060 = vsel %vm6927, %v2073, 0.0
  %v7061 = vsel %vm6928, %v2074, 0.0
  %v7062 = vsel %vm6929, %v2075, 0.0
  %v7063 = vsel %vm6930, %v2076, 0.0
  %v7064 = vsel %vm6931, %v2077, 0.0
  %v7065 = vsel %vm6932, %v2078, 0.0
  %v7066 = vsel %vm6933, %v2079, 0.0
  %v7067 = vsel %vm6934, %v2080, 0.0
  %v7068 = vsel %vm6935, %v2081, 0.0
  %v7069 = vsel %vm6936, %v2082, 0.0
  %v7070 = vsel %vm6937, %v2083, 0.0
  %v7071 = vsel %vm6938, %v2084, 0.0
  %v7072 = vsel %vm6939, %v2085, 0.0
  %v7073 = vsel %vm6940, %v2086, 0.0
  %v7074 = vsel %vm6941, %v2087, 0.0
  %v7075 = vsel %vm6942, %v2088, 0.0
  %v7076 = vsel %vm6943, %v2089, 0.0
  %v7077 = vsel %vm6944, %v2090, 0.0
  %v7078 = vsel %vm6945, %v2091, 0.0
  %v7079 = vsel %vm6946, %v2092, 0.0
  %v7080 = vsel %vm6947, %v2093, 0.0
  %v7081 = vsel %vm6948, %v2094, 0.0
  %v7082 = vsel %vm6949, %v2095, 0.0
  %v7083 = vsel %vm6950, %v2096, 0.0
  %v7084 = vsel %vm6951, %v2097, 0.0
  %v7085 = vsel %vm6952, %v2098, 0.0
  %v7086 = vsel %vm6953, %v2099, 0.0
  %v7087 = vsel %vm6954, %v2100, 0.0
  %v7088 = vsel %vm6955, %v2101, 0.0
  %v7089 = vsel %vm6956, %v2102, 0.0
  %v7090 = vsel %vm6957, %v2103, 0.0
  %v7091 = vsel %vm6958, %v2104, 0.0
  %v7092 = vsel %vm3426, %v6959, 0.0
  %v7093 = vsel %vm3426, %v6960, 0.0
  %v7094 = vadd.f32 %v7092, %v7093
  %v7095 = vsel %vm3426, %v6961, 0.0
  %v7096 = vadd.f32 %v7094, %v7095
  %v7097 = vsel %vm3426, %v6962, 0.0
  %v7098 = vadd.f32 %v7096, %v7097
  %v7099 = vsel %vm3426, %v6963, 0.0
  %v7100 = vadd.f32 %v7098, %v7099
  %v7101 = vsel %vm3426, %v6964, 0.0
  %v7102 = vadd.f32 %v7100, %v7101
  %v7103 = vsel %vm3426, %v6965, 0.0
  %v7104 = vadd.f32 %v7102, %v7103
  %v7105 = vsel %vm3426, %v6966, 0.0
  %v7106 = vadd.f32 %v7104, %v7105
  %v7107 = vsel %vm3426, %v6967, 0.0
  %v7108 = vadd.f32 %v7106, %v7107
  %v7109 = vsel %vm3426, %v6968, 0.0
  %v7110 = vadd.f32 %v7108, %v7109
  %v7111 = vsel %vm3426, %v6969, 0.0
  %v7112 = vadd.f32 %v7110, %v7111
  %v7113 = vsel %vm3426, %v6970, 0.0
  %v7114 = vadd.f32 %v7112, %v7113
  %v7115 = vsel %vm3426, %v6971, 0.0
  %v7116 = vadd.f32 %v7114, %v7115
  %v7117 = vsel %vm3426, %v6972, 0.0
  %v7118 = vadd.f32 %v7116, %v7117
  %v7119 = vsel %vm3426, %v6973, 0.0
  %v7120 = vadd.f32 %v7118, %v7119
  %v7121 = vsel %vm3426, %v6974, 0.0
  %v7122 = vadd.f32 %v7120, %v7121
  %v7123 = vsel %vm3426, %v6975, 0.0
  %v7124 = vadd.f32 %v7122, %v7123
  %v7125 = vsel %vm3426, %v6976, 0.0
  %v7126 = vadd.f32 %v7124, %v7125
  %v7127 = vsel %vm3426, %v6977, 0.0
  %v7128 = vadd.f32 %v7126, %v7127
  %v7129 = vsel %vm3426, %v6978, 0.0
  %v7130 = vadd.f32 %v7128, %v7129
  %v7131 = vsel %vm3426, %v6979, 0.0
  %v7132 = vadd.f32 %v7130, %v7131
  %v7133 = vsel %vm3426, %v6980, 0.0
  %v7134 = vadd.f32 %v7132, %v7133
  %v7135 = vsel %vm3426, %v6981, 0.0
  %v7136 = vadd.f32 %v7134, %v7135
  %v7137 = vsel %vm3426, %v6982, 0.0
  %v7138 = vadd.f32 %v7136, %v7137
  %v7139 = vsel %vm3426, %v6983, 0.0
  %v7140 = vadd.f32 %v7138, %v7139
  %v7141 = vsel %vm3426, %v6984, 0.0
  %v7142 = vadd.f32 %v7140, %v7141
  %v7143 = vsel %vm3426, %v6985, 0.0
  %v7144 = vadd.f32 %v7142, %v7143
  %v7145 = vsel %vm3426, %v6986, 0.0
  %v7146 = vadd.f32 %v7144, %v7145
  %v7147 = vsel %vm3426, %v6987, 0.0
  %v7148 = vadd.f32 %v7146, %v7147
  %v7149 = vsel %vm3426, %v6988, 0.0
  %v7150 = vadd.f32 %v7148, %v7149
  %v7151 = vsel %vm3426, %v6989, 0.0
  %v7152 = vadd.f32 %v7150, %v7151
  %v7153 = vsel %vm3426, %v6990, 0.0
  %v7154 = vadd.f32 %v7152, %v7153
  %v7155 = vsel %vm3426, %v6991, 0.0
  %v7156 = vadd.f32 %v7154, %v7155
  %v7157 = vsel %vm3426, %v6992, 0.0
  %v7158 = vadd.f32 %v7156, %v7157
  %v7159 = vsel %vm3426, %v6993, 0.0
  %v7160 = vadd.f32 %v7158, %v7159
  %v7161 = vsel %vm3426, %v6994, 0.0
  %v7162 = vadd.f32 %v7160, %v7161
  %v7163 = vsel %vm3426, %v6995, 0.0
  %v7164 = vadd.f32 %v7162, %v7163
  %v7165 = vsel %vm3426, %v6996, 0.0
  %v7166 = vadd.f32 %v7164, %v7165
  %v7167 = vsel %vm3426, %v6997, 0.0
  %v7168 = vadd.f32 %v7166, %v7167
  %v7169 = vsel %vm3426, %v6998, 0.0
  %v7170 = vadd.f32 %v7168, %v7169
  %v7171 = vsel %vm3426, %v6999, 0.0
  %v7172 = vadd.f32 %v7170, %v7171
  %v7173 = vsel %vm3426, %v7000, 0.0
  %v7174 = vadd.f32 %v7172, %v7173
  %v7175 = vsel %vm3426, %v7001, 0.0
  %v7176 = vadd.f32 %v7174, %v7175
  %v7177 = vsel %vm3426, %v7002, 0.0
  %v7178 = vadd.f32 %v7176, %v7177
  %v7179 = vsel %vm3426, %v7003, 0.0
  %v7180 = vadd.f32 %v7178, %v7179
  %v7181 = vsel %vm3426, %v7004, 0.0
  %v7182 = vadd.f32 %v7180, %v7181
  %v7183 = vsel %vm3426, %v7005, 0.0
  %v7184 = vadd.f32 %v7182, %v7183
  %v7185 = vsel %vm3426, %v7006, 0.0
  %v7186 = vadd.f32 %v7184, %v7185
  %v7187 = vsel %vm3426, %v7007, 0.0
  %v7188 = vadd.f32 %v7186, %v7187
  %v7189 = vsel %vm3426, %v7008, 0.0
  %v7190 = vadd.f32 %v7188, %v7189
  %v7191 = vsel %vm3426, %v7009, 0.0
  %v7192 = vadd.f32 %v7190, %v7191
  %v7193 = vsel %vm3426, %v7010, 0.0
  %v7194 = vadd.f32 %v7192, %v7193
  %v7195 = vsel %vm3426, %v7011, 0.0
  %v7196 = vadd.f32 %v7194, %v7195
  %v7197 = vsel %vm3426, %v7012, 0.0
  %v7198 = vadd.f32 %v7196, %v7197
  %v7199 = vsel %vm3426, %v7013, 0.0
  %v7200 = vadd.f32 %v7198, %v7199
  %v7201 = vsel %vm3426, %v7014, 0.0
  %v7202 = vadd.f32 %v7200, %v7201
  %v7203 = vsel %vm3426, %v7015, 0.0
  %v7204 = vadd.f32 %v7202, %v7203
  %v7205 = vsel %vm3426, %v7016, 0.0
  %v7206 = vadd.f32 %v7204, %v7205
  %v7207 = vsel %vm3426, %v7017, 0.0
  %v7208 = vadd.f32 %v7206, %v7207
  %v7209 = vsel %vm3426, %v7018, 0.0
  %v7210 = vadd.f32 %v7208, %v7209
  %v7211 = vsel %vm3426, %v7019, 0.0
  %v7212 = vadd.f32 %v7210, %v7211
  %v7213 = vsel %vm3426, %v7020, 0.0
  %v7214 = vadd.f32 %v7212, %v7213
  %v7215 = vsel %vm3426, %v7021, 0.0
  %v7216 = vadd.f32 %v7214, %v7215
  %v7217 = vsel %vm3426, %v7022, 0.0
  %v7218 = vadd.f32 %v7216, %v7217
  %v7219 = vsel %vm3426, %v7023, 0.0
  %v7220 = vadd.f32 %v7218, %v7219
  %v7221 = vsel %vm3426, %v7024, 0.0
  %v7222 = vadd.f32 %v7220, %v7221
  %v7223 = vsel %vm3426, %v7025, 0.0
  %v7224 = vadd.f32 %v7222, %v7223
  %v7225 = vsel %vm3426, %v7026, 0.0
  %v7226 = vadd.f32 %v7224, %v7225
  %v7227 = vsel %vm3426, %v7027, 0.0
  %v7228 = vadd.f32 %v7226, %v7227
  %v7229 = vsel %vm3426, %v7028, 0.0
  %v7230 = vadd.f32 %v7228, %v7229
  %v7231 = vsel %vm3426, %v7029, 0.0
  %v7232 = vadd.f32 %v7230, %v7231
  %v7233 = vsel %vm3426, %v7030, 0.0
  %v7234 = vadd.f32 %v7232, %v7233
  %v7235 = vsel %vm3426, %v7031, 0.0
  %v7236 = vadd.f32 %v7234, %v7235
  %v7237 = vsel %vm3426, %v7032, 0.0
  %v7238 = vadd.f32 %v7236, %v7237
  %v7239 = vsel %vm3426, %v7033, 0.0
  %v7240 = vadd.f32 %v7238, %v7239
  %v7241 = vsel %vm3426, %v7034, 0.0
  %v7242 = vadd.f32 %v7240, %v7241
  %v7243 = vsel %vm3426, %v7035, 0.0
  %v7244 = vadd.f32 %v7242, %v7243
  %v7245 = vsel %vm3426, %v7036, 0.0
  %v7246 = vadd.f32 %v7244, %v7245
  %v7247 = vsel %vm3426, %v7037, 0.0
  %v7248 = vadd.f32 %v7246, %v7247
  %v7249 = vsel %vm3426, %v7038, 0.0
  %v7250 = vadd.f32 %v7248, %v7249
  %v7251 = vsel %vm3426, %v7039, 0.0
  %v7252 = vadd.f32 %v7250, %v7251
  %v7253 = vsel %vm3426, %v7040, 0.0
  %v7254 = vadd.f32 %v7252, %v7253
  %v7255 = vsel %vm3426, %v7041, 0.0
  %v7256 = vadd.f32 %v7254, %v7255
  %v7257 = vsel %vm3426, %v7042, 0.0
  %v7258 = vadd.f32 %v7256, %v7257
  %v7259 = vsel %vm3426, %v7043, 0.0
  %v7260 = vadd.f32 %v7258, %v7259
  %v7261 = vsel %vm3426, %v7044, 0.0
  %v7262 = vadd.f32 %v7260, %v7261
  %v7263 = vsel %vm3426, %v7045, 0.0
  %v7264 = vadd.f32 %v7262, %v7263
  %v7265 = vsel %vm3426, %v7046, 0.0
  %v7266 = vadd.f32 %v7264, %v7265
  %v7267 = vsel %vm3426, %v7047, 0.0
  %v7268 = vadd.f32 %v7266, %v7267
  %v7269 = vsel %vm3426, %v7048, 0.0
  %v7270 = vadd.f32 %v7268, %v7269
  %v7271 = vsel %vm3426, %v7049, 0.0
  %v7272 = vadd.f32 %v7270, %v7271
  %v7273 = vsel %vm3426, %v7050, 0.0
  %v7274 = vadd.f32 %v7272, %v7273
  %v7275 = vsel %vm3426, %v7051, 0.0
  %v7276 = vadd.f32 %v7274, %v7275
  %v7277 = vsel %vm3426, %v7052, 0.0
  %v7278 = vadd.f32 %v7276, %v7277
  %v7279 = vsel %vm3426, %v7053, 0.0
  %v7280 = vadd.f32 %v7278, %v7279
  %v7281 = vsel %vm3426, %v7054, 0.0
  %v7282 = vadd.f32 %v7280, %v7281
  %v7283 = vsel %vm3426, %v7055, 0.0
  %v7284 = vadd.f32 %v7282, %v7283
  %v7285 = vsel %vm3426, %v7056, 0.0
  %v7286 = vadd.f32 %v7284, %v7285
  %v7287 = vsel %vm3426, %v7057, 0.0
  %v7288 = vadd.f32 %v7286, %v7287
  %v7289 = vsel %vm3426, %v7058, 0.0
  %v7290 = vadd.f32 %v7288, %v7289
  %v7291 = vsel %vm3426, %v7059, 0.0
  %v7292 = vadd.f32 %v7290, %v7291
  %v7293 = vsel %vm3426, %v7060, 0.0
  %v7294 = vadd.f32 %v7292, %v7293
  %v7295 = vsel %vm3426, %v7061, 0.0
  %v7296 = vadd.f32 %v7294, %v7295
  %v7297 = vsel %vm3426, %v7062, 0.0
  %v7298 = vadd.f32 %v7296, %v7297
  %v7299 = vsel %vm3426, %v7063, 0.0
  %v7300 = vadd.f32 %v7298, %v7299
  %v7301 = vsel %vm3426, %v7064, 0.0
  %v7302 = vadd.f32 %v7300, %v7301
  %v7303 = vsel %vm3426, %v7065, 0.0
  %v7304 = vadd.f32 %v7302, %v7303
  %v7305 = vsel %vm3426, %v7066, 0.0
  %v7306 = vadd.f32 %v7304, %v7305
  %v7307 = vsel %vm3426, %v7067, 0.0
  %v7308 = vadd.f32 %v7306, %v7307
  %v7309 = vsel %vm3426, %v7068, 0.0
  %v7310 = vadd.f32 %v7308, %v7309
  %v7311 = vsel %vm3426, %v7069, 0.0
  %v7312 = vadd.f32 %v7310, %v7311
  %v7313 = vsel %vm3426, %v7070, 0.0
  %v7314 = vadd.f32 %v7312, %v7313
  %v7315 = vsel %vm3426, %v7071, 0.0
  %v7316 = vadd.f32 %v7314, %v7315
  %v7317 = vsel %vm3426, %v7072, 0.0
  %v7318 = vadd.f32 %v7316, %v7317
  %v7319 = vsel %vm3426, %v7073, 0.0
  %v7320 = vadd.f32 %v7318, %v7319
  %v7321 = vsel %vm3426, %v7074, 0.0
  %v7322 = vadd.f32 %v7320, %v7321
  %v7323 = vsel %vm3426, %v7075, 0.0
  %v7324 = vadd.f32 %v7322, %v7323
  %v7325 = vsel %vm3426, %v7076, 0.0
  %v7326 = vadd.f32 %v7324, %v7325
  %v7327 = vsel %vm3426, %v7077, 0.0
  %v7328 = vadd.f32 %v7326, %v7327
  %v7329 = vsel %vm3426, %v7078, 0.0
  %v7330 = vadd.f32 %v7328, %v7329
  %v7331 = vsel %vm3426, %v7079, 0.0
  %v7332 = vadd.f32 %v7330, %v7331
  %v7333 = vsel %vm3426, %v7080, 0.0
  %v7334 = vadd.f32 %v7332, %v7333
  %v7335 = vsel %vm3426, %v7081, 0.0
  %v7336 = vadd.f32 %v7334, %v7335
  %v7337 = vsel %vm3426, %v7082, 0.0
  %v7338 = vadd.f32 %v7336, %v7337
  %v7339 = vsel %vm3426, %v7083, 0.0
  %v7340 = vadd.f32 %v7338, %v7339
  %v7341 = vsel %vm3426, %v7084, 0.0
  %v7342 = vadd.f32 %v7340, %v7341
  %v7343 = vsel %vm3426, %v7085, 0.0
  %v7344 = vadd.f32 %v7342, %v7343
  %v7345 = vsel %vm3426, %v7086, 0.0
  %v7346 = vadd.f32 %v7344, %v7345
  %v7347 = vsel %vm3426, %v7087, 0.0
  %v7348 = vadd.f32 %v7346, %v7347
  %v7349 = vsel %vm3426, %v7088, 0.0
  %v7350 = vadd.f32 %v7348, %v7349
  %v7351 = vsel %vm3426, %v7089, 0.0
  %v7352 = vadd.f32 %v7350, %v7351
  %v7353 = vsel %vm3426, %v7090, 0.0
  %v7354 = vadd.f32 %v7352, %v7353
  %v7355 = vsel %vm3690, %v7091, 0.0
  %v7356 = vadd.f32 %v7354, %v7355
  %v7357 = vrot.slane %v7356, 4
  %v7358 = vadd.f32 %v7356, %v7357
  %v7359 = vrot.slane %v7358, 2
  %v7360 = vadd.f32 %v7358, %v7359
  %v7361 = vrot.slane %v7360, 1
  %v7362 = vadd.f32 %v7360, %v7361
  %v7363 = vmul.f32 %v7362, 0.0062111802
  %vm7364 = vcmp.ge.s32.totalorder %v2628, 869
  %vm7365 = vcmp.ge.s32.totalorder %v2629, 869
  %vm7366 = vcmp.ge.s32.totalorder %v2630, 869
  %vm7367 = vcmp.ge.s32.totalorder %v2631, 869
  %vm7368 = vcmp.ge.s32.totalorder %v2632, 869
  %vm7369 = vcmp.ge.s32.totalorder %v2633, 869
  %vm7370 = vcmp.ge.s32.totalorder %v2634, 869
  %vm7371 = vcmp.ge.s32.totalorder %v2635, 869
  %vm7372 = vcmp.ge.s32.totalorder %v2636, 869
  %vm7373 = vcmp.ge.s32.totalorder %v2637, 869
  %vm7374 = vcmp.ge.s32.totalorder %v2638, 869
  %vm7375 = vcmp.ge.s32.totalorder %v2639, 869
  %vm7376 = vcmp.ge.s32.totalorder %v2640, 869
  %vm7377 = vcmp.ge.s32.totalorder %v2641, 869
  %vm7378 = vcmp.ge.s32.totalorder %v2642, 869
  %vm7379 = vcmp.ge.s32.totalorder %v2643, 869
  %vm7380 = vcmp.ge.s32.totalorder %v2644, 869
  %vm7381 = vcmp.ge.s32.totalorder %v2645, 869
  %vm7382 = vcmp.ge.s32.totalorder %v2646, 869
  %vm7383 = vcmp.ge.s32.totalorder %v2647, 869
  %vm7384 = vcmp.ge.s32.totalorder %v2648, 869
  %vm7385 = vcmp.ge.s32.totalorder %v2649, 869
  %vm7386 = vcmp.ge.s32.totalorder %v2650, 869
  %vm7387 = vcmp.ge.s32.totalorder %v2651, 869
  %vm7388 = vcmp.ge.s32.totalorder %v2652, 869
  %vm7389 = vcmp.ge.s32.totalorder %v2653, 869
  %vm7390 = vcmp.ge.s32.totalorder %v2654, 869
  %vm7391 = vcmp.ge.s32.totalorder %v2655, 869
  %vm7392 = vcmp.ge.s32.totalorder %v2656, 869
  %vm7393 = vcmp.ge.s32.totalorder %v2657, 869
  %vm7394 = vcmp.ge.s32.totalorder %v2658, 869
  %vm7395 = vcmp.ge.s32.totalorder %v2659, 869
  %vm7396 = vcmp.ge.s32.totalorder %v2660, 869
  %vm7397 = vcmp.ge.s32.totalorder %v2661, 869
  %vm7398 = vcmp.ge.s32.totalorder %v2662, 869
  %vm7399 = vcmp.ge.s32.totalorder %v2663, 869
  %vm7400 = vcmp.ge.s32.totalorder %v2664, 869
  %vm7401 = vcmp.ge.s32.totalorder %v2665, 869
  %vm7402 = vcmp.ge.s32.totalorder %v2666, 869
  %vm7403 = vcmp.ge.s32.totalorder %v2667, 869
  %vm7404 = vcmp.ge.s32.totalorder %v2668, 869
  %vm7405 = vcmp.ge.s32.totalorder %v2669, 869
  %vm7406 = vcmp.ge.s32.totalorder %v2670, 869
  %vm7407 = vcmp.ge.s32.totalorder %v2671, 869
  %vm7408 = vcmp.ge.s32.totalorder %v2672, 869
  %vm7409 = vcmp.ge.s32.totalorder %v2673, 869
  %vm7410 = vcmp.ge.s32.totalorder %v2674, 869
  %vm7411 = vcmp.ge.s32.totalorder %v2675, 869
  %vm7412 = vcmp.ge.s32.totalorder %v2676, 869
  %vm7413 = vcmp.ge.s32.totalorder %v2677, 869
  %vm7414 = vcmp.ge.s32.totalorder %v2678, 869
  %vm7415 = vcmp.ge.s32.totalorder %v2679, 869
  %vm7416 = vcmp.ge.s32.totalorder %v2680, 869
  %vm7417 = vcmp.ge.s32.totalorder %v2681, 869
  %vm7418 = vcmp.ge.s32.totalorder %v2682, 869
  %vm7419 = vcmp.ge.s32.totalorder %v2683, 869
  %vm7420 = vcmp.ge.s32.totalorder %v2684, 869
  %vm7421 = vcmp.ge.s32.totalorder %v2685, 869
  %vm7422 = vcmp.ge.s32.totalorder %v2686, 869
  %vm7423 = vcmp.ge.s32.totalorder %v2687, 869
  %vm7424 = vcmp.ge.s32.totalorder %v2688, 869
  %vm7425 = vcmp.ge.s32.totalorder %v2689, 869
  %vm7426 = vcmp.ge.s32.totalorder %v2690, 869
  %vm7427 = vcmp.ge.s32.totalorder %v2691, 869
  %vm7428 = vcmp.ge.s32.totalorder %v2692, 869
  %vm7429 = vcmp.ge.s32.totalorder %v2693, 869
  %vm7430 = vcmp.ge.s32.totalorder %v2694, 869
  %vm7431 = vcmp.ge.s32.totalorder %v2695, 869
  %vm7432 = vcmp.ge.s32.totalorder %v2696, 869
  %vm7433 = vcmp.ge.s32.totalorder %v2697, 869
  %vm7434 = vcmp.ge.s32.totalorder %v2698, 869
  %vm7435 = vcmp.ge.s32.totalorder %v2699, 869
  %vm7436 = vcmp.ge.s32.totalorder %v2700, 869
  %vm7437 = vcmp.ge.s32.totalorder %v2701, 869
  %vm7438 = vcmp.ge.s32.totalorder %v2702, 869
  %vm7439 = vcmp.ge.s32.totalorder %v2703, 869
  %vm7440 = vcmp.ge.s32.totalorder %v2704, 869
  %vm7441 = vcmp.ge.s32.totalorder %v2705, 869
  %vm7442 = vcmp.ge.s32.totalorder %v2706, 869
  %vm7443 = vcmp.ge.s32.totalorder %v2707, 869
  %vm7444 = vcmp.ge.s32.totalorder %v2708, 869
  %vm7445 = vcmp.ge.s32.totalorder %v2709, 869
  %vm7446 = vcmp.ge.s32.totalorder %v2710, 869
  %vm7447 = vcmp.ge.s32.totalorder %v2711, 869
  %vm7448 = vcmp.ge.s32.totalorder %v2712, 869
  %vm7449 = vcmp.ge.s32.totalorder %v2713, 869
  %vm7450 = vcmp.ge.s32.totalorder %v2714, 869
  %vm7451 = vcmp.ge.s32.totalorder %v2715, 869
  %vm7452 = vcmp.ge.s32.totalorder %v2716, 869
  %vm7453 = vcmp.ge.s32.totalorder %v2717, 869
  %vm7454 = vcmp.ge.s32.totalorder %v2718, 869
  %vm7455 = vcmp.ge.s32.totalorder %v2719, 869
  %vm7456 = vcmp.ge.s32.totalorder %v2720, 869
  %vm7457 = vcmp.ge.s32.totalorder %v2721, 869
  %vm7458 = vcmp.ge.s32.totalorder %v2722, 869
  %vm7459 = vcmp.ge.s32.totalorder %v2723, 869
  %vm7460 = vcmp.ge.s32.totalorder %v2724, 869
  %vm7461 = vcmp.ge.s32.totalorder %v2725, 869
  %vm7462 = vcmp.ge.s32.totalorder %v2726, 869
  %vm7463 = vcmp.ge.s32.totalorder %v2727, 869
  %vm7464 = vcmp.ge.s32.totalorder %v2728, 869
  %vm7465 = vcmp.ge.s32.totalorder %v2729, 869
  %vm7466 = vcmp.ge.s32.totalorder %v2730, 869
  %vm7467 = vcmp.ge.s32.totalorder %v2731, 869
  %vm7468 = vcmp.ge.s32.totalorder %v2732, 869
  %vm7469 = vcmp.ge.s32.totalorder %v2733, 869
  %vm7470 = vcmp.ge.s32.totalorder %v2734, 869
  %vm7471 = vcmp.ge.s32.totalorder %v2735, 869
  %vm7472 = vcmp.ge.s32.totalorder %v2736, 869
  %vm7473 = vcmp.ge.s32.totalorder %v2737, 869
  %vm7474 = vcmp.ge.s32.totalorder %v2738, 869
  %vm7475 = vcmp.ge.s32.totalorder %v2739, 869
  %vm7476 = vcmp.ge.s32.totalorder %v2740, 869
  %vm7477 = vcmp.ge.s32.totalorder %v2741, 869
  %vm7478 = vcmp.ge.s32.totalorder %v2742, 869
  %vm7479 = vcmp.ge.s32.totalorder %v2743, 869
  %vm7480 = vcmp.ge.s32.totalorder %v2744, 869
  %vm7481 = vcmp.ge.s32.totalorder %v2745, 869
  %vm7482 = vcmp.ge.s32.totalorder %v2746, 869
  %vm7483 = vcmp.ge.s32.totalorder %v2747, 869
  %vm7484 = vcmp.ge.s32.totalorder %v2748, 869
  %vm7485 = vcmp.ge.s32.totalorder %v2749, 869
  %vm7486 = vcmp.ge.s32.totalorder %v2750, 869
  %vm7487 = vcmp.ge.s32.totalorder %v2751, 869
  %vm7488 = vcmp.ge.s32.totalorder %v2752, 869
  %vm7489 = vcmp.ge.s32.totalorder %v2753, 869
  %vm7490 = vcmp.ge.s32.totalorder %v2754, 869
  %vm7491 = vcmp.ge.s32.totalorder %v2755, 869
  %vm7492 = vcmp.ge.s32.totalorder %v2756, 869
  %vm7493 = vcmp.ge.s32.totalorder %v2757, 869
  %vm7494 = vcmp.ge.s32.totalorder %v2758, 869
  %vm7495 = vcmp.ge.s32.totalorder %v2759, 869
  %vm7496 = vcmp.ge.s32.totalorder %v2760, 869
  %vm7497 = vcmp.lt.s32.totalorder %v2628, 1062
  %vm7498 = vcmp.lt.s32.totalorder %v2629, 1062
  %vm7499 = vcmp.lt.s32.totalorder %v2630, 1062
  %vm7500 = vcmp.lt.s32.totalorder %v2631, 1062
  %vm7501 = vcmp.lt.s32.totalorder %v2632, 1062
  %vm7502 = vcmp.lt.s32.totalorder %v2633, 1062
  %vm7503 = vcmp.lt.s32.totalorder %v2634, 1062
  %vm7504 = vcmp.lt.s32.totalorder %v2635, 1062
  %vm7505 = vcmp.lt.s32.totalorder %v2636, 1062
  %vm7506 = vcmp.lt.s32.totalorder %v2637, 1062
  %vm7507 = vcmp.lt.s32.totalorder %v2638, 1062
  %vm7508 = vcmp.lt.s32.totalorder %v2639, 1062
  %vm7509 = vcmp.lt.s32.totalorder %v2640, 1062
  %vm7510 = vcmp.lt.s32.totalorder %v2641, 1062
  %vm7511 = vcmp.lt.s32.totalorder %v2642, 1062
  %vm7512 = vcmp.lt.s32.totalorder %v2643, 1062
  %vm7513 = vcmp.lt.s32.totalorder %v2644, 1062
  %vm7514 = vcmp.lt.s32.totalorder %v2645, 1062
  %vm7515 = vcmp.lt.s32.totalorder %v2646, 1062
  %vm7516 = vcmp.lt.s32.totalorder %v2647, 1062
  %vm7517 = vcmp.lt.s32.totalorder %v2648, 1062
  %vm7518 = vcmp.lt.s32.totalorder %v2649, 1062
  %vm7519 = vcmp.lt.s32.totalorder %v2650, 1062
  %vm7520 = vcmp.lt.s32.totalorder %v2651, 1062
  %vm7521 = vcmp.lt.s32.totalorder %v2652, 1062
  %vm7522 = vcmp.lt.s32.totalorder %v2653, 1062
  %vm7523 = vcmp.lt.s32.totalorder %v2654, 1062
  %vm7524 = vcmp.lt.s32.totalorder %v2655, 1062
  %vm7525 = vcmp.lt.s32.totalorder %v2656, 1062
  %vm7526 = vcmp.lt.s32.totalorder %v2657, 1062
  %vm7527 = vcmp.lt.s32.totalorder %v2658, 1062
  %vm7528 = vcmp.lt.s32.totalorder %v2659, 1062
  %vm7529 = vcmp.lt.s32.totalorder %v2660, 1062
  %vm7530 = vcmp.lt.s32.totalorder %v2661, 1062
  %vm7531 = vcmp.lt.s32.totalorder %v2662, 1062
  %vm7532 = vcmp.lt.s32.totalorder %v2663, 1062
  %vm7533 = vcmp.lt.s32.totalorder %v2664, 1062
  %vm7534 = vcmp.lt.s32.totalorder %v2665, 1062
  %vm7535 = vcmp.lt.s32.totalorder %v2666, 1062
  %vm7536 = vcmp.lt.s32.totalorder %v2667, 1062
  %vm7537 = vcmp.lt.s32.totalorder %v2668, 1062
  %vm7538 = vcmp.lt.s32.totalorder %v2669, 1062
  %vm7539 = vcmp.lt.s32.totalorder %v2670, 1062
  %vm7540 = vcmp.lt.s32.totalorder %v2671, 1062
  %vm7541 = vcmp.lt.s32.totalorder %v2672, 1062
  %vm7542 = vcmp.lt.s32.totalorder %v2673, 1062
  %vm7543 = vcmp.lt.s32.totalorder %v2674, 1062
  %vm7544 = vcmp.lt.s32.totalorder %v2675, 1062
  %vm7545 = vcmp.lt.s32.totalorder %v2676, 1062
  %vm7546 = vcmp.lt.s32.totalorder %v2677, 1062
  %vm7547 = vcmp.lt.s32.totalorder %v2678, 1062
  %vm7548 = vcmp.lt.s32.totalorder %v2679, 1062
  %vm7549 = vcmp.lt.s32.totalorder %v2680, 1062
  %vm7550 = vcmp.lt.s32.totalorder %v2681, 1062
  %vm7551 = vcmp.lt.s32.totalorder %v2682, 1062
  %vm7552 = vcmp.lt.s32.totalorder %v2683, 1062
  %vm7553 = vcmp.lt.s32.totalorder %v2684, 1062
  %vm7554 = vcmp.lt.s32.totalorder %v2685, 1062
  %vm7555 = vcmp.lt.s32.totalorder %v2686, 1062
  %vm7556 = vcmp.lt.s32.totalorder %v2687, 1062
  %vm7557 = vcmp.lt.s32.totalorder %v2688, 1062
  %vm7558 = vcmp.lt.s32.totalorder %v2689, 1062
  %vm7559 = vcmp.lt.s32.totalorder %v2690, 1062
  %vm7560 = vcmp.lt.s32.totalorder %v2691, 1062
  %vm7561 = vcmp.lt.s32.totalorder %v2692, 1062
  %vm7562 = vcmp.lt.s32.totalorder %v2693, 1062
  %vm7563 = vcmp.lt.s32.totalorder %v2694, 1062
  %vm7564 = vcmp.lt.s32.totalorder %v2695, 1062
  %vm7565 = vcmp.lt.s32.totalorder %v2696, 1062
  %vm7566 = vcmp.lt.s32.totalorder %v2697, 1062
  %vm7567 = vcmp.lt.s32.totalorder %v2698, 1062
  %vm7568 = vcmp.lt.s32.totalorder %v2699, 1062
  %vm7569 = vcmp.lt.s32.totalorder %v2700, 1062
  %vm7570 = vcmp.lt.s32.totalorder %v2701, 1062
  %vm7571 = vcmp.lt.s32.totalorder %v2702, 1062
  %vm7572 = vcmp.lt.s32.totalorder %v2703, 1062
  %vm7573 = vcmp.lt.s32.totalorder %v2704, 1062
  %vm7574 = vcmp.lt.s32.totalorder %v2705, 1062
  %vm7575 = vcmp.lt.s32.totalorder %v2706, 1062
  %vm7576 = vcmp.lt.s32.totalorder %v2707, 1062
  %vm7577 = vcmp.lt.s32.totalorder %v2708, 1062
  %vm7578 = vcmp.lt.s32.totalorder %v2709, 1062
  %vm7579 = vcmp.lt.s32.totalorder %v2710, 1062
  %vm7580 = vcmp.lt.s32.totalorder %v2711, 1062
  %vm7581 = vcmp.lt.s32.totalorder %v2712, 1062
  %vm7582 = vcmp.lt.s32.totalorder %v2713, 1062
  %vm7583 = vcmp.lt.s32.totalorder %v2714, 1062
  %vm7584 = vcmp.lt.s32.totalorder %v2715, 1062
  %vm7585 = vcmp.lt.s32.totalorder %v2716, 1062
  %vm7586 = vcmp.lt.s32.totalorder %v2717, 1062
  %vm7587 = vcmp.lt.s32.totalorder %v2718, 1062
  %vm7588 = vcmp.lt.s32.totalorder %v2719, 1062
  %vm7589 = vcmp.lt.s32.totalorder %v2720, 1062
  %vm7590 = vcmp.lt.s32.totalorder %v2721, 1062
  %vm7591 = vcmp.lt.s32.totalorder %v2722, 1062
  %vm7592 = vcmp.lt.s32.totalorder %v2723, 1062
  %vm7593 = vcmp.lt.s32.totalorder %v2724, 1062
  %vm7594 = vcmp.lt.s32.totalorder %v2725, 1062
  %vm7595 = vcmp.lt.s32.totalorder %v2726, 1062
  %vm7596 = vcmp.lt.s32.totalorder %v2727, 1062
  %vm7597 = vcmp.lt.s32.totalorder %v2728, 1062
  %vm7598 = vcmp.lt.s32.totalorder %v2729, 1062
  %vm7599 = vcmp.lt.s32.totalorder %v2730, 1062
  %vm7600 = vcmp.lt.s32.totalorder %v2731, 1062
  %vm7601 = vcmp.lt.s32.totalorder %v2732, 1062
  %vm7602 = vcmp.lt.s32.totalorder %v2733, 1062
  %vm7603 = vcmp.lt.s32.totalorder %v2734, 1062
  %vm7604 = vcmp.lt.s32.totalorder %v2735, 1062
  %vm7605 = vcmp.lt.s32.totalorder %v2736, 1062
  %vm7606 = vcmp.lt.s32.totalorder %v2737, 1062
  %vm7607 = vcmp.lt.s32.totalorder %v2738, 1062
  %vm7608 = vcmp.lt.s32.totalorder %v2739, 1062
  %vm7609 = vcmp.lt.s32.totalorder %v2740, 1062
  %vm7610 = vcmp.lt.s32.totalorder %v2741, 1062
  %vm7611 = vcmp.lt.s32.totalorder %v2742, 1062
  %vm7612 = vcmp.lt.s32.totalorder %v2743, 1062
  %vm7613 = vcmp.lt.s32.totalorder %v2744, 1062
  %vm7614 = vcmp.lt.s32.totalorder %v2745, 1062
  %vm7615 = vcmp.lt.s32.totalorder %v2746, 1062
  %vm7616 = vcmp.lt.s32.totalorder %v2747, 1062
  %vm7617 = vcmp.lt.s32.totalorder %v2748, 1062
  %vm7618 = vcmp.lt.s32.totalorder %v2749, 1062
  %vm7619 = vcmp.lt.s32.totalorder %v2750, 1062
  %vm7620 = vcmp.lt.s32.totalorder %v2751, 1062
  %vm7621 = vcmp.lt.s32.totalorder %v2752, 1062
  %vm7622 = vcmp.lt.s32.totalorder %v2753, 1062
  %vm7623 = vcmp.lt.s32.totalorder %v2754, 1062
  %vm7624 = vcmp.lt.s32.totalorder %v2755, 1062
  %vm7625 = vcmp.lt.s32.totalorder %v2756, 1062
  %vm7626 = vcmp.lt.s32.totalorder %v2757, 1062
  %vm7627 = vcmp.lt.s32.totalorder %v2758, 1062
  %vm7628 = vcmp.lt.s32.totalorder %v2759, 1062
  %vm7629 = vcmp.lt.s32.totalorder %v2760, 1062
  %vm7630 = vmand %vm7364, %vm7497
  %vm7631 = vmand %vm7365, %vm7498
  %vm7632 = vmand %vm7366, %vm7499
  %vm7633 = vmand %vm7367, %vm7500
  %vm7634 = vmand %vm7368, %vm7501
  %vm7635 = vmand %vm7369, %vm7502
  %vm7636 = vmand %vm7370, %vm7503
  %vm7637 = vmand %vm7371, %vm7504
  %vm7638 = vmand %vm7372, %vm7505
  %vm7639 = vmand %vm7373, %vm7506
  %vm7640 = vmand %vm7374, %vm7507
  %vm7641 = vmand %vm7375, %vm7508
  %vm7642 = vmand %vm7376, %vm7509
  %vm7643 = vmand %vm7377, %vm7510
  %vm7644 = vmand %vm7378, %vm7511
  %vm7645 = vmand %vm7379, %vm7512
  %vm7646 = vmand %vm7380, %vm7513
  %vm7647 = vmand %vm7381, %vm7514
  %vm7648 = vmand %vm7382, %vm7515
  %vm7649 = vmand %vm7383, %vm7516
  %vm7650 = vmand %vm7384, %vm7517
  %vm7651 = vmand %vm7385, %vm7518
  %vm7652 = vmand %vm7386, %vm7519
  %vm7653 = vmand %vm7387, %vm7520
  %vm7654 = vmand %vm7388, %vm7521
  %vm7655 = vmand %vm7389, %vm7522
  %vm7656 = vmand %vm7390, %vm7523
  %vm7657 = vmand %vm7391, %vm7524
  %vm7658 = vmand %vm7392, %vm7525
  %vm7659 = vmand %vm7393, %vm7526
  %vm7660 = vmand %vm7394, %vm7527
  %vm7661 = vmand %vm7395, %vm7528
  %vm7662 = vmand %vm7396, %vm7529
  %vm7663 = vmand %vm7397, %vm7530
  %vm7664 = vmand %vm7398, %vm7531
  %vm7665 = vmand %vm7399, %vm7532
  %vm7666 = vmand %vm7400, %vm7533
  %vm7667 = vmand %vm7401, %vm7534
  %vm7668 = vmand %vm7402, %vm7535
  %vm7669 = vmand %vm7403, %vm7536
  %vm7670 = vmand %vm7404, %vm7537
  %vm7671 = vmand %vm7405, %vm7538
  %vm7672 = vmand %vm7406, %vm7539
  %vm7673 = vmand %vm7407, %vm7540
  %vm7674 = vmand %vm7408, %vm7541
  %vm7675 = vmand %vm7409, %vm7542
  %vm7676 = vmand %vm7410, %vm7543
  %vm7677 = vmand %vm7411, %vm7544
  %vm7678 = vmand %vm7412, %vm7545
  %vm7679 = vmand %vm7413, %vm7546
  %vm7680 = vmand %vm7414, %vm7547
  %vm7681 = vmand %vm7415, %vm7548
  %vm7682 = vmand %vm7416, %vm7549
  %vm7683 = vmand %vm7417, %vm7550
  %vm7684 = vmand %vm7418, %vm7551
  %vm7685 = vmand %vm7419, %vm7552
  %vm7686 = vmand %vm7420, %vm7553
  %vm7687 = vmand %vm7421, %vm7554
  %vm7688 = vmand %vm7422, %vm7555
  %vm7689 = vmand %vm7423, %vm7556
  %vm7690 = vmand %vm7424, %vm7557
  %vm7691 = vmand %vm7425, %vm7558
  %vm7692 = vmand %vm7426, %vm7559
  %vm7693 = vmand %vm7427, %vm7560
  %vm7694 = vmand %vm7428, %vm7561
  %vm7695 = vmand %vm7429, %vm7562
  %vm7696 = vmand %vm7430, %vm7563
  %vm7697 = vmand %vm7431, %vm7564
  %vm7698 = vmand %vm7432, %vm7565
  %vm7699 = vmand %vm7433, %vm7566
  %vm7700 = vmand %vm7434, %vm7567
  %vm7701 = vmand %vm7435, %vm7568
  %vm7702 = vmand %vm7436, %vm7569
  %vm7703 = vmand %vm7437, %vm7570
  %vm7704 = vmand %vm7438, %vm7571
  %vm7705 = vmand %vm7439, %vm7572
  %vm7706 = vmand %vm7440, %vm7573
  %vm7707 = vmand %vm7441, %vm7574
  %vm7708 = vmand %vm7442, %vm7575
  %vm7709 = vmand %vm7443, %vm7576
  %vm7710 = vmand %vm7444, %vm7577
  %vm7711 = vmand %vm7445, %vm7578
  %vm7712 = vmand %vm7446, %vm7579
  %vm7713 = vmand %vm7447, %vm7580
  %vm7714 = vmand %vm7448, %vm7581
  %vm7715 = vmand %vm7449, %vm7582
  %vm7716 = vmand %vm7450, %vm7583
  %vm7717 = vmand %vm7451, %vm7584
  %vm7718 = vmand %vm7452, %vm7585
  %vm7719 = vmand %vm7453, %vm7586
  %vm7720 = vmand %vm7454, %vm7587
  %vm7721 = vmand %vm7455, %vm7588
  %vm7722 = vmand %vm7456, %vm7589
  %vm7723 = vmand %vm7457, %vm7590
  %vm7724 = vmand %vm7458, %vm7591
  %vm7725 = vmand %vm7459, %vm7592
  %vm7726 = vmand %vm7460, %vm7593
  %vm7727 = vmand %vm7461, %vm7594
  %vm7728 = vmand %vm7462, %vm7595
  %vm7729 = vmand %vm7463, %vm7596
  %vm7730 = vmand %vm7464, %vm7597
  %vm7731 = vmand %vm7465, %vm7598
  %vm7732 = vmand %vm7466, %vm7599
  %vm7733 = vmand %vm7467, %vm7600
  %vm7734 = vmand %vm7468, %vm7601
  %vm7735 = vmand %vm7469, %vm7602
  %vm7736 = vmand %vm7470, %vm7603
  %vm7737 = vmand %vm7471, %vm7604
  %vm7738 = vmand %vm7472, %vm7605
  %vm7739 = vmand %vm7473, %vm7606
  %vm7740 = vmand %vm7474, %vm7607
  %vm7741 = vmand %vm7475, %vm7608
  %vm7742 = vmand %vm7476, %vm7609
  %vm7743 = vmand %vm7477, %vm7610
  %vm7744 = vmand %vm7478, %vm7611
  %vm7745 = vmand %vm7479, %vm7612
  %vm7746 = vmand %vm7480, %vm7613
  %vm7747 = vmand %vm7481, %vm7614
  %vm7748 = vmand %vm7482, %vm7615
  %vm7749 = vmand %vm7483, %vm7616
  %vm7750 = vmand %vm7484, %vm7617
  %vm7751 = vmand %vm7485, %vm7618
  %vm7752 = vmand %vm7486, %vm7619
  %vm7753 = vmand %vm7487, %vm7620
  %vm7754 = vmand %vm7488, %vm7621
  %vm7755 = vmand %vm7489, %vm7622
  %vm7756 = vmand %vm7490, %vm7623
  %vm7757 = vmand %vm7491, %vm7624
  %vm7758 = vmand %vm7492, %vm7625
  %vm7759 = vmand %vm7493, %vm7626
  %vm7760 = vmand %vm7494, %vm7627
  %vm7761 = vmand %vm7495, %vm7628
  %vm7762 = vmand %vm7496, %vm7629
  %v7763 = vsel %vm7630, %v1972, 0.0
  %v7764 = vsel %vm7631, %v1973, 0.0
  %v7765 = vsel %vm7632, %v1974, 0.0
  %v7766 = vsel %vm7633, %v1975, 0.0
  %v7767 = vsel %vm7634, %v1976, 0.0
  %v7768 = vsel %vm7635, %v1977, 0.0
  %v7769 = vsel %vm7636, %v1978, 0.0
  %v7770 = vsel %vm7637, %v1979, 0.0
  %v7771 = vsel %vm7638, %v1980, 0.0
  %v7772 = vsel %vm7639, %v1981, 0.0
  %v7773 = vsel %vm7640, %v1982, 0.0
  %v7774 = vsel %vm7641, %v1983, 0.0
  %v7775 = vsel %vm7642, %v1984, 0.0
  %v7776 = vsel %vm7643, %v1985, 0.0
  %v7777 = vsel %vm7644, %v1986, 0.0
  %v7778 = vsel %vm7645, %v1987, 0.0
  %v7779 = vsel %vm7646, %v1988, 0.0
  %v7780 = vsel %vm7647, %v1989, 0.0
  %v7781 = vsel %vm7648, %v1990, 0.0
  %v7782 = vsel %vm7649, %v1991, 0.0
  %v7783 = vsel %vm7650, %v1992, 0.0
  %v7784 = vsel %vm7651, %v1993, 0.0
  %v7785 = vsel %vm7652, %v1994, 0.0
  %v7786 = vsel %vm7653, %v1995, 0.0
  %v7787 = vsel %vm7654, %v1996, 0.0
  %v7788 = vsel %vm7655, %v1997, 0.0
  %v7789 = vsel %vm7656, %v1998, 0.0
  %v7790 = vsel %vm7657, %v1999, 0.0
  %v7791 = vsel %vm7658, %v2000, 0.0
  %v7792 = vsel %vm7659, %v2001, 0.0
  %v7793 = vsel %vm7660, %v2002, 0.0
  %v7794 = vsel %vm7661, %v2003, 0.0
  %v7795 = vsel %vm7662, %v2004, 0.0
  %v7796 = vsel %vm7663, %v2005, 0.0
  %v7797 = vsel %vm7664, %v2006, 0.0
  %v7798 = vsel %vm7665, %v2007, 0.0
  %v7799 = vsel %vm7666, %v2008, 0.0
  %v7800 = vsel %vm7667, %v2009, 0.0
  %v7801 = vsel %vm7668, %v2010, 0.0
  %v7802 = vsel %vm7669, %v2011, 0.0
  %v7803 = vsel %vm7670, %v2012, 0.0
  %v7804 = vsel %vm7671, %v2013, 0.0
  %v7805 = vsel %vm7672, %v2014, 0.0
  %v7806 = vsel %vm7673, %v2015, 0.0
  %v7807 = vsel %vm7674, %v2016, 0.0
  %v7808 = vsel %vm7675, %v2017, 0.0
  %v7809 = vsel %vm7676, %v2018, 0.0
  %v7810 = vsel %vm7677, %v2019, 0.0
  %v7811 = vsel %vm7678, %v2020, 0.0
  %v7812 = vsel %vm7679, %v2021, 0.0
  %v7813 = vsel %vm7680, %v2022, 0.0
  %v7814 = vsel %vm7681, %v2023, 0.0
  %v7815 = vsel %vm7682, %v2024, 0.0
  %v7816 = vsel %vm7683, %v2025, 0.0
  %v7817 = vsel %vm7684, %v2026, 0.0
  %v7818 = vsel %vm7685, %v2027, 0.0
  %v7819 = vsel %vm7686, %v2028, 0.0
  %v7820 = vsel %vm7687, %v2029, 0.0
  %v7821 = vsel %vm7688, %v2030, 0.0
  %v7822 = vsel %vm7689, %v2031, 0.0
  %v7823 = vsel %vm7690, %v2032, 0.0
  %v7824 = vsel %vm7691, %v2033, 0.0
  %v7825 = vsel %vm7692, %v2034, 0.0
  %v7826 = vsel %vm7693, %v2035, 0.0
  %v7827 = vsel %vm7694, %v2036, 0.0
  %v7828 = vsel %vm7695, %v2037, 0.0
  %v7829 = vsel %vm7696, %v2038, 0.0
  %v7830 = vsel %vm7697, %v2039, 0.0
  %v7831 = vsel %vm7698, %v2040, 0.0
  %v7832 = vsel %vm7699, %v2041, 0.0
  %v7833 = vsel %vm7700, %v2042, 0.0
  %v7834 = vsel %vm7701, %v2043, 0.0
  %v7835 = vsel %vm7702, %v2044, 0.0
  %v7836 = vsel %vm7703, %v2045, 0.0
  %v7837 = vsel %vm7704, %v2046, 0.0
  %v7838 = vsel %vm7705, %v2047, 0.0
  %v7839 = vsel %vm7706, %v2048, 0.0
  %v7840 = vsel %vm7707, %v2049, 0.0
  %v7841 = vsel %vm7708, %v2050, 0.0
  %v7842 = vsel %vm7709, %v2051, 0.0
  %v7843 = vsel %vm7710, %v2052, 0.0
  %v7844 = vsel %vm7711, %v2053, 0.0
  %v7845 = vsel %vm7712, %v2054, 0.0
  %v7846 = vsel %vm7713, %v2055, 0.0
  %v7847 = vsel %vm7714, %v2056, 0.0
  %v7848 = vsel %vm7715, %v2057, 0.0
  %v7849 = vsel %vm7716, %v2058, 0.0
  %v7850 = vsel %vm7717, %v2059, 0.0
  %v7851 = vsel %vm7718, %v2060, 0.0
  %v7852 = vsel %vm7719, %v2061, 0.0
  %v7853 = vsel %vm7720, %v2062, 0.0
  %v7854 = vsel %vm7721, %v2063, 0.0
  %v7855 = vsel %vm7722, %v2064, 0.0
  %v7856 = vsel %vm7723, %v2065, 0.0
  %v7857 = vsel %vm7724, %v2066, 0.0
  %v7858 = vsel %vm7725, %v2067, 0.0
  %v7859 = vsel %vm7726, %v2068, 0.0
  %v7860 = vsel %vm7727, %v2069, 0.0
  %v7861 = vsel %vm7728, %v2070, 0.0
  %v7862 = vsel %vm7729, %v2071, 0.0
  %v7863 = vsel %vm7730, %v2072, 0.0
  %v7864 = vsel %vm7731, %v2073, 0.0
  %v7865 = vsel %vm7732, %v2074, 0.0
  %v7866 = vsel %vm7733, %v2075, 0.0
  %v7867 = vsel %vm7734, %v2076, 0.0
  %v7868 = vsel %vm7735, %v2077, 0.0
  %v7869 = vsel %vm7736, %v2078, 0.0
  %v7870 = vsel %vm7737, %v2079, 0.0
  %v7871 = vsel %vm7738, %v2080, 0.0
  %v7872 = vsel %vm7739, %v2081, 0.0
  %v7873 = vsel %vm7740, %v2082, 0.0
  %v7874 = vsel %vm7741, %v2083, 0.0
  %v7875 = vsel %vm7742, %v2084, 0.0
  %v7876 = vsel %vm7743, %v2085, 0.0
  %v7877 = vsel %vm7744, %v2086, 0.0
  %v7878 = vsel %vm7745, %v2087, 0.0
  %v7879 = vsel %vm7746, %v2088, 0.0
  %v7880 = vsel %vm7747, %v2089, 0.0
  %v7881 = vsel %vm7748, %v2090, 0.0
  %v7882 = vsel %vm7749, %v2091, 0.0
  %v7883 = vsel %vm7750, %v2092, 0.0
  %v7884 = vsel %vm7751, %v2093, 0.0
  %v7885 = vsel %vm7752, %v2094, 0.0
  %v7886 = vsel %vm7753, %v2095, 0.0
  %v7887 = vsel %vm7754, %v2096, 0.0
  %v7888 = vsel %vm7755, %v2097, 0.0
  %v7889 = vsel %vm7756, %v2098, 0.0
  %v7890 = vsel %vm7757, %v2099, 0.0
  %v7891 = vsel %vm7758, %v2100, 0.0
  %v7892 = vsel %vm7759, %v2101, 0.0
  %v7893 = vsel %vm7760, %v2102, 0.0
  %v7894 = vsel %vm7761, %v2103, 0.0
  %v7895 = vsel %vm7762, %v2104, 0.0
  %v7896 = vsel %vm3426, %v7763, 0.0
  %v7897 = vsel %vm3426, %v7764, 0.0
  %v7898 = vadd.f32 %v7896, %v7897
  %v7899 = vsel %vm3426, %v7765, 0.0
  %v7900 = vadd.f32 %v7898, %v7899
  %v7901 = vsel %vm3426, %v7766, 0.0
  %v7902 = vadd.f32 %v7900, %v7901
  %v7903 = vsel %vm3426, %v7767, 0.0
  %v7904 = vadd.f32 %v7902, %v7903
  %v7905 = vsel %vm3426, %v7768, 0.0
  %v7906 = vadd.f32 %v7904, %v7905
  %v7907 = vsel %vm3426, %v7769, 0.0
  %v7908 = vadd.f32 %v7906, %v7907
  %v7909 = vsel %vm3426, %v7770, 0.0
  %v7910 = vadd.f32 %v7908, %v7909
  %v7911 = vsel %vm3426, %v7771, 0.0
  %v7912 = vadd.f32 %v7910, %v7911
  %v7913 = vsel %vm3426, %v7772, 0.0
  %v7914 = vadd.f32 %v7912, %v7913
  %v7915 = vsel %vm3426, %v7773, 0.0
  %v7916 = vadd.f32 %v7914, %v7915
  %v7917 = vsel %vm3426, %v7774, 0.0
  %v7918 = vadd.f32 %v7916, %v7917
  %v7919 = vsel %vm3426, %v7775, 0.0
  %v7920 = vadd.f32 %v7918, %v7919
  %v7921 = vsel %vm3426, %v7776, 0.0
  %v7922 = vadd.f32 %v7920, %v7921
  %v7923 = vsel %vm3426, %v7777, 0.0
  %v7924 = vadd.f32 %v7922, %v7923
  %v7925 = vsel %vm3426, %v7778, 0.0
  %v7926 = vadd.f32 %v7924, %v7925
  %v7927 = vsel %vm3426, %v7779, 0.0
  %v7928 = vadd.f32 %v7926, %v7927
  %v7929 = vsel %vm3426, %v7780, 0.0
  %v7930 = vadd.f32 %v7928, %v7929
  %v7931 = vsel %vm3426, %v7781, 0.0
  %v7932 = vadd.f32 %v7930, %v7931
  %v7933 = vsel %vm3426, %v7782, 0.0
  %v7934 = vadd.f32 %v7932, %v7933
  %v7935 = vsel %vm3426, %v7783, 0.0
  %v7936 = vadd.f32 %v7934, %v7935
  %v7937 = vsel %vm3426, %v7784, 0.0
  %v7938 = vadd.f32 %v7936, %v7937
  %v7939 = vsel %vm3426, %v7785, 0.0
  %v7940 = vadd.f32 %v7938, %v7939
  %v7941 = vsel %vm3426, %v7786, 0.0
  %v7942 = vadd.f32 %v7940, %v7941
  %v7943 = vsel %vm3426, %v7787, 0.0
  %v7944 = vadd.f32 %v7942, %v7943
  %v7945 = vsel %vm3426, %v7788, 0.0
  %v7946 = vadd.f32 %v7944, %v7945
  %v7947 = vsel %vm3426, %v7789, 0.0
  %v7948 = vadd.f32 %v7946, %v7947
  %v7949 = vsel %vm3426, %v7790, 0.0
  %v7950 = vadd.f32 %v7948, %v7949
  %v7951 = vsel %vm3426, %v7791, 0.0
  %v7952 = vadd.f32 %v7950, %v7951
  %v7953 = vsel %vm3426, %v7792, 0.0
  %v7954 = vadd.f32 %v7952, %v7953
  %v7955 = vsel %vm3426, %v7793, 0.0
  %v7956 = vadd.f32 %v7954, %v7955
  %v7957 = vsel %vm3426, %v7794, 0.0
  %v7958 = vadd.f32 %v7956, %v7957
  %v7959 = vsel %vm3426, %v7795, 0.0
  %v7960 = vadd.f32 %v7958, %v7959
  %v7961 = vsel %vm3426, %v7796, 0.0
  %v7962 = vadd.f32 %v7960, %v7961
  %v7963 = vsel %vm3426, %v7797, 0.0
  %v7964 = vadd.f32 %v7962, %v7963
  %v7965 = vsel %vm3426, %v7798, 0.0
  %v7966 = vadd.f32 %v7964, %v7965
  %v7967 = vsel %vm3426, %v7799, 0.0
  %v7968 = vadd.f32 %v7966, %v7967
  %v7969 = vsel %vm3426, %v7800, 0.0
  %v7970 = vadd.f32 %v7968, %v7969
  %v7971 = vsel %vm3426, %v7801, 0.0
  %v7972 = vadd.f32 %v7970, %v7971
  %v7973 = vsel %vm3426, %v7802, 0.0
  %v7974 = vadd.f32 %v7972, %v7973
  %v7975 = vsel %vm3426, %v7803, 0.0
  %v7976 = vadd.f32 %v7974, %v7975
  %v7977 = vsel %vm3426, %v7804, 0.0
  %v7978 = vadd.f32 %v7976, %v7977
  %v7979 = vsel %vm3426, %v7805, 0.0
  %v7980 = vadd.f32 %v7978, %v7979
  %v7981 = vsel %vm3426, %v7806, 0.0
  %v7982 = vadd.f32 %v7980, %v7981
  %v7983 = vsel %vm3426, %v7807, 0.0
  %v7984 = vadd.f32 %v7982, %v7983
  %v7985 = vsel %vm3426, %v7808, 0.0
  %v7986 = vadd.f32 %v7984, %v7985
  %v7987 = vsel %vm3426, %v7809, 0.0
  %v7988 = vadd.f32 %v7986, %v7987
  %v7989 = vsel %vm3426, %v7810, 0.0
  %v7990 = vadd.f32 %v7988, %v7989
  %v7991 = vsel %vm3426, %v7811, 0.0
  %v7992 = vadd.f32 %v7990, %v7991
  %v7993 = vsel %vm3426, %v7812, 0.0
  %v7994 = vadd.f32 %v7992, %v7993
  %v7995 = vsel %vm3426, %v7813, 0.0
  %v7996 = vadd.f32 %v7994, %v7995
  %v7997 = vsel %vm3426, %v7814, 0.0
  %v7998 = vadd.f32 %v7996, %v7997
  %v7999 = vsel %vm3426, %v7815, 0.0
  %v8000 = vadd.f32 %v7998, %v7999
  %v8001 = vsel %vm3426, %v7816, 0.0
  %v8002 = vadd.f32 %v8000, %v8001
  %v8003 = vsel %vm3426, %v7817, 0.0
  %v8004 = vadd.f32 %v8002, %v8003
  %v8005 = vsel %vm3426, %v7818, 0.0
  %v8006 = vadd.f32 %v8004, %v8005
  %v8007 = vsel %vm3426, %v7819, 0.0
  %v8008 = vadd.f32 %v8006, %v8007
  %v8009 = vsel %vm3426, %v7820, 0.0
  %v8010 = vadd.f32 %v8008, %v8009
  %v8011 = vsel %vm3426, %v7821, 0.0
  %v8012 = vadd.f32 %v8010, %v8011
  %v8013 = vsel %vm3426, %v7822, 0.0
  %v8014 = vadd.f32 %v8012, %v8013
  %v8015 = vsel %vm3426, %v7823, 0.0
  %v8016 = vadd.f32 %v8014, %v8015
  %v8017 = vsel %vm3426, %v7824, 0.0
  %v8018 = vadd.f32 %v8016, %v8017
  %v8019 = vsel %vm3426, %v7825, 0.0
  %v8020 = vadd.f32 %v8018, %v8019
  %v8021 = vsel %vm3426, %v7826, 0.0
  %v8022 = vadd.f32 %v8020, %v8021
  %v8023 = vsel %vm3426, %v7827, 0.0
  %v8024 = vadd.f32 %v8022, %v8023
  %v8025 = vsel %vm3426, %v7828, 0.0
  %v8026 = vadd.f32 %v8024, %v8025
  %v8027 = vsel %vm3426, %v7829, 0.0
  %v8028 = vadd.f32 %v8026, %v8027
  %v8029 = vsel %vm3426, %v7830, 0.0
  %v8030 = vadd.f32 %v8028, %v8029
  %v8031 = vsel %vm3426, %v7831, 0.0
  %v8032 = vadd.f32 %v8030, %v8031
  %v8033 = vsel %vm3426, %v7832, 0.0
  %v8034 = vadd.f32 %v8032, %v8033
  %v8035 = vsel %vm3426, %v7833, 0.0
  %v8036 = vadd.f32 %v8034, %v8035
  %v8037 = vsel %vm3426, %v7834, 0.0
  %v8038 = vadd.f32 %v8036, %v8037
  %v8039 = vsel %vm3426, %v7835, 0.0
  %v8040 = vadd.f32 %v8038, %v8039
  %v8041 = vsel %vm3426, %v7836, 0.0
  %v8042 = vadd.f32 %v8040, %v8041
  %v8043 = vsel %vm3426, %v7837, 0.0
  %v8044 = vadd.f32 %v8042, %v8043
  %v8045 = vsel %vm3426, %v7838, 0.0
  %v8046 = vadd.f32 %v8044, %v8045
  %v8047 = vsel %vm3426, %v7839, 0.0
  %v8048 = vadd.f32 %v8046, %v8047
  %v8049 = vsel %vm3426, %v7840, 0.0
  %v8050 = vadd.f32 %v8048, %v8049
  %v8051 = vsel %vm3426, %v7841, 0.0
  %v8052 = vadd.f32 %v8050, %v8051
  %v8053 = vsel %vm3426, %v7842, 0.0
  %v8054 = vadd.f32 %v8052, %v8053
  %v8055 = vsel %vm3426, %v7843, 0.0
  %v8056 = vadd.f32 %v8054, %v8055
  %v8057 = vsel %vm3426, %v7844, 0.0
  %v8058 = vadd.f32 %v8056, %v8057
  %v8059 = vsel %vm3426, %v7845, 0.0
  %v8060 = vadd.f32 %v8058, %v8059
  %v8061 = vsel %vm3426, %v7846, 0.0
  %v8062 = vadd.f32 %v8060, %v8061
  %v8063 = vsel %vm3426, %v7847, 0.0
  %v8064 = vadd.f32 %v8062, %v8063
  %v8065 = vsel %vm3426, %v7848, 0.0
  %v8066 = vadd.f32 %v8064, %v8065
  %v8067 = vsel %vm3426, %v7849, 0.0
  %v8068 = vadd.f32 %v8066, %v8067
  %v8069 = vsel %vm3426, %v7850, 0.0
  %v8070 = vadd.f32 %v8068, %v8069
  %v8071 = vsel %vm3426, %v7851, 0.0
  %v8072 = vadd.f32 %v8070, %v8071
  %v8073 = vsel %vm3426, %v7852, 0.0
  %v8074 = vadd.f32 %v8072, %v8073
  %v8075 = vsel %vm3426, %v7853, 0.0
  %v8076 = vadd.f32 %v8074, %v8075
  %v8077 = vsel %vm3426, %v7854, 0.0
  %v8078 = vadd.f32 %v8076, %v8077
  %v8079 = vsel %vm3426, %v7855, 0.0
  %v8080 = vadd.f32 %v8078, %v8079
  %v8081 = vsel %vm3426, %v7856, 0.0
  %v8082 = vadd.f32 %v8080, %v8081
  %v8083 = vsel %vm3426, %v7857, 0.0
  %v8084 = vadd.f32 %v8082, %v8083
  %v8085 = vsel %vm3426, %v7858, 0.0
  %v8086 = vadd.f32 %v8084, %v8085
  %v8087 = vsel %vm3426, %v7859, 0.0
  %v8088 = vadd.f32 %v8086, %v8087
  %v8089 = vsel %vm3426, %v7860, 0.0
  %v8090 = vadd.f32 %v8088, %v8089
  %v8091 = vsel %vm3426, %v7861, 0.0
  %v8092 = vadd.f32 %v8090, %v8091
  %v8093 = vsel %vm3426, %v7862, 0.0
  %v8094 = vadd.f32 %v8092, %v8093
  %v8095 = vsel %vm3426, %v7863, 0.0
  %v8096 = vadd.f32 %v8094, %v8095
  %v8097 = vsel %vm3426, %v7864, 0.0
  %v8098 = vadd.f32 %v8096, %v8097
  %v8099 = vsel %vm3426, %v7865, 0.0
  %v8100 = vadd.f32 %v8098, %v8099
  %v8101 = vsel %vm3426, %v7866, 0.0
  %v8102 = vadd.f32 %v8100, %v8101
  %v8103 = vsel %vm3426, %v7867, 0.0
  %v8104 = vadd.f32 %v8102, %v8103
  %v8105 = vsel %vm3426, %v7868, 0.0
  %v8106 = vadd.f32 %v8104, %v8105
  %v8107 = vsel %vm3426, %v7869, 0.0
  %v8108 = vadd.f32 %v8106, %v8107
  %v8109 = vsel %vm3426, %v7870, 0.0
  %v8110 = vadd.f32 %v8108, %v8109
  %v8111 = vsel %vm3426, %v7871, 0.0
  %v8112 = vadd.f32 %v8110, %v8111
  %v8113 = vsel %vm3426, %v7872, 0.0
  %v8114 = vadd.f32 %v8112, %v8113
  %v8115 = vsel %vm3426, %v7873, 0.0
  %v8116 = vadd.f32 %v8114, %v8115
  %v8117 = vsel %vm3426, %v7874, 0.0
  %v8118 = vadd.f32 %v8116, %v8117
  %v8119 = vsel %vm3426, %v7875, 0.0
  %v8120 = vadd.f32 %v8118, %v8119
  %v8121 = vsel %vm3426, %v7876, 0.0
  %v8122 = vadd.f32 %v8120, %v8121
  %v8123 = vsel %vm3426, %v7877, 0.0
  %v8124 = vadd.f32 %v8122, %v8123
  %v8125 = vsel %vm3426, %v7878, 0.0
  %v8126 = vadd.f32 %v8124, %v8125
  %v8127 = vsel %vm3426, %v7879, 0.0
  %v8128 = vadd.f32 %v8126, %v8127
  %v8129 = vsel %vm3426, %v7880, 0.0
  %v8130 = vadd.f32 %v8128, %v8129
  %v8131 = vsel %vm3426, %v7881, 0.0
  %v8132 = vadd.f32 %v8130, %v8131
  %v8133 = vsel %vm3426, %v7882, 0.0
  %v8134 = vadd.f32 %v8132, %v8133
  %v8135 = vsel %vm3426, %v7883, 0.0
  %v8136 = vadd.f32 %v8134, %v8135
  %v8137 = vsel %vm3426, %v7884, 0.0
  %v8138 = vadd.f32 %v8136, %v8137
  %v8139 = vsel %vm3426, %v7885, 0.0
  %v8140 = vadd.f32 %v8138, %v8139
  %v8141 = vsel %vm3426, %v7886, 0.0
  %v8142 = vadd.f32 %v8140, %v8141
  %v8143 = vsel %vm3426, %v7887, 0.0
  %v8144 = vadd.f32 %v8142, %v8143
  %v8145 = vsel %vm3426, %v7888, 0.0
  %v8146 = vadd.f32 %v8144, %v8145
  %v8147 = vsel %vm3426, %v7889, 0.0
  %v8148 = vadd.f32 %v8146, %v8147
  %v8149 = vsel %vm3426, %v7890, 0.0
  %v8150 = vadd.f32 %v8148, %v8149
  %v8151 = vsel %vm3426, %v7891, 0.0
  %v8152 = vadd.f32 %v8150, %v8151
  %v8153 = vsel %vm3426, %v7892, 0.0
  %v8154 = vadd.f32 %v8152, %v8153
  %v8155 = vsel %vm3426, %v7893, 0.0
  %v8156 = vadd.f32 %v8154, %v8155
  %v8157 = vsel %vm3426, %v7894, 0.0
  %v8158 = vadd.f32 %v8156, %v8157
  %v8159 = vsel %vm3690, %v7895, 0.0
  %v8160 = vadd.f32 %v8158, %v8159
  %v8161 = vrot.slane %v8160, 4
  %v8162 = vadd.f32 %v8160, %v8161
  %v8163 = vrot.slane %v8162, 2
  %v8164 = vadd.f32 %v8162, %v8163
  %v8165 = vrot.slane %v8164, 1
  %v8166 = vadd.f32 %v8164, %v8165
  %v8167 = vmul.f32 %v8166, 0.005181347
  %vm8168 = vcmp.ge.s32.totalorder %v2628, 10
  %vm8169 = vcmp.ge.s32.totalorder %v2629, 10
  %vm8170 = vcmp.lt.s32.totalorder %v2628, 15
  %vm8171 = vcmp.lt.s32.totalorder %v2629, 15
  %vm8172 = vmand %vm8168, %vm8170
  %vm8173 = vmand %vm8169, %vm8171
  %v8174 = vsel %vm8172, %v2605, 0.0
  %v8175 = vsel %vm8172, %v2612, 0.0
  %v8176 = vsel %vm8173, %v2619, 0.0
  %v8177 = vsel %vm8173, %v2626, 0.0
  %v8178 = vsel %vm4512, %v8176, 0.0
  %v8179 = vadd.f32 %v8174, %v8178
  %v8180 = vrot.slane %v8179, 4
  %v8181 = vadd.f32 %v8179, %v8180
  %v8182 = vrot.slane %v8181, 2
  %v8183 = vadd.f32 %v8181, %v8182
  %v8184 = vrot.slane %v8183, 1
  %v8185 = vadd.f32 %v8183, %v8184
  %v8186 = vsel %vm4512, %v8177, 0.0
  %v8187 = vadd.f32 %v8175, %v8186
  %v8188 = vrot.slane %v8187, 4
  %v8189 = vadd.f32 %v8187, %v8188
  %v8190 = vrot.slane %v8189, 2
  %v8191 = vadd.f32 %v8189, %v8190
  %v8192 = vrot.slane %v8191, 1
  %v8193 = vadd.f32 %v8191, %v8192
  %v8194 = vmul.f32 %v8185, 0.2
  %v8195 = vmul.f32 %v8193, 0.2
  %8197 = vrot.lane.b32.xlu0 %v7363, 8
  %v8198 = vpop.permute.xlu0 %8197
  %8201 = vrot.lane.b32.xlu0 %v8167, 8
  %v8202 = vpop.permute.xlu0 %8201
  %8206 = vrot.lane.b32.xlu0 %v8194, 24
  %v8207 = vpop.permute.xlu0 %8206
  %8208 = vrot.lane.b32.xlu0 %v8195, 24
  %v8209 = vpop.permute.xlu0 %8208
  %v8210 = vsel %vm4545, %v8207, %v8209
  %v8214 = vsel %vm2861, %v6559, %v8198
  %v8215 = vsel %vm3426, %v8214, %v8202
  %v8216 = vsel %vm4545, %v8215, %v8207
  %vm8217 = vcmp.eq.s32.totalorder %v2628, 2
  %v8218 = vlaneseq
  %v8219 = vshrl.u32 %v8218, 7
  %v8220 = vsub.s32 0, %v8219
  %v8221 = vrot.slane %v8216, %v8220
  %v8222 = vlaneseq
  %v8223 = vshrl.u32 %v8222, 7
  %v8224 = vsub.s32 0, %v8223
  %v8225 = vrot.slane %v8210, %v8224
  %v8226 = vlaneseq
  %v8227 = vshrl.u32 %v8226, 7
  %v8228 = vsub.s32 0, %v8227
  %v8229 = vrot.slane %v8209, %v8228
  %v8230 = vsel %vm8217, %v8221, 0.0
  %v8231 = vsel %vm8217, %v8225, 0.0
  %v8232 = vsel %vm8217, %v8229, 0.0
  %v8233 = vadd.f32 %v6401, %v8230
  %v8234 = vadd.f32 %v6402, %v8231
  %v8235 = vadd.f32 %v6403, %v8232
  %v8236 = vpack.c.bf16 %v8233, %v8233
  %v8237 = vpack.c.bf16 %v8234, %v8234
  %v8238 = vpack.c.bf16 %v8235, %v8235
  %v8239 = vld [vmem:[%s8] sm:$0xf]
  %v8240 = vld [vmem:[%s8 + $0x4] sm:$0xf]
  %v8241 = vld [vmem:[%s8 + $0x8] sm:$0xf]
  %v8242 = vld [vmem:[%s8 + $0xc] sm:$0xf]
  %v8243 = vld [vmem:[%s8 + $0x10] sm:$0xf]
  %v8244 = vld [vmem:[%s8 + $0x14] sm:$0xf]
  %v8245 = vld [vmem:[%s8 + $0x18] sm:$0xf]
  %v8246 = vld [vmem:[%s8 + $0x1c] sm:$0xf]
  %v8247 = vld [vmem:[%s8 + $0x20] sm:$0xf]
  %v8248 = vld [vmem:[%s8 + $0x24] sm:$0xf]
  %v8249 = vld [vmem:[%s8 + $0x28] sm:$0xf]
  %v8250 = vld [vmem:[%s8 + $0x2c] sm:$0xf]
  %v8251 = vld [vmem:[%s8 + $0x30] sm:$0xf]
  %v8252 = vld [vmem:[%s8 + $0x34] sm:$0xf]
  %v8253 = vld [vmem:[%s8 + $0x38] sm:$0xf]
  %v8254 = vld [vmem:[%s8 + $0x3c] sm:$0xf]
  %v8255 = vld [vmem:[%s8 + $0x40] sm:$0xf]
  %v8256 = vld [vmem:[%s8 + $0x44] sm:$0xf]
  %v8257 = vld [vmem:[%s8 + $0x48] sm:$0xf]
  %v8258 = vld [vmem:[%s8 + $0x4c] sm:$0xf]
  %v8259 = vld [vmem:[%s8 + $0x50] sm:$0xf]
  %v8260 = vld [vmem:[%s8 + $0x54] sm:$0xf]
  %v8261 = vld [vmem:[%s8 + $0x58] sm:$0xf]
  %v8262 = vld [vmem:[%s8 + $0x5c] sm:$0xf]
  %v8263 = vld [vmem:[%s8 + $0x60] sm:$0xf]
  %v8264 = vld [vmem:[%s8 + $0x64] sm:$0xf]
  %v8265 = vld [vmem:[%s8 + $0x68] sm:$0xf]
  %v8266 = vld [vmem:[%s8 + $0x6c] sm:$0xf]
  %v8267 = vld [vmem:[%s8 + $0x70] sm:$0xf]
  %v8268 = vld [vmem:[%s8 + $0x74] sm:$0xf]
  %v8269 = vld [vmem:[%s8 + $0x78] sm:$0xf]
  %v8270 = vld [vmem:[%s8 + $0x7c] sm:$0xf]
  %v8271 = vld [vmem:[%s8 + $0x80] sm:$0xf]
  %v8272 = vld [vmem:[%s8 + $0x84] sm:$0xf]
  %v8273 = vld [vmem:[%s8 + $0x88] sm:$0xf]
  %v8274 = vld [vmem:[%s9] sm:$0x1]
  %v8276 = vlaneseq
  %v8277 = vshrl.u32 %v8276, 7
  %v8278 = vsub.s32 0, %v8277
  %v8279 = vrot.slane %v8274, %v8278
  %v8316 = vunpack.c.l.b16 %v8239
  %v8317 = vunpack.c.l.b16 %v8240
  %v8318 = vunpack.c.l.b16 %v8241
  %v8319 = vunpack.c.l.b16 %v8242
  %v8320 = vunpack.c.l.b16 %v8243
  %v8321 = vunpack.c.l.b16 %v8244
  %v8322 = vunpack.c.l.b16 %v8245
  %v8323 = vunpack.c.l.b16 %v8246
  %v8324 = vunpack.c.l.b16 %v8247
  %v8325 = vunpack.c.l.b16 %v8248
  %v8326 = vunpack.c.l.b16 %v8249
  %v8327 = vunpack.c.l.b16 %v8250
  %v8328 = vunpack.c.l.b16 %v8251
  %v8329 = vunpack.c.l.b16 %v8252
  %v8330 = vunpack.c.l.b16 %v8253
  %v8331 = vunpack.c.l.b16 %v8254
  %v8332 = vunpack.c.l.b16 %v8255
  %v8333 = vunpack.c.l.b16 %v8256
  %v8334 = vunpack.c.l.b16 %v8257
  %v8335 = vunpack.c.l.b16 %v8258
  %v8336 = vunpack.c.l.b16 %v8259
  %v8337 = vunpack.c.l.b16 %v8260
  %v8338 = vunpack.c.l.b16 %v8261
  %v8339 = vunpack.c.l.b16 %v8262
  %v8340 = vunpack.c.l.b16 %v8263
  %v8341 = vunpack.c.l.b16 %v8264
  %v8342 = vunpack.c.l.b16 %v8265
  %v8343 = vunpack.c.l.b16 %v8266
  %v8344 = vunpack.c.l.b16 %v8267
  %v8345 = vunpack.c.l.b16 %v8268
  %v8346 = vunpack.c.l.b16 %v8269
  %v8347 = vunpack.c.l.b16 %v8270
  %v8348 = vunpack.c.l.b16 %v8271
  %v8349 = vunpack.c.l.b16 %v8272
  %v8350 = vunpack.c.l.b16 %v8273
  %v8351 = vpack.c.b16 %v8317, %v8316
  %v8352 = vpack.c.b16 %v8319, %v8318
  %v8353 = vpack.c.b16 %v8321, %v8320
  %v8354 = vpack.c.b16 %v8323, %v8322
  %v8355 = vpack.c.b16 %v8325, %v8324
  %v8356 = vpack.c.b16 %v8327, %v8326
  %v8357 = vpack.c.b16 %v8329, %v8328
  %v8358 = vpack.c.b16 %v8331, %v8330
  %v8359 = vpack.c.b16 %v8333, %v8332
  %v8360 = vpack.c.b16 %v8335, %v8334
  %v8361 = vpack.c.b16 %v8337, %v8336
  %v8362 = vpack.c.b16 %v8339, %v8338
  %v8363 = vpack.c.b16 %v8341, %v8340
  %v8364 = vpack.c.b16 %v8343, %v8342
  %v8365 = vpack.c.b16 %v8345, %v8344
  %v8366 = vpack.c.b16 %v8347, %v8346
  %v8367 = vpack.c.b16 %v8349, %v8348
  %v8368 = vpack.c.b16 %v8350, %v8350
  %v8387 = vsel %vm4545, %v8238, 0
  %vm8389 = vcmask 1043456
  %v8391 = vsel %vm8389, %v8368, 0
  %8393 = vmatprep.subr.bf16.mxu0 0
  %8394 = vmatpush1.bf16.msra.mxu0 %v8358
  %8395 = vmatprep.subr.bf16.mxu0 0
  %8396 = vmatpush1.bf16.msra.mxu0 %v8357
  %8397 = vmatprep.subr.bf16.mxu0 0
  %8398 = vmatpush1.bf16.msra.mxu0 %v8356
  %8399 = vmatprep.subr.bf16.mxu0 0
  %8400 = vmatpush1.bf16.msra.mxu0 %v8355
  %8401 = vmatprep.subr.bf16.mxu0 0
  %8402 = vmatpush1.bf16.msra.mxu0 %v8354
  %8403 = vmatprep.subr.bf16.mxu0 0
  %8404 = vmatpush1.bf16.msra.mxu0 %v8353
  %8405 = vmatprep.subr.bf16.mxu0 0
  %8406 = vmatpush1.bf16.msra.mxu0 %v8352
  %8407 = vmatprep.subr.bf16.mxu0 0
  %8408 = vmatpush1.bf16.msra.mxu0 %v8351
  %8409 = vmatprep.subr.bf16.mxu0 0
  %8410 = vmatpush2.bf16.msra.mxu0 %v8366
  %8411 = vmatprep.subr.bf16.mxu0 0
  %8412 = vmatpush2.bf16.msra.mxu0 %v8365
  %8413 = vmatprep.subr.bf16.mxu0 0
  %8414 = vmatpush2.bf16.msra.mxu0 %v8364
  %8415 = vmatprep.subr.bf16.mxu0 0
  %8416 = vmatpush2.bf16.msra.mxu0 %v8363
  %8417 = vmatprep.subr.bf16.mxu0 0
  %8418 = vmatpush2.bf16.msra.mxu0 %v8362
  %8419 = vmatprep.subr.bf16.mxu0 0
  %8420 = vmatpush2.bf16.msra.mxu0 %v8361
  %8421 = vmatprep.subr.bf16.mxu0 0
  %8422 = vmatpush2.bf16.msra.mxu0 %v8360
  %8423 = vmatprep.subr.bf16.mxu0 0
  %8424 = vmatpush2.bf16.msra.mxu0 %v8359
  %8425 = vmatprep.mubr.bf16.mxu0 %v8237
  %8426 = vmatmul.mubr.bf16.gmra.mxu0 %v8236
  %v8427 = vpop.f32.mrf.mxu0
  %v8428 = vadd.f32 %v8279, %v8427
  %v8429 = vpop.f32.mrf.mxu0
  %v8430 = vpop.f32.mrf.mxu0
  %v8431 = vpop.f32.mrf.mxu0
  %8432 = vdwg.mxu0
  %8433 = vmatprep.subr.bf16.mxu0 0
  %8434 = vmatpush1.bf16.msra.mxu0 0
  %8435 = vmatprep.subr.bf16.mxu0 0
  %8436 = vmatpush1.bf16.msra.mxu0 0
  %8437 = vmatprep.subr.bf16.mxu0 0
  %8438 = vmatpush1.bf16.msra.mxu0 0
  %8439 = vmatprep.subr.bf16.mxu0 0
  %8440 = vmatpush1.bf16.msra.mxu0 0
  %8441 = vmatprep.subr.bf16.mxu0 0
  %8442 = vmatpush1.bf16.msra.mxu0 0
  %8443 = vmatprep.subr.bf16.mxu0 0
  %8444 = vmatpush1.bf16.msra.mxu0 0
  %8445 = vmatprep.subr.bf16.mxu0 0
  %8446 = vmatpush1.bf16.msra.mxu0 %v8391
  %8447 = vmatprep.subr.bf16.mxu0 0
  %8448 = vmatpush1.bf16.msra.mxu0 %v8367
  %8449 = vmatprep.subr.bf16.mxu0 0
  %8450 = vmatpush2.bf16.msra.mxu0 0
  %8451 = vmatprep.subr.bf16.mxu0 0
  %8452 = vmatpush2.bf16.msra.mxu0 0
  %8453 = vmatprep.subr.bf16.mxu0 0
  %8454 = vmatpush2.bf16.msra.mxu0 0
  %8455 = vmatprep.subr.bf16.mxu0 0
  %8456 = vmatpush2.bf16.msra.mxu0 0
  %8457 = vmatprep.subr.bf16.mxu0 0
  %8458 = vmatpush2.bf16.msra.mxu0 0
  %8459 = vmatprep.subr.bf16.mxu0 0
  %8460 = vmatpush2.bf16.msra.mxu0 0
  %8461 = vmatprep.subr.bf16.mxu0 0
  %8462 = vmatpush2.bf16.msra.mxu0 0
  %8463 = vmatprep.subr.bf16.mxu0 0
  %8464 = vmatpush2.bf16.msra.mxu0 0
  %8465 = vmatprep.mubr.bf16.mxu0 0
  %8466 = vmatmul.mubr.bf16.gmra.mxu0 %v8387
  %v8467 = vpop.f32.mrf.mxu0
  %v8468 = vadd.f32 %v8428, %v8467
  %v8469 = vpop.f32.mrf.mxu0
  %v8470 = vpop.f32.mrf.mxu0
  %v8471 = vpop.f32.mrf.mxu0
  %8472 = vdwg.mxu0
  %8473 = vst [vmem:[%s10] sm:$0x7] %v8468
  // Predicated region
  $region42: #{enhanced_secure_model.1} parent=0 // pred_check
    _
  $region43: #{enhanced_secure_model.1} parent=0 // pred_check_branch
    %8475 = sbr.rel (0) target = $region45
  $region44: #{enhanced_secure_model.1} parent=0 // pred_region
    _
  $region45: #{enhanced_secure_model.1} parent=0 // pred_fallthru
    _
  // Predicated region
  $region46: #{enhanced_secure_model.1} parent=0 // pred_check
    _
  $region47: #{enhanced_secure_model.1} parent=0 // pred_check_branch
    %8477 = sbr.rel (0) target = $region49
  $region48: #{enhanced_secure_model.1} parent=0 // pred_region
    _
  $region49: #{enhanced_secure_model.1} parent=0 // pred_fallthru
    _

</llo_original>
